<compile_context>
chip_gen: v7x
topology: tpu7x:2x2x1
jax: 0.10.0
libtpu: 0.0.40
codegen_flags: <defaults>
</compile_context>

<pallas_src>
import functools

import numpy as np
import jax
import jax.numpy as jnp
from jax import lax
from jax.experimental import pallas as pl
from jax.experimental.pallas import tpu as pltpu


# ---------------------------------------------------------------------------
# Glue: index tables (built once and cached)
# ---------------------------------------------------------------------------
@functools.lru_cache(maxsize=None)
def _aligned_relative_position_index(pws0, pws1):
    coords_h = np.arange(pws0)
    coords_w = np.arange(pws1)
    coords = np.stack(np.meshgrid(coords_h, coords_w, indexing="ij"))
    coords_flatten = coords.reshape(2, -1)
    rel = coords_flatten[:, :, None] - coords_flatten[:, None, :]
    rel = rel.transpose(1, 2, 0).astype(np.int64)
    rel[:, :, 0] += pws0 - 1
    rel[:, :, 1] += pws1 - 1
    rel[:, :, 0] *= 2 * pws1 - 1
    idx = rel.sum(-1)                                        # (n4, n4)
    aligned = idx.reshape(pws0, pws1, 1, 1, pws0 * pws1)
    aligned = np.tile(aligned, (1, 1, 2, 2, 1))
    aligned = aligned.transpose(0, 2, 1, 3, 4).reshape(
        4 * pws0 * pws1, pws0 * pws1)
    return aligned                                           # (n, n4)


@functools.lru_cache(maxsize=None)
def _perm_index(pws0, pws1):
    """perm_idx[p*n4 + t] = original token (2i+hs)*W + (2j+ws) for permuted
    token t = i*pws1 + j and sub-pixel p = hs*2 + ws (same reorder as the
    torch 2x2 pixel-unshuffle)."""
    n4 = pws0 * pws1
    W = 2 * pws1
    idx = np.zeros((4 * n4,), dtype=np.int32)
    for hs in range(2):
        for ws in range(2):
            p = hs * 2 + ws
            for i in range(pws0):
                for j in range(pws1):
                    t = i * pws1 + j
                    idx[p * n4 + t] = (2 * i + hs) * W + (2 * j + ws)
    return idx


def _vmem_limit_bytes():
    cap = 64 << 20
    try:
        info = pltpu.get_tpu_info()
        cap = int(getattr(info, "vmem_capacity_bytes", cap))
    except Exception:
        pass
    # v5e/v6e (128 MiB) -> 96 MiB scoped; v7x (64 MiB) -> 48 MiB scoped.
    return max(32 << 20, min(100 << 20, (cap * 3) // 4))


def _choose_blocking(b_, blk_target):
    """Pick (blk, padded_b_).  blk*n windows per grid step; padded_b_ % blk == 0
    and an even step count where cheap (v7x: 2 TensorCores)."""
    blk_target = max(1, int(blk_target))
    if b_ <= blk_target:
        if b_ % 2 == 0 and b_ >= 8:        # split work over both TCs for free
            return b_ // 2, b_
        return b_, b_
    blk = blk_target
    steps = -(-b_ // blk)
    if steps % 2:                          # keep step count even for v7x
        steps += 1
    return blk, steps * blk


# ---------------------------------------------------------------------------
# Pallas kernel: BLK windows per grid step, merged qkv projection,
# per-head direct slices, wp folded into V.
# ---------------------------------------------------------------------------
def _make_psa_kernel(num_heads, head_dim, n4, c4, compute_dtype):
    cd = compute_dtype
    H, hd = num_heads, head_dim
    # Fast path: each head's k/v channels lie inside one sub-pixel block.
    direct_slice = (hd <= c4) and (c4 % hd == 0)

    def kernel(x_ref, wqkv_ref, bqkv_ref, wp_ref, bp_ref, bias_ref, out_ref):
        blk, n, c = x_ref.shape
        c2 = 2 * c4

        # x tile is already token-permuted (rows in (sub-pixel, token) order).
        x = x_ref[...].reshape(blk * n, c).astype(cd)

        # Single merged projection: [q*scale | kv]  (scale folded into wqkv).
        qkv = (jnp.dot(x, wqkv_ref[...], preferred_element_type=jnp.float32)
               + bqkv_ref[...])                              # (blk*n, c + c/2)
        qkv = qkv.astype(cd).reshape(blk, n, c + c2)

        bias = bias_ref[...]                                 # (H, n, n4) f32
        wp = wp_ref[...]                                     # (c, c) cd

        if direct_slice:
            def get_kv(h):
                off_ch = h * hd
                p, off = off_ch // c4, off_ch % c4
                rows = slice(p * n4, (p + 1) * n4)
                kh = qkv[:, rows, c + off:c + off + hd]
                vh = qkv[:, rows, c + c4 + off:c + c4 + off + hd]
                return kh, vh
        else:
            # Generic fallback (head channels straddle sub-pixel blocks).
            k_full = jnp.concatenate(
                [qkv[:, p * n4:(p + 1) * n4, c:c + c4] for p in range(4)],
                axis=-1)
            v_full = jnp.concatenate(
                [qkv[:, p * n4:(p + 1) * n4, c + c4:c + 2 * c4]
                 for p in range(4)], axis=-1)

            def get_kv(h):
                sl = slice(h * hd, (h + 1) * hd)
                return k_full[:, :, sl], v_full[:, :, sl]

        acc = jnp.zeros((blk, n, c), jnp.float32)
        for h in range(H):                                   # static, unrolled
            qh = qkv[:, :, h * hd:(h + 1) * hd]              # (blk, n, hd)
            kh, vh = get_kv(h)                               # (blk, n4, hd)

            # scores: (blk, n, hd) x (blk, n4, hd) -> (blk, n, n4)
            s = lax.dot_general(qh, kh, (((2,), (2,)), ((0,), (0,))),
                                preferred_element_type=jnp.float32)
            s = s + bias[h]
            s = s - jnp.max(s, axis=-1, keepdims=True)
            e = jnp.exp(s)
            p_attn = (e * pl.reciprocal(jnp.sum(e, axis=-1, keepdims=True),
                                        approx=True)).astype(cd)

            # Fold the output projection into V:  (blk, n4, hd) @ (hd, c)
            vproj = lax.dot_general(vh, wp[h * hd:(h + 1) * hd, :],
                                    (((2,), (0,)), ((), ())),
                                    preferred_element_type=jnp.float32)
            vproj = vproj.astype(cd)                         # (blk, n4, c)

            # (blk, n, n4) x (blk, n4, c) -> (blk, n, c)
            acc = acc + lax.dot_general(p_attn, vproj,
                                        (((2,), (1,)), ((0,), (0,))),
                                        preferred_element_type=jnp.float32)

        out = acc + bp_ref[...]                              # (1, c) broadcast
        out_ref[...] = out.astype(out_ref.dtype)

    return kernel


# ---------------------------------------------------------------------------
# One-time parameter / glue preparation (module init, not per forward call)
# ---------------------------------------------------------------------------
def prepare_psa(params, window_size, num_heads, compute_dtype=jnp.float32):
    dim = params["wq"].shape[0]
    pws0, pws1 = window_size[0] // 2, window_size[1] // 2
    n = window_size[0] * window_size[1]
    n4 = n // 4
    head_dim = dim // num_heads
    scale = head_dim ** -0.5
    cd = compute_dtype

    # Relative-position bias (H, n, n4).
    aligned = _aligned_relative_position_index(pws0, pws1)
    bias = params["table"][aligned.reshape(-1)].reshape(n, n4, num_heads)
    bias = jnp.transpose(bias, (2, 0, 1)).astype(jnp.float32)

    # Token permutation (applied to x outside the kernel); bias rows follow q.
    perm_idx = _perm_index(pws0, pws1)
    inv_perm = np.argsort(perm_idx).astype(np.int32)
    bias_perm = jnp.take(bias, jnp.asarray(perm_idx), axis=1)

    # Merged q/kv projection, qk scale folded in.
    wqkv = jnp.concatenate([params["wq"] * scale, params["wkv"]],
                           axis=1).astype(cd)                 # (c, 1.5c)
    bqkv = jnp.concatenate([params["bq"] * scale, params["bkv"]]
                           )[None, :].astype(jnp.float32)     # (1, 1.5c)

    return dict(
        num_heads=num_heads, head_dim=head_dim,
        n=n, n4=n4, c4=dim // 4, dim=dim,
        compute_dtype=cd,
        wqkv=wqkv, bqkv=bqkv,
        wp=params["wp"].astype(cd),
        bp=params["bp"][None, :].astype(jnp.float32),
        bias=bias_perm,
        perm_idx=jnp.asarray(perm_idx, dtype=jnp.int32),
        inv_perm=jnp.asarray(inv_perm, dtype=jnp.int32),
    )


# ---------------------------------------------------------------------------
# Forward wrapper
# ---------------------------------------------------------------------------
def psa_forward(x, prep, mask=None, blk_target=128):
    # TODO(synk): the optional `mask` branch and attn/proj dropout (identity
    # at eval) are not implemented; this is the mask=None inference path.
    assert mask is None, "PSA Pallas kernel implements the mask=None path only"
    b_, n, c = x.shape
    assert n == prep["n"] and c == prep["dim"]
    H, hd = prep["num_heads"], prep["head_dim"]
    n4, c4 = prep["n4"], prep["c4"]
    cd = prep["compute_dtype"]
    c2 = c // 2
    out_dtype = x.dtype

    blk, bp_ = _choose_blocking(b_, blk_target)
    grid = (bp_ // blk,)

    # One-time XLA gather: permuted token order (commutes with projections).
    x_perm = jnp.take(x, prep["perm_idx"], axis=1)
    if bp_ > b_:
        x_perm = jnp.pad(x_perm, ((0, bp_ - b_), (0, 0), (0, 0)))

    # Advisory cost estimate for XLA scheduling around the custom call.
    flops_w = (2 * n * c * (c + c2)          # merged qkv projection
               + 2 * H * n * n4 * hd         # q @ k^T
               + 2 * H * n4 * hd * c         # wp folded into V
               + 2 * H * n * n4 * c)         # attn @ vproj
    itm_in = jnp.dtype(x.dtype).itemsize
    itm_out = jnp.dtype(out_dtype).itemsize
    param_bytes = sum(
        int(np.prod(prep[k].shape)) * jnp.dtype(prep[k].dtype).itemsize
        for k in ("wqkv", "bqkv", "wp", "bp", "bias"))
    cost = pl.CostEstimate(
        flops=int(bp_ * flops_w),
        transcendentals=int(bp_ * H * n * n4),
        bytes_accessed=int(bp_ * n * c * (itm_in + itm_out) + param_bytes))

    kernel = _make_psa_kernel(H, hd, n4, c4, cd)
    out_perm = pl.pallas_call(
        kernel,
        out_shape=jax.ShapeDtypeStruct((bp_, n, c), out_dtype),
        grid=grid,
        in_specs=[
            pl.BlockSpec((blk, n, c), lambda b: (b, 0, 0)),     # x (permuted)
            pl.BlockSpec((c, c + c2), lambda b: (0, 0)),        # wqkv (scaled)
            pl.BlockSpec((1, c + c2), lambda b: (0, 0)),        # bqkv (scaled)
            pl.BlockSpec((c, c), lambda b: (0, 0)),             # wp
            pl.BlockSpec((1, c), lambda b: (0, 0)),             # bp
            pl.BlockSpec((H, n, n4), lambda b: (0, 0, 0)),      # rel-pos bias
        ],
        out_specs=pl.BlockSpec((blk, n, c), lambda b: (b, 0, 0)),
        compiler_params=pltpu.CompilerParams(
            dimension_semantics=("parallel",),
            vmem_limit_bytes=_vmem_limit_bytes()),
        cost_estimate=cost,
    )(x_perm, prep["wqkv"], prep["bqkv"], prep["wp"], prep["bp"], prep["bias"])

    # Un-permute window tokens back to the module's order (cheap XLA gather).
    return jnp.take(out_perm[:b_], prep["inv_perm"], axis=1)


# ---------------------------------------------------------------------------
# Pure-JAX reference (direct transcription of the torch forward, mask=None)
# ---------------------------------------------------------------------------
def psa_reference(x, params, window_size, num_heads):
    b_, n, c = x.shape
    pws0, pws1 = window_size[0] // 2, window_size[1] // 2
    H = num_heads
    hd = c // H
    scale = hd ** -0.5

    kv = x @ params["wkv"] + params["bkv"]                    # (b_, n, c//2)
    kv = kv.reshape(b_, pws0, 2, pws1, 2, 2, c // 4)
    kv = kv.transpose(0, 1, 3, 5, 2, 4, 6)
    kv = kv.reshape(b_, n // 4, 2, H, hd).transpose(2, 0, 3, 1, 4)
    k, v = kv[0], kv[1]                                       # (b_, H, n//4, hd)

    q = (x @ params["wq"] + params["bq"]).reshape(b_, n, 1, H, hd)
    q = q.transpose(2, 0, 3, 1, 4)[0] * scale                 # (b_, H, n, hd)

    attn = jnp.einsum("bhmd,bhtd->bhmt", q, k)
    aligned = _aligned_relative_position_index(pws0, pws1)
    rpb = params["table"][aligned.reshape(-1)].reshape(n, n // 4, H)
    rpb = rpb.transpose(2, 0, 1)
    attn = attn + rpb[None]
    attn = jax.nn.softmax(attn, axis=-1)
    out = jnp.einsum("bhmt,bhtd->bhmd", attn, v)
    out = out.transpose(0, 2, 1, 3).reshape(b_, n, c)
    return out @ params["wp"] + params["bp"]


# ---------------------------------------------------------------------------
if __name__ == "__main__":
    dim = 32
    window_size = (8, 8)
    num_heads = 4
    b_ = 8                                    # num_windows * batch
    n = window_size[0] * window_size[1]       # 64
    pws0, pws1 = window_size[0] // 2, window_size[1] // 2

    key = jax.random.PRNGKey(0)
    ks = jax.random.split(key, 9)
    x = jax.random.normal(ks[0], (b_, n, dim), dtype=jnp.float32)
    params = {
        "wq": 0.1 * jax.random.normal(ks[1], (dim, dim), dtype=jnp.float32),
        "bq": 0.1 * jax.random.normal(ks[2], (dim,), dtype=jnp.float32),
        "wkv": 0.1 * jax.random.normal(ks[3], (dim, dim // 2), dtype=jnp.float32),
        "bkv": 0.1 * jax.random.normal(ks[4], (dim // 2,), dtype=jnp.float32),
        "wp": 0.1 * jax.random.normal(ks[5], (dim, dim), dtype=jnp.float32),
        "bp": 0.1 * jax.random.normal(ks[6], (dim,), dtype=jnp.float32),
        "table": 0.02 * jax.random.normal(
            ks[7], ((2 * pws0 - 1) * (2 * pws1 - 1), num_heads),
            dtype=jnp.float32),
    }

    out_ref = jax.block_until_ready(
        psa_reference(x, params, window_size, num_heads))

    # f32 path (strict check).  b_=8 -> blk=4, grid=(2,) (both v7x TCs busy).
    prep32 = prepare_psa(params, window_size, num_heads, jnp.float32)
    out32 = jax.block_until_ready(psa_forward(x, prep32))
    np.testing.assert_allclose(np.asarray(out32), np.asarray(out_ref),
                               rtol=3e-3, atol=3e-3)

    # Awkward b_ exercising the zero-pad + even-grid path (blk=8, padded to 16).
    x2 = jax.random.normal(ks[8], (12, n, dim), dtype=jnp.float32)
    out_ref2 = jax.block_until_ready(
        psa_reference(x2, params, window_size, num_heads))
    out2 = jax.block_until_ready(psa_forward(x2, prep32, blk_target=8))
    np.testing.assert_allclose(np.asarray(out2), np.asarray(out_ref2),
                               rtol=3e-3, atol=3e-3)

    # bf16 MXU path (v6e/v7x recommendation); softmax stats / accum stay f32.
    prep16 = prepare_psa(params, window_size, num_heads, jnp.bfloat16)
    out16 = jax.block_until_ready(psa_forward(x, prep16))
    np.testing.assert_allclose(np.asarray(out16), np.asarray(out_ref),
                               rtol=6e-2, atol=6e-2)

    print("KERNEL_OK")
</pallas_src>

<mosaic_0001>
module attributes {stable_mosaic.version = 11 : i64} {
  func.func @kernel(%arg0: i32, %arg1: memref<4x64x32xf32, #tpu.memory_space<vmem>>, %arg2: memref<32x48xf32, #tpu.memory_space<vmem>>, %arg3: memref<1x48xf32, #tpu.memory_space<vmem>>, %arg4: memref<32x32xf32, #tpu.memory_space<vmem>>, %arg5: memref<1x32xf32, #tpu.memory_space<vmem>>, %arg6: memref<4x64x16xf32, #tpu.memory_space<vmem>>, %arg7: memref<4x64x32xf32, #tpu.memory_space<vmem>>) attributes {dimension_semantics = [#tpu.dimension_semantics<parallel>], iteration_bounds = array<i64: 2>, scalar_prefetch = 0 : i64, scratch_operands = 0 : i64, tpu.core_type = #tpu.core_type<tc>, window_params = [{transform_indices = @transform_0, window_bounds = array<i64: 4, 64, 32>}, {pipeline_mode = #tpu.pipeline_mode<synchronous>, transform_indices = @transform_1, window_bounds = array<i64: 32, 48>}, {pipeline_mode = #tpu.pipeline_mode<synchronous>, transform_indices = @transform_2, window_bounds = array<i64: 1, 48>}, {pipeline_mode = #tpu.pipeline_mode<synchronous>, transform_indices = @transform_3, window_bounds = array<i64: 32, 32>}, {pipeline_mode = #tpu.pipeline_mode<synchronous>, transform_indices = @transform_4, window_bounds = array<i64: 1, 32>}, {pipeline_mode = #tpu.pipeline_mode<synchronous>, transform_indices = @transform_5, window_bounds = array<i64: 4, 64, 16>}, {transform_indices = @transform_6, window_bounds = array<i64: 4, 64, 32>}]} {
    %c0 = arith.constant 0 : index
    %c0_0 = arith.constant 0 : index
    %c0_1 = arith.constant 0 : index
    %0 = vector.load %arg1[%c0, %c0_0, %c0_1] : memref<4x64x32xf32, #tpu.memory_space<vmem>>, vector<4x64x32xf32>
    %1 = vector.shape_cast %0 : vector<4x64x32xf32> to vector<256x32xf32>
    %c0_2 = arith.constant 0 : index
    %c0_3 = arith.constant 0 : index
    %2 = vector.load %arg2[%c0_2, %c0_3] : memref<32x48xf32, #tpu.memory_space<vmem>>, vector<32x48xf32>
    %cst = arith.constant dense<0.000000e+00> : vector<256x48xf32>
    %3 = tpu.matmul %1, %2, %cst {dimension_numbers = #tpu.dot_dimension_numbers<[1], [0], [0], [1], [0, 0, 1, 1], [], []>} : vector<256x32xf32>, vector<32x48xf32>, vector<256x48xf32> -> vector<256x48xf32>
    %c0_4 = arith.constant 0 : index
    %c0_5 = arith.constant 0 : index
    %4 = vector.load %arg3[%c0_4, %c0_5] : memref<1x48xf32, #tpu.memory_space<vmem>>, vector<1x48xf32>
    %5 = vector.broadcast %4 : vector<1x48xf32> to vector<256x48xf32>
    %6 = arith.addf %3, %5 : vector<256x48xf32>
    %7 = vector.shape_cast %6 : vector<256x48xf32> to vector<4x64x48xf32>
    %c0_6 = arith.constant 0 : index
    %c0_7 = arith.constant 0 : index
    %c0_8 = arith.constant 0 : index
    %8 = vector.load %arg6[%c0_6, %c0_7, %c0_8] : memref<4x64x16xf32, #tpu.memory_space<vmem>>, vector<4x64x16xf32>
    %c0_9 = arith.constant 0 : index
    %c0_10 = arith.constant 0 : index
    %9 = vector.load %arg4[%c0_9, %c0_10] : memref<32x32xf32, #tpu.memory_space<vmem>>, vector<32x32xf32>
    %cst_11 = arith.constant 0.000000e+00 : f32
    %10 = vector.broadcast %cst_11 : f32 to vector<4x64x32xf32>
    %11 = vector.extract_strided_slice %7 {offsets = [0, 0, 0], sizes = [4, 64, 8], strides = [1, 1, 1]} : vector<4x64x48xf32> to vector<4x64x8xf32>
    %12 = vector.extract_strided_slice %7 {offsets = [0, 0, 32], sizes = [4, 16, 8], strides = [1, 1, 1]} : vector<4x64x48xf32> to vector<4x16x8xf32>
    %13 = vector.extract_strided_slice %7 {offsets = [0, 0, 40], sizes = [4, 16, 8], strides = [1, 1, 1]} : vector<4x64x48xf32> to vector<4x16x8xf32>
    %cst_12 = arith.constant dense<0.000000e+00> : vector<4x64x16xf32>
    %14 = tpu.matmul %11, %12, %cst_12 {dimension_numbers = #tpu.dot_dimension_numbers<[2], [2], [1], [1], [0, 0, 0, 1, 1, 1], [0], [0]>} : vector<4x64x8xf32>, vector<4x16x8xf32>, vector<4x64x16xf32> -> vector<4x64x16xf32>
    %15 = vector.extract_strided_slice %8 {offsets = [0, 0, 0], sizes = [1, 64, 16], strides = [1, 1, 1]} : vector<4x64x16xf32> to vector<1x64x16xf32>
    %16 = vector.shape_cast %15 : vector<1x64x16xf32> to vector<64x16xf32>
    %17 = vector.shape_cast %16 : vector<64x16xf32> to vector<1x64x16xf32>
    %18 = vector.broadcast %17 : vector<1x64x16xf32> to vector<4x64x16xf32>
    %19 = arith.addf %14, %18 : vector<4x64x16xf32>
    %cst_13 = arith.constant dense<0xFF800000> : vector<4x64xf32>
    %20 = vector.multi_reduction <maximumf>, %19, %cst_13 [2] : vector<4x64x16xf32> to vector<4x64xf32>
    %21 = vector.shape_cast %20 : vector<4x64xf32> to vector<4x64x1xf32>
    %22 = vector.broadcast %21 : vector<4x64x1xf32> to vector<4x64x16xf32>
    %23 = arith.subf %19, %22 : vector<4x64x16xf32>
    %24 = math.exp %23 : vector<4x64x16xf32>
    %cst_14 = arith.constant dense<0.000000e+00> : vector<4x64xf32>
    %25 = vector.multi_reduction <add>, %24, %cst_14 [2] : vector<4x64x16xf32> to vector<4x64xf32>
    %26 = vector.shape_cast %25 : vector<4x64xf32> to vector<4x64x1xf32>
    %27 = tpu.reciprocal %26 {approx = true} : vector<4x64x1xf32> -> vector<4x64x1xf32>
    %28 = vector.broadcast %27 : vector<4x64x1xf32> to vector<4x64x16xf32>
    %29 = arith.mulf %24, %28 : vector<4x64x16xf32>
    %30 = vector.extract_strided_slice %9 {offsets = [0, 0], sizes = [8, 32], strides = [1, 1]} : vector<32x32xf32> to vector<8x32xf32>
    %cst_15 = arith.constant dense<0.000000e+00> : vector<4x16x32xf32>
    %31 = tpu.matmul %13, %30, %cst_15 {dimension_numbers = #tpu.dot_dimension_numbers<[2], [0], [0, 1], [1], [0, 0, 0, 1, 1, 1], [], []>} : vector<4x16x8xf32>, vector<8x32xf32>, vector<4x16x32xf32> -> vector<4x16x32xf32>
    %cst_16 = arith.constant dense<0.000000e+00> : vector<4x64x32xf32>
    %32 = tpu.matmul %29, %31, %cst_16 {dimension_numbers = #tpu.dot_dimension_numbers<[2], [1], [1], [2], [0, 0, 0, 1, 1, 2], [0], [0]>} : vector<4x64x16xf32>, vector<4x16x32xf32>, vector<4x64x32xf32> -> vector<4x64x32xf32>
    %33 = arith.addf %10, %32 : vector<4x64x32xf32>
    %34 = vector.extract_strided_slice %7 {offsets = [0, 0, 8], sizes = [4, 64, 8], strides = [1, 1, 1]} : vector<4x64x48xf32> to vector<4x64x8xf32>
    %35 = vector.extract_strided_slice %7 {offsets = [0, 16, 32], sizes = [4, 16, 8], strides = [1, 1, 1]} : vector<4x64x48xf32> to vector<4x16x8xf32>
    %36 = vector.extract_strided_slice %7 {offsets = [0, 16, 40], sizes = [4, 16, 8], strides = [1, 1, 1]} : vector<4x64x48xf32> to vector<4x16x8xf32>
    %cst_17 = arith.constant dense<0.000000e+00> : vector<4x64x16xf32>
    %37 = tpu.matmul %34, %35, %cst_17 {dimension_numbers = #tpu.dot_dimension_numbers<[2], [2], [1], [1], [0, 0, 0, 1, 1, 1], [0], [0]>} : vector<4x64x8xf32>, vector<4x16x8xf32>, vector<4x64x16xf32> -> vector<4x64x16xf32>
    %38 = vector.extract_strided_slice %8 {offsets = [1, 0, 0], sizes = [1, 64, 16], strides = [1, 1, 1]} : vector<4x64x16xf32> to vector<1x64x16xf32>
    %39 = vector.shape_cast %38 : vector<1x64x16xf32> to vector<64x16xf32>
    %40 = vector.shape_cast %39 : vector<64x16xf32> to vector<1x64x16xf32>
    %41 = vector.broadcast %40 : vector<1x64x16xf32> to vector<4x64x16xf32>
    %42 = arith.addf %37, %41 : vector<4x64x16xf32>
    %cst_18 = arith.constant dense<0xFF800000> : vector<4x64xf32>
    %43 = vector.multi_reduction <maximumf>, %42, %cst_18 [2] : vector<4x64x16xf32> to vector<4x64xf32>
    %44 = vector.shape_cast %43 : vector<4x64xf32> to vector<4x64x1xf32>
    %45 = vector.broadcast %44 : vector<4x64x1xf32> to vector<4x64x16xf32>
    %46 = arith.subf %42, %45 : vector<4x64x16xf32>
    %47 = math.exp %46 : vector<4x64x16xf32>
    %cst_19 = arith.constant dense<0.000000e+00> : vector<4x64xf32>
    %48 = vector.multi_reduction <add>, %47, %cst_19 [2] : vector<4x64x16xf32> to vector<4x64xf32>
    %49 = vector.shape_cast %48 : vector<4x64xf32> to vector<4x64x1xf32>
    %50 = tpu.reciprocal %49 {approx = true} : vector<4x64x1xf32> -> vector<4x64x1xf32>
    %51 = vector.broadcast %50 : vector<4x64x1xf32> to vector<4x64x16xf32>
    %52 = arith.mulf %47, %51 : vector<4x64x16xf32>
    %53 = vector.extract_strided_slice %9 {offsets = [8, 0], sizes = [8, 32], strides = [1, 1]} : vector<32x32xf32> to vector<8x32xf32>
    %cst_20 = arith.constant dense<0.000000e+00> : vector<4x16x32xf32>
    %54 = tpu.matmul %36, %53, %cst_20 {dimension_numbers = #tpu.dot_dimension_numbers<[2], [0], [0, 1], [1], [0, 0, 0, 1, 1, 1], [], []>} : vector<4x16x8xf32>, vector<8x32xf32>, vector<4x16x32xf32> -> vector<4x16x32xf32>
    %cst_21 = arith.constant dense<0.000000e+00> : vector<4x64x32xf32>
    %55 = tpu.matmul %52, %54, %cst_21 {dimension_numbers = #tpu.dot_dimension_numbers<[2], [1], [1], [2], [0, 0, 0, 1, 1, 2], [0], [0]>} : vector<4x64x16xf32>, vector<4x16x32xf32>, vector<4x64x32xf32> -> vector<4x64x32xf32>
    %56 = arith.addf %33, %55 : vector<4x64x32xf32>
    %57 = vector.extract_strided_slice %7 {offsets = [0, 0, 16], sizes = [4, 64, 8], strides = [1, 1, 1]} : vector<4x64x48xf32> to vector<4x64x8xf32>
    %58 = vector.extract_strided_slice %7 {offsets = [0, 32, 32], sizes = [4, 16, 8], strides = [1, 1, 1]} : vector<4x64x48xf32> to vector<4x16x8xf32>
    %59 = vector.extract_strided_slice %7 {offsets = [0, 32, 40], sizes = [4, 16, 8], strides = [1, 1, 1]} : vector<4x64x48xf32> to vector<4x16x8xf32>
    %cst_22 = arith.constant dense<0.000000e+00> : vector<4x64x16xf32>
    %60 = tpu.matmul %57, %58, %cst_22 {dimension_numbers = #tpu.dot_dimension_numbers<[2], [2], [1], [1], [0, 0, 0, 1, 1, 1], [0], [0]>} : vector<4x64x8xf32>, vector<4x16x8xf32>, vector<4x64x16xf32> -> vector<4x64x16xf32>
    %61 = vector.extract_strided_slice %8 {offsets = [2, 0, 0], sizes = [1, 64, 16], strides = [1, 1, 1]} : vector<4x64x16xf32> to vector<1x64x16xf32>
    %62 = vector.shape_cast %61 : vector<1x64x16xf32> to vector<64x16xf32>
    %63 = vector.shape_cast %62 : vector<64x16xf32> to vector<1x64x16xf32>
    %64 = vector.broadcast %63 : vector<1x64x16xf32> to vector<4x64x16xf32>
    %65 = arith.addf %60, %64 : vector<4x64x16xf32>
    %cst_23 = arith.constant dense<0xFF800000> : vector<4x64xf32>
    %66 = vector.multi_reduction <maximumf>, %65, %cst_23 [2] : vector<4x64x16xf32> to vector<4x64xf32>
    %67 = vector.shape_cast %66 : vector<4x64xf32> to vector<4x64x1xf32>
    %68 = vector.broadcast %67 : vector<4x64x1xf32> to vector<4x64x16xf32>
    %69 = arith.subf %65, %68 : vector<4x64x16xf32>
    %70 = math.exp %69 : vector<4x64x16xf32>
    %cst_24 = arith.constant dense<0.000000e+00> : vector<4x64xf32>
    %71 = vector.multi_reduction <add>, %70, %cst_24 [2] : vector<4x64x16xf32> to vector<4x64xf32>
    %72 = vector.shape_cast %71 : vector<4x64xf32> to vector<4x64x1xf32>
    %73 = tpu.reciprocal %72 {approx = true} : vector<4x64x1xf32> -> vector<4x64x1xf32>
    %74 = vector.broadcast %73 : vector<4x64x1xf32> to vector<4x64x16xf32>
    %75 = arith.mulf %70, %74 : vector<4x64x16xf32>
    %76 = vector.extract_strided_slice %9 {offsets = [16, 0], sizes = [8, 32], strides = [1, 1]} : vector<32x32xf32> to vector<8x32xf32>
    %cst_25 = arith.constant dense<0.000000e+00> : vector<4x16x32xf32>
    %77 = tpu.matmul %59, %76, %cst_25 {dimension_numbers = #tpu.dot_dimension_numbers<[2], [0], [0, 1], [1], [0, 0, 0, 1, 1, 1], [], []>} : vector<4x16x8xf32>, vector<8x32xf32>, vector<4x16x32xf32> -> vector<4x16x32xf32>
    %cst_26 = arith.constant dense<0.000000e+00> : vector<4x64x32xf32>
    %78 = tpu.matmul %75, %77, %cst_26 {dimension_numbers = #tpu.dot_dimension_numbers<[2], [1], [1], [2], [0, 0, 0, 1, 1, 2], [0], [0]>} : vector<4x64x16xf32>, vector<4x16x32xf32>, vector<4x64x32xf32> -> vector<4x64x32xf32>
    %79 = arith.addf %56, %78 : vector<4x64x32xf32>
    %80 = vector.extract_strided_slice %7 {offsets = [0, 0, 24], sizes = [4, 64, 8], strides = [1, 1, 1]} : vector<4x64x48xf32> to vector<4x64x8xf32>
    %81 = vector.extract_strided_slice %7 {offsets = [0, 48, 32], sizes = [4, 16, 8], strides = [1, 1, 1]} : vector<4x64x48xf32> to vector<4x16x8xf32>
    %82 = vector.extract_strided_slice %7 {offsets = [0, 48, 40], sizes = [4, 16, 8], strides = [1, 1, 1]} : vector<4x64x48xf32> to vector<4x16x8xf32>
    %cst_27 = arith.constant dense<0.000000e+00> : vector<4x64x16xf32>
    %83 = tpu.matmul %80, %81, %cst_27 {dimension_numbers = #tpu.dot_dimension_numbers<[2], [2], [1], [1], [0, 0, 0, 1, 1, 1], [0], [0]>} : vector<4x64x8xf32>, vector<4x16x8xf32>, vector<4x64x16xf32> -> vector<4x64x16xf32>
    %84 = vector.extract_strided_slice %8 {offsets = [3, 0, 0], sizes = [1, 64, 16], strides = [1, 1, 1]} : vector<4x64x16xf32> to vector<1x64x16xf32>
    %85 = vector.shape_cast %84 : vector<1x64x16xf32> to vector<64x16xf32>
    %86 = vector.shape_cast %85 : vector<64x16xf32> to vector<1x64x16xf32>
    %87 = vector.broadcast %86 : vector<1x64x16xf32> to vector<4x64x16xf32>
    %88 = arith.addf %83, %87 : vector<4x64x16xf32>
    %cst_28 = arith.constant dense<0xFF800000> : vector<4x64xf32>
    %89 = vector.multi_reduction <maximumf>, %88, %cst_28 [2] : vector<4x64x16xf32> to vector<4x64xf32>
    %90 = vector.shape_cast %89 : vector<4x64xf32> to vector<4x64x1xf32>
    %91 = vector.broadcast %90 : vector<4x64x1xf32> to vector<4x64x16xf32>
    %92 = arith.subf %88, %91 : vector<4x64x16xf32>
    %93 = math.exp %92 : vector<4x64x16xf32>
    %cst_29 = arith.constant dense<0.000000e+00> : vector<4x64xf32>
    %94 = vector.multi_reduction <add>, %93, %cst_29 [2] : vector<4x64x16xf32> to vector<4x64xf32>
    %95 = vector.shape_cast %94 : vector<4x64xf32> to vector<4x64x1xf32>
    %96 = tpu.reciprocal %95 {approx = true} : vector<4x64x1xf32> -> vector<4x64x1xf32>
    %97 = vector.broadcast %96 : vector<4x64x1xf32> to vector<4x64x16xf32>
    %98 = arith.mulf %93, %97 : vector<4x64x16xf32>
    %99 = vector.extract_strided_slice %9 {offsets = [24, 0], sizes = [8, 32], strides = [1, 1]} : vector<32x32xf32> to vector<8x32xf32>
    %cst_30 = arith.constant dense<0.000000e+00> : vector<4x16x32xf32>
    %100 = tpu.matmul %82, %99, %cst_30 {dimension_numbers = #tpu.dot_dimension_numbers<[2], [0], [0, 1], [1], [0, 0, 0, 1, 1, 1], [], []>} : vector<4x16x8xf32>, vector<8x32xf32>, vector<4x16x32xf32> -> vector<4x16x32xf32>
    %cst_31 = arith.constant dense<0.000000e+00> : vector<4x64x32xf32>
    %101 = tpu.matmul %98, %100, %cst_31 {dimension_numbers = #tpu.dot_dimension_numbers<[2], [1], [1], [2], [0, 0, 0, 1, 1, 2], [0], [0]>} : vector<4x64x16xf32>, vector<4x16x32xf32>, vector<4x64x32xf32> -> vector<4x64x32xf32>
    %102 = arith.addf %79, %101 : vector<4x64x32xf32>
    %c0_32 = arith.constant 0 : index
    %c0_33 = arith.constant 0 : index
    %103 = vector.load %arg5[%c0_32, %c0_33] : memref<1x32xf32, #tpu.memory_space<vmem>>, vector<1x32xf32>
    %104 = vector.shape_cast %103 : vector<1x32xf32> to vector<1x1x32xf32>
    %105 = vector.broadcast %104 : vector<1x1x32xf32> to vector<4x64x32xf32>
    %106 = arith.addf %102, %105 : vector<4x64x32xf32>
    %c0_34 = arith.constant 0 : index
    %c0_35 = arith.constant 0 : index
    %c0_36 = arith.constant 0 : index
    %107 = vector.load %arg7[%c0_34, %c0_35, %c0_36] : memref<4x64x32xf32, #tpu.memory_space<vmem>>, vector<4x64x32xf32>
    tpu.vector_store %arg7[%c0_34, %c0_35, %c0_36], %106 {strides = array<i32>} : memref<4x64x32xf32, #tpu.memory_space<vmem>>, vector<4x64x32xf32>,
    return
  }
  func.func @transform_0(%arg0: i32) -> (i32, i32, i32) {
    %c0_i32 = arith.constant 0 : i32
    %c0_i32_0 = arith.constant 0 : i32
    %c0_i32_1 = arith.constant 0 : i32
    return %arg0, %c0_i32, %c0_i32_0 : i32, i32, i32
  }
  func.func @transform_1(%arg0: i32) -> (i32, i32) {
    %c0_i32 = arith.constant 0 : i32
    %c0_i32_0 = arith.constant 0 : i32
    %c0_i32_1 = arith.constant 0 : i32
    return %c0_i32, %c0_i32_0 : i32, i32
  }
  func.func @transform_2(%arg0: i32) -> (i32, i32) {
    %c0_i32 = arith.constant 0 : i32
    %c0_i32_0 = arith.constant 0 : i32
    %c0_i32_1 = arith.constant 0 : i32
    return %c0_i32, %c0_i32_0 : i32, i32
  }
  func.func @transform_3(%arg0: i32) -> (i32, i32) {
    %c0_i32 = arith.constant 0 : i32
    %c0_i32_0 = arith.constant 0 : i32
    %c0_i32_1 = arith.constant 0 : i32
    return %c0_i32, %c0_i32_0 : i32, i32
  }
  func.func @transform_4(%arg0: i32) -> (i32, i32) {
    %c0_i32 = arith.constant 0 : i32
    %c0_i32_0 = arith.constant 0 : i32
    %c0_i32_1 = arith.constant 0 : i32
    return %c0_i32, %c0_i32_0 : i32, i32
  }
  func.func @transform_5(%arg0: i32) -> (i32, i32, i32) {
    %c0_i32 = arith.constant 0 : i32
    %c0_i32_0 = arith.constant 0 : i32
    %c0_i32_1 = arith.constant 0 : i32
    %c0_i32_2 = arith.constant 0 : i32
    return %c0_i32, %c0_i32_0, %c0_i32_1 : i32, i32, i32
  }
  func.func @transform_6(%arg0: i32) -> (i32, i32, i32) {
    %c0_i32 = arith.constant 0 : i32
    %c0_i32_0 = arith.constant 0 : i32
    %c0_i32_1 = arith.constant 0 : i32
    return %arg0, %c0_i32, %c0_i32_0 : i32, i32, i32
  }
}

</mosaic_0001>

<llo_original>
// kernel: tpu_custom_call.1
$region0: #{tpu_custom_call.1}
  #allocation0 [shape = 'u32[]', space=smem, size = 0x4, offset = 0x4, fixed_abs, tag = 'smem constant byte address 0x4 - core index']
  #allocation1 [shape = 'u32[144,128]{1,0:T(1,128)}', space=vmem, size = 0x12000, scoped, tag = 'internal scratch']
  %s0 = inlined_call_operand.vmem [shape: f32[8,64,32], index: 0, kind: input, shape index: {}]
  %s1 = inlined_call_operand.vmem [shape: f32[32,48], index: 1, kind: input, shape index: {}]
  %s2 = inlined_call_operand.vmem [shape: f32[1,48], index: 2, kind: input, shape index: {}]
  %s3 = inlined_call_operand.vmem [shape: f32[32,32], index: 3, kind: input, shape index: {}]
  %s4 = inlined_call_operand.vmem [shape: f32[1,32], index: 4, kind: input, shape index: {}]
  %s5 = inlined_call_operand.vmem [shape: f32[4,64,16], index: 5, kind: input, shape index: {}]
  %s6 = inlined_call_operand.vmem [shape: f32[8,64,32], index: 6, kind: output, shape index: {}]
  %s7 = sld [smem:[#allocation0]]
  $region57: #{tpu_custom_call.1} parent=0
    _
  %s9 = ssub.s32 1, %s7
  %s10 = scalar_select 0, %s9, %s7
  loop: start=0, step=1, limit=4
  $region2: #{tpu_custom_call.1} parent=0 // loop_pre_header
    _
  $region3: #{tpu_custom_call.1} parent=0 // loop_header
    %s12 = sphi 0, %s16
    %p13 = scmp.ge.s32.totalorder %s12, 4
    %s22 = sphi 0, %s24
    %s25 = sphi 0, %s22
    %s26 = sphi 0, %s25
    %s42 = sphi 0, %s26
    %s46 = sphi 0, %s46
    %s48 = sphi 0, %s46
    %s49 = sphi 0, %s48
    %s63 = sphi 0, %s49
    %s67 = sphi 0, %s67
    %s69 = sphi 0, %s67
    %s70 = sphi 0, %s69
    %s84 = sphi 0, %s70
    %s88 = sphi 0, %s88
    %s90 = sphi 0, %s88
    %s91 = sphi 0, %s90
    %s105 = sphi 0, %s91
    %s109 = sphi 0, %s109
    %s111 = sphi 0, %s109
    %s112 = sphi 0, %s111
    %s126 = sphi 0, %s112
    %s130 = sphi 0, %s130
    %s132 = sphi 0, %s130
    %s133 = sphi 0, %s132
    %s147 = sphi 0, %s133
    %s153 = sphi 0, %s155
    %s156 = sphi 0, %s153
    %s157 = sphi 0, %s156
    %s173 = sphi 0, %s157
  $region4: #{tpu_custom_call.1} parent=0 // loop_header_branch
    %15 = sbr.rel (%p13) target = $region8
  $region5: #{tpu_custom_call.1} parent=0 // loop_body
    %s17 = ssub.s32 %s12, 1
    %s18 = ssub.s32 %s12, 2
    %s19 = sadd.s32 %s12, 1
    %s20 = ssub.s32 %s12, %s19
    %p21 = scmp.eq.s32.totalorder %s20, 0
    %s23 = sadd.s32 %s22, 1
    %s24 = scalar_select %p21, %s22, %s23
    %p27 = pneg %p21
    %p28 = scmp.eq.s32.totalorder %s12, 1
    %p29 = por %p27, %p28
    %p30 = scmp.ne.s32.totalorder %s22, %s25
    %p31 = scmp.eq.s32.totalorder %s12, 0
    %p32 = por %p30, %p31
    %p33 = scmp.ne.s32.totalorder %s22, %s25
    %p34 = scmp.eq.s32.totalorder %s17, 1
    %p35 = por %p33, %p34
    %p36 = scmp.ne.s32.totalorder %s25, %s26
    %p37 = scmp.eq.s32.totalorder %s17, 0
    %p38 = por %p36, %p37
    %p39 = scmp.ne.s32.totalorder %s25, %s26
    %p40 = scmp.eq.s32.totalorder %s18, 1
    %p41 = por %p39, %p40
    %p43 = scmp.ne.s32.totalorder %s26, %s42
    %p44 = scmp.eq.s32.totalorder %s18, 0
    %p45 = por %p43, %p44
    %s47 = sadd.s32 %s46, 1
    %p50 = scmp.eq.s32.totalorder %s12, 1
    %p51 = scmp.ne.s32.totalorder %s46, %s48
    %p52 = scmp.eq.s32.totalorder %s12, 0
    %p53 = por %p51, %p52
    %p54 = scmp.ne.s32.totalorder %s46, %s48
    %p55 = scmp.eq.s32.totalorder %s17, 1
    %p56 = por %p54, %p55
    %p57 = scmp.ne.s32.totalorder %s48, %s49
    %p58 = scmp.eq.s32.totalorder %s17, 0
    %p59 = por %p57, %p58
    %p60 = scmp.ne.s32.totalorder %s48, %s49
    %p61 = scmp.eq.s32.totalorder %s18, 1
    %p62 = por %p60, %p61
    %p64 = scmp.ne.s32.totalorder %s49, %s63
    %p65 = scmp.eq.s32.totalorder %s18, 0
    %p66 = por %p64, %p65
    %s68 = sadd.s32 %s67, 1
    %p71 = scmp.eq.s32.totalorder %s12, 1
    %p72 = scmp.ne.s32.totalorder %s67, %s69
    %p73 = scmp.eq.s32.totalorder %s12, 0
    %p74 = por %p72, %p73
    %p75 = scmp.ne.s32.totalorder %s67, %s69
    %p76 = scmp.eq.s32.totalorder %s17, 1
    %p77 = por %p75, %p76
    %p78 = scmp.ne.s32.totalorder %s69, %s70
    %p79 = scmp.eq.s32.totalorder %s17, 0
    %p80 = por %p78, %p79
    %p81 = scmp.ne.s32.totalorder %s69, %s70
    %p82 = scmp.eq.s32.totalorder %s18, 1
    %p83 = por %p81, %p82
    %p85 = scmp.ne.s32.totalorder %s70, %s84
    %p86 = scmp.eq.s32.totalorder %s18, 0
    %p87 = por %p85, %p86
    %s89 = sadd.s32 %s88, 1
    %p92 = scmp.eq.s32.totalorder %s12, 1
    %p93 = scmp.ne.s32.totalorder %s88, %s90
    %p94 = scmp.eq.s32.totalorder %s12, 0
    %p95 = por %p93, %p94
    %p96 = scmp.ne.s32.totalorder %s88, %s90
    %p97 = scmp.eq.s32.totalorder %s17, 1
    %p98 = por %p96, %p97
    %p99 = scmp.ne.s32.totalorder %s90, %s91
    %p100 = scmp.eq.s32.totalorder %s17, 0
    %p101 = por %p99, %p100
    %p102 = scmp.ne.s32.totalorder %s90, %s91
    %p103 = scmp.eq.s32.totalorder %s18, 1
    %p104 = por %p102, %p103
    %p106 = scmp.ne.s32.totalorder %s91, %s105
    %p107 = scmp.eq.s32.totalorder %s18, 0
    %p108 = por %p106, %p107
    %s110 = sadd.s32 %s109, 1
    %p113 = scmp.eq.s32.totalorder %s12, 1
    %p114 = scmp.ne.s32.totalorder %s109, %s111
    %p115 = scmp.eq.s32.totalorder %s12, 0
    %p116 = por %p114, %p115
    %p117 = scmp.ne.s32.totalorder %s109, %s111
    %p118 = scmp.eq.s32.totalorder %s17, 1
    %p119 = por %p117, %p118
    %p120 = scmp.ne.s32.totalorder %s111, %s112
    %p121 = scmp.eq.s32.totalorder %s17, 0
    %p122 = por %p120, %p121
    %p123 = scmp.ne.s32.totalorder %s111, %s112
    %p124 = scmp.eq.s32.totalorder %s18, 1
    %p125 = por %p123, %p124
    %p127 = scmp.ne.s32.totalorder %s112, %s126
    %p128 = scmp.eq.s32.totalorder %s18, 0
    %p129 = por %p127, %p128
    %s131 = sadd.s32 %s130, 1
    %p134 = scmp.eq.s32.totalorder %s12, 1
    %p135 = scmp.ne.s32.totalorder %s130, %s132
    %p136 = scmp.eq.s32.totalorder %s12, 0
    %p137 = por %p135, %p136
    %p138 = scmp.ne.s32.totalorder %s130, %s132
    %p139 = scmp.eq.s32.totalorder %s17, 1
    %p140 = por %p138, %p139
    %p141 = scmp.ne.s32.totalorder %s132, %s133
    %p142 = scmp.eq.s32.totalorder %s17, 0
    %p143 = por %p141, %p142
    %p144 = scmp.ne.s32.totalorder %s132, %s133
    %p145 = scmp.eq.s32.totalorder %s18, 1
    %p146 = por %p144, %p145
    %p148 = scmp.ne.s32.totalorder %s133, %s147
    %p149 = scmp.eq.s32.totalorder %s18, 0
    %p150 = por %p148, %p149
    %s151 = ssub.s32 %s12, %s19
    %p152 = scmp.eq.s32.totalorder %s151, 0
    %s154 = sadd.s32 %s153, 1
    %s155 = scalar_select %p152, %s153, %s154
    %p158 = pneg %p152
    %p159 = scmp.eq.s32.totalorder %s12, 1
    %p160 = por %p158, %p159
    %p161 = scmp.ne.s32.totalorder %s153, %s156
    %p162 = scmp.eq.s32.totalorder %s12, 0
    %p163 = por %p161, %p162
    %p164 = scmp.ne.s32.totalorder %s153, %s156
    %p165 = scmp.eq.s32.totalorder %s17, 1
    %p166 = por %p164, %p165
    %p167 = scmp.ne.s32.totalorder %s156, %s157
    %p168 = scmp.eq.s32.totalorder %s17, 0
    %p169 = por %p167, %p168
    %p170 = scmp.ne.s32.totalorder %s156, %s157
    %p171 = scmp.eq.s32.totalorder %s18, 1
    %p172 = por %p170, %p171
    %p174 = scmp.ne.s32.totalorder %s157, %s173
    %p175 = scmp.eq.s32.totalorder %s18, 0
    %p176 = por %p174, %p175
    %p177 = scmp.le.s32.totalorder 1, %s12
    %p178 = scmp.lt.s32.totalorder %s12, 3
    %p179 = pnand %p177, %p178
    %p180 = pneg %p179
    // Predicated region
    $region9: #{tpu_custom_call.1} parent=5 // pred_check
      _
    $region10: #{tpu_custom_call.1} parent=5 // pred_check_branch
      %182 = sbr.rel (%p179) target = $region12
    $region11: #{tpu_custom_call.1} parent=5 // pred_region
      %s183 = ssub.s32 %s12, 1
      // Predicated region
      $region13: #{tpu_custom_call.1} parent=11 // pred_check
        %p184 = pneg %p59
      $region14: #{tpu_custom_call.1} parent=11 // pred_check_branch
        %186 = sbr.rel (%p184) target = $region16
      $region15: #{tpu_custom_call.1} parent=11 // pred_region
        _
      $region16: #{tpu_custom_call.1} parent=11 // pred_fallthru
        _
      // Predicated region
      $region17: #{tpu_custom_call.1} parent=11 // pred_check
        %p187 = pneg %p80
      $region18: #{tpu_custom_call.1} parent=11 // pred_check_branch
        %189 = sbr.rel (%p187) target = $region20
      $region19: #{tpu_custom_call.1} parent=11 // pred_region
        _
      $region20: #{tpu_custom_call.1} parent=11 // pred_fallthru
        _
      // Predicated region
      $region21: #{tpu_custom_call.1} parent=11 // pred_check
        %p190 = pneg %p101
      $region22: #{tpu_custom_call.1} parent=11 // pred_check_branch
        %192 = sbr.rel (%p190) target = $region24
      $region23: #{tpu_custom_call.1} parent=11 // pred_region
        _
      $region24: #{tpu_custom_call.1} parent=11 // pred_fallthru
        _
      // Predicated region
      $region25: #{tpu_custom_call.1} parent=11 // pred_check
        %p193 = pneg %p122
      $region26: #{tpu_custom_call.1} parent=11 // pred_check_branch
        %195 = sbr.rel (%p193) target = $region28
      $region27: #{tpu_custom_call.1} parent=11 // pred_region
        _
      $region28: #{tpu_custom_call.1} parent=11 // pred_fallthru
        _
      // Predicated region
      $region29: #{tpu_custom_call.1} parent=11 // pred_check
        %p196 = pneg %p143
      $region30: #{tpu_custom_call.1} parent=11 // pred_check_branch
        %198 = sbr.rel (%p196) target = $region32
      $region31: #{tpu_custom_call.1} parent=11 // pred_region
        _
      $region32: #{tpu_custom_call.1} parent=11 // pred_fallthru
        _
    $region12: #{tpu_custom_call.1} parent=5 // pred_fallthru
      _
    %p199 = scmp.lt.s32.totalorder %s12, 2
    // Predicated region
    $region33: #{tpu_custom_call.1} parent=5 // pred_check
      %p200 = pneg %p199
    $region34: #{tpu_custom_call.1} parent=5 // pred_check_branch
      %202 = sbr.rel (%p200) target = $region36
    $region35: #{tpu_custom_call.1} parent=5 // pred_region
      // Predicated region
      $region37: #{tpu_custom_call.1} parent=35 // pred_check
        %p203 = pneg %p32
      $region38: #{tpu_custom_call.1} parent=35 // pred_check_branch
        %205 = sbr.rel (%p203) target = $region40
      $region39: #{tpu_custom_call.1} parent=35 // pred_region
        %s206 = smul.u32 4, %s12
        %p207 = scmp.lt.s32.totalorder %s206, 7
        %s208 = scalar_select %p207, %s206, 7
        %s209 = smul.addr %s208, 8
        %s210 = smul.addr %s209, 8
        %s211 = scalar_lea.vmem %s0, %s210
        %s212 = smul.u32 4, %s12
      $region40: #{tpu_custom_call.1} parent=35 // pred_fallthru
        _
    $region36: #{tpu_custom_call.1} parent=5 // pred_fallthru
      _
    %p213 = scmp.le.s32.totalorder 1, %s12
    %p214 = scmp.lt.s32.totalorder %s12, 3
    %p215 = pnand %p213, %p214
    %p216 = pneg %p215
    // Predicated region
    $region41: #{tpu_custom_call.1} parent=5 // pred_check
      _
    $region42: #{tpu_custom_call.1} parent=5 // pred_check_branch
      %218 = sbr.rel (%p215) target = $region44
    $region43: #{tpu_custom_call.1} parent=5 // pred_region
      %s219 = ssub.s32 %s12, 1
      %s220 = smul.u32 4, %s17
      %p221 = scmp.lt.s32.totalorder %s220, 7
      %s222 = scalar_select %p221, %s220, 7
      %s223 = smul.addr %s222, 8
      %s224 = smul.addr %s223, 8
      %s225 = scalar_lea.vmem %s0, %s224
      %p226 = pneg %p38
      %p227 = pneg %p35
      %p228 = pneg %p59
      %p229 = pneg %p56
      %p230 = pneg %p80
      %p231 = pneg %p77
      %p232 = pneg %p101
      %p233 = pneg %p98
      %p234 = pneg %p122
      %p235 = pneg %p119
      %p236 = pneg %p143
      %p237 = pneg %p140
      %p238 = pneg %p169
      %p239 = pneg %p166
      %s240 = smul.u32 4, %s17
      %p241 = scmp.lt.s32.totalorder %s240, 7
      %s242 = scalar_select %p241, %s240, 7
      %s243 = smul.addr %s242, 8
      %s244 = smul.addr %s243, 8
      %s245 = scalar_lea.vmem %s6, %s244
      %s246 = smul.u32 4, %s17
      %p247 = scmp.lt.s32.totalorder %s246, 7
      %s248 = scalar_select %p247, %s246, 7
      %s249 = smul.addr %s248, 8
      %s250 = smul.addr %s249, 8
      %s251 = scalar_lea.vmem %s0, %s250
      %s252 = smul.u32 4, %s17
      %s253 = smul.u32 4, %s17
      %p254 = scmp.lt.s32.totalorder %s253, 7
      %s255 = scalar_select %p254, %s253, 7
      %s256 = smul.addr %s255, 8
      %s257 = smul.addr %s256, 8
      %s258 = scalar_lea.vmem %s6, %s257
      %s259 = smul.u32 4, %s17
      %v260 = vld [vmem:[%s251] sm:$0xff]
      %v261 = vld [vmem:[%s251 + $0x8] sm:$0xff]
      %v262 = vld [vmem:[%s251 + $0x10] sm:$0xff]
      %v263 = vld [vmem:[%s251 + $0x18] sm:$0xff]
      %v264 = vld [vmem:[%s251 + $0x20] sm:$0xff]
      %v265 = vld [vmem:[%s251 + $0x28] sm:$0xff]
      %v266 = vld [vmem:[%s251 + $0x30] sm:$0xff]
      %v267 = vld [vmem:[%s251 + $0x38] sm:$0xff]
      %v268 = vld [vmem:[%s251 + $0x40] sm:$0xff]
      %v269 = vld [vmem:[%s251 + $0x48] sm:$0xff]
      %v270 = vld [vmem:[%s251 + $0x50] sm:$0xff]
      %v271 = vld [vmem:[%s251 + $0x58] sm:$0xff]
      %v272 = vld [vmem:[%s251 + $0x60] sm:$0xff]
      %v273 = vld [vmem:[%s251 + $0x68] sm:$0xff]
      %v274 = vld [vmem:[%s251 + $0x70] sm:$0xff]
      %v275 = vld [vmem:[%s251 + $0x78] sm:$0xff]
      %v276 = vld [vmem:[%s251 + $0x80] sm:$0xff]
      %v277 = vld [vmem:[%s251 + $0x88] sm:$0xff]
      %v278 = vld [vmem:[%s251 + $0x90] sm:$0xff]
      %v279 = vld [vmem:[%s251 + $0x98] sm:$0xff]
      %v280 = vld [vmem:[%s251 + $0xa0] sm:$0xff]
      %v281 = vld [vmem:[%s251 + $0xa8] sm:$0xff]
      %v282 = vld [vmem:[%s251 + $0xb0] sm:$0xff]
      %v283 = vld [vmem:[%s251 + $0xb8] sm:$0xff]
      %v284 = vld [vmem:[%s251 + $0xc0] sm:$0xff]
      %v285 = vld [vmem:[%s251 + $0xc8] sm:$0xff]
      %v286 = vld [vmem:[%s251 + $0xd0] sm:$0xff]
      %v287 = vld [vmem:[%s251 + $0xd8] sm:$0xff]
      %v288 = vld [vmem:[%s251 + $0xe0] sm:$0xff]
      %v289 = vld [vmem:[%s251 + $0xe8] sm:$0xff]
      %v290 = vld [vmem:[%s251 + $0xf0] sm:$0xff]
      %v291 = vld [vmem:[%s251 + $0xf8] sm:$0xff]
      %v292 = vld [vmem:[%s1] sm:$0xff]
      %v293 = vld [vmem:[%s1 + $0x8] sm:$0xff]
      %v294 = vld [vmem:[%s1 + $0x10] sm:$0xff]
      %v295 = vld [vmem:[%s1 + $0x18] sm:$0xff]
      %v296 = vld [vmem:[%s2] sm:$0x1]
      %v298 = vlaneseq
      %v299 = vshrl.u32 %v298, 7
      %v300 = vsub.s32 0, %v299
      %v301 = vrot.slane %v296, %v300
      %vm303 = vcmask 261120
      %v305 = vsel %vm303, %v260, 0
      %v308 = vsel %vm303, %v261, 0
      %v311 = vsel %vm303, %v262, 0
      %v314 = vsel %vm303, %v263, 0
      %v317 = vsel %vm303, %v264, 0
      %v320 = vsel %vm303, %v265, 0
      %v323 = vsel %vm303, %v266, 0
      %v326 = vsel %vm303, %v267, 0
      %v329 = vsel %vm303, %v268, 0
      %v332 = vsel %vm303, %v269, 0
      %v335 = vsel %vm303, %v270, 0
      %v338 = vsel %vm303, %v271, 0
      %v341 = vsel %vm303, %v272, 0
      %v344 = vsel %vm303, %v273, 0
      %v347 = vsel %vm303, %v274, 0
      %v350 = vsel %vm303, %v275, 0
      %v353 = vsel %vm303, %v276, 0
      %v356 = vsel %vm303, %v277, 0
      %v359 = vsel %vm303, %v278, 0
      %v362 = vsel %vm303, %v279, 0
      %v365 = vsel %vm303, %v280, 0
      %v368 = vsel %vm303, %v281, 0
      %v371 = vsel %vm303, %v282, 0
      %v374 = vsel %vm303, %v283, 0
      %v377 = vsel %vm303, %v284, 0
      %v380 = vsel %vm303, %v285, 0
      %v383 = vsel %vm303, %v286, 0
      %v386 = vsel %vm303, %v287, 0
      %v389 = vsel %vm303, %v288, 0
      %v392 = vsel %vm303, %v289, 0
      %v395 = vsel %vm303, %v290, 0
      %v398 = vsel %vm303, %v291, 0
      %400 = vmatprep.subr.mxu0 0.0
      %401 = vmatpush1.msra.mxu0 %v292
      %402 = vmatprep.subr.mxu0 0.0
      %403 = vmatpush1.msra.mxu0 %v293
      %404 = vmatprep.subr.mxu0 0.0
      %405 = vmatpush1.msra.mxu0 %v294
      %406 = vmatprep.subr.mxu0 0.0
      %407 = vmatpush1.msra.mxu0 %v295
      %408 = vmatprep.subr.mxu0 0.0
      %409 = vmatpush1.msra.mxu0 0.0
      %410 = vmatprep.subr.mxu0 0.0
      %411 = vmatpush1.msra.mxu0 0.0
      %412 = vmatprep.subr.mxu0 0.0
      %413 = vmatpush1.msra.mxu0 0.0
      %414 = vmatprep.subr.mxu0 0.0
      %415 = vmatpush1.msra.mxu0 0.0
      %416 = vmatprep.subr.mxu0 0.0
      %417 = vmatpush1.msra.mxu0 0.0
      %418 = vmatprep.subr.mxu0 0.0
      %419 = vmatpush1.msra.mxu0 0.0
      %420 = vmatprep.subr.mxu0 0.0
      %421 = vmatpush1.msra.mxu0 0.0
      %422 = vmatprep.subr.mxu0 0.0
      %423 = vmatpush1.msra.mxu0 0.0
      %424 = vmatprep.subr.mxu0 0.0
      %425 = vmatpush1.msra.mxu0 0.0
      %426 = vmatprep.subr.mxu0 0.0
      %427 = vmatpush1.msra.mxu0 0.0
      %428 = vmatprep.subr.mxu0 0.0
      %429 = vmatpush1.msra.mxu0 0.0
      %430 = vmatprep.subr.mxu0 0.0
      %431 = vmatpush1.msra.mxu0 0.0
      %432 = vmatprep.subr.mxu0 0.0
      %433 = vmatpush1.msra.mxu0 0.0
      %434 = vmatprep.subr.mxu0 0.0
      %435 = vmatpush1.msra.mxu0 0.0
      %436 = vmatprep.subr.mxu0 0.0
      %437 = vmatpush1.msra.mxu0 0.0
      %438 = vmatprep.subr.mxu0 0.0
      %439 = vmatpush1.msra.mxu0 0.0
      %440 = vmatprep.subr.mxu0 0.0
      %441 = vmatpush1.msra.mxu0 0.0
      %442 = vmatprep.subr.mxu0 0.0
      %443 = vmatpush1.msra.mxu0 0.0
      %444 = vmatprep.subr.mxu0 0.0
      %445 = vmatpush1.msra.mxu0 0.0
      %446 = vmatprep.subr.mxu0 0.0
      %447 = vmatpush1.msra.mxu0 0.0
      %448 = vmatprep.subr.mxu0 0.0
      %449 = vmatpush1.msra.mxu0 0.0
      %450 = vmatprep.subr.mxu0 0.0
      %451 = vmatpush1.msra.mxu0 0.0
      %452 = vmatprep.subr.mxu0 0.0
      %453 = vmatpush1.msra.mxu0 0.0
      %454 = vmatprep.subr.mxu0 0.0
      %455 = vmatpush1.msra.mxu0 0.0
      %456 = vmatprep.subr.mxu0 0.0
      %457 = vmatpush1.msra.mxu0 0.0
      %458 = vmatprep.subr.mxu0 0.0
      %459 = vmatpush1.msra.mxu0 0.0
      %460 = vmatprep.subr.mxu0 0.0
      %461 = vmatpush1.msra.mxu0 0.0
      %462 = vmatprep.subr.mxu0 0.0
      %463 = vmatpush1.msra.mxu0 0.0
      %464 = vmatprep.mubr.f32.mxu0 0.0
      %465 = vmatmul.mubr.f32.gmra.mrb[0].mxu0 %v305
      %v466 = vpop.f32.mrb[0].mxu0
      %v467 = vadd.f32 %v301, %v466
      %v468 = vpop.f32.mrb[0].mxu0
      %469 = vmatprep.mubr.f32.mxu0 0.0
      %470 = vmatmul.mubr.f32.gmra.mrb[0].mxu0 %v308
      %v471 = vpop.f32.mrb[0].mxu0
      %v472 = vadd.f32 %v301, %v471
      %v473 = vpop.f32.mrb[0].mxu0
      %474 = vmatprep.mubr.f32.mxu0 0.0
      %475 = vmatmul.mubr.f32.gmra.mrb[0].mxu0 %v311
      %v476 = vpop.f32.mrb[0].mxu0
      %v477 = vadd.f32 %v301, %v476
      %v478 = vpop.f32.mrb[0].mxu0
      %479 = vmatprep.mubr.f32.mxu0 0.0
      %480 = vmatmul.mubr.f32.gmra.mrb[0].mxu0 %v314
      %v481 = vpop.f32.mrb[0].mxu0
      %v482 = vadd.f32 %v301, %v481
      %v483 = vpop.f32.mrb[0].mxu0
      %484 = vmatprep.mubr.f32.mxu0 0.0
      %485 = vmatmul.mubr.f32.gmra.mrb[0].mxu0 %v317
      %v486 = vpop.f32.mrb[0].mxu0
      %v487 = vadd.f32 %v301, %v486
      %v488 = vpop.f32.mrb[0].mxu0
      %489 = vmatprep.mubr.f32.mxu0 0.0
      %490 = vmatmul.mubr.f32.gmra.mrb[0].mxu0 %v320
      %v491 = vpop.f32.mrb[0].mxu0
      %v492 = vadd.f32 %v301, %v491
      %v493 = vpop.f32.mrb[0].mxu0
      %494 = vmatprep.mubr.f32.mxu0 0.0
      %495 = vmatmul.mubr.f32.gmra.mrb[0].mxu0 %v323
      %v496 = vpop.f32.mrb[0].mxu0
      %v497 = vadd.f32 %v301, %v496
      %v498 = vpop.f32.mrb[0].mxu0
      %499 = vmatprep.mubr.f32.mxu0 0.0
      %500 = vmatmul.mubr.f32.gmra.mrb[0].mxu0 %v326
      %v501 = vpop.f32.mrb[0].mxu0
      %v502 = vadd.f32 %v301, %v501
      %v503 = vpop.f32.mrb[0].mxu0
      %504 = vmatprep.mubr.f32.mxu0 0.0
      %505 = vmatmul.mubr.f32.gmra.mrb[0].mxu0 %v329
      %v506 = vpop.f32.mrb[0].mxu0
      %v507 = vadd.f32 %v301, %v506
      %v508 = vpop.f32.mrb[0].mxu0
      %509 = vmatprep.mubr.f32.mxu0 0.0
      %510 = vmatmul.mubr.f32.gmra.mrb[0].mxu0 %v332
      %v511 = vpop.f32.mrb[0].mxu0
      %v512 = vadd.f32 %v301, %v511
      %v513 = vpop.f32.mrb[0].mxu0
      %514 = vmatprep.mubr.f32.mxu0 0.0
      %515 = vmatmul.mubr.f32.gmra.mrb[0].mxu0 %v335
      %v516 = vpop.f32.mrb[0].mxu0
      %v517 = vadd.f32 %v301, %v516
      %v518 = vpop.f32.mrb[0].mxu0
      %519 = vmatprep.mubr.f32.mxu0 0.0
      %520 = vmatmul.mubr.f32.gmra.mrb[0].mxu0 %v338
      %v521 = vpop.f32.mrb[0].mxu0
      %v522 = vadd.f32 %v301, %v521
      %v523 = vpop.f32.mrb[0].mxu0
      %524 = vmatprep.mubr.f32.mxu0 0.0
      %525 = vmatmul.mubr.f32.gmra.mrb[0].mxu0 %v341
      %v526 = vpop.f32.mrb[0].mxu0
      %v527 = vadd.f32 %v301, %v526
      %v528 = vpop.f32.mrb[0].mxu0
      %529 = vmatprep.mubr.f32.mxu0 0.0
      %530 = vmatmul.mubr.f32.gmra.mrb[0].mxu0 %v344
      %v531 = vpop.f32.mrb[0].mxu0
      %v532 = vadd.f32 %v301, %v531
      %v533 = vpop.f32.mrb[0].mxu0
      %534 = vmatprep.mubr.f32.mxu0 0.0
      %535 = vmatmul.mubr.f32.gmra.mrb[0].mxu0 %v347
      %v536 = vpop.f32.mrb[0].mxu0
      %v537 = vadd.f32 %v301, %v536
      %v538 = vpop.f32.mrb[0].mxu0
      %539 = vmatprep.mubr.f32.mxu0 0.0
      %540 = vmatmul.mubr.f32.gmra.mrb[0].mxu0 %v350
      %v541 = vpop.f32.mrb[0].mxu0
      %v542 = vadd.f32 %v301, %v541
      %v543 = vpop.f32.mrb[0].mxu0
      %544 = vmatprep.mubr.f32.mxu0 0.0
      %545 = vmatmul.mubr.f32.gmra.mrb[0].mxu0 %v353
      %v546 = vpop.f32.mrb[0].mxu0
      %v547 = vadd.f32 %v301, %v546
      %v548 = vpop.f32.mrb[0].mxu0
      %549 = vmatprep.mubr.f32.mxu0 0.0
      %550 = vmatmul.mubr.f32.gmra.mrb[0].mxu0 %v356
      %v551 = vpop.f32.mrb[0].mxu0
      %v552 = vadd.f32 %v301, %v551
      %v553 = vpop.f32.mrb[0].mxu0
      %554 = vmatprep.mubr.f32.mxu0 0.0
      %555 = vmatmul.mubr.f32.gmra.mrb[0].mxu0 %v359
      %v556 = vpop.f32.mrb[0].mxu0
      %v557 = vadd.f32 %v301, %v556
      %v558 = vpop.f32.mrb[0].mxu0
      %559 = vmatprep.mubr.f32.mxu0 0.0
      %560 = vmatmul.mubr.f32.gmra.mrb[0].mxu0 %v362
      %v561 = vpop.f32.mrb[0].mxu0
      %v562 = vadd.f32 %v301, %v561
      %v563 = vpop.f32.mrb[0].mxu0
      %564 = vmatprep.mubr.f32.mxu0 0.0
      %565 = vmatmul.mubr.f32.gmra.mrb[0].mxu0 %v365
      %v566 = vpop.f32.mrb[0].mxu0
      %v567 = vadd.f32 %v301, %v566
      %v568 = vpop.f32.mrb[0].mxu0
      %569 = vmatprep.mubr.f32.mxu0 0.0
      %570 = vmatmul.mubr.f32.gmra.mrb[0].mxu0 %v368
      %v571 = vpop.f32.mrb[0].mxu0
      %v572 = vadd.f32 %v301, %v571
      %v573 = vpop.f32.mrb[0].mxu0
      %574 = vmatprep.mubr.f32.mxu0 0.0
      %575 = vmatmul.mubr.f32.gmra.mrb[0].mxu0 %v371
      %v576 = vpop.f32.mrb[0].mxu0
      %v577 = vadd.f32 %v301, %v576
      %v578 = vpop.f32.mrb[0].mxu0
      %579 = vmatprep.mubr.f32.mxu0 0.0
      %580 = vmatmul.mubr.f32.gmra.mrb[0].mxu0 %v374
      %v581 = vpop.f32.mrb[0].mxu0
      %v582 = vadd.f32 %v301, %v581
      %v583 = vpop.f32.mrb[0].mxu0
      %584 = vmatprep.mubr.f32.mxu0 0.0
      %585 = vmatmul.mubr.f32.gmra.mrb[0].mxu0 %v377
      %v586 = vpop.f32.mrb[0].mxu0
      %v587 = vadd.f32 %v301, %v586
      %v588 = vpop.f32.mrb[0].mxu0
      %589 = vmatprep.mubr.f32.mxu0 0.0
      %590 = vmatmul.mubr.f32.gmra.mrb[0].mxu0 %v380
      %v591 = vpop.f32.mrb[0].mxu0
      %v592 = vadd.f32 %v301, %v591
      %v593 = vpop.f32.mrb[0].mxu0
      %594 = vmatprep.mubr.f32.mxu0 0.0
      %595 = vmatmul.mubr.f32.gmra.mrb[0].mxu0 %v383
      %v596 = vpop.f32.mrb[0].mxu0
      %v597 = vadd.f32 %v301, %v596
      %v598 = vpop.f32.mrb[0].mxu0
      %599 = vmatprep.mubr.f32.mxu0 0.0
      %600 = vmatmul.mubr.f32.gmra.mrb[0].mxu0 %v386
      %v601 = vpop.f32.mrb[0].mxu0
      %v602 = vadd.f32 %v301, %v601
      %v603 = vpop.f32.mrb[0].mxu0
      %604 = vmatprep.mubr.f32.mxu0 0.0
      %605 = vmatmul.mubr.f32.gmra.mrb[0].mxu0 %v389
      %v606 = vpop.f32.mrb[0].mxu0
      %v607 = vadd.f32 %v301, %v606
      %v608 = vpop.f32.mrb[0].mxu0
      %609 = vmatprep.mubr.f32.mxu0 0.0
      %610 = vmatmul.mubr.f32.gmra.mrb[0].mxu0 %v392
      %v611 = vpop.f32.mrb[0].mxu0
      %v612 = vadd.f32 %v301, %v611
      %v613 = vpop.f32.mrb[0].mxu0
      %614 = vmatprep.mubr.f32.mxu0 0.0
      %615 = vmatmul.mubr.f32.gmra.mrb[0].mxu0 %v395
      %v616 = vpop.f32.mrb[0].mxu0
      %v617 = vadd.f32 %v301, %v616
      %v618 = vpop.f32.mrb[0].mxu0
      %619 = vmatprep.mubr.f32.mxu0 0.0
      %620 = vmatmul.mubr.f32.gmra.mrb[0].mxu0 %v398
      %v621 = vpop.f32.mrb[0].mxu0
      %v622 = vadd.f32 %v301, %v621
      %v623 = vpop.f32.mrb[0].mxu0
      %624 = vdwg.mxu0
      %v625 = vld [vmem:[%s5] sm:$0xff]
      %v626 = vld [vmem:[%s5 + $0x8] sm:$0xff]
      %v627 = vld [vmem:[%s5 + $0x10] sm:$0xff]
      %v628 = vld [vmem:[%s5 + $0x18] sm:$0xff]
      %v629 = vld [vmem:[%s5 + $0x20] sm:$0xff]
      %v630 = vld [vmem:[%s5 + $0x28] sm:$0xff]
      %v631 = vld [vmem:[%s5 + $0x30] sm:$0xff]
      %v632 = vld [vmem:[%s5 + $0x38] sm:$0xff]
      %v633 = vld [vmem:[%s5 + $0x40] sm:$0xff]
      %v634 = vld [vmem:[%s5 + $0x48] sm:$0xff]
      %v635 = vld [vmem:[%s5 + $0x50] sm:$0xff]
      %v636 = vld [vmem:[%s5 + $0x58] sm:$0xff]
      %v637 = vld [vmem:[%s5 + $0x60] sm:$0xff]
      %v638 = vld [vmem:[%s5 + $0x68] sm:$0xff]
      %v639 = vld [vmem:[%s5 + $0x70] sm:$0xff]
      %v640 = vld [vmem:[%s5 + $0x78] sm:$0xff]
      %v641 = vld [vmem:[%s5 + $0x80] sm:$0xff]
      %v642 = vld [vmem:[%s5 + $0x88] sm:$0xff]
      %v643 = vld [vmem:[%s5 + $0x90] sm:$0xff]
      %v644 = vld [vmem:[%s5 + $0x98] sm:$0xff]
      %v645 = vld [vmem:[%s5 + $0xa0] sm:$0xff]
      %v646 = vld [vmem:[%s5 + $0xa8] sm:$0xff]
      %v647 = vld [vmem:[%s5 + $0xb0] sm:$0xff]
      %v648 = vld [vmem:[%s5 + $0xb8] sm:$0xff]
      %v649 = vld [vmem:[%s5 + $0xc0] sm:$0xff]
      %v650 = vld [vmem:[%s5 + $0xc8] sm:$0xff]
      %v651 = vld [vmem:[%s5 + $0xd0] sm:$0xff]
      %v652 = vld [vmem:[%s5 + $0xd8] sm:$0xff]
      %v653 = vld [vmem:[%s5 + $0xe0] sm:$0xff]
      %v654 = vld [vmem:[%s5 + $0xe8] sm:$0xff]
      %v655 = vld [vmem:[%s5 + $0xf0] sm:$0xff]
      %v656 = vld [vmem:[%s5 + $0xf8] sm:$0xff]
      %v657 = vld [vmem:[%s3] sm:$0xff]
      %v658 = vld [vmem:[%s3 + $0x8] sm:$0xff]
      %v659 = vld [vmem:[%s3 + $0x10] sm:$0xff]
      %v660 = vld [vmem:[%s3 + $0x18] sm:$0xff]
      %663 = vrot.lane.b32.xlu0 %v467, 96
      %v664 = vpop.permute.xlu0 %663
      %665 = vrot.lane.b32.xlu0 %v472, 96
      %v666 = vpop.permute.xlu0 %665
      %vm667 = vcmask 64512
      %v668 = vsel %vm667, %v467, 0
      %v670 = vsel %vm667, %v472, 0
      %v673 = vsel %vm667, %v477, 0
      %v676 = vsel %vm667, %v482, 0
      %v679 = vsel %vm667, %v487, 0
      %v682 = vsel %vm667, %v492, 0
      %v685 = vsel %vm667, %v497, 0
      %v688 = vsel %vm667, %v502, 0
      %v690 = vsel %vm667, %v664, 0
      %v692 = vsel %vm667, %v666, 0
      %694 = vmatprep.subr.mxu0 0.0
      %695 = vmatpush1.xpose.msra.mxu0 %v690
      %696 = vmatprep.subr.mxu0 0.0
      %697 = vmatpush1.xpose.msra.mxu0 %v692
      %698 = vmatprep.subr.mxu0 0.0
      %699 = vmatpush1.xpose.msra.mxu0 0.0
      %700 = vmatprep.subr.mxu0 0.0
      %701 = vmatpush1.xpose.msra.mxu0 0.0
      %702 = vmatprep.subr.mxu0 0.0
      %703 = vmatpush1.xpose.msra.mxu0 0.0
      %704 = vmatprep.subr.mxu0 0.0
      %705 = vmatpush1.xpose.msra.mxu0 0.0
      %706 = vmatprep.subr.mxu0 0.0
      %707 = vmatpush1.xpose.msra.mxu0 0.0
      %708 = vmatprep.subr.mxu0 0.0
      %709 = vmatpush1.xpose.msra.mxu0 0.0
      %710 = vmatprep.subr.mxu0 0.0
      %711 = vmatpush1.xpose.msra.mxu0 0.0
      %712 = vmatprep.subr.mxu0 0.0
      %713 = vmatpush1.xpose.msra.mxu0 0.0
      %714 = vmatprep.subr.mxu0 0.0
      %715 = vmatpush1.xpose.msra.mxu0 0.0
      %716 = vmatprep.subr.mxu0 0.0
      %717 = vmatpush1.xpose.msra.mxu0 0.0
      %718 = vmatprep.subr.mxu0 0.0
      %719 = vmatpush1.xpose.msra.mxu0 0.0
      %720 = vmatprep.subr.mxu0 0.0
      %721 = vmatpush1.xpose.msra.mxu0 0.0
      %722 = vmatprep.subr.mxu0 0.0
      %723 = vmatpush1.xpose.msra.mxu0 0.0
      %724 = vmatprep.subr.mxu0 0.0
      %725 = vmatpush1.xpose.msra.mxu0 0.0
      %726 = vmatprep.subr.mxu0 0.0
      %727 = vmatpush1.xpose.msra.mxu0 0.0
      %728 = vmatprep.subr.mxu0 0.0
      %729 = vmatpush1.xpose.msra.mxu0 0.0
      %730 = vmatprep.subr.mxu0 0.0
      %731 = vmatpush1.xpose.msra.mxu0 0.0
      %732 = vmatprep.subr.mxu0 0.0
      %733 = vmatpush1.xpose.msra.mxu0 0.0
      %734 = vmatprep.subr.mxu0 0.0
      %735 = vmatpush1.xpose.msra.mxu0 0.0
      %736 = vmatprep.subr.mxu0 0.0
      %737 = vmatpush1.xpose.msra.mxu0 0.0
      %738 = vmatprep.subr.mxu0 0.0
      %739 = vmatpush1.xpose.msra.mxu0 0.0
      %740 = vmatprep.subr.mxu0 0.0
      %741 = vmatpush1.xpose.msra.mxu0 0.0
      %742 = vmatprep.subr.mxu0 0.0
      %743 = vmatpush1.xpose.msra.mxu0 0.0
      %744 = vmatprep.subr.mxu0 0.0
      %745 = vmatpush1.xpose.msra.mxu0 0.0
      %746 = vmatprep.subr.mxu0 0.0
      %747 = vmatpush1.xpose.msra.mxu0 0.0
      %748 = vmatprep.subr.mxu0 0.0
      %749 = vmatpush1.xpose.msra.mxu0 0.0
      %750 = vmatprep.subr.mxu0 0.0
      %751 = vmatpush1.xpose.msra.mxu0 0.0
      %752 = vmatprep.subr.mxu0 0.0
      %753 = vmatpush1.xpose.msra.mxu0 0.0
      %754 = vmatprep.subr.mxu0 0.0
      %755 = vmatpush1.xpose.msra.mxu0 0.0
      %756 = vmatprep.subr.mxu0 0.0
      %757 = vmatpush1.xpose.msra.mxu0 0.0
      %758 = vmatprep.mubr.f32.mxu0 0.0
      %759 = vmatmul.mubr.f32.gmra.mrb[0].mxu0 %v668
      %v760 = vpop.f32.mrb[0].mxu0
      %v761 = vadd.f32 %v625, %v760
      %v762 = vpop.f32.mrb[0].mxu0
      %763 = vmatprep.mubr.f32.mxu0 0.0
      %764 = vmatmul.mubr.f32.gmra.mrb[0].mxu0 %v670
      %v765 = vpop.f32.mrb[0].mxu0
      %v766 = vadd.f32 %v626, %v765
      %v767 = vpop.f32.mrb[0].mxu0
      %768 = vmatprep.mubr.f32.mxu0 0.0
      %769 = vmatmul.mubr.f32.gmra.mrb[0].mxu0 %v673
      %v770 = vpop.f32.mrb[0].mxu0
      %v771 = vadd.f32 %v627, %v770
      %v772 = vpop.f32.mrb[0].mxu0
      %773 = vmatprep.mubr.f32.mxu0 0.0
      %774 = vmatmul.mubr.f32.gmra.mrb[0].mxu0 %v676
      %v775 = vpop.f32.mrb[0].mxu0
      %v776 = vadd.f32 %v628, %v775
      %v777 = vpop.f32.mrb[0].mxu0
      %778 = vmatprep.mubr.f32.mxu0 0.0
      %779 = vmatmul.mubr.f32.gmra.mrb[0].mxu0 %v679
      %v780 = vpop.f32.mrb[0].mxu0
      %v781 = vadd.f32 %v629, %v780
      %v782 = vpop.f32.mrb[0].mxu0
      %783 = vmatprep.mubr.f32.mxu0 0.0
      %784 = vmatmul.mubr.f32.gmra.mrb[0].mxu0 %v682
      %v785 = vpop.f32.mrb[0].mxu0
      %v786 = vadd.f32 %v630, %v785
      %v787 = vpop.f32.mrb[0].mxu0
      %788 = vmatprep.mubr.f32.mxu0 0.0
      %789 = vmatmul.mubr.f32.gmra.mrb[0].mxu0 %v685
      %v790 = vpop.f32.mrb[0].mxu0
      %v791 = vadd.f32 %v631, %v790
      %v792 = vpop.f32.mrb[0].mxu0
      %793 = vmatprep.mubr.f32.mxu0 0.0
      %794 = vmatmul.mubr.f32.gmra.mrb[0].mxu0 %v688
      %v795 = vpop.f32.mrb[0].mxu0
      %v796 = vadd.f32 %v632, %v795
      %v797 = vpop.f32.mrb[0].mxu0
      %798 = vdwg.mxu0
      %801 = vrot.lane.b32.xlu0 %v507, 96
      %v802 = vpop.permute.xlu0 %801
      %803 = vrot.lane.b32.xlu0 %v512, 96
      %v804 = vpop.permute.xlu0 %803
      %v805 = vsel %vm667, %v507, 0
      %v807 = vsel %vm667, %v512, 0
      %v810 = vsel %vm667, %v517, 0
      %v813 = vsel %vm667, %v522, 0
      %v816 = vsel %vm667, %v527, 0
      %v819 = vsel %vm667, %v532, 0
      %v822 = vsel %vm667, %v537, 0
      %v825 = vsel %vm667, %v542, 0
      %v827 = vsel %vm667, %v802, 0
      %v829 = vsel %vm667, %v804, 0
      %831 = vmatprep.subr.mxu0 0.0
      %832 = vmatpush1.xpose.msra.mxu0 %v827
      %833 = vmatprep.subr.mxu0 0.0
      %834 = vmatpush1.xpose.msra.mxu0 %v829
      %835 = vmatprep.subr.mxu0 0.0
      %836 = vmatpush1.xpose.msra.mxu0 0.0
      %837 = vmatprep.subr.mxu0 0.0
      %838 = vmatpush1.xpose.msra.mxu0 0.0
      %839 = vmatprep.subr.mxu0 0.0
      %840 = vmatpush1.xpose.msra.mxu0 0.0
      %841 = vmatprep.subr.mxu0 0.0
      %842 = vmatpush1.xpose.msra.mxu0 0.0
      %843 = vmatprep.subr.mxu0 0.0
      %844 = vmatpush1.xpose.msra.mxu0 0.0
      %845 = vmatprep.subr.mxu0 0.0
      %846 = vmatpush1.xpose.msra.mxu0 0.0
      %847 = vmatprep.subr.mxu0 0.0
      %848 = vmatpush1.xpose.msra.mxu0 0.0
      %849 = vmatprep.subr.mxu0 0.0
      %850 = vmatpush1.xpose.msra.mxu0 0.0
      %851 = vmatprep.subr.mxu0 0.0
      %852 = vmatpush1.xpose.msra.mxu0 0.0
      %853 = vmatprep.subr.mxu0 0.0
      %854 = vmatpush1.xpose.msra.mxu0 0.0
      %855 = vmatprep.subr.mxu0 0.0
      %856 = vmatpush1.xpose.msra.mxu0 0.0
      %857 = vmatprep.subr.mxu0 0.0
      %858 = vmatpush1.xpose.msra.mxu0 0.0
      %859 = vmatprep.subr.mxu0 0.0
      %860 = vmatpush1.xpose.msra.mxu0 0.0
      %861 = vmatprep.subr.mxu0 0.0
      %862 = vmatpush1.xpose.msra.mxu0 0.0
      %863 = vmatprep.subr.mxu0 0.0
      %864 = vmatpush1.xpose.msra.mxu0 0.0
      %865 = vmatprep.subr.mxu0 0.0
      %866 = vmatpush1.xpose.msra.mxu0 0.0
      %867 = vmatprep.subr.mxu0 0.0
      %868 = vmatpush1.xpose.msra.mxu0 0.0
      %869 = vmatprep.subr.mxu0 0.0
      %870 = vmatpush1.xpose.msra.mxu0 0.0
      %871 = vmatprep.subr.mxu0 0.0
      %872 = vmatpush1.xpose.msra.mxu0 0.0
      %873 = vmatprep.subr.mxu0 0.0
      %874 = vmatpush1.xpose.msra.mxu0 0.0
      %875 = vmatprep.subr.mxu0 0.0
      %876 = vmatpush1.xpose.msra.mxu0 0.0
      %877 = vmatprep.subr.mxu0 0.0
      %878 = vmatpush1.xpose.msra.mxu0 0.0
      %879 = vmatprep.subr.mxu0 0.0
      %880 = vmatpush1.xpose.msra.mxu0 0.0
      %881 = vmatprep.subr.mxu0 0.0
      %882 = vmatpush1.xpose.msra.mxu0 0.0
      %883 = vmatprep.subr.mxu0 0.0
      %884 = vmatpush1.xpose.msra.mxu0 0.0
      %885 = vmatprep.subr.mxu0 0.0
      %886 = vmatpush1.xpose.msra.mxu0 0.0
      %887 = vmatprep.subr.mxu0 0.0
      %888 = vmatpush1.xpose.msra.mxu0 0.0
      %889 = vmatprep.subr.mxu0 0.0
      %890 = vmatpush1.xpose.msra.mxu0 0.0
      %891 = vmatprep.subr.mxu0 0.0
      %892 = vmatpush1.xpose.msra.mxu0 0.0
      %893 = vmatprep.subr.mxu0 0.0
      %894 = vmatpush1.xpose.msra.mxu0 0.0
      %895 = vmatprep.mubr.f32.mxu0 0.0
      %896 = vmatmul.mubr.f32.gmra.mrb[0].mxu0 %v805
      %v897 = vpop.f32.mrb[0].mxu0
      %v898 = vadd.f32 %v625, %v897
      %v899 = vpop.f32.mrb[0].mxu0
      %900 = vmatprep.mubr.f32.mxu0 0.0
      %901 = vmatmul.mubr.f32.gmra.mrb[0].mxu0 %v807
      %v902 = vpop.f32.mrb[0].mxu0
      %v903 = vadd.f32 %v626, %v902
      %v904 = vpop.f32.mrb[0].mxu0
      %905 = vmatprep.mubr.f32.mxu0 0.0
      %906 = vmatmul.mubr.f32.gmra.mrb[0].mxu0 %v810
      %v907 = vpop.f32.mrb[0].mxu0
      %v908 = vadd.f32 %v627, %v907
      %v909 = vpop.f32.mrb[0].mxu0
      %910 = vmatprep.mubr.f32.mxu0 0.0
      %911 = vmatmul.mubr.f32.gmra.mrb[0].mxu0 %v813
      %v912 = vpop.f32.mrb[0].mxu0
      %v913 = vadd.f32 %v628, %v912
      %v914 = vpop.f32.mrb[0].mxu0
      %915 = vmatprep.mubr.f32.mxu0 0.0
      %916 = vmatmul.mubr.f32.gmra.mrb[0].mxu0 %v816
      %v917 = vpop.f32.mrb[0].mxu0
      %v918 = vadd.f32 %v629, %v917
      %v919 = vpop.f32.mrb[0].mxu0
      %920 = vmatprep.mubr.f32.mxu0 0.0
      %921 = vmatmul.mubr.f32.gmra.mrb[0].mxu0 %v819
      %v922 = vpop.f32.mrb[0].mxu0
      %v923 = vadd.f32 %v630, %v922
      %v924 = vpop.f32.mrb[0].mxu0
      %925 = vmatprep.mubr.f32.mxu0 0.0
      %926 = vmatmul.mubr.f32.gmra.mrb[0].mxu0 %v822
      %v927 = vpop.f32.mrb[0].mxu0
      %v928 = vadd.f32 %v631, %v927
      %v929 = vpop.f32.mrb[0].mxu0
      %930 = vmatprep.mubr.f32.mxu0 0.0
      %931 = vmatmul.mubr.f32.gmra.mrb[0].mxu0 %v825
      %v932 = vpop.f32.mrb[0].mxu0
      %v933 = vadd.f32 %v632, %v932
      %v934 = vpop.f32.mrb[0].mxu0
      %935 = vdwg.mxu0
      %938 = vrot.lane.b32.xlu0 %v547, 96
      %v939 = vpop.permute.xlu0 %938
      %940 = vrot.lane.b32.xlu0 %v552, 96
      %v941 = vpop.permute.xlu0 %940
      %v942 = vsel %vm667, %v547, 0
      %v944 = vsel %vm667, %v552, 0
      %v947 = vsel %vm667, %v557, 0
      %v950 = vsel %vm667, %v562, 0
      %v953 = vsel %vm667, %v567, 0
      %v956 = vsel %vm667, %v572, 0
      %v959 = vsel %vm667, %v577, 0
      %v962 = vsel %vm667, %v582, 0
      %v964 = vsel %vm667, %v939, 0
      %v966 = vsel %vm667, %v941, 0
      %968 = vmatprep.subr.mxu0 0.0
      %969 = vmatpush1.xpose.msra.mxu0 %v964
      %970 = vmatprep.subr.mxu0 0.0
      %971 = vmatpush1.xpose.msra.mxu0 %v966
      %972 = vmatprep.subr.mxu0 0.0
      %973 = vmatpush1.xpose.msra.mxu0 0.0
      %974 = vmatprep.subr.mxu0 0.0
      %975 = vmatpush1.xpose.msra.mxu0 0.0
      %976 = vmatprep.subr.mxu0 0.0
      %977 = vmatpush1.xpose.msra.mxu0 0.0
      %978 = vmatprep.subr.mxu0 0.0
      %979 = vmatpush1.xpose.msra.mxu0 0.0
      %980 = vmatprep.subr.mxu0 0.0
      %981 = vmatpush1.xpose.msra.mxu0 0.0
      %982 = vmatprep.subr.mxu0 0.0
      %983 = vmatpush1.xpose.msra.mxu0 0.0
      %984 = vmatprep.subr.mxu0 0.0
      %985 = vmatpush1.xpose.msra.mxu0 0.0
      %986 = vmatprep.subr.mxu0 0.0
      %987 = vmatpush1.xpose.msra.mxu0 0.0
      %988 = vmatprep.subr.mxu0 0.0
      %989 = vmatpush1.xpose.msra.mxu0 0.0
      %990 = vmatprep.subr.mxu0 0.0
      %991 = vmatpush1.xpose.msra.mxu0 0.0
      %992 = vmatprep.subr.mxu0 0.0
      %993 = vmatpush1.xpose.msra.mxu0 0.0
      %994 = vmatprep.subr.mxu0 0.0
      %995 = vmatpush1.xpose.msra.mxu0 0.0
      %996 = vmatprep.subr.mxu0 0.0
      %997 = vmatpush1.xpose.msra.mxu0 0.0
      %998 = vmatprep.subr.mxu0 0.0
      %999 = vmatpush1.xpose.msra.mxu0 0.0
      %1000 = vmatprep.subr.mxu0 0.0
      %1001 = vmatpush1.xpose.msra.mxu0 0.0
      %1002 = vmatprep.subr.mxu0 0.0
      %1003 = vmatpush1.xpose.msra.mxu0 0.0
      %1004 = vmatprep.subr.mxu0 0.0
      %1005 = vmatpush1.xpose.msra.mxu0 0.0
      %1006 = vmatprep.subr.mxu0 0.0
      %1007 = vmatpush1.xpose.msra.mxu0 0.0
      %1008 = vmatprep.subr.mxu0 0.0
      %1009 = vmatpush1.xpose.msra.mxu0 0.0
      %1010 = vmatprep.subr.mxu0 0.0
      %1011 = vmatpush1.xpose.msra.mxu0 0.0
      %1012 = vmatprep.subr.mxu0 0.0
      %1013 = vmatpush1.xpose.msra.mxu0 0.0
      %1014 = vmatprep.subr.mxu0 0.0
      %1015 = vmatpush1.xpose.msra.mxu0 0.0
      %1016 = vmatprep.subr.mxu0 0.0
      %1017 = vmatpush1.xpose.msra.mxu0 0.0
      %1018 = vmatprep.subr.mxu0 0.0
      %1019 = vmatpush1.xpose.msra.mxu0 0.0
      %1020 = vmatprep.subr.mxu0 0.0
      %1021 = vmatpush1.xpose.msra.mxu0 0.0
      %1022 = vmatprep.subr.mxu0 0.0
      %1023 = vmatpush1.xpose.msra.mxu0 0.0
      %1024 = vmatprep.subr.mxu0 0.0
      %1025 = vmatpush1.xpose.msra.mxu0 0.0
      %1026 = vmatprep.subr.mxu0 0.0
      %1027 = vmatpush1.xpose.msra.mxu0 0.0
      %1028 = vmatprep.subr.mxu0 0.0
      %1029 = vmatpush1.xpose.msra.mxu0 0.0
      %1030 = vmatprep.subr.mxu0 0.0
      %1031 = vmatpush1.xpose.msra.mxu0 0.0
      %1032 = vmatprep.mubr.f32.mxu0 0.0
      %1033 = vmatmul.mubr.f32.gmra.mrb[0].mxu0 %v942
      %v1034 = vpop.f32.mrb[0].mxu0
      %v1035 = vadd.f32 %v625, %v1034
      %v1036 = vpop.f32.mrb[0].mxu0
      %1037 = vmatprep.mubr.f32.mxu0 0.0
      %1038 = vmatmul.mubr.f32.gmra.mrb[0].mxu0 %v944
      %v1039 = vpop.f32.mrb[0].mxu0
      %v1040 = vadd.f32 %v626, %v1039
      %v1041 = vpop.f32.mrb[0].mxu0
      %1042 = vmatprep.mubr.f32.mxu0 0.0
      %1043 = vmatmul.mubr.f32.gmra.mrb[0].mxu0 %v947
      %v1044 = vpop.f32.mrb[0].mxu0
      %v1045 = vadd.f32 %v627, %v1044
      %v1046 = vpop.f32.mrb[0].mxu0
      %1047 = vmatprep.mubr.f32.mxu0 0.0
      %1048 = vmatmul.mubr.f32.gmra.mrb[0].mxu0 %v950
      %v1049 = vpop.f32.mrb[0].mxu0
      %v1050 = vadd.f32 %v628, %v1049
      %v1051 = vpop.f32.mrb[0].mxu0
      %1052 = vmatprep.mubr.f32.mxu0 0.0
      %1053 = vmatmul.mubr.f32.gmra.mrb[0].mxu0 %v953
      %v1054 = vpop.f32.mrb[0].mxu0
      %v1055 = vadd.f32 %v629, %v1054
      %v1056 = vpop.f32.mrb[0].mxu0
      %1057 = vmatprep.mubr.f32.mxu0 0.0
      %1058 = vmatmul.mubr.f32.gmra.mrb[0].mxu0 %v956
      %v1059 = vpop.f32.mrb[0].mxu0
      %v1060 = vadd.f32 %v630, %v1059
      %v1061 = vpop.f32.mrb[0].mxu0
      %1062 = vmatprep.mubr.f32.mxu0 0.0
      %1063 = vmatmul.mubr.f32.gmra.mrb[0].mxu0 %v959
      %v1064 = vpop.f32.mrb[0].mxu0
      %v1065 = vadd.f32 %v631, %v1064
      %v1066 = vpop.f32.mrb[0].mxu0
      %1067 = vmatprep.mubr.f32.mxu0 0.0
      %1068 = vmatmul.mubr.f32.gmra.mrb[0].mxu0 %v962
      %v1069 = vpop.f32.mrb[0].mxu0
      %v1070 = vadd.f32 %v632, %v1069
      %v1071 = vpop.f32.mrb[0].mxu0
      %1072 = vdwg.mxu0
      %1075 = vrot.lane.b32.xlu0 %v587, 96
      %v1076 = vpop.permute.xlu0 %1075
      %1077 = vrot.lane.b32.xlu0 %v592, 96
      %v1078 = vpop.permute.xlu0 %1077
      %v1079 = vsel %vm667, %v587, 0
      %v1081 = vsel %vm667, %v592, 0
      %v1084 = vsel %vm667, %v597, 0
      %v1087 = vsel %vm667, %v602, 0
      %v1090 = vsel %vm667, %v607, 0
      %v1093 = vsel %vm667, %v612, 0
      %v1096 = vsel %vm667, %v617, 0
      %v1099 = vsel %vm667, %v622, 0
      %v1101 = vsel %vm667, %v1076, 0
      %v1103 = vsel %vm667, %v1078, 0
      %1105 = vmatprep.subr.mxu0 0.0
      %1106 = vmatpush1.xpose.msra.mxu0 %v1101
      %1107 = vmatprep.subr.mxu0 0.0
      %1108 = vmatpush1.xpose.msra.mxu0 %v1103
      %1109 = vmatprep.subr.mxu0 0.0
      %1110 = vmatpush1.xpose.msra.mxu0 0.0
      %1111 = vmatprep.subr.mxu0 0.0
      %1112 = vmatpush1.xpose.msra.mxu0 0.0
      %1113 = vmatprep.subr.mxu0 0.0
      %1114 = vmatpush1.xpose.msra.mxu0 0.0
      %1115 = vmatprep.subr.mxu0 0.0
      %1116 = vmatpush1.xpose.msra.mxu0 0.0
      %1117 = vmatprep.subr.mxu0 0.0
      %1118 = vmatpush1.xpose.msra.mxu0 0.0
      %1119 = vmatprep.subr.mxu0 0.0
      %1120 = vmatpush1.xpose.msra.mxu0 0.0
      %1121 = vmatprep.subr.mxu0 0.0
      %1122 = vmatpush1.xpose.msra.mxu0 0.0
      %1123 = vmatprep.subr.mxu0 0.0
      %1124 = vmatpush1.xpose.msra.mxu0 0.0
      %1125 = vmatprep.subr.mxu0 0.0
      %1126 = vmatpush1.xpose.msra.mxu0 0.0
      %1127 = vmatprep.subr.mxu0 0.0
      %1128 = vmatpush1.xpose.msra.mxu0 0.0
      %1129 = vmatprep.subr.mxu0 0.0
      %1130 = vmatpush1.xpose.msra.mxu0 0.0
      %1131 = vmatprep.subr.mxu0 0.0
      %1132 = vmatpush1.xpose.msra.mxu0 0.0
      %1133 = vmatprep.subr.mxu0 0.0
      %1134 = vmatpush1.xpose.msra.mxu0 0.0
      %1135 = vmatprep.subr.mxu0 0.0
      %1136 = vmatpush1.xpose.msra.mxu0 0.0
      %1137 = vmatprep.subr.mxu0 0.0
      %1138 = vmatpush1.xpose.msra.mxu0 0.0
      %1139 = vmatprep.subr.mxu0 0.0
      %1140 = vmatpush1.xpose.msra.mxu0 0.0
      %1141 = vmatprep.subr.mxu0 0.0
      %1142 = vmatpush1.xpose.msra.mxu0 0.0
      %1143 = vmatprep.subr.mxu0 0.0
      %1144 = vmatpush1.xpose.msra.mxu0 0.0
      %1145 = vmatprep.subr.mxu0 0.0
      %1146 = vmatpush1.xpose.msra.mxu0 0.0
      %1147 = vmatprep.subr.mxu0 0.0
      %1148 = vmatpush1.xpose.msra.mxu0 0.0
      %1149 = vmatprep.subr.mxu0 0.0
      %1150 = vmatpush1.xpose.msra.mxu0 0.0
      %1151 = vmatprep.subr.mxu0 0.0
      %1152 = vmatpush1.xpose.msra.mxu0 0.0
      %1153 = vmatprep.subr.mxu0 0.0
      %1154 = vmatpush1.xpose.msra.mxu0 0.0
      %1155 = vmatprep.subr.mxu0 0.0
      %1156 = vmatpush1.xpose.msra.mxu0 0.0
      %1157 = vmatprep.subr.mxu0 0.0
      %1158 = vmatpush1.xpose.msra.mxu0 0.0
      %1159 = vmatprep.subr.mxu0 0.0
      %1160 = vmatpush1.xpose.msra.mxu0 0.0
      %1161 = vmatprep.subr.mxu0 0.0
      %1162 = vmatpush1.xpose.msra.mxu0 0.0
      %1163 = vmatprep.subr.mxu0 0.0
      %1164 = vmatpush1.xpose.msra.mxu0 0.0
      %1165 = vmatprep.subr.mxu0 0.0
      %1166 = vmatpush1.xpose.msra.mxu0 0.0
      %1167 = vmatprep.subr.mxu0 0.0
      %1168 = vmatpush1.xpose.msra.mxu0 0.0
      %1169 = vmatprep.mubr.f32.mxu0 0.0
      %1170 = vmatmul.mubr.f32.gmra.mrb[0].mxu0 %v1079
      %v1171 = vpop.f32.mrb[0].mxu0
      %v1172 = vadd.f32 %v625, %v1171
      %v1173 = vpop.f32.mrb[0].mxu0
      %1174 = vmatprep.mubr.f32.mxu0 0.0
      %1175 = vmatmul.mubr.f32.gmra.mrb[0].mxu0 %v1081
      %v1176 = vpop.f32.mrb[0].mxu0
      %v1177 = vadd.f32 %v626, %v1176
      %v1178 = vpop.f32.mrb[0].mxu0
      %1179 = vmatprep.mubr.f32.mxu0 0.0
      %1180 = vmatmul.mubr.f32.gmra.mrb[0].mxu0 %v1084
      %v1181 = vpop.f32.mrb[0].mxu0
      %v1182 = vadd.f32 %v627, %v1181
      %v1183 = vpop.f32.mrb[0].mxu0
      %1184 = vmatprep.mubr.f32.mxu0 0.0
      %1185 = vmatmul.mubr.f32.gmra.mrb[0].mxu0 %v1087
      %v1186 = vpop.f32.mrb[0].mxu0
      %v1187 = vadd.f32 %v628, %v1186
      %v1188 = vpop.f32.mrb[0].mxu0
      %1189 = vmatprep.mubr.f32.mxu0 0.0
      %1190 = vmatmul.mubr.f32.gmra.mrb[0].mxu0 %v1090
      %v1191 = vpop.f32.mrb[0].mxu0
      %v1192 = vadd.f32 %v629, %v1191
      %v1193 = vpop.f32.mrb[0].mxu0
      %1194 = vmatprep.mubr.f32.mxu0 0.0
      %1195 = vmatmul.mubr.f32.gmra.mrb[0].mxu0 %v1093
      %v1196 = vpop.f32.mrb[0].mxu0
      %v1197 = vadd.f32 %v630, %v1196
      %v1198 = vpop.f32.mrb[0].mxu0
      %1199 = vmatprep.mubr.f32.mxu0 0.0
      %1200 = vmatmul.mubr.f32.gmra.mrb[0].mxu0 %v1096
      %v1201 = vpop.f32.mrb[0].mxu0
      %v1202 = vadd.f32 %v631, %v1201
      %v1203 = vpop.f32.mrb[0].mxu0
      %1204 = vmatprep.mubr.f32.mxu0 0.0
      %1205 = vmatmul.mubr.f32.gmra.mrb[0].mxu0 %v1099
      %v1206 = vpop.f32.mrb[0].mxu0
      %v1207 = vadd.f32 %v632, %v1206
      %v1208 = vpop.f32.mrb[0].mxu0
      %1209 = vdwg.mxu0
      %vm1210 = vcmask 130048
      %v1211 = vsel %vm1210, %v761, -inf
      %1212 = vmax.xlane.f32.xlu0 %v1211
      %v1213 = vpop.xlane.xlu0 %1212
      %v1214 = vsel %vm1210, %v766, -inf
      %1215 = vmax.xlane.f32.xlu0 %v1214
      %v1216 = vpop.xlane.xlu0 %1215
      %v1217 = vsel %vm1210, %v771, -inf
      %1218 = vmax.xlane.f32.xlu0 %v1217
      %v1219 = vpop.xlane.xlu0 %1218
      %v1220 = vsel %vm1210, %v776, -inf
      %1221 = vmax.xlane.f32.xlu0 %v1220
      %v1222 = vpop.xlane.xlu0 %1221
      %v1223 = vsel %vm1210, %v781, -inf
      %1224 = vmax.xlane.f32.xlu0 %v1223
      %v1225 = vpop.xlane.xlu0 %1224
      %v1226 = vsel %vm1210, %v786, -inf
      %1227 = vmax.xlane.f32.xlu0 %v1226
      %v1228 = vpop.xlane.xlu0 %1227
      %v1229 = vsel %vm1210, %v791, -inf
      %1230 = vmax.xlane.f32.xlu0 %v1229
      %v1231 = vpop.xlane.xlu0 %1230
      %v1232 = vsel %vm1210, %v796, -inf
      %1233 = vmax.xlane.f32.xlu0 %v1232
      %v1234 = vpop.xlane.xlu0 %1233
      %v1235 = vsel %vm1210, %v898, -inf
      %1236 = vmax.xlane.f32.xlu0 %v1235
      %v1237 = vpop.xlane.xlu0 %1236
      %v1238 = vsel %vm1210, %v903, -inf
      %1239 = vmax.xlane.f32.xlu0 %v1238
      %v1240 = vpop.xlane.xlu0 %1239
      %v1241 = vsel %vm1210, %v908, -inf
      %1242 = vmax.xlane.f32.xlu0 %v1241
      %v1243 = vpop.xlane.xlu0 %1242
      %v1244 = vsel %vm1210, %v913, -inf
      %1245 = vmax.xlane.f32.xlu0 %v1244
      %v1246 = vpop.xlane.xlu0 %1245
      %v1247 = vsel %vm1210, %v918, -inf
      %1248 = vmax.xlane.f32.xlu0 %v1247
      %v1249 = vpop.xlane.xlu0 %1248
      %v1250 = vsel %vm1210, %v923, -inf
      %1251 = vmax.xlane.f32.xlu0 %v1250
      %v1252 = vpop.xlane.xlu0 %1251
      %v1253 = vsel %vm1210, %v928, -inf
      %1254 = vmax.xlane.f32.xlu0 %v1253
      %v1255 = vpop.xlane.xlu0 %1254
      %v1256 = vsel %vm1210, %v933, -inf
      %1257 = vmax.xlane.f32.xlu0 %v1256
      %v1258 = vpop.xlane.xlu0 %1257
      %v1259 = vsel %vm1210, %v1035, -inf
      %1260 = vmax.xlane.f32.xlu0 %v1259
      %v1261 = vpop.xlane.xlu0 %1260
      %v1262 = vsel %vm1210, %v1040, -inf
      %1263 = vmax.xlane.f32.xlu0 %v1262
      %v1264 = vpop.xlane.xlu0 %1263
      %v1265 = vsel %vm1210, %v1045, -inf
      %1266 = vmax.xlane.f32.xlu0 %v1265
      %v1267 = vpop.xlane.xlu0 %1266
      %v1268 = vsel %vm1210, %v1050, -inf
      %1269 = vmax.xlane.f32.xlu0 %v1268
      %v1270 = vpop.xlane.xlu0 %1269
      %v1271 = vsel %vm1210, %v1055, -inf
      %1272 = vmax.xlane.f32.xlu0 %v1271
      %v1273 = vpop.xlane.xlu0 %1272
      %v1274 = vsel %vm1210, %v1060, -inf
      %1275 = vmax.xlane.f32.xlu0 %v1274
      %v1276 = vpop.xlane.xlu0 %1275
      %v1277 = vsel %vm1210, %v1065, -inf
      %1278 = vmax.xlane.f32.xlu0 %v1277
      %v1279 = vpop.xlane.xlu0 %1278
      %v1280 = vsel %vm1210, %v1070, -inf
      %1281 = vmax.xlane.f32.xlu0 %v1280
      %v1282 = vpop.xlane.xlu0 %1281
      %v1283 = vsel %vm1210, %v1172, -inf
      %1284 = vmax.xlane.f32.xlu0 %v1283
      %v1285 = vpop.xlane.xlu0 %1284
      %v1286 = vsel %vm1210, %v1177, -inf
      %1287 = vmax.xlane.f32.xlu0 %v1286
      %v1288 = vpop.xlane.xlu0 %1287
      %v1289 = vsel %vm1210, %v1182, -inf
      %1290 = vmax.xlane.f32.xlu0 %v1289
      %v1291 = vpop.xlane.xlu0 %1290
      %v1292 = vsel %vm1210, %v1187, -inf
      %1293 = vmax.xlane.f32.xlu0 %v1292
      %v1294 = vpop.xlane.xlu0 %1293
      %v1295 = vsel %vm1210, %v1192, -inf
      %1296 = vmax.xlane.f32.xlu0 %v1295
      %v1297 = vpop.xlane.xlu0 %1296
      %v1298 = vsel %vm1210, %v1197, -inf
      %1299 = vmax.xlane.f32.xlu0 %v1298
      %v1300 = vpop.xlane.xlu0 %1299
      %v1301 = vsel %vm1210, %v1202, -inf
      %1302 = vmax.xlane.f32.xlu0 %v1301
      %v1303 = vpop.xlane.xlu0 %1302
      %v1304 = vsel %vm1210, %v1207, -inf
      %1305 = vmax.xlane.f32.xlu0 %v1304
      %v1306 = vpop.xlane.xlu0 %1305
      %v1307 = vsub.f32 %v761, %v1213
      %v1308 = vsub.f32 %v766, %v1216
      %v1309 = vsub.f32 %v771, %v1219
      %v1310 = vsub.f32 %v776, %v1222
      %v1311 = vsub.f32 %v781, %v1225
      %v1312 = vsub.f32 %v786, %v1228
      %v1313 = vsub.f32 %v791, %v1231
      %v1314 = vsub.f32 %v796, %v1234
      %v1315 = vsub.f32 %v898, %v1237
      %v1316 = vsub.f32 %v903, %v1240
      %v1317 = vsub.f32 %v908, %v1243
      %v1318 = vsub.f32 %v913, %v1246
      %v1319 = vsub.f32 %v918, %v1249
      %v1320 = vsub.f32 %v923, %v1252
      %v1321 = vsub.f32 %v928, %v1255
      %v1322 = vsub.f32 %v933, %v1258
      %v1323 = vsub.f32 %v1035, %v1261
      %v1324 = vsub.f32 %v1040, %v1264
      %v1325 = vsub.f32 %v1045, %v1267
      %v1326 = vsub.f32 %v1050, %v1270
      %v1327 = vsub.f32 %v1055, %v1273
      %v1328 = vsub.f32 %v1060, %v1276
      %v1329 = vsub.f32 %v1065, %v1279
      %v1330 = vsub.f32 %v1070, %v1282
      %v1331 = vsub.f32 %v1172, %v1285
      %v1332 = vsub.f32 %v1177, %v1288
      %v1333 = vsub.f32 %v1182, %v1291
      %v1334 = vsub.f32 %v1187, %v1294
      %v1335 = vsub.f32 %v1192, %v1297
      %v1336 = vsub.f32 %v1197, %v1300
      %v1337 = vsub.f32 %v1202, %v1303
      %v1338 = vsub.f32 %v1207, %v1306
      %v1339 = vmul.f32 %v1307, 1.442695
      %v1340 = vpow.pop %v1339
      %v1341 = vmul.f32 %v1308, 1.442695
      %v1342 = vpow.pop %v1341
      %v1343 = vmul.f32 %v1309, 1.442695
      %v1344 = vpow.pop %v1343
      %v1345 = vmul.f32 %v1310, 1.442695
      %v1346 = vpow.pop %v1345
      %v1347 = vmul.f32 %v1311, 1.442695
      %v1348 = vpow.pop %v1347
      %v1349 = vmul.f32 %v1312, 1.442695
      %v1350 = vpow.pop %v1349
      %v1351 = vmul.f32 %v1313, 1.442695
      %v1352 = vpow.pop %v1351
      %v1353 = vmul.f32 %v1314, 1.442695
      %v1354 = vpow.pop %v1353
      %v1355 = vmul.f32 %v1315, 1.442695
      %v1356 = vpow.pop %v1355
      %v1357 = vmul.f32 %v1316, 1.442695
      %v1358 = vpow.pop %v1357
      %v1359 = vmul.f32 %v1317, 1.442695
      %v1360 = vpow.pop %v1359
      %v1361 = vmul.f32 %v1318, 1.442695
      %v1362 = vpow.pop %v1361
      %v1363 = vmul.f32 %v1319, 1.442695
      %v1364 = vpow.pop %v1363
      %v1365 = vmul.f32 %v1320, 1.442695
      %v1366 = vpow.pop %v1365
      %v1367 = vmul.f32 %v1321, 1.442695
      %v1368 = vpow.pop %v1367
      %v1369 = vmul.f32 %v1322, 1.442695
      %v1370 = vpow.pop %v1369
      %v1371 = vmul.f32 %v1323, 1.442695
      %v1372 = vpow.pop %v1371
      %v1373 = vmul.f32 %v1324, 1.442695
      %v1374 = vpow.pop %v1373
      %v1375 = vmul.f32 %v1325, 1.442695
      %v1376 = vpow.pop %v1375
      %v1377 = vmul.f32 %v1326, 1.442695
      %v1378 = vpow.pop %v1377
      %v1379 = vmul.f32 %v1327, 1.442695
      %v1380 = vpow.pop %v1379
      %v1381 = vmul.f32 %v1328, 1.442695
      %v1382 = vpow.pop %v1381
      %v1383 = vmul.f32 %v1329, 1.442695
      %v1384 = vpow.pop %v1383
      %v1385 = vmul.f32 %v1330, 1.442695
      %v1386 = vpow.pop %v1385
      %v1387 = vmul.f32 %v1331, 1.442695
      %v1388 = vpow.pop %v1387
      %v1389 = vmul.f32 %v1332, 1.442695
      %v1390 = vpow.pop %v1389
      %v1391 = vmul.f32 %v1333, 1.442695
      %v1392 = vpow.pop %v1391
      %v1393 = vmul.f32 %v1334, 1.442695
      %v1394 = vpow.pop %v1393
      %v1395 = vmul.f32 %v1335, 1.442695
      %v1396 = vpow.pop %v1395
      %v1397 = vmul.f32 %v1336, 1.442695
      %v1398 = vpow.pop %v1397
      %v1399 = vmul.f32 %v1337, 1.442695
      %v1400 = vpow.pop %v1399
      %v1401 = vmul.f32 %v1338, 1.442695
      %v1402 = vpow.pop %v1401
      %v1403 = vsel %vm1210, %v1340, 0.0
      %1404 = vadd.xlane.f32.xlu0 %v1403
      %v1405 = vpop.xlane.xlu0 %1404
      %v1406 = vsel %vm1210, %v1342, 0.0
      %1407 = vadd.xlane.f32.xlu0 %v1406
      %v1408 = vpop.xlane.xlu0 %1407
      %v1409 = vsel %vm1210, %v1344, 0.0
      %1410 = vadd.xlane.f32.xlu0 %v1409
      %v1411 = vpop.xlane.xlu0 %1410
      %v1412 = vsel %vm1210, %v1346, 0.0
      %1413 = vadd.xlane.f32.xlu0 %v1412
      %v1414 = vpop.xlane.xlu0 %1413
      %v1415 = vsel %vm1210, %v1348, 0.0
      %1416 = vadd.xlane.f32.xlu0 %v1415
      %v1417 = vpop.xlane.xlu0 %1416
      %v1418 = vsel %vm1210, %v1350, 0.0
      %1419 = vadd.xlane.f32.xlu0 %v1418
      %v1420 = vpop.xlane.xlu0 %1419
      %v1421 = vsel %vm1210, %v1352, 0.0
      %1422 = vadd.xlane.f32.xlu0 %v1421
      %v1423 = vpop.xlane.xlu0 %1422
      %v1424 = vsel %vm1210, %v1354, 0.0
      %1425 = vadd.xlane.f32.xlu0 %v1424
      %v1426 = vpop.xlane.xlu0 %1425
      %v1427 = vsel %vm1210, %v1356, 0.0
      %1428 = vadd.xlane.f32.xlu0 %v1427
      %v1429 = vpop.xlane.xlu0 %1428
      %v1430 = vsel %vm1210, %v1358, 0.0
      %1431 = vadd.xlane.f32.xlu0 %v1430
      %v1432 = vpop.xlane.xlu0 %1431
      %v1433 = vsel %vm1210, %v1360, 0.0
      %1434 = vadd.xlane.f32.xlu0 %v1433
      %v1435 = vpop.xlane.xlu0 %1434
      %v1436 = vsel %vm1210, %v1362, 0.0
      %1437 = vadd.xlane.f32.xlu0 %v1436
      %v1438 = vpop.xlane.xlu0 %1437
      %v1439 = vsel %vm1210, %v1364, 0.0
      %1440 = vadd.xlane.f32.xlu0 %v1439
      %v1441 = vpop.xlane.xlu0 %1440
      %v1442 = vsel %vm1210, %v1366, 0.0
      %1443 = vadd.xlane.f32.xlu0 %v1442
      %v1444 = vpop.xlane.xlu0 %1443
      %v1445 = vsel %vm1210, %v1368, 0.0
      %1446 = vadd.xlane.f32.xlu0 %v1445
      %v1447 = vpop.xlane.xlu0 %1446
      %v1448 = vsel %vm1210, %v1370, 0.0
      %1449 = vadd.xlane.f32.xlu0 %v1448
      %v1450 = vpop.xlane.xlu0 %1449
      %v1451 = vsel %vm1210, %v1372, 0.0
      %1452 = vadd.xlane.f32.xlu0 %v1451
      %v1453 = vpop.xlane.xlu0 %1452
      %v1454 = vsel %vm1210, %v1374, 0.0
      %1455 = vadd.xlane.f32.xlu0 %v1454
      %v1456 = vpop.xlane.xlu0 %1455
      %v1457 = vsel %vm1210, %v1376, 0.0
      %1458 = vadd.xlane.f32.xlu0 %v1457
      %v1459 = vpop.xlane.xlu0 %1458
      %v1460 = vsel %vm1210, %v1378, 0.0
      %1461 = vadd.xlane.f32.xlu0 %v1460
      %v1462 = vpop.xlane.xlu0 %1461
      %v1463 = vsel %vm1210, %v1380, 0.0
      %1464 = vadd.xlane.f32.xlu0 %v1463
      %v1465 = vpop.xlane.xlu0 %1464
      %v1466 = vsel %vm1210, %v1382, 0.0
      %1467 = vadd.xlane.f32.xlu0 %v1466
      %v1468 = vpop.xlane.xlu0 %1467
      %v1469 = vsel %vm1210, %v1384, 0.0
      %1470 = vadd.xlane.f32.xlu0 %v1469
      %v1471 = vpop.xlane.xlu0 %1470
      %v1472 = vsel %vm1210, %v1386, 0.0
      %1473 = vadd.xlane.f32.xlu0 %v1472
      %v1474 = vpop.xlane.xlu0 %1473
      %v1475 = vsel %vm1210, %v1388, 0.0
      %1476 = vadd.xlane.f32.xlu0 %v1475
      %v1477 = vpop.xlane.xlu0 %1476
      %v1478 = vsel %vm1210, %v1390, 0.0
      %1479 = vadd.xlane.f32.xlu0 %v1478
      %v1480 = vpop.xlane.xlu0 %1479
      %v1481 = vsel %vm1210, %v1392, 0.0
      %1482 = vadd.xlane.f32.xlu0 %v1481
      %v1483 = vpop.xlane.xlu0 %1482
      %v1484 = vsel %vm1210, %v1394, 0.0
      %1485 = vadd.xlane.f32.xlu0 %v1484
      %v1486 = vpop.xlane.xlu0 %1485
      %v1487 = vsel %vm1210, %v1396, 0.0
      %1488 = vadd.xlane.f32.xlu0 %v1487
      %v1489 = vpop.xlane.xlu0 %1488
      %v1490 = vsel %vm1210, %v1398, 0.0
      %1491 = vadd.xlane.f32.xlu0 %v1490
      %v1492 = vpop.xlane.xlu0 %1491
      %v1493 = vsel %vm1210, %v1400, 0.0
      %1494 = vadd.xlane.f32.xlu0 %v1493
      %v1495 = vpop.xlane.xlu0 %1494
      %v1496 = vsel %vm1210, %v1402, 0.0
      %1497 = vadd.xlane.f32.xlu0 %v1496
      %v1498 = vpop.xlane.xlu0 %1497
      %v1499 = vrcp.pop %v1405
      %v1500 = vrcp.pop %v1408
      %v1501 = vrcp.pop %v1411
      %v1502 = vrcp.pop %v1414
      %v1503 = vrcp.pop %v1417
      %v1504 = vrcp.pop %v1420
      %v1505 = vrcp.pop %v1423
      %v1506 = vrcp.pop %v1426
      %v1507 = vrcp.pop %v1429
      %v1508 = vrcp.pop %v1432
      %v1509 = vrcp.pop %v1435
      %v1510 = vrcp.pop %v1438
      %v1511 = vrcp.pop %v1441
      %v1512 = vrcp.pop %v1444
      %v1513 = vrcp.pop %v1447
      %v1514 = vrcp.pop %v1450
      %v1515 = vrcp.pop %v1453
      %v1516 = vrcp.pop %v1456
      %v1517 = vrcp.pop %v1459
      %v1518 = vrcp.pop %v1462
      %v1519 = vrcp.pop %v1465
      %v1520 = vrcp.pop %v1468
      %v1521 = vrcp.pop %v1471
      %v1522 = vrcp.pop %v1474
      %v1523 = vrcp.pop %v1477
      %v1524 = vrcp.pop %v1480
      %v1525 = vrcp.pop %v1483
      %v1526 = vrcp.pop %v1486
      %v1527 = vrcp.pop %v1489
      %v1528 = vrcp.pop %v1492
      %v1529 = vrcp.pop %v1495
      %v1530 = vrcp.pop %v1498
      %v1531 = vmul.f32 %v1340, %v1499
      %v1532 = vmul.f32 %v1342, %v1500
      %v1533 = vmul.f32 %v1344, %v1501
      %v1534 = vmul.f32 %v1346, %v1502
      %v1535 = vmul.f32 %v1348, %v1503
      %v1536 = vmul.f32 %v1350, %v1504
      %v1537 = vmul.f32 %v1352, %v1505
      %v1538 = vmul.f32 %v1354, %v1506
      %v1539 = vmul.f32 %v1356, %v1507
      %v1540 = vmul.f32 %v1358, %v1508
      %v1541 = vmul.f32 %v1360, %v1509
      %v1542 = vmul.f32 %v1362, %v1510
      %v1543 = vmul.f32 %v1364, %v1511
      %v1544 = vmul.f32 %v1366, %v1512
      %v1545 = vmul.f32 %v1368, %v1513
      %v1546 = vmul.f32 %v1370, %v1514
      %v1547 = vmul.f32 %v1372, %v1515
      %v1548 = vmul.f32 %v1374, %v1516
      %v1549 = vmul.f32 %v1376, %v1517
      %v1550 = vmul.f32 %v1378, %v1518
      %v1551 = vmul.f32 %v1380, %v1519
      %v1552 = vmul.f32 %v1382, %v1520
      %v1553 = vmul.f32 %v1384, %v1521
      %v1554 = vmul.f32 %v1386, %v1522
      %v1555 = vmul.f32 %v1388, %v1523
      %v1556 = vmul.f32 %v1390, %v1524
      %v1557 = vmul.f32 %v1392, %v1525
      %v1558 = vmul.f32 %v1394, %v1526
      %v1559 = vmul.f32 %v1396, %v1527
      %v1560 = vmul.f32 %v1398, %v1528
      %v1561 = vmul.f32 %v1400, %v1529
      %v1562 = vmul.f32 %v1402, %v1530
      %1563 = vrot.lane.b32.xlu0 %v467, 88
      %v1564 = vpop.permute.xlu0 %1563
      %1565 = vrot.lane.b32.xlu0 %v472, 88
      %v1566 = vpop.permute.xlu0 %1565
      %1567 = vrot.lane.b32.xlu0 %v507, 88
      %v1568 = vpop.permute.xlu0 %1567
      %1569 = vrot.lane.b32.xlu0 %v512, 88
      %v1570 = vpop.permute.xlu0 %1569
      %1571 = vrot.lane.b32.xlu0 %v547, 88
      %v1572 = vpop.permute.xlu0 %1571
      %1573 = vrot.lane.b32.xlu0 %v552, 88
      %v1574 = vpop.permute.xlu0 %1573
      %1575 = vrot.lane.b32.xlu0 %v587, 88
      %v1576 = vpop.permute.xlu0 %1575
      %1577 = vrot.lane.b32.xlu0 %v592, 88
      %v1578 = vpop.permute.xlu0 %1577
      %v1579 = vsel %vm667, %v1564, 0
      %v1581 = vsel %vm667, %v1566, 0
      %v1583 = vsel %vm667, %v1568, 0
      %v1585 = vsel %vm667, %v1570, 0
      %v1587 = vsel %vm667, %v1572, 0
      %v1589 = vsel %vm667, %v1574, 0
      %v1591 = vsel %vm667, %v1576, 0
      %v1593 = vsel %vm667, %v1578, 0
      %1595 = vmatprep.subr.mxu0 0.0
      %1596 = vmatpush1.msra.mxu0 %v657
      %1597 = vmatprep.subr.mxu0 0.0
      %1598 = vmatpush1.msra.mxu0 0.0
      %1599 = vmatprep.subr.mxu0 0.0
      %1600 = vmatpush1.msra.mxu0 0.0
      %1601 = vmatprep.subr.mxu0 0.0
      %1602 = vmatpush1.msra.mxu0 0.0
      %1603 = vmatprep.subr.mxu0 0.0
      %1604 = vmatpush1.msra.mxu0 0.0
      %1605 = vmatprep.subr.mxu0 0.0
      %1606 = vmatpush1.msra.mxu0 0.0
      %1607 = vmatprep.subr.mxu0 0.0
      %1608 = vmatpush1.msra.mxu0 0.0
      %1609 = vmatprep.subr.mxu0 0.0
      %1610 = vmatpush1.msra.mxu0 0.0
      %1611 = vmatprep.subr.mxu0 0.0
      %1612 = vmatpush1.msra.mxu0 0.0
      %1613 = vmatprep.subr.mxu0 0.0
      %1614 = vmatpush1.msra.mxu0 0.0
      %1615 = vmatprep.subr.mxu0 0.0
      %1616 = vmatpush1.msra.mxu0 0.0
      %1617 = vmatprep.subr.mxu0 0.0
      %1618 = vmatpush1.msra.mxu0 0.0
      %1619 = vmatprep.subr.mxu0 0.0
      %1620 = vmatpush1.msra.mxu0 0.0
      %1621 = vmatprep.subr.mxu0 0.0
      %1622 = vmatpush1.msra.mxu0 0.0
      %1623 = vmatprep.subr.mxu0 0.0
      %1624 = vmatpush1.msra.mxu0 0.0
      %1625 = vmatprep.subr.mxu0 0.0
      %1626 = vmatpush1.msra.mxu0 0.0
      %1627 = vmatprep.subr.mxu0 0.0
      %1628 = vmatpush1.msra.mxu0 0.0
      %1629 = vmatprep.subr.mxu0 0.0
      %1630 = vmatpush1.msra.mxu0 0.0
      %1631 = vmatprep.subr.mxu0 0.0
      %1632 = vmatpush1.msra.mxu0 0.0
      %1633 = vmatprep.subr.mxu0 0.0
      %1634 = vmatpush1.msra.mxu0 0.0
      %1635 = vmatprep.subr.mxu0 0.0
      %1636 = vmatpush1.msra.mxu0 0.0
      %1637 = vmatprep.subr.mxu0 0.0
      %1638 = vmatpush1.msra.mxu0 0.0
      %1639 = vmatprep.subr.mxu0 0.0
      %1640 = vmatpush1.msra.mxu0 0.0
      %1641 = vmatprep.subr.mxu0 0.0
      %1642 = vmatpush1.msra.mxu0 0.0
      %1643 = vmatprep.subr.mxu0 0.0
      %1644 = vmatpush1.msra.mxu0 0.0
      %1645 = vmatprep.subr.mxu0 0.0
      %1646 = vmatpush1.msra.mxu0 0.0
      %1647 = vmatprep.subr.mxu0 0.0
      %1648 = vmatpush1.msra.mxu0 0.0
      %1649 = vmatprep.subr.mxu0 0.0
      %1650 = vmatpush1.msra.mxu0 0.0
      %1651 = vmatprep.subr.mxu0 0.0
      %1652 = vmatpush1.msra.mxu0 0.0
      %1653 = vmatprep.subr.mxu0 0.0
      %1654 = vmatpush1.msra.mxu0 0.0
      %1655 = vmatprep.subr.mxu0 0.0
      %1656 = vmatpush1.msra.mxu0 0.0
      %1657 = vmatprep.subr.mxu0 0.0
      %1658 = vmatpush1.msra.mxu0 0.0
      %1659 = vmatprep.mubr.f32.mxu0 0.0
      %1660 = vmatmul.mubr.f32.gmra.mrb[0].mxu0 %v1579
      %v1661 = vpop.f32.mrb[0].mxu0
      %v1662 = vadd.f32 0.0, %v1661
      %v1663 = vpop.f32.mrb[0].mxu0
      %1664 = vmatprep.mubr.f32.mxu0 0.0
      %1665 = vmatmul.mubr.f32.gmra.mrb[0].mxu0 %v1581
      %v1666 = vpop.f32.mrb[0].mxu0
      %v1667 = vadd.f32 0.0, %v1666
      %v1668 = vpop.f32.mrb[0].mxu0
      %1669 = vmatprep.mubr.f32.mxu0 0.0
      %1670 = vmatmul.mubr.f32.gmra.mrb[0].mxu0 %v1583
      %v1671 = vpop.f32.mrb[0].mxu0
      %v1672 = vadd.f32 0.0, %v1671
      %v1673 = vpop.f32.mrb[0].mxu0
      %1674 = vmatprep.mubr.f32.mxu0 0.0
      %1675 = vmatmul.mubr.f32.gmra.mrb[0].mxu0 %v1585
      %v1676 = vpop.f32.mrb[0].mxu0
      %v1677 = vadd.f32 0.0, %v1676
      %v1678 = vpop.f32.mrb[0].mxu0
      %1679 = vmatprep.mubr.f32.mxu0 0.0
      %1680 = vmatmul.mubr.f32.gmra.mrb[0].mxu0 %v1587
      %v1681 = vpop.f32.mrb[0].mxu0
      %v1682 = vadd.f32 0.0, %v1681
      %v1683 = vpop.f32.mrb[0].mxu0
      %1684 = vmatprep.mubr.f32.mxu0 0.0
      %1685 = vmatmul.mubr.f32.gmra.mrb[0].mxu0 %v1589
      %v1686 = vpop.f32.mrb[0].mxu0
      %v1687 = vadd.f32 0.0, %v1686
      %v1688 = vpop.f32.mrb[0].mxu0
      %1689 = vmatprep.mubr.f32.mxu0 0.0
      %1690 = vmatmul.mubr.f32.gmra.mrb[0].mxu0 %v1591
      %v1691 = vpop.f32.mrb[0].mxu0
      %v1692 = vadd.f32 0.0, %v1691
      %v1693 = vpop.f32.mrb[0].mxu0
      %1694 = vmatprep.mubr.f32.mxu0 0.0
      %1695 = vmatmul.mubr.f32.gmra.mrb[0].mxu0 %v1593
      %v1696 = vpop.f32.mrb[0].mxu0
      %v1697 = vadd.f32 0.0, %v1696
      %v1698 = vpop.f32.mrb[0].mxu0
      %1699 = vdwg.mxu0
      %1700 = vrot.lane.b32.xlu0 %v467, 120
      %v1701 = vpop.permute.xlu0 %1700
      %1702 = vrot.lane.b32.xlu0 %v472, 120
      %v1703 = vpop.permute.xlu0 %1702
      %1704 = vrot.lane.b32.xlu0 %v477, 120
      %v1705 = vpop.permute.xlu0 %1704
      %1706 = vrot.lane.b32.xlu0 %v482, 120
      %v1707 = vpop.permute.xlu0 %1706
      %1708 = vrot.lane.b32.xlu0 %v487, 120
      %v1709 = vpop.permute.xlu0 %1708
      %1710 = vrot.lane.b32.xlu0 %v492, 120
      %v1711 = vpop.permute.xlu0 %1710
      %1712 = vrot.lane.b32.xlu0 %v497, 120
      %v1713 = vpop.permute.xlu0 %1712
      %1714 = vrot.lane.b32.xlu0 %v502, 120
      %v1715 = vpop.permute.xlu0 %1714
      %1716 = vrot.lane.b32.xlu0 %v477, 96
      %v1717 = vpop.permute.xlu0 %1716
      %1718 = vrot.lane.b32.xlu0 %v482, 96
      %v1719 = vpop.permute.xlu0 %1718
      %v1720 = vsel %vm667, %v1701, 0
      %v1722 = vsel %vm667, %v1703, 0
      %v1724 = vsel %vm667, %v1705, 0
      %v1726 = vsel %vm667, %v1707, 0
      %v1728 = vsel %vm667, %v1709, 0
      %v1730 = vsel %vm667, %v1711, 0
      %v1732 = vsel %vm667, %v1713, 0
      %v1734 = vsel %vm667, %v1715, 0
      %v1736 = vsel %vm667, %v1717, 0
      %v1738 = vsel %vm667, %v1719, 0
      %1740 = vmatprep.subr.mxu0 0.0
      %1741 = vmatpush1.xpose.msra.mxu0 %v1736
      %1742 = vmatprep.subr.mxu0 0.0
      %1743 = vmatpush1.xpose.msra.mxu0 %v1738
      %1744 = vmatprep.subr.mxu0 0.0
      %1745 = vmatpush1.xpose.msra.mxu0 0.0
      %1746 = vmatprep.subr.mxu0 0.0
      %1747 = vmatpush1.xpose.msra.mxu0 0.0
      %1748 = vmatprep.subr.mxu0 0.0
      %1749 = vmatpush1.xpose.msra.mxu0 0.0
      %1750 = vmatprep.subr.mxu0 0.0
      %1751 = vmatpush1.xpose.msra.mxu0 0.0
      %1752 = vmatprep.subr.mxu0 0.0
      %1753 = vmatpush1.xpose.msra.mxu0 0.0
      %1754 = vmatprep.subr.mxu0 0.0
      %1755 = vmatpush1.xpose.msra.mxu0 0.0
      %1756 = vmatprep.subr.mxu0 0.0
      %1757 = vmatpush1.xpose.msra.mxu0 0.0
      %1758 = vmatprep.subr.mxu0 0.0
      %1759 = vmatpush1.xpose.msra.mxu0 0.0
      %1760 = vmatprep.subr.mxu0 0.0
      %1761 = vmatpush1.xpose.msra.mxu0 0.0
      %1762 = vmatprep.subr.mxu0 0.0
      %1763 = vmatpush1.xpose.msra.mxu0 0.0
      %1764 = vmatprep.subr.mxu0 0.0
      %1765 = vmatpush1.xpose.msra.mxu0 0.0
      %1766 = vmatprep.subr.mxu0 0.0
      %1767 = vmatpush1.xpose.msra.mxu0 0.0
      %1768 = vmatprep.subr.mxu0 0.0
      %1769 = vmatpush1.xpose.msra.mxu0 0.0
      %1770 = vmatprep.subr.mxu0 0.0
      %1771 = vmatpush1.xpose.msra.mxu0 0.0
      %1772 = vmatprep.subr.mxu0 0.0
      %1773 = vmatpush1.xpose.msra.mxu0 0.0
      %1774 = vmatprep.subr.mxu0 0.0
      %1775 = vmatpush1.xpose.msra.mxu0 0.0
      %1776 = vmatprep.subr.mxu0 0.0
      %1777 = vmatpush1.xpose.msra.mxu0 0.0
      %1778 = vmatprep.subr.mxu0 0.0
      %1779 = vmatpush1.xpose.msra.mxu0 0.0
      %1780 = vmatprep.subr.mxu0 0.0
      %1781 = vmatpush1.xpose.msra.mxu0 0.0
      %1782 = vmatprep.subr.mxu0 0.0
      %1783 = vmatpush1.xpose.msra.mxu0 0.0
      %1784 = vmatprep.subr.mxu0 0.0
      %1785 = vmatpush1.xpose.msra.mxu0 0.0
      %1786 = vmatprep.subr.mxu0 0.0
      %1787 = vmatpush1.xpose.msra.mxu0 0.0
      %1788 = vmatprep.subr.mxu0 0.0
      %1789 = vmatpush1.xpose.msra.mxu0 0.0
      %1790 = vmatprep.subr.mxu0 0.0
      %1791 = vmatpush1.xpose.msra.mxu0 0.0
      %1792 = vmatprep.subr.mxu0 0.0
      %1793 = vmatpush1.xpose.msra.mxu0 0.0
      %1794 = vmatprep.subr.mxu0 0.0
      %1795 = vmatpush1.xpose.msra.mxu0 0.0
      %1796 = vmatprep.subr.mxu0 0.0
      %1797 = vmatpush1.xpose.msra.mxu0 0.0
      %1798 = vmatprep.subr.mxu0 0.0
      %1799 = vmatpush1.xpose.msra.mxu0 0.0
      %1800 = vmatprep.subr.mxu0 0.0
      %1801 = vmatpush1.xpose.msra.mxu0 0.0
      %1802 = vmatprep.subr.mxu0 0.0
      %1803 = vmatpush1.xpose.msra.mxu0 0.0
      %1804 = vmatprep.mubr.f32.mxu0 0.0
      %1805 = vmatmul.mubr.f32.gmra.mrb[0].mxu0 %v1720
      %v1806 = vpop.f32.mrb[0].mxu0
      %v1807 = vadd.f32 %v633, %v1806
      %v1808 = vpop.f32.mrb[0].mxu0
      %1809 = vmatprep.mubr.f32.mxu0 0.0
      %1810 = vmatmul.mubr.f32.gmra.mrb[0].mxu0 %v1722
      %v1811 = vpop.f32.mrb[0].mxu0
      %v1812 = vadd.f32 %v634, %v1811
      %v1813 = vpop.f32.mrb[0].mxu0
      %1814 = vmatprep.mubr.f32.mxu0 0.0
      %1815 = vmatmul.mubr.f32.gmra.mrb[0].mxu0 %v1724
      %v1816 = vpop.f32.mrb[0].mxu0
      %v1817 = vadd.f32 %v635, %v1816
      %v1818 = vpop.f32.mrb[0].mxu0
      %1819 = vmatprep.mubr.f32.mxu0 0.0
      %1820 = vmatmul.mubr.f32.gmra.mrb[0].mxu0 %v1726
      %v1821 = vpop.f32.mrb[0].mxu0
      %v1822 = vadd.f32 %v636, %v1821
      %v1823 = vpop.f32.mrb[0].mxu0
      %1824 = vmatprep.mubr.f32.mxu0 0.0
      %1825 = vmatmul.mubr.f32.gmra.mrb[0].mxu0 %v1728
      %v1826 = vpop.f32.mrb[0].mxu0
      %v1827 = vadd.f32 %v637, %v1826
      %v1828 = vpop.f32.mrb[0].mxu0
      %1829 = vmatprep.mubr.f32.mxu0 0.0
      %1830 = vmatmul.mubr.f32.gmra.mrb[0].mxu0 %v1730
      %v1831 = vpop.f32.mrb[0].mxu0
      %v1832 = vadd.f32 %v638, %v1831
      %v1833 = vpop.f32.mrb[0].mxu0
      %1834 = vmatprep.mubr.f32.mxu0 0.0
      %1835 = vmatmul.mubr.f32.gmra.mrb[0].mxu0 %v1732
      %v1836 = vpop.f32.mrb[0].mxu0
      %v1837 = vadd.f32 %v639, %v1836
      %v1838 = vpop.f32.mrb[0].mxu0
      %1839 = vmatprep.mubr.f32.mxu0 0.0
      %1840 = vmatmul.mubr.f32.gmra.mrb[0].mxu0 %v1734
      %v1841 = vpop.f32.mrb[0].mxu0
      %v1842 = vadd.f32 %v640, %v1841
      %v1843 = vpop.f32.mrb[0].mxu0
      %1844 = vdwg.mxu0
      %1845 = vrot.lane.b32.xlu0 %v507, 120
      %v1846 = vpop.permute.xlu0 %1845
      %1847 = vrot.lane.b32.xlu0 %v512, 120
      %v1848 = vpop.permute.xlu0 %1847
      %1849 = vrot.lane.b32.xlu0 %v517, 120
      %v1850 = vpop.permute.xlu0 %1849
      %1851 = vrot.lane.b32.xlu0 %v522, 120
      %v1852 = vpop.permute.xlu0 %1851
      %1853 = vrot.lane.b32.xlu0 %v527, 120
      %v1854 = vpop.permute.xlu0 %1853
      %1855 = vrot.lane.b32.xlu0 %v532, 120
      %v1856 = vpop.permute.xlu0 %1855
      %1857 = vrot.lane.b32.xlu0 %v537, 120
      %v1858 = vpop.permute.xlu0 %1857
      %1859 = vrot.lane.b32.xlu0 %v542, 120
      %v1860 = vpop.permute.xlu0 %1859
      %1861 = vrot.lane.b32.xlu0 %v517, 96
      %v1862 = vpop.permute.xlu0 %1861
      %1863 = vrot.lane.b32.xlu0 %v522, 96
      %v1864 = vpop.permute.xlu0 %1863
      %v1865 = vsel %vm667, %v1846, 0
      %v1867 = vsel %vm667, %v1848, 0
      %v1869 = vsel %vm667, %v1850, 0
      %v1871 = vsel %vm667, %v1852, 0
      %v1873 = vsel %vm667, %v1854, 0
      %v1875 = vsel %vm667, %v1856, 0
      %v1877 = vsel %vm667, %v1858, 0
      %v1879 = vsel %vm667, %v1860, 0
      %v1881 = vsel %vm667, %v1862, 0
      %v1883 = vsel %vm667, %v1864, 0
      %1885 = vmatprep.subr.mxu0 0.0
      %1886 = vmatpush1.xpose.msra.mxu0 %v1881
      %1887 = vmatprep.subr.mxu0 0.0
      %1888 = vmatpush1.xpose.msra.mxu0 %v1883
      %1889 = vmatprep.subr.mxu0 0.0
      %1890 = vmatpush1.xpose.msra.mxu0 0.0
      %1891 = vmatprep.subr.mxu0 0.0
      %1892 = vmatpush1.xpose.msra.mxu0 0.0
      %1893 = vmatprep.subr.mxu0 0.0
      %1894 = vmatpush1.xpose.msra.mxu0 0.0
      %1895 = vmatprep.subr.mxu0 0.0
      %1896 = vmatpush1.xpose.msra.mxu0 0.0
      %1897 = vmatprep.subr.mxu0 0.0
      %1898 = vmatpush1.xpose.msra.mxu0 0.0
      %1899 = vmatprep.subr.mxu0 0.0
      %1900 = vmatpush1.xpose.msra.mxu0 0.0
      %1901 = vmatprep.subr.mxu0 0.0
      %1902 = vmatpush1.xpose.msra.mxu0 0.0
      %1903 = vmatprep.subr.mxu0 0.0
      %1904 = vmatpush1.xpose.msra.mxu0 0.0
      %1905 = vmatprep.subr.mxu0 0.0
      %1906 = vmatpush1.xpose.msra.mxu0 0.0
      %1907 = vmatprep.subr.mxu0 0.0
      %1908 = vmatpush1.xpose.msra.mxu0 0.0
      %1909 = vmatprep.subr.mxu0 0.0
      %1910 = vmatpush1.xpose.msra.mxu0 0.0
      %1911 = vmatprep.subr.mxu0 0.0
      %1912 = vmatpush1.xpose.msra.mxu0 0.0
      %1913 = vmatprep.subr.mxu0 0.0
      %1914 = vmatpush1.xpose.msra.mxu0 0.0
      %1915 = vmatprep.subr.mxu0 0.0
      %1916 = vmatpush1.xpose.msra.mxu0 0.0
      %1917 = vmatprep.subr.mxu0 0.0
      %1918 = vmatpush1.xpose.msra.mxu0 0.0
      %1919 = vmatprep.subr.mxu0 0.0
      %1920 = vmatpush1.xpose.msra.mxu0 0.0
      %1921 = vmatprep.subr.mxu0 0.0
      %1922 = vmatpush1.xpose.msra.mxu0 0.0
      %1923 = vmatprep.subr.mxu0 0.0
      %1924 = vmatpush1.xpose.msra.mxu0 0.0
      %1925 = vmatprep.subr.mxu0 0.0
      %1926 = vmatpush1.xpose.msra.mxu0 0.0
      %1927 = vmatprep.subr.mxu0 0.0
      %1928 = vmatpush1.xpose.msra.mxu0 0.0
      %1929 = vmatprep.subr.mxu0 0.0
      %1930 = vmatpush1.xpose.msra.mxu0 0.0
      %1931 = vmatprep.subr.mxu0 0.0
      %1932 = vmatpush1.xpose.msra.mxu0 0.0
      %1933 = vmatprep.subr.mxu0 0.0
      %1934 = vmatpush1.xpose.msra.mxu0 0.0
      %1935 = vmatprep.subr.mxu0 0.0
      %1936 = vmatpush1.xpose.msra.mxu0 0.0
      %1937 = vmatprep.subr.mxu0 0.0
      %1938 = vmatpush1.xpose.msra.mxu0 0.0
      %1939 = vmatprep.subr.mxu0 0.0
      %1940 = vmatpush1.xpose.msra.mxu0 0.0
      %1941 = vmatprep.subr.mxu0 0.0
      %1942 = vmatpush1.xpose.msra.mxu0 0.0
      %1943 = vmatprep.subr.mxu0 0.0
      %1944 = vmatpush1.xpose.msra.mxu0 0.0
      %1945 = vmatprep.subr.mxu0 0.0
      %1946 = vmatpush1.xpose.msra.mxu0 0.0
      %1947 = vmatprep.subr.mxu0 0.0
      %1948 = vmatpush1.xpose.msra.mxu0 0.0
      %1949 = vmatprep.mubr.f32.mxu0 0.0
      %1950 = vmatmul.mubr.f32.gmra.mrb[0].mxu0 %v1865
      %v1951 = vpop.f32.mrb[0].mxu0
      %v1952 = vadd.f32 %v633, %v1951
      %v1953 = vpop.f32.mrb[0].mxu0
      %1954 = vmatprep.mubr.f32.mxu0 0.0
      %1955 = vmatmul.mubr.f32.gmra.mrb[0].mxu0 %v1867
      %v1956 = vpop.f32.mrb[0].mxu0
      %v1957 = vadd.f32 %v634, %v1956
      %v1958 = vpop.f32.mrb[0].mxu0
      %1959 = vmatprep.mubr.f32.mxu0 0.0
      %1960 = vmatmul.mubr.f32.gmra.mrb[0].mxu0 %v1869
      %v1961 = vpop.f32.mrb[0].mxu0
      %v1962 = vadd.f32 %v635, %v1961
      %v1963 = vpop.f32.mrb[0].mxu0
      %1964 = vmatprep.mubr.f32.mxu0 0.0
      %1965 = vmatmul.mubr.f32.gmra.mrb[0].mxu0 %v1871
      %v1966 = vpop.f32.mrb[0].mxu0
      %v1967 = vadd.f32 %v636, %v1966
      %v1968 = vpop.f32.mrb[0].mxu0
      %1969 = vmatprep.mubr.f32.mxu0 0.0
      %1970 = vmatmul.mubr.f32.gmra.mrb[0].mxu0 %v1873
      %v1971 = vpop.f32.mrb[0].mxu0
      %v1972 = vadd.f32 %v637, %v1971
      %v1973 = vpop.f32.mrb[0].mxu0
      %1974 = vmatprep.mubr.f32.mxu0 0.0
      %1975 = vmatmul.mubr.f32.gmra.mrb[0].mxu0 %v1875
      %v1976 = vpop.f32.mrb[0].mxu0
      %v1977 = vadd.f32 %v638, %v1976
      %v1978 = vpop.f32.mrb[0].mxu0
      %1979 = vmatprep.mubr.f32.mxu0 0.0
      %1980 = vmatmul.mubr.f32.gmra.mrb[0].mxu0 %v1877
      %v1981 = vpop.f32.mrb[0].mxu0
      %v1982 = vadd.f32 %v639, %v1981
      %v1983 = vpop.f32.mrb[0].mxu0
      %1984 = vmatprep.mubr.f32.mxu0 0.0
      %1985 = vmatmul.mubr.f32.gmra.mrb[0].mxu0 %v1879
      %v1986 = vpop.f32.mrb[0].mxu0
      %v1987 = vadd.f32 %v640, %v1986
      %v1988 = vpop.f32.mrb[0].mxu0
      %1989 = vdwg.mxu0
      %1990 = vrot.lane.b32.xlu0 %v547, 120
      %v1991 = vpop.permute.xlu0 %1990
      %1992 = vrot.lane.b32.xlu0 %v552, 120
      %v1993 = vpop.permute.xlu0 %1992
      %1994 = vrot.lane.b32.xlu0 %v557, 120
      %v1995 = vpop.permute.xlu0 %1994
      %1996 = vrot.lane.b32.xlu0 %v562, 120
      %v1997 = vpop.permute.xlu0 %1996
      %1998 = vrot.lane.b32.xlu0 %v567, 120
      %v1999 = vpop.permute.xlu0 %1998
      %2000 = vrot.lane.b32.xlu0 %v572, 120
      %v2001 = vpop.permute.xlu0 %2000
      %2002 = vrot.lane.b32.xlu0 %v577, 120
      %v2003 = vpop.permute.xlu0 %2002
      %2004 = vrot.lane.b32.xlu0 %v582, 120
      %v2005 = vpop.permute.xlu0 %2004
      %2006 = vrot.lane.b32.xlu0 %v557, 96
      %v2007 = vpop.permute.xlu0 %2006
      %2008 = vrot.lane.b32.xlu0 %v562, 96
      %v2009 = vpop.permute.xlu0 %2008
      %v2010 = vsel %vm667, %v1991, 0
      %v2012 = vsel %vm667, %v1993, 0
      %v2014 = vsel %vm667, %v1995, 0
      %v2016 = vsel %vm667, %v1997, 0
      %v2018 = vsel %vm667, %v1999, 0
      %v2020 = vsel %vm667, %v2001, 0
      %v2022 = vsel %vm667, %v2003, 0
      %v2024 = vsel %vm667, %v2005, 0
      %v2026 = vsel %vm667, %v2007, 0
      %v2028 = vsel %vm667, %v2009, 0
      %2030 = vmatprep.subr.mxu0 0.0
      %2031 = vmatpush1.xpose.msra.mxu0 %v2026
      %2032 = vmatprep.subr.mxu0 0.0
      %2033 = vmatpush1.xpose.msra.mxu0 %v2028
      %2034 = vmatprep.subr.mxu0 0.0
      %2035 = vmatpush1.xpose.msra.mxu0 0.0
      %2036 = vmatprep.subr.mxu0 0.0
      %2037 = vmatpush1.xpose.msra.mxu0 0.0
      %2038 = vmatprep.subr.mxu0 0.0
      %2039 = vmatpush1.xpose.msra.mxu0 0.0
      %2040 = vmatprep.subr.mxu0 0.0
      %2041 = vmatpush1.xpose.msra.mxu0 0.0
      %2042 = vmatprep.subr.mxu0 0.0
      %2043 = vmatpush1.xpose.msra.mxu0 0.0
      %2044 = vmatprep.subr.mxu0 0.0
      %2045 = vmatpush1.xpose.msra.mxu0 0.0
      %2046 = vmatprep.subr.mxu0 0.0
      %2047 = vmatpush1.xpose.msra.mxu0 0.0
      %2048 = vmatprep.subr.mxu0 0.0
      %2049 = vmatpush1.xpose.msra.mxu0 0.0
      %2050 = vmatprep.subr.mxu0 0.0
      %2051 = vmatpush1.xpose.msra.mxu0 0.0
      %2052 = vmatprep.subr.mxu0 0.0
      %2053 = vmatpush1.xpose.msra.mxu0 0.0
      %2054 = vmatprep.subr.mxu0 0.0
      %2055 = vmatpush1.xpose.msra.mxu0 0.0
      %2056 = vmatprep.subr.mxu0 0.0
      %2057 = vmatpush1.xpose.msra.mxu0 0.0
      %2058 = vmatprep.subr.mxu0 0.0
      %2059 = vmatpush1.xpose.msra.mxu0 0.0
      %2060 = vmatprep.subr.mxu0 0.0
      %2061 = vmatpush1.xpose.msra.mxu0 0.0
      %2062 = vmatprep.subr.mxu0 0.0
      %2063 = vmatpush1.xpose.msra.mxu0 0.0
      %2064 = vmatprep.subr.mxu0 0.0
      %2065 = vmatpush1.xpose.msra.mxu0 0.0
      %2066 = vmatprep.subr.mxu0 0.0
      %2067 = vmatpush1.xpose.msra.mxu0 0.0
      %2068 = vmatprep.subr.mxu0 0.0
      %2069 = vmatpush1.xpose.msra.mxu0 0.0
      %2070 = vmatprep.subr.mxu0 0.0
      %2071 = vmatpush1.xpose.msra.mxu0 0.0
      %2072 = vmatprep.subr.mxu0 0.0
      %2073 = vmatpush1.xpose.msra.mxu0 0.0
      %2074 = vmatprep.subr.mxu0 0.0
      %2075 = vmatpush1.xpose.msra.mxu0 0.0
      %2076 = vmatprep.subr.mxu0 0.0
      %2077 = vmatpush1.xpose.msra.mxu0 0.0
      %2078 = vmatprep.subr.mxu0 0.0
      %2079 = vmatpush1.xpose.msra.mxu0 0.0
      %2080 = vmatprep.subr.mxu0 0.0
      %2081 = vmatpush1.xpose.msra.mxu0 0.0
      %2082 = vmatprep.subr.mxu0 0.0
      %2083 = vmatpush1.xpose.msra.mxu0 0.0
      %2084 = vmatprep.subr.mxu0 0.0
      %2085 = vmatpush1.xpose.msra.mxu0 0.0
      %2086 = vmatprep.subr.mxu0 0.0
      %2087 = vmatpush1.xpose.msra.mxu0 0.0
      %2088 = vmatprep.subr.mxu0 0.0
      %2089 = vmatpush1.xpose.msra.mxu0 0.0
      %2090 = vmatprep.subr.mxu0 0.0
      %2091 = vmatpush1.xpose.msra.mxu0 0.0
      %2092 = vmatprep.subr.mxu0 0.0
      %2093 = vmatpush1.xpose.msra.mxu0 0.0
      %2094 = vmatprep.mubr.f32.mxu0 0.0
      %2095 = vmatmul.mubr.f32.gmra.mrb[0].mxu0 %v2010
      %v2096 = vpop.f32.mrb[0].mxu0
      %v2097 = vadd.f32 %v633, %v2096
      %v2098 = vpop.f32.mrb[0].mxu0
      %2099 = vmatprep.mubr.f32.mxu0 0.0
      %2100 = vmatmul.mubr.f32.gmra.mrb[0].mxu0 %v2012
      %v2101 = vpop.f32.mrb[0].mxu0
      %v2102 = vadd.f32 %v634, %v2101
      %v2103 = vpop.f32.mrb[0].mxu0
      %2104 = vmatprep.mubr.f32.mxu0 0.0
      %2105 = vmatmul.mubr.f32.gmra.mrb[0].mxu0 %v2014
      %v2106 = vpop.f32.mrb[0].mxu0
      %v2107 = vadd.f32 %v635, %v2106
      %v2108 = vpop.f32.mrb[0].mxu0
      %2109 = vmatprep.mubr.f32.mxu0 0.0
      %2110 = vmatmul.mubr.f32.gmra.mrb[0].mxu0 %v2016
      %v2111 = vpop.f32.mrb[0].mxu0
      %v2112 = vadd.f32 %v636, %v2111
      %v2113 = vpop.f32.mrb[0].mxu0
      %2114 = vmatprep.mubr.f32.mxu0 0.0
      %2115 = vmatmul.mubr.f32.gmra.mrb[0].mxu0 %v2018
      %v2116 = vpop.f32.mrb[0].mxu0
      %v2117 = vadd.f32 %v637, %v2116
      %v2118 = vpop.f32.mrb[0].mxu0
      %2119 = vmatprep.mubr.f32.mxu0 0.0
      %2120 = vmatmul.mubr.f32.gmra.mrb[0].mxu0 %v2020
      %v2121 = vpop.f32.mrb[0].mxu0
      %v2122 = vadd.f32 %v638, %v2121
      %v2123 = vpop.f32.mrb[0].mxu0
      %2124 = vmatprep.mubr.f32.mxu0 0.0
      %2125 = vmatmul.mubr.f32.gmra.mrb[0].mxu0 %v2022
      %v2126 = vpop.f32.mrb[0].mxu0
      %v2127 = vadd.f32 %v639, %v2126
      %v2128 = vpop.f32.mrb[0].mxu0
      %2129 = vmatprep.mubr.f32.mxu0 0.0
      %2130 = vmatmul.mubr.f32.gmra.mrb[0].mxu0 %v2024
      %v2131 = vpop.f32.mrb[0].mxu0
      %v2132 = vadd.f32 %v640, %v2131
      %v2133 = vpop.f32.mrb[0].mxu0
      %2134 = vdwg.mxu0
      %2135 = vrot.lane.b32.xlu0 %v587, 120
      %v2136 = vpop.permute.xlu0 %2135
      %2137 = vrot.lane.b32.xlu0 %v592, 120
      %v2138 = vpop.permute.xlu0 %2137
      %2139 = vrot.lane.b32.xlu0 %v597, 120
      %v2140 = vpop.permute.xlu0 %2139
      %2141 = vrot.lane.b32.xlu0 %v602, 120
      %v2142 = vpop.permute.xlu0 %2141
      %2143 = vrot.lane.b32.xlu0 %v607, 120
      %v2144 = vpop.permute.xlu0 %2143
      %2145 = vrot.lane.b32.xlu0 %v612, 120
      %v2146 = vpop.permute.xlu0 %2145
      %2147 = vrot.lane.b32.xlu0 %v617, 120
      %v2148 = vpop.permute.xlu0 %2147
      %2149 = vrot.lane.b32.xlu0 %v622, 120
      %v2150 = vpop.permute.xlu0 %2149
      %2151 = vrot.lane.b32.xlu0 %v597, 96
      %v2152 = vpop.permute.xlu0 %2151
      %2153 = vrot.lane.b32.xlu0 %v602, 96
      %v2154 = vpop.permute.xlu0 %2153
      %v2155 = vsel %vm667, %v2136, 0
      %v2157 = vsel %vm667, %v2138, 0
      %v2159 = vsel %vm667, %v2140, 0
      %v2161 = vsel %vm667, %v2142, 0
      %v2163 = vsel %vm667, %v2144, 0
      %v2165 = vsel %vm667, %v2146, 0
      %v2167 = vsel %vm667, %v2148, 0
      %v2169 = vsel %vm667, %v2150, 0
      %v2171 = vsel %vm667, %v2152, 0
      %v2173 = vsel %vm667, %v2154, 0
      %2175 = vmatprep.subr.mxu0 0.0
      %2176 = vmatpush1.xpose.msra.mxu0 %v2171
      %2177 = vmatprep.subr.mxu0 0.0
      %2178 = vmatpush1.xpose.msra.mxu0 %v2173
      %2179 = vmatprep.subr.mxu0 0.0
      %2180 = vmatpush1.xpose.msra.mxu0 0.0
      %2181 = vmatprep.subr.mxu0 0.0
      %2182 = vmatpush1.xpose.msra.mxu0 0.0
      %2183 = vmatprep.subr.mxu0 0.0
      %2184 = vmatpush1.xpose.msra.mxu0 0.0
      %2185 = vmatprep.subr.mxu0 0.0
      %2186 = vmatpush1.xpose.msra.mxu0 0.0
      %2187 = vmatprep.subr.mxu0 0.0
      %2188 = vmatpush1.xpose.msra.mxu0 0.0
      %2189 = vmatprep.subr.mxu0 0.0
      %2190 = vmatpush1.xpose.msra.mxu0 0.0
      %2191 = vmatprep.subr.mxu0 0.0
      %2192 = vmatpush1.xpose.msra.mxu0 0.0
      %2193 = vmatprep.subr.mxu0 0.0
      %2194 = vmatpush1.xpose.msra.mxu0 0.0
      %2195 = vmatprep.subr.mxu0 0.0
      %2196 = vmatpush1.xpose.msra.mxu0 0.0
      %2197 = vmatprep.subr.mxu0 0.0
      %2198 = vmatpush1.xpose.msra.mxu0 0.0
      %2199 = vmatprep.subr.mxu0 0.0
      %2200 = vmatpush1.xpose.msra.mxu0 0.0
      %2201 = vmatprep.subr.mxu0 0.0
      %2202 = vmatpush1.xpose.msra.mxu0 0.0
      %2203 = vmatprep.subr.mxu0 0.0
      %2204 = vmatpush1.xpose.msra.mxu0 0.0
      %2205 = vmatprep.subr.mxu0 0.0
      %2206 = vmatpush1.xpose.msra.mxu0 0.0
      %2207 = vmatprep.subr.mxu0 0.0
      %2208 = vmatpush1.xpose.msra.mxu0 0.0
      %2209 = vmatprep.subr.mxu0 0.0
      %2210 = vmatpush1.xpose.msra.mxu0 0.0
      %2211 = vmatprep.subr.mxu0 0.0
      %2212 = vmatpush1.xpose.msra.mxu0 0.0
      %2213 = vmatprep.subr.mxu0 0.0
      %2214 = vmatpush1.xpose.msra.mxu0 0.0
      %2215 = vmatprep.subr.mxu0 0.0
      %2216 = vmatpush1.xpose.msra.mxu0 0.0
      %2217 = vmatprep.subr.mxu0 0.0
      %2218 = vmatpush1.xpose.msra.mxu0 0.0
      %2219 = vmatprep.subr.mxu0 0.0
      %2220 = vmatpush1.xpose.msra.mxu0 0.0
      %2221 = vmatprep.subr.mxu0 0.0
      %2222 = vmatpush1.xpose.msra.mxu0 0.0
      %2223 = vmatprep.subr.mxu0 0.0
      %2224 = vmatpush1.xpose.msra.mxu0 0.0
      %2225 = vmatprep.subr.mxu0 0.0
      %2226 = vmatpush1.xpose.msra.mxu0 0.0
      %2227 = vmatprep.subr.mxu0 0.0
      %2228 = vmatpush1.xpose.msra.mxu0 0.0
      %2229 = vmatprep.subr.mxu0 0.0
      %2230 = vmatpush1.xpose.msra.mxu0 0.0
      %2231 = vmatprep.subr.mxu0 0.0
      %2232 = vmatpush1.xpose.msra.mxu0 0.0
      %2233 = vmatprep.subr.mxu0 0.0
      %2234 = vmatpush1.xpose.msra.mxu0 0.0
      %2235 = vmatprep.subr.mxu0 0.0
      %2236 = vmatpush1.xpose.msra.mxu0 0.0
      %2237 = vmatprep.subr.mxu0 0.0
      %2238 = vmatpush1.xpose.msra.mxu0 0.0
      %2239 = vmatprep.mubr.f32.mxu0 0.0
      %2240 = vmatmul.mubr.f32.gmra.mrb[0].mxu0 %v2155
      %v2241 = vpop.f32.mrb[0].mxu0
      %v2242 = vadd.f32 %v633, %v2241
      %v2243 = vpop.f32.mrb[0].mxu0
      %2244 = vmatprep.mubr.f32.mxu0 0.0
      %2245 = vmatmul.mubr.f32.gmra.mrb[0].mxu0 %v2157
      %v2246 = vpop.f32.mrb[0].mxu0
      %v2247 = vadd.f32 %v634, %v2246
      %v2248 = vpop.f32.mrb[0].mxu0
      %2249 = vmatprep.mubr.f32.mxu0 0.0
      %2250 = vmatmul.mubr.f32.gmra.mrb[0].mxu0 %v2159
      %v2251 = vpop.f32.mrb[0].mxu0
      %v2252 = vadd.f32 %v635, %v2251
      %v2253 = vpop.f32.mrb[0].mxu0
      %2254 = vmatprep.mubr.f32.mxu0 0.0
      %2255 = vmatmul.mubr.f32.gmra.mrb[0].mxu0 %v2161
      %v2256 = vpop.f32.mrb[0].mxu0
      %v2257 = vadd.f32 %v636, %v2256
      %v2258 = vpop.f32.mrb[0].mxu0
      %2259 = vmatprep.mubr.f32.mxu0 0.0
      %2260 = vmatmul.mubr.f32.gmra.mrb[0].mxu0 %v2163
      %v2261 = vpop.f32.mrb[0].mxu0
      %v2262 = vadd.f32 %v637, %v2261
      %v2263 = vpop.f32.mrb[0].mxu0
      %2264 = vmatprep.mubr.f32.mxu0 0.0
      %2265 = vmatmul.mubr.f32.gmra.mrb[0].mxu0 %v2165
      %v2266 = vpop.f32.mrb[0].mxu0
      %v2267 = vadd.f32 %v638, %v2266
      %v2268 = vpop.f32.mrb[0].mxu0
      %2269 = vmatprep.mubr.f32.mxu0 0.0
      %2270 = vmatmul.mubr.f32.gmra.mrb[0].mxu0 %v2167
      %v2271 = vpop.f32.mrb[0].mxu0
      %v2272 = vadd.f32 %v639, %v2271
      %v2273 = vpop.f32.mrb[0].mxu0
      %2274 = vmatprep.mubr.f32.mxu0 0.0
      %2275 = vmatmul.mubr.f32.gmra.mrb[0].mxu0 %v2169
      %v2276 = vpop.f32.mrb[0].mxu0
      %v2277 = vadd.f32 %v640, %v2276
      %v2278 = vpop.f32.mrb[0].mxu0
      %2279 = vdwg.mxu0
      %v2280 = vsel %vm1210, %v1807, -inf
      %2281 = vmax.xlane.f32.xlu0 %v2280
      %v2282 = vpop.xlane.xlu0 %2281
      %v2283 = vsel %vm1210, %v1812, -inf
      %2284 = vmax.xlane.f32.xlu0 %v2283
      %v2285 = vpop.xlane.xlu0 %2284
      %v2286 = vsel %vm1210, %v1817, -inf
      %2287 = vmax.xlane.f32.xlu0 %v2286
      %v2288 = vpop.xlane.xlu0 %2287
      %v2289 = vsel %vm1210, %v1822, -inf
      %2290 = vmax.xlane.f32.xlu0 %v2289
      %v2291 = vpop.xlane.xlu0 %2290
      %v2292 = vsel %vm1210, %v1827, -inf
      %2293 = vmax.xlane.f32.xlu0 %v2292
      %v2294 = vpop.xlane.xlu0 %2293
      %v2295 = vsel %vm1210, %v1832, -inf
      %2296 = vmax.xlane.f32.xlu0 %v2295
      %v2297 = vpop.xlane.xlu0 %2296
      %v2298 = vsel %vm1210, %v1837, -inf
      %2299 = vmax.xlane.f32.xlu0 %v2298
      %v2300 = vpop.xlane.xlu0 %2299
      %v2301 = vsel %vm1210, %v1842, -inf
      %2302 = vmax.xlane.f32.xlu0 %v2301
      %v2303 = vpop.xlane.xlu0 %2302
      %v2304 = vsel %vm1210, %v1952, -inf
      %2305 = vmax.xlane.f32.xlu0 %v2304
      %v2306 = vpop.xlane.xlu0 %2305
      %v2307 = vsel %vm1210, %v1957, -inf
      %2308 = vmax.xlane.f32.xlu0 %v2307
      %v2309 = vpop.xlane.xlu0 %2308
      %v2310 = vsel %vm1210, %v1962, -inf
      %2311 = vmax.xlane.f32.xlu0 %v2310
      %v2312 = vpop.xlane.xlu0 %2311
      %v2313 = vsel %vm1210, %v1967, -inf
      %2314 = vmax.xlane.f32.xlu0 %v2313
      %v2315 = vpop.xlane.xlu0 %2314
      %v2316 = vsel %vm1210, %v1972, -inf
      %2317 = vmax.xlane.f32.xlu0 %v2316
      %v2318 = vpop.xlane.xlu0 %2317
      %v2319 = vsel %vm1210, %v1977, -inf
      %2320 = vmax.xlane.f32.xlu0 %v2319
      %v2321 = vpop.xlane.xlu0 %2320
      %v2322 = vsel %vm1210, %v1982, -inf
      %2323 = vmax.xlane.f32.xlu0 %v2322
      %v2324 = vpop.xlane.xlu0 %2323
      %v2325 = vsel %vm1210, %v1987, -inf
      %2326 = vmax.xlane.f32.xlu0 %v2325
      %v2327 = vpop.xlane.xlu0 %2326
      %v2328 = vsel %vm1210, %v2097, -inf
      %2329 = vmax.xlane.f32.xlu0 %v2328
      %v2330 = vpop.xlane.xlu0 %2329
      %v2331 = vsel %vm1210, %v2102, -inf
      %2332 = vmax.xlane.f32.xlu0 %v2331
      %v2333 = vpop.xlane.xlu0 %2332
      %v2334 = vsel %vm1210, %v2107, -inf
      %2335 = vmax.xlane.f32.xlu0 %v2334
      %v2336 = vpop.xlane.xlu0 %2335
      %v2337 = vsel %vm1210, %v2112, -inf
      %2338 = vmax.xlane.f32.xlu0 %v2337
      %v2339 = vpop.xlane.xlu0 %2338
      %v2340 = vsel %vm1210, %v2117, -inf
      %2341 = vmax.xlane.f32.xlu0 %v2340
      %v2342 = vpop.xlane.xlu0 %2341
      %v2343 = vsel %vm1210, %v2122, -inf
      %2344 = vmax.xlane.f32.xlu0 %v2343
      %v2345 = vpop.xlane.xlu0 %2344
      %v2346 = vsel %vm1210, %v2127, -inf
      %2347 = vmax.xlane.f32.xlu0 %v2346
      %v2348 = vpop.xlane.xlu0 %2347
      %v2349 = vsel %vm1210, %v2132, -inf
      %2350 = vmax.xlane.f32.xlu0 %v2349
      %v2351 = vpop.xlane.xlu0 %2350
      %v2352 = vsel %vm1210, %v2242, -inf
      %2353 = vmax.xlane.f32.xlu0 %v2352
      %v2354 = vpop.xlane.xlu0 %2353
      %v2355 = vsel %vm1210, %v2247, -inf
      %2356 = vmax.xlane.f32.xlu0 %v2355
      %v2357 = vpop.xlane.xlu0 %2356
      %v2358 = vsel %vm1210, %v2252, -inf
      %2359 = vmax.xlane.f32.xlu0 %v2358
      %v2360 = vpop.xlane.xlu0 %2359
      %v2361 = vsel %vm1210, %v2257, -inf
      %2362 = vmax.xlane.f32.xlu0 %v2361
      %v2363 = vpop.xlane.xlu0 %2362
      %v2364 = vsel %vm1210, %v2262, -inf
      %2365 = vmax.xlane.f32.xlu0 %v2364
      %v2366 = vpop.xlane.xlu0 %2365
      %v2367 = vsel %vm1210, %v2267, -inf
      %2368 = vmax.xlane.f32.xlu0 %v2367
      %v2369 = vpop.xlane.xlu0 %2368
      %v2370 = vsel %vm1210, %v2272, -inf
      %2371 = vmax.xlane.f32.xlu0 %v2370
      %v2372 = vpop.xlane.xlu0 %2371
      %v2373 = vsel %vm1210, %v2277, -inf
      %2374 = vmax.xlane.f32.xlu0 %v2373
      %v2375 = vpop.xlane.xlu0 %2374
      %v2376 = vsub.f32 %v1807, %v2282
      %v2377 = vsub.f32 %v1812, %v2285
      %v2378 = vsub.f32 %v1817, %v2288
      %v2379 = vsub.f32 %v1822, %v2291
      %v2380 = vsub.f32 %v1827, %v2294
      %v2381 = vsub.f32 %v1832, %v2297
      %v2382 = vsub.f32 %v1837, %v2300
      %v2383 = vsub.f32 %v1842, %v2303
      %v2384 = vsub.f32 %v1952, %v2306
      %v2385 = vsub.f32 %v1957, %v2309
      %v2386 = vsub.f32 %v1962, %v2312
      %v2387 = vsub.f32 %v1967, %v2315
      %v2388 = vsub.f32 %v1972, %v2318
      %v2389 = vsub.f32 %v1977, %v2321
      %v2390 = vsub.f32 %v1982, %v2324
      %v2391 = vsub.f32 %v1987, %v2327
      %v2392 = vsub.f32 %v2097, %v2330
      %v2393 = vsub.f32 %v2102, %v2333
      %v2394 = vsub.f32 %v2107, %v2336
      %v2395 = vsub.f32 %v2112, %v2339
      %v2396 = vsub.f32 %v2117, %v2342
      %v2397 = vsub.f32 %v2122, %v2345
      %v2398 = vsub.f32 %v2127, %v2348
      %v2399 = vsub.f32 %v2132, %v2351
      %v2400 = vsub.f32 %v2242, %v2354
      %v2401 = vsub.f32 %v2247, %v2357
      %v2402 = vsub.f32 %v2252, %v2360
      %v2403 = vsub.f32 %v2257, %v2363
      %v2404 = vsub.f32 %v2262, %v2366
      %v2405 = vsub.f32 %v2267, %v2369
      %v2406 = vsub.f32 %v2272, %v2372
      %v2407 = vsub.f32 %v2277, %v2375
      %v2408 = vmul.f32 %v2376, 1.442695
      %v2409 = vpow.pop %v2408
      %v2410 = vmul.f32 %v2377, 1.442695
      %v2411 = vpow.pop %v2410
      %v2412 = vmul.f32 %v2378, 1.442695
      %v2413 = vpow.pop %v2412
      %v2414 = vmul.f32 %v2379, 1.442695
      %v2415 = vpow.pop %v2414
      %v2416 = vmul.f32 %v2380, 1.442695
      %v2417 = vpow.pop %v2416
      %v2418 = vmul.f32 %v2381, 1.442695
      %v2419 = vpow.pop %v2418
      %v2420 = vmul.f32 %v2382, 1.442695
      %v2421 = vpow.pop %v2420
      %v2422 = vmul.f32 %v2383, 1.442695
      %v2423 = vpow.pop %v2422
      %v2424 = vmul.f32 %v2384, 1.442695
      %v2425 = vpow.pop %v2424
      %v2426 = vmul.f32 %v2385, 1.442695
      %v2427 = vpow.pop %v2426
      %v2428 = vmul.f32 %v2386, 1.442695
      %v2429 = vpow.pop %v2428
      %v2430 = vmul.f32 %v2387, 1.442695
      %v2431 = vpow.pop %v2430
      %v2432 = vmul.f32 %v2388, 1.442695
      %v2433 = vpow.pop %v2432
      %v2434 = vmul.f32 %v2389, 1.442695
      %v2435 = vpow.pop %v2434
      %v2436 = vmul.f32 %v2390, 1.442695
      %v2437 = vpow.pop %v2436
      %v2438 = vmul.f32 %v2391, 1.442695
      %v2439 = vpow.pop %v2438
      %v2440 = vmul.f32 %v2392, 1.442695
      %v2441 = vpow.pop %v2440
      %v2442 = vmul.f32 %v2393, 1.442695
      %v2443 = vpow.pop %v2442
      %v2444 = vmul.f32 %v2394, 1.442695
      %v2445 = vpow.pop %v2444
      %v2446 = vmul.f32 %v2395, 1.442695
      %v2447 = vpow.pop %v2446
      %v2448 = vmul.f32 %v2396, 1.442695
      %v2449 = vpow.pop %v2448
      %v2450 = vmul.f32 %v2397, 1.442695
      %v2451 = vpow.pop %v2450
      %v2452 = vmul.f32 %v2398, 1.442695
      %v2453 = vpow.pop %v2452
      %v2454 = vmul.f32 %v2399, 1.442695
      %v2455 = vpow.pop %v2454
      %v2456 = vmul.f32 %v2400, 1.442695
      %v2457 = vpow.pop %v2456
      %v2458 = vmul.f32 %v2401, 1.442695
      %v2459 = vpow.pop %v2458
      %v2460 = vmul.f32 %v2402, 1.442695
      %v2461 = vpow.pop %v2460
      %v2462 = vmul.f32 %v2403, 1.442695
      %v2463 = vpow.pop %v2462
      %v2464 = vmul.f32 %v2404, 1.442695
      %v2465 = vpow.pop %v2464
      %v2466 = vmul.f32 %v2405, 1.442695
      %v2467 = vpow.pop %v2466
      %v2468 = vmul.f32 %v2406, 1.442695
      %v2469 = vpow.pop %v2468
      %v2470 = vmul.f32 %v2407, 1.442695
      %v2471 = vpow.pop %v2470
      %v2472 = vsel %vm1210, %v2409, 0.0
      %2473 = vadd.xlane.f32.xlu0 %v2472
      %v2474 = vpop.xlane.xlu0 %2473
      %v2475 = vsel %vm1210, %v2411, 0.0
      %2476 = vadd.xlane.f32.xlu0 %v2475
      %v2477 = vpop.xlane.xlu0 %2476
      %v2478 = vsel %vm1210, %v2413, 0.0
      %2479 = vadd.xlane.f32.xlu0 %v2478
      %v2480 = vpop.xlane.xlu0 %2479
      %v2481 = vsel %vm1210, %v2415, 0.0
      %2482 = vadd.xlane.f32.xlu0 %v2481
      %v2483 = vpop.xlane.xlu0 %2482
      %v2484 = vsel %vm1210, %v2417, 0.0
      %2485 = vadd.xlane.f32.xlu0 %v2484
      %v2486 = vpop.xlane.xlu0 %2485
      %v2487 = vsel %vm1210, %v2419, 0.0
      %2488 = vadd.xlane.f32.xlu0 %v2487
      %v2489 = vpop.xlane.xlu0 %2488
      %v2490 = vsel %vm1210, %v2421, 0.0
      %2491 = vadd.xlane.f32.xlu0 %v2490
      %v2492 = vpop.xlane.xlu0 %2491
      %v2493 = vsel %vm1210, %v2423, 0.0
      %2494 = vadd.xlane.f32.xlu0 %v2493
      %v2495 = vpop.xlane.xlu0 %2494
      %v2496 = vsel %vm1210, %v2425, 0.0
      %2497 = vadd.xlane.f32.xlu0 %v2496
      %v2498 = vpop.xlane.xlu0 %2497
      %v2499 = vsel %vm1210, %v2427, 0.0
      %2500 = vadd.xlane.f32.xlu0 %v2499
      %v2501 = vpop.xlane.xlu0 %2500
      %v2502 = vsel %vm1210, %v2429, 0.0
      %2503 = vadd.xlane.f32.xlu0 %v2502
      %v2504 = vpop.xlane.xlu0 %2503
      %v2505 = vsel %vm1210, %v2431, 0.0
      %2506 = vadd.xlane.f32.xlu0 %v2505
      %v2507 = vpop.xlane.xlu0 %2506
      %v2508 = vsel %vm1210, %v2433, 0.0
      %2509 = vadd.xlane.f32.xlu0 %v2508
      %v2510 = vpop.xlane.xlu0 %2509
      %v2511 = vsel %vm1210, %v2435, 0.0
      %2512 = vadd.xlane.f32.xlu0 %v2511
      %v2513 = vpop.xlane.xlu0 %2512
      %v2514 = vsel %vm1210, %v2437, 0.0
      %2515 = vadd.xlane.f32.xlu0 %v2514
      %v2516 = vpop.xlane.xlu0 %2515
      %v2517 = vsel %vm1210, %v2439, 0.0
      %2518 = vadd.xlane.f32.xlu0 %v2517
      %v2519 = vpop.xlane.xlu0 %2518
      %v2520 = vsel %vm1210, %v2441, 0.0
      %2521 = vadd.xlane.f32.xlu0 %v2520
      %v2522 = vpop.xlane.xlu0 %2521
      %v2523 = vsel %vm1210, %v2443, 0.0
      %2524 = vadd.xlane.f32.xlu0 %v2523
      %v2525 = vpop.xlane.xlu0 %2524
      %v2526 = vsel %vm1210, %v2445, 0.0
      %2527 = vadd.xlane.f32.xlu0 %v2526
      %v2528 = vpop.xlane.xlu0 %2527
      %v2529 = vsel %vm1210, %v2447, 0.0
      %2530 = vadd.xlane.f32.xlu0 %v2529
      %v2531 = vpop.xlane.xlu0 %2530
      %v2532 = vsel %vm1210, %v2449, 0.0
      %2533 = vadd.xlane.f32.xlu0 %v2532
      %v2534 = vpop.xlane.xlu0 %2533
      %v2535 = vsel %vm1210, %v2451, 0.0
      %2536 = vadd.xlane.f32.xlu0 %v2535
      %v2537 = vpop.xlane.xlu0 %2536
      %v2538 = vsel %vm1210, %v2453, 0.0
      %2539 = vadd.xlane.f32.xlu0 %v2538
      %v2540 = vpop.xlane.xlu0 %2539
      %v2541 = vsel %vm1210, %v2455, 0.0
      %2542 = vadd.xlane.f32.xlu0 %v2541
      %v2543 = vpop.xlane.xlu0 %2542
      %v2544 = vsel %vm1210, %v2457, 0.0
      %2545 = vadd.xlane.f32.xlu0 %v2544
      %v2546 = vpop.xlane.xlu0 %2545
      %v2547 = vsel %vm1210, %v2459, 0.0
      %2548 = vadd.xlane.f32.xlu0 %v2547
      %v2549 = vpop.xlane.xlu0 %2548
      %v2550 = vsel %vm1210, %v2461, 0.0
      %2551 = vadd.xlane.f32.xlu0 %v2550
      %v2552 = vpop.xlane.xlu0 %2551
      %v2553 = vsel %vm1210, %v2463, 0.0
      %2554 = vadd.xlane.f32.xlu0 %v2553
      %v2555 = vpop.xlane.xlu0 %2554
      %v2556 = vsel %vm1210, %v2465, 0.0
      %2557 = vadd.xlane.f32.xlu0 %v2556
      %v2558 = vpop.xlane.xlu0 %2557
      %v2559 = vsel %vm1210, %v2467, 0.0
      %2560 = vadd.xlane.f32.xlu0 %v2559
      %v2561 = vpop.xlane.xlu0 %2560
      %v2562 = vsel %vm1210, %v2469, 0.0
      %2563 = vadd.xlane.f32.xlu0 %v2562
      %v2564 = vpop.xlane.xlu0 %2563
      %v2565 = vsel %vm1210, %v2471, 0.0
      %2566 = vadd.xlane.f32.xlu0 %v2565
      %v2567 = vpop.xlane.xlu0 %2566
      %v2568 = vrcp.pop %v2474
      %v2569 = vrcp.pop %v2477
      %v2570 = vrcp.pop %v2480
      %v2571 = vrcp.pop %v2483
      %v2572 = vrcp.pop %v2486
      %v2573 = vrcp.pop %v2489
      %v2574 = vrcp.pop %v2492
      %v2575 = vrcp.pop %v2495
      %v2576 = vrcp.pop %v2498
      %v2577 = vrcp.pop %v2501
      %v2578 = vrcp.pop %v2504
      %v2579 = vrcp.pop %v2507
      %v2580 = vrcp.pop %v2510
      %v2581 = vrcp.pop %v2513
      %v2582 = vrcp.pop %v2516
      %v2583 = vrcp.pop %v2519
      %v2584 = vrcp.pop %v2522
      %v2585 = vrcp.pop %v2525
      %v2586 = vrcp.pop %v2528
      %v2587 = vrcp.pop %v2531
      %v2588 = vrcp.pop %v2534
      %v2589 = vrcp.pop %v2537
      %v2590 = vrcp.pop %v2540
      %v2591 = vrcp.pop %v2543
      %v2592 = vrcp.pop %v2546
      %v2593 = vrcp.pop %v2549
      %v2594 = vrcp.pop %v2552
      %v2595 = vrcp.pop %v2555
      %v2596 = vrcp.pop %v2558
      %v2597 = vrcp.pop %v2561
      %v2598 = vrcp.pop %v2564
      %v2599 = vrcp.pop %v2567
      %v2600 = vmul.f32 %v2409, %v2568
      %v2601 = vmul.f32 %v2411, %v2569
      %v2602 = vmul.f32 %v2413, %v2570
      %v2603 = vmul.f32 %v2415, %v2571
      %v2604 = vmul.f32 %v2417, %v2572
      %v2605 = vmul.f32 %v2419, %v2573
      %v2606 = vmul.f32 %v2421, %v2574
      %v2607 = vmul.f32 %v2423, %v2575
      %v2608 = vmul.f32 %v2425, %v2576
      %v2609 = vmul.f32 %v2427, %v2577
      %v2610 = vmul.f32 %v2429, %v2578
      %v2611 = vmul.f32 %v2431, %v2579
      %v2612 = vmul.f32 %v2433, %v2580
      %v2613 = vmul.f32 %v2435, %v2581
      %v2614 = vmul.f32 %v2437, %v2582
      %v2615 = vmul.f32 %v2439, %v2583
      %v2616 = vmul.f32 %v2441, %v2584
      %v2617 = vmul.f32 %v2443, %v2585
      %v2618 = vmul.f32 %v2445, %v2586
      %v2619 = vmul.f32 %v2447, %v2587
      %v2620 = vmul.f32 %v2449, %v2588
      %v2621 = vmul.f32 %v2451, %v2589
      %v2622 = vmul.f32 %v2453, %v2590
      %v2623 = vmul.f32 %v2455, %v2591
      %v2624 = vmul.f32 %v2457, %v2592
      %v2625 = vmul.f32 %v2459, %v2593
      %v2626 = vmul.f32 %v2461, %v2594
      %v2627 = vmul.f32 %v2463, %v2595
      %v2628 = vmul.f32 %v2465, %v2596
      %v2629 = vmul.f32 %v2467, %v2597
      %v2630 = vmul.f32 %v2469, %v2598
      %v2631 = vmul.f32 %v2471, %v2599
      %2632 = vrot.lane.b32.xlu0 %v477, 88
      %v2633 = vpop.permute.xlu0 %2632
      %2634 = vrot.lane.b32.xlu0 %v482, 88
      %v2635 = vpop.permute.xlu0 %2634
      %2636 = vrot.lane.b32.xlu0 %v517, 88
      %v2637 = vpop.permute.xlu0 %2636
      %2638 = vrot.lane.b32.xlu0 %v522, 88
      %v2639 = vpop.permute.xlu0 %2638
      %2640 = vrot.lane.b32.xlu0 %v557, 88
      %v2641 = vpop.permute.xlu0 %2640
      %2642 = vrot.lane.b32.xlu0 %v562, 88
      %v2643 = vpop.permute.xlu0 %2642
      %2644 = vrot.lane.b32.xlu0 %v597, 88
      %v2645 = vpop.permute.xlu0 %2644
      %2646 = vrot.lane.b32.xlu0 %v602, 88
      %v2647 = vpop.permute.xlu0 %2646
      %v2648 = vsel %vm667, %v2633, 0
      %v2650 = vsel %vm667, %v2635, 0
      %v2652 = vsel %vm667, %v2637, 0
      %v2654 = vsel %vm667, %v2639, 0
      %v2656 = vsel %vm667, %v2641, 0
      %v2658 = vsel %vm667, %v2643, 0
      %v2660 = vsel %vm667, %v2645, 0
      %v2662 = vsel %vm667, %v2647, 0
      %2664 = vmatprep.subr.mxu0 0.0
      %2665 = vmatpush1.msra.mxu0 %v658
      %2666 = vmatprep.subr.mxu0 0.0
      %2667 = vmatpush1.msra.mxu0 0.0
      %2668 = vmatprep.subr.mxu0 0.0
      %2669 = vmatpush1.msra.mxu0 0.0
      %2670 = vmatprep.subr.mxu0 0.0
      %2671 = vmatpush1.msra.mxu0 0.0
      %2672 = vmatprep.subr.mxu0 0.0
      %2673 = vmatpush1.msra.mxu0 0.0
      %2674 = vmatprep.subr.mxu0 0.0
      %2675 = vmatpush1.msra.mxu0 0.0
      %2676 = vmatprep.subr.mxu0 0.0
      %2677 = vmatpush1.msra.mxu0 0.0
      %2678 = vmatprep.subr.mxu0 0.0
      %2679 = vmatpush1.msra.mxu0 0.0
      %2680 = vmatprep.subr.mxu0 0.0
      %2681 = vmatpush1.msra.mxu0 0.0
      %2682 = vmatprep.subr.mxu0 0.0
      %2683 = vmatpush1.msra.mxu0 0.0
      %2684 = vmatprep.subr.mxu0 0.0
      %2685 = vmatpush1.msra.mxu0 0.0
      %2686 = vmatprep.subr.mxu0 0.0
      %2687 = vmatpush1.msra.mxu0 0.0
      %2688 = vmatprep.subr.mxu0 0.0
      %2689 = vmatpush1.msra.mxu0 0.0
      %2690 = vmatprep.subr.mxu0 0.0
      %2691 = vmatpush1.msra.mxu0 0.0
      %2692 = vmatprep.subr.mxu0 0.0
      %2693 = vmatpush1.msra.mxu0 0.0
      %2694 = vmatprep.subr.mxu0 0.0
      %2695 = vmatpush1.msra.mxu0 0.0
      %2696 = vmatprep.subr.mxu0 0.0
      %2697 = vmatpush1.msra.mxu0 0.0
      %2698 = vmatprep.subr.mxu0 0.0
      %2699 = vmatpush1.msra.mxu0 0.0
      %2700 = vmatprep.subr.mxu0 0.0
      %2701 = vmatpush1.msra.mxu0 0.0
      %2702 = vmatprep.subr.mxu0 0.0
      %2703 = vmatpush1.msra.mxu0 0.0
      %2704 = vmatprep.subr.mxu0 0.0
      %2705 = vmatpush1.msra.mxu0 0.0
      %2706 = vmatprep.subr.mxu0 0.0
      %2707 = vmatpush1.msra.mxu0 0.0
      %2708 = vmatprep.subr.mxu0 0.0
      %2709 = vmatpush1.msra.mxu0 0.0
      %2710 = vmatprep.subr.mxu0 0.0
      %2711 = vmatpush1.msra.mxu0 0.0
      %2712 = vmatprep.subr.mxu0 0.0
      %2713 = vmatpush1.msra.mxu0 0.0
      %2714 = vmatprep.subr.mxu0 0.0
      %2715 = vmatpush1.msra.mxu0 0.0
      %2716 = vmatprep.subr.mxu0 0.0
      %2717 = vmatpush1.msra.mxu0 0.0
      %2718 = vmatprep.subr.mxu0 0.0
      %2719 = vmatpush1.msra.mxu0 0.0
      %2720 = vmatprep.subr.mxu0 0.0
      %2721 = vmatpush1.msra.mxu0 0.0
      %2722 = vmatprep.subr.mxu0 0.0
      %2723 = vmatpush1.msra.mxu0 0.0
      %2724 = vmatprep.subr.mxu0 0.0
      %2725 = vmatpush1.msra.mxu0 0.0
      %2726 = vmatprep.subr.mxu0 0.0
      %2727 = vmatpush1.msra.mxu0 0.0
      %2728 = vmatprep.mubr.f32.mxu0 0.0
      %2729 = vmatmul.mubr.f32.gmra.mrb[0].mxu0 %v2648
      %v2730 = vpop.f32.mrb[0].mxu0
      %v2731 = vadd.f32 0.0, %v2730
      %v2732 = vpop.f32.mrb[0].mxu0
      %2733 = vmatprep.mubr.f32.mxu0 0.0
      %2734 = vmatmul.mubr.f32.gmra.mrb[0].mxu0 %v2650
      %v2735 = vpop.f32.mrb[0].mxu0
      %v2736 = vadd.f32 0.0, %v2735
      %v2737 = vpop.f32.mrb[0].mxu0
      %2738 = vmatprep.mubr.f32.mxu0 0.0
      %2739 = vmatmul.mubr.f32.gmra.mrb[0].mxu0 %v2652
      %v2740 = vpop.f32.mrb[0].mxu0
      %v2741 = vadd.f32 0.0, %v2740
      %v2742 = vpop.f32.mrb[0].mxu0
      %2743 = vmatprep.mubr.f32.mxu0 0.0
      %2744 = vmatmul.mubr.f32.gmra.mrb[0].mxu0 %v2654
      %v2745 = vpop.f32.mrb[0].mxu0
      %v2746 = vadd.f32 0.0, %v2745
      %v2747 = vpop.f32.mrb[0].mxu0
      %2748 = vmatprep.mubr.f32.mxu0 0.0
      %2749 = vmatmul.mubr.f32.gmra.mrb[0].mxu0 %v2656
      %v2750 = vpop.f32.mrb[0].mxu0
      %v2751 = vadd.f32 0.0, %v2750
      %v2752 = vpop.f32.mrb[0].mxu0
      %2753 = vmatprep.mubr.f32.mxu0 0.0
      %2754 = vmatmul.mubr.f32.gmra.mrb[0].mxu0 %v2658
      %v2755 = vpop.f32.mrb[0].mxu0
      %v2756 = vadd.f32 0.0, %v2755
      %v2757 = vpop.f32.mrb[0].mxu0
      %2758 = vmatprep.mubr.f32.mxu0 0.0
      %2759 = vmatmul.mubr.f32.gmra.mrb[0].mxu0 %v2660
      %v2760 = vpop.f32.mrb[0].mxu0
      %v2761 = vadd.f32 0.0, %v2760
      %v2762 = vpop.f32.mrb[0].mxu0
      %2763 = vmatprep.mubr.f32.mxu0 0.0
      %2764 = vmatmul.mubr.f32.gmra.mrb[0].mxu0 %v2662
      %v2765 = vpop.f32.mrb[0].mxu0
      %v2766 = vadd.f32 0.0, %v2765
      %v2767 = vpop.f32.mrb[0].mxu0
      %2768 = vdwg.mxu0
      %v2770 = vsel %vm1210, %v2600, 0
      %v2773 = vsel %vm1210, %v2601, 0
      %v2776 = vsel %vm1210, %v2602, 0
      %v2779 = vsel %vm1210, %v2603, 0
      %v2782 = vsel %vm1210, %v2604, 0
      %v2785 = vsel %vm1210, %v2605, 0
      %v2788 = vsel %vm1210, %v2606, 0
      %v2791 = vsel %vm1210, %v2607, 0
      %2793 = vmatprep.subr.mxu0 0.0
      %2794 = vmatpush1.msra.mxu0 %v2731
      %2795 = vmatprep.subr.mxu0 0.0
      %2796 = vmatpush1.msra.mxu0 %v2736
      %2797 = vmatprep.subr.mxu0 0.0
      %2798 = vmatpush1.msra.mxu0 0.0
      %2799 = vmatprep.subr.mxu0 0.0
      %2800 = vmatpush1.msra.mxu0 0.0
      %2801 = vmatprep.subr.mxu0 0.0
      %2802 = vmatpush1.msra.mxu0 0.0
      %2803 = vmatprep.subr.mxu0 0.0
      %2804 = vmatpush1.msra.mxu0 0.0
      %2805 = vmatprep.subr.mxu0 0.0
      %2806 = vmatpush1.msra.mxu0 0.0
      %2807 = vmatprep.subr.mxu0 0.0
      %2808 = vmatpush1.msra.mxu0 0.0
      %2809 = vmatprep.subr.mxu0 0.0
      %2810 = vmatpush1.msra.mxu0 0.0
      %2811 = vmatprep.subr.mxu0 0.0
      %2812 = vmatpush1.msra.mxu0 0.0
      %2813 = vmatprep.subr.mxu0 0.0
      %2814 = vmatpush1.msra.mxu0 0.0
      %2815 = vmatprep.subr.mxu0 0.0
      %2816 = vmatpush1.msra.mxu0 0.0
      %2817 = vmatprep.subr.mxu0 0.0
      %2818 = vmatpush1.msra.mxu0 0.0
      %2819 = vmatprep.subr.mxu0 0.0
      %2820 = vmatpush1.msra.mxu0 0.0
      %2821 = vmatprep.subr.mxu0 0.0
      %2822 = vmatpush1.msra.mxu0 0.0
      %2823 = vmatprep.subr.mxu0 0.0
      %2824 = vmatpush1.msra.mxu0 0.0
      %2825 = vmatprep.subr.mxu0 0.0
      %2826 = vmatpush1.msra.mxu0 0.0
      %2827 = vmatprep.subr.mxu0 0.0
      %2828 = vmatpush1.msra.mxu0 0.0
      %2829 = vmatprep.subr.mxu0 0.0
      %2830 = vmatpush1.msra.mxu0 0.0
      %2831 = vmatprep.subr.mxu0 0.0
      %2832 = vmatpush1.msra.mxu0 0.0
      %2833 = vmatprep.subr.mxu0 0.0
      %2834 = vmatpush1.msra.mxu0 0.0
      %2835 = vmatprep.subr.mxu0 0.0
      %2836 = vmatpush1.msra.mxu0 0.0
      %2837 = vmatprep.subr.mxu0 0.0
      %2838 = vmatpush1.msra.mxu0 0.0
      %2839 = vmatprep.subr.mxu0 0.0
      %2840 = vmatpush1.msra.mxu0 0.0
      %2841 = vmatprep.subr.mxu0 0.0
      %2842 = vmatpush1.msra.mxu0 0.0
      %2843 = vmatprep.subr.mxu0 0.0
      %2844 = vmatpush1.msra.mxu0 0.0
      %2845 = vmatprep.subr.mxu0 0.0
      %2846 = vmatpush1.msra.mxu0 0.0
      %2847 = vmatprep.subr.mxu0 0.0
      %2848 = vmatpush1.msra.mxu0 0.0
      %2849 = vmatprep.subr.mxu0 0.0
      %2850 = vmatpush1.msra.mxu0 0.0
      %2851 = vmatprep.subr.mxu0 0.0
      %2852 = vmatpush1.msra.mxu0 0.0
      %2853 = vmatprep.subr.mxu0 0.0
      %2854 = vmatpush1.msra.mxu0 0.0
      %2855 = vmatprep.subr.mxu0 0.0
      %2856 = vmatpush1.msra.mxu0 0.0
      %2857 = vmatprep.mubr.f32.mxu0 0.0
      %2858 = vmatmul.mubr.f32.gmra.mrb[0].mxu0 %v2770
      %v2859 = vpop.f32.mrb[0].mxu0
      %v2860 = vadd.f32 0.0, %v2859
      %v2861 = vpop.f32.mrb[0].mxu0
      %2862 = vmatprep.mubr.f32.mxu0 0.0
      %2863 = vmatmul.mubr.f32.gmra.mrb[0].mxu0 %v2773
      %v2864 = vpop.f32.mrb[0].mxu0
      %v2865 = vadd.f32 0.0, %v2864
      %v2866 = vpop.f32.mrb[0].mxu0
      %2867 = vmatprep.mubr.f32.mxu0 0.0
      %2868 = vmatmul.mubr.f32.gmra.mrb[0].mxu0 %v2776
      %v2869 = vpop.f32.mrb[0].mxu0
      %v2870 = vadd.f32 0.0, %v2869
      %v2871 = vpop.f32.mrb[0].mxu0
      %2872 = vmatprep.mubr.f32.mxu0 0.0
      %2873 = vmatmul.mubr.f32.gmra.mrb[0].mxu0 %v2779
      %v2874 = vpop.f32.mrb[0].mxu0
      %v2875 = vadd.f32 0.0, %v2874
      %v2876 = vpop.f32.mrb[0].mxu0
      %2877 = vmatprep.mubr.f32.mxu0 0.0
      %2878 = vmatmul.mubr.f32.gmra.mrb[0].mxu0 %v2782
      %v2879 = vpop.f32.mrb[0].mxu0
      %v2880 = vadd.f32 0.0, %v2879
      %v2881 = vpop.f32.mrb[0].mxu0
      %2882 = vmatprep.mubr.f32.mxu0 0.0
      %2883 = vmatmul.mubr.f32.gmra.mrb[0].mxu0 %v2785
      %v2884 = vpop.f32.mrb[0].mxu0
      %v2885 = vadd.f32 0.0, %v2884
      %v2886 = vpop.f32.mrb[0].mxu0
      %2887 = vmatprep.mubr.f32.mxu0 0.0
      %2888 = vmatmul.mubr.f32.gmra.mrb[0].mxu0 %v2788
      %v2889 = vpop.f32.mrb[0].mxu0
      %v2890 = vadd.f32 0.0, %v2889
      %v2891 = vpop.f32.mrb[0].mxu0
      %2892 = vmatprep.mubr.f32.mxu0 0.0
      %2893 = vmatmul.mubr.f32.gmra.mrb[0].mxu0 %v2791
      %v2894 = vpop.f32.mrb[0].mxu0
      %v2895 = vadd.f32 0.0, %v2894
      %v2896 = vpop.f32.mrb[0].mxu0
      %2897 = vdwg.mxu0
      %v2899 = vsel %vm1210, %v2608, 0
      %v2902 = vsel %vm1210, %v2609, 0
      %v2905 = vsel %vm1210, %v2610, 0
      %v2908 = vsel %vm1210, %v2611, 0
      %v2911 = vsel %vm1210, %v2612, 0
      %v2914 = vsel %vm1210, %v2613, 0
      %v2917 = vsel %vm1210, %v2614, 0
      %v2920 = vsel %vm1210, %v2615, 0
      %2922 = vmatprep.subr.mxu0 0.0
      %2923 = vmatpush1.msra.mxu0 %v2741
      %2924 = vmatprep.subr.mxu0 0.0
      %2925 = vmatpush1.msra.mxu0 %v2746
      %2926 = vmatprep.subr.mxu0 0.0
      %2927 = vmatpush1.msra.mxu0 0.0
      %2928 = vmatprep.subr.mxu0 0.0
      %2929 = vmatpush1.msra.mxu0 0.0
      %2930 = vmatprep.subr.mxu0 0.0
      %2931 = vmatpush1.msra.mxu0 0.0
      %2932 = vmatprep.subr.mxu0 0.0
      %2933 = vmatpush1.msra.mxu0 0.0
      %2934 = vmatprep.subr.mxu0 0.0
      %2935 = vmatpush1.msra.mxu0 0.0
      %2936 = vmatprep.subr.mxu0 0.0
      %2937 = vmatpush1.msra.mxu0 0.0
      %2938 = vmatprep.subr.mxu0 0.0
      %2939 = vmatpush1.msra.mxu0 0.0
      %2940 = vmatprep.subr.mxu0 0.0
      %2941 = vmatpush1.msra.mxu0 0.0
      %2942 = vmatprep.subr.mxu0 0.0
      %2943 = vmatpush1.msra.mxu0 0.0
      %2944 = vmatprep.subr.mxu0 0.0
      %2945 = vmatpush1.msra.mxu0 0.0
      %2946 = vmatprep.subr.mxu0 0.0
      %2947 = vmatpush1.msra.mxu0 0.0
      %2948 = vmatprep.subr.mxu0 0.0
      %2949 = vmatpush1.msra.mxu0 0.0
      %2950 = vmatprep.subr.mxu0 0.0
      %2951 = vmatpush1.msra.mxu0 0.0
      %2952 = vmatprep.subr.mxu0 0.0
      %2953 = vmatpush1.msra.mxu0 0.0
      %2954 = vmatprep.subr.mxu0 0.0
      %2955 = vmatpush1.msra.mxu0 0.0
      %2956 = vmatprep.subr.mxu0 0.0
      %2957 = vmatpush1.msra.mxu0 0.0
      %2958 = vmatprep.subr.mxu0 0.0
      %2959 = vmatpush1.msra.mxu0 0.0
      %2960 = vmatprep.subr.mxu0 0.0
      %2961 = vmatpush1.msra.mxu0 0.0
      %2962 = vmatprep.subr.mxu0 0.0
      %2963 = vmatpush1.msra.mxu0 0.0
      %2964 = vmatprep.subr.mxu0 0.0
      %2965 = vmatpush1.msra.mxu0 0.0
      %2966 = vmatprep.subr.mxu0 0.0
      %2967 = vmatpush1.msra.mxu0 0.0
      %2968 = vmatprep.subr.mxu0 0.0
      %2969 = vmatpush1.msra.mxu0 0.0
      %2970 = vmatprep.subr.mxu0 0.0
      %2971 = vmatpush1.msra.mxu0 0.0
      %2972 = vmatprep.subr.mxu0 0.0
      %2973 = vmatpush1.msra.mxu0 0.0
      %2974 = vmatprep.subr.mxu0 0.0
      %2975 = vmatpush1.msra.mxu0 0.0
      %2976 = vmatprep.subr.mxu0 0.0
      %2977 = vmatpush1.msra.mxu0 0.0
      %2978 = vmatprep.subr.mxu0 0.0
      %2979 = vmatpush1.msra.mxu0 0.0
      %2980 = vmatprep.subr.mxu0 0.0
      %2981 = vmatpush1.msra.mxu0 0.0
      %2982 = vmatprep.subr.mxu0 0.0
      %2983 = vmatpush1.msra.mxu0 0.0
      %2984 = vmatprep.subr.mxu0 0.0
      %2985 = vmatpush1.msra.mxu0 0.0
      %2986 = vmatprep.mubr.f32.mxu0 0.0
      %2987 = vmatmul.mubr.f32.gmra.mrb[0].mxu0 %v2899
      %v2988 = vpop.f32.mrb[0].mxu0
      %v2989 = vadd.f32 0.0, %v2988
      %v2990 = vpop.f32.mrb[0].mxu0
      %2991 = vmatprep.mubr.f32.mxu0 0.0
      %2992 = vmatmul.mubr.f32.gmra.mrb[0].mxu0 %v2902
      %v2993 = vpop.f32.mrb[0].mxu0
      %v2994 = vadd.f32 0.0, %v2993
      %v2995 = vpop.f32.mrb[0].mxu0
      %2996 = vmatprep.mubr.f32.mxu0 0.0
      %2997 = vmatmul.mubr.f32.gmra.mrb[0].mxu0 %v2905
      %v2998 = vpop.f32.mrb[0].mxu0
      %v2999 = vadd.f32 0.0, %v2998
      %v3000 = vpop.f32.mrb[0].mxu0
      %3001 = vmatprep.mubr.f32.mxu0 0.0
      %3002 = vmatmul.mubr.f32.gmra.mrb[0].mxu0 %v2908
      %v3003 = vpop.f32.mrb[0].mxu0
      %v3004 = vadd.f32 0.0, %v3003
      %v3005 = vpop.f32.mrb[0].mxu0
      %3006 = vmatprep.mubr.f32.mxu0 0.0
      %3007 = vmatmul.mubr.f32.gmra.mrb[0].mxu0 %v2911
      %v3008 = vpop.f32.mrb[0].mxu0
      %v3009 = vadd.f32 0.0, %v3008
      %v3010 = vpop.f32.mrb[0].mxu0
      %3011 = vmatprep.mubr.f32.mxu0 0.0
      %3012 = vmatmul.mubr.f32.gmra.mrb[0].mxu0 %v2914
      %v3013 = vpop.f32.mrb[0].mxu0
      %v3014 = vadd.f32 0.0, %v3013
      %v3015 = vpop.f32.mrb[0].mxu0
      %3016 = vmatprep.mubr.f32.mxu0 0.0
      %3017 = vmatmul.mubr.f32.gmra.mrb[0].mxu0 %v2917
      %v3018 = vpop.f32.mrb[0].mxu0
      %v3019 = vadd.f32 0.0, %v3018
      %v3020 = vpop.f32.mrb[0].mxu0
      %3021 = vmatprep.mubr.f32.mxu0 0.0
      %3022 = vmatmul.mubr.f32.gmra.mrb[0].mxu0 %v2920
      %v3023 = vpop.f32.mrb[0].mxu0
      %v3024 = vadd.f32 0.0, %v3023
      %v3025 = vpop.f32.mrb[0].mxu0
      %3026 = vdwg.mxu0
      %v3028 = vsel %vm1210, %v2616, 0
      %v3031 = vsel %vm1210, %v2617, 0
      %v3034 = vsel %vm1210, %v2618, 0
      %v3037 = vsel %vm1210, %v2619, 0
      %v3040 = vsel %vm1210, %v2620, 0
      %v3043 = vsel %vm1210, %v2621, 0
      %v3046 = vsel %vm1210, %v2622, 0
      %v3049 = vsel %vm1210, %v2623, 0
      %3051 = vmatprep.subr.mxu0 0.0
      %3052 = vmatpush1.msra.mxu0 %v2751
      %3053 = vmatprep.subr.mxu0 0.0
      %3054 = vmatpush1.msra.mxu0 %v2756
      %3055 = vmatprep.subr.mxu0 0.0
      %3056 = vmatpush1.msra.mxu0 0.0
      %3057 = vmatprep.subr.mxu0 0.0
      %3058 = vmatpush1.msra.mxu0 0.0
      %3059 = vmatprep.subr.mxu0 0.0
      %3060 = vmatpush1.msra.mxu0 0.0
      %3061 = vmatprep.subr.mxu0 0.0
      %3062 = vmatpush1.msra.mxu0 0.0
      %3063 = vmatprep.subr.mxu0 0.0
      %3064 = vmatpush1.msra.mxu0 0.0
      %3065 = vmatprep.subr.mxu0 0.0
      %3066 = vmatpush1.msra.mxu0 0.0
      %3067 = vmatprep.subr.mxu0 0.0
      %3068 = vmatpush1.msra.mxu0 0.0
      %3069 = vmatprep.subr.mxu0 0.0
      %3070 = vmatpush1.msra.mxu0 0.0
      %3071 = vmatprep.subr.mxu0 0.0
      %3072 = vmatpush1.msra.mxu0 0.0
      %3073 = vmatprep.subr.mxu0 0.0
      %3074 = vmatpush1.msra.mxu0 0.0
      %3075 = vmatprep.subr.mxu0 0.0
      %3076 = vmatpush1.msra.mxu0 0.0
      %3077 = vmatprep.subr.mxu0 0.0
      %3078 = vmatpush1.msra.mxu0 0.0
      %3079 = vmatprep.subr.mxu0 0.0
      %3080 = vmatpush1.msra.mxu0 0.0
      %3081 = vmatprep.subr.mxu0 0.0
      %3082 = vmatpush1.msra.mxu0 0.0
      %3083 = vmatprep.subr.mxu0 0.0
      %3084 = vmatpush1.msra.mxu0 0.0
      %3085 = vmatprep.subr.mxu0 0.0
      %3086 = vmatpush1.msra.mxu0 0.0
      %3087 = vmatprep.subr.mxu0 0.0
      %3088 = vmatpush1.msra.mxu0 0.0
      %3089 = vmatprep.subr.mxu0 0.0
      %3090 = vmatpush1.msra.mxu0 0.0
      %3091 = vmatprep.subr.mxu0 0.0
      %3092 = vmatpush1.msra.mxu0 0.0
      %3093 = vmatprep.subr.mxu0 0.0
      %3094 = vmatpush1.msra.mxu0 0.0
      %3095 = vmatprep.subr.mxu0 0.0
      %3096 = vmatpush1.msra.mxu0 0.0
      %3097 = vmatprep.subr.mxu0 0.0
      %3098 = vmatpush1.msra.mxu0 0.0
      %3099 = vmatprep.subr.mxu0 0.0
      %3100 = vmatpush1.msra.mxu0 0.0
      %3101 = vmatprep.subr.mxu0 0.0
      %3102 = vmatpush1.msra.mxu0 0.0
      %3103 = vmatprep.subr.mxu0 0.0
      %3104 = vmatpush1.msra.mxu0 0.0
      %3105 = vmatprep.subr.mxu0 0.0
      %3106 = vmatpush1.msra.mxu0 0.0
      %3107 = vmatprep.subr.mxu0 0.0
      %3108 = vmatpush1.msra.mxu0 0.0
      %3109 = vmatprep.subr.mxu0 0.0
      %3110 = vmatpush1.msra.mxu0 0.0
      %3111 = vmatprep.subr.mxu0 0.0
      %3112 = vmatpush1.msra.mxu0 0.0
      %3113 = vmatprep.subr.mxu0 0.0
      %3114 = vmatpush1.msra.mxu0 0.0
      %3115 = vmatprep.mubr.f32.mxu0 0.0
      %3116 = vmatmul.mubr.f32.gmra.mrb[0].mxu0 %v3028
      %v3117 = vpop.f32.mrb[0].mxu0
      %v3118 = vadd.f32 0.0, %v3117
      %v3119 = vpop.f32.mrb[0].mxu0
      %3120 = vmatprep.mubr.f32.mxu0 0.0
      %3121 = vmatmul.mubr.f32.gmra.mrb[0].mxu0 %v3031
      %v3122 = vpop.f32.mrb[0].mxu0
      %v3123 = vadd.f32 0.0, %v3122
      %v3124 = vpop.f32.mrb[0].mxu0
      %3125 = vmatprep.mubr.f32.mxu0 0.0
      %3126 = vmatmul.mubr.f32.gmra.mrb[0].mxu0 %v3034
      %v3127 = vpop.f32.mrb[0].mxu0
      %v3128 = vadd.f32 0.0, %v3127
      %v3129 = vpop.f32.mrb[0].mxu0
      %3130 = vmatprep.mubr.f32.mxu0 0.0
      %3131 = vmatmul.mubr.f32.gmra.mrb[0].mxu0 %v3037
      %v3132 = vpop.f32.mrb[0].mxu0
      %v3133 = vadd.f32 0.0, %v3132
      %v3134 = vpop.f32.mrb[0].mxu0
      %3135 = vmatprep.mubr.f32.mxu0 0.0
      %3136 = vmatmul.mubr.f32.gmra.mrb[0].mxu0 %v3040
      %v3137 = vpop.f32.mrb[0].mxu0
      %v3138 = vadd.f32 0.0, %v3137
      %v3139 = vpop.f32.mrb[0].mxu0
      %3140 = vmatprep.mubr.f32.mxu0 0.0
      %3141 = vmatmul.mubr.f32.gmra.mrb[0].mxu0 %v3043
      %v3142 = vpop.f32.mrb[0].mxu0
      %v3143 = vadd.f32 0.0, %v3142
      %v3144 = vpop.f32.mrb[0].mxu0
      %3145 = vmatprep.mubr.f32.mxu0 0.0
      %3146 = vmatmul.mubr.f32.gmra.mrb[0].mxu0 %v3046
      %v3147 = vpop.f32.mrb[0].mxu0
      %v3148 = vadd.f32 0.0, %v3147
      %v3149 = vpop.f32.mrb[0].mxu0
      %3150 = vmatprep.mubr.f32.mxu0 0.0
      %3151 = vmatmul.mubr.f32.gmra.mrb[0].mxu0 %v3049
      %v3152 = vpop.f32.mrb[0].mxu0
      %v3153 = vadd.f32 0.0, %v3152
      %v3154 = vpop.f32.mrb[0].mxu0
      %3155 = vdwg.mxu0
      %v3157 = vsel %vm1210, %v2624, 0
      %v3160 = vsel %vm1210, %v2625, 0
      %v3163 = vsel %vm1210, %v2626, 0
      %v3166 = vsel %vm1210, %v2627, 0
      %v3169 = vsel %vm1210, %v2628, 0
      %v3172 = vsel %vm1210, %v2629, 0
      %v3175 = vsel %vm1210, %v2630, 0
      %v3178 = vsel %vm1210, %v2631, 0
      %3180 = vmatprep.subr.mxu0 0.0
      %3181 = vmatpush1.msra.mxu0 %v2761
      %3182 = vmatprep.subr.mxu0 0.0
      %3183 = vmatpush1.msra.mxu0 %v2766
      %3184 = vmatprep.subr.mxu0 0.0
      %3185 = vmatpush1.msra.mxu0 0.0
      %3186 = vmatprep.subr.mxu0 0.0
      %3187 = vmatpush1.msra.mxu0 0.0
      %3188 = vmatprep.subr.mxu0 0.0
      %3189 = vmatpush1.msra.mxu0 0.0
      %3190 = vmatprep.subr.mxu0 0.0
      %3191 = vmatpush1.msra.mxu0 0.0
      %3192 = vmatprep.subr.mxu0 0.0
      %3193 = vmatpush1.msra.mxu0 0.0
      %3194 = vmatprep.subr.mxu0 0.0
      %3195 = vmatpush1.msra.mxu0 0.0
      %3196 = vmatprep.subr.mxu0 0.0
      %3197 = vmatpush1.msra.mxu0 0.0
      %3198 = vmatprep.subr.mxu0 0.0
      %3199 = vmatpush1.msra.mxu0 0.0
      %3200 = vmatprep.subr.mxu0 0.0
      %3201 = vmatpush1.msra.mxu0 0.0
      %3202 = vmatprep.subr.mxu0 0.0
      %3203 = vmatpush1.msra.mxu0 0.0
      %3204 = vmatprep.subr.mxu0 0.0
      %3205 = vmatpush1.msra.mxu0 0.0
      %3206 = vmatprep.subr.mxu0 0.0
      %3207 = vmatpush1.msra.mxu0 0.0
      %3208 = vmatprep.subr.mxu0 0.0
      %3209 = vmatpush1.msra.mxu0 0.0
      %3210 = vmatprep.subr.mxu0 0.0
      %3211 = vmatpush1.msra.mxu0 0.0
      %3212 = vmatprep.subr.mxu0 0.0
      %3213 = vmatpush1.msra.mxu0 0.0
      %3214 = vmatprep.subr.mxu0 0.0
      %3215 = vmatpush1.msra.mxu0 0.0
      %3216 = vmatprep.subr.mxu0 0.0
      %3217 = vmatpush1.msra.mxu0 0.0
      %3218 = vmatprep.subr.mxu0 0.0
      %3219 = vmatpush1.msra.mxu0 0.0
      %3220 = vmatprep.subr.mxu0 0.0
      %3221 = vmatpush1.msra.mxu0 0.0
      %3222 = vmatprep.subr.mxu0 0.0
      %3223 = vmatpush1.msra.mxu0 0.0
      %3224 = vmatprep.subr.mxu0 0.0
      %3225 = vmatpush1.msra.mxu0 0.0
      %3226 = vmatprep.subr.mxu0 0.0
      %3227 = vmatpush1.msra.mxu0 0.0
      %3228 = vmatprep.subr.mxu0 0.0
      %3229 = vmatpush1.msra.mxu0 0.0
      %3230 = vmatprep.subr.mxu0 0.0
      %3231 = vmatpush1.msra.mxu0 0.0
      %3232 = vmatprep.subr.mxu0 0.0
      %3233 = vmatpush1.msra.mxu0 0.0
      %3234 = vmatprep.subr.mxu0 0.0
      %3235 = vmatpush1.msra.mxu0 0.0
      %3236 = vmatprep.subr.mxu0 0.0
      %3237 = vmatpush1.msra.mxu0 0.0
      %3238 = vmatprep.subr.mxu0 0.0
      %3239 = vmatpush1.msra.mxu0 0.0
      %3240 = vmatprep.subr.mxu0 0.0
      %3241 = vmatpush1.msra.mxu0 0.0
      %3242 = vmatprep.subr.mxu0 0.0
      %3243 = vmatpush1.msra.mxu0 0.0
      %3244 = vmatprep.mubr.f32.mxu0 0.0
      %3245 = vmatmul.mubr.f32.gmra.mrb[0].mxu0 %v3157
      %v3246 = vpop.f32.mrb[0].mxu0
      %v3247 = vadd.f32 0.0, %v3246
      %v3248 = vpop.f32.mrb[0].mxu0
      %3249 = vmatprep.mubr.f32.mxu0 0.0
      %3250 = vmatmul.mubr.f32.gmra.mrb[0].mxu0 %v3160
      %v3251 = vpop.f32.mrb[0].mxu0
      %v3252 = vadd.f32 0.0, %v3251
      %v3253 = vpop.f32.mrb[0].mxu0
      %3254 = vmatprep.mubr.f32.mxu0 0.0
      %3255 = vmatmul.mubr.f32.gmra.mrb[0].mxu0 %v3163
      %v3256 = vpop.f32.mrb[0].mxu0
      %v3257 = vadd.f32 0.0, %v3256
      %v3258 = vpop.f32.mrb[0].mxu0
      %3259 = vmatprep.mubr.f32.mxu0 0.0
      %3260 = vmatmul.mubr.f32.gmra.mrb[0].mxu0 %v3166
      %v3261 = vpop.f32.mrb[0].mxu0
      %v3262 = vadd.f32 0.0, %v3261
      %v3263 = vpop.f32.mrb[0].mxu0
      %3264 = vmatprep.mubr.f32.mxu0 0.0
      %3265 = vmatmul.mubr.f32.gmra.mrb[0].mxu0 %v3169
      %v3266 = vpop.f32.mrb[0].mxu0
      %v3267 = vadd.f32 0.0, %v3266
      %v3268 = vpop.f32.mrb[0].mxu0
      %3269 = vmatprep.mubr.f32.mxu0 0.0
      %3270 = vmatmul.mubr.f32.gmra.mrb[0].mxu0 %v3172
      %v3271 = vpop.f32.mrb[0].mxu0
      %v3272 = vadd.f32 0.0, %v3271
      %v3273 = vpop.f32.mrb[0].mxu0
      %3274 = vmatprep.mubr.f32.mxu0 0.0
      %3275 = vmatmul.mubr.f32.gmra.mrb[0].mxu0 %v3175
      %v3276 = vpop.f32.mrb[0].mxu0
      %v3277 = vadd.f32 0.0, %v3276
      %v3278 = vpop.f32.mrb[0].mxu0
      %3279 = vmatprep.mubr.f32.mxu0 0.0
      %3280 = vmatmul.mubr.f32.gmra.mrb[0].mxu0 %v3178
      %v3281 = vpop.f32.mrb[0].mxu0
      %v3282 = vadd.f32 0.0, %v3281
      %v3283 = vpop.f32.mrb[0].mxu0
      %3284 = vdwg.mxu0
      %v3286 = vsel %vm1210, %v1531, 0
      %v3289 = vsel %vm1210, %v1532, 0
      %v3292 = vsel %vm1210, %v1533, 0
      %v3295 = vsel %vm1210, %v1534, 0
      %v3298 = vsel %vm1210, %v1535, 0
      %v3301 = vsel %vm1210, %v1536, 0
      %v3304 = vsel %vm1210, %v1537, 0
      %v3307 = vsel %vm1210, %v1538, 0
      %3309 = vmatprep.subr.mxu0 0.0
      %3310 = vmatpush1.msra.mxu0 %v1662
      %3311 = vmatprep.subr.mxu0 0.0
      %3312 = vmatpush1.msra.mxu0 %v1667
      %3313 = vmatprep.subr.mxu0 0.0
      %3314 = vmatpush1.msra.mxu0 0.0
      %3315 = vmatprep.subr.mxu0 0.0
      %3316 = vmatpush1.msra.mxu0 0.0
      %3317 = vmatprep.subr.mxu0 0.0
      %3318 = vmatpush1.msra.mxu0 0.0
      %3319 = vmatprep.subr.mxu0 0.0
      %3320 = vmatpush1.msra.mxu0 0.0
      %3321 = vmatprep.subr.mxu0 0.0
      %3322 = vmatpush1.msra.mxu0 0.0
      %3323 = vmatprep.subr.mxu0 0.0
      %3324 = vmatpush1.msra.mxu0 0.0
      %3325 = vmatprep.subr.mxu0 0.0
      %3326 = vmatpush1.msra.mxu0 0.0
      %3327 = vmatprep.subr.mxu0 0.0
      %3328 = vmatpush1.msra.mxu0 0.0
      %3329 = vmatprep.subr.mxu0 0.0
      %3330 = vmatpush1.msra.mxu0 0.0
      %3331 = vmatprep.subr.mxu0 0.0
      %3332 = vmatpush1.msra.mxu0 0.0
      %3333 = vmatprep.subr.mxu0 0.0
      %3334 = vmatpush1.msra.mxu0 0.0
      %3335 = vmatprep.subr.mxu0 0.0
      %3336 = vmatpush1.msra.mxu0 0.0
      %3337 = vmatprep.subr.mxu0 0.0
      %3338 = vmatpush1.msra.mxu0 0.0
      %3339 = vmatprep.subr.mxu0 0.0
      %3340 = vmatpush1.msra.mxu0 0.0
      %3341 = vmatprep.subr.mxu0 0.0
      %3342 = vmatpush1.msra.mxu0 0.0
      %3343 = vmatprep.subr.mxu0 0.0
      %3344 = vmatpush1.msra.mxu0 0.0
      %3345 = vmatprep.subr.mxu0 0.0
      %3346 = vmatpush1.msra.mxu0 0.0
      %3347 = vmatprep.subr.mxu0 0.0
      %3348 = vmatpush1.msra.mxu0 0.0
      %3349 = vmatprep.subr.mxu0 0.0
      %3350 = vmatpush1.msra.mxu0 0.0
      %3351 = vmatprep.subr.mxu0 0.0
      %3352 = vmatpush1.msra.mxu0 0.0
      %3353 = vmatprep.subr.mxu0 0.0
      %3354 = vmatpush1.msra.mxu0 0.0
      %3355 = vmatprep.subr.mxu0 0.0
      %3356 = vmatpush1.msra.mxu0 0.0
      %3357 = vmatprep.subr.mxu0 0.0
      %3358 = vmatpush1.msra.mxu0 0.0
      %3359 = vmatprep.subr.mxu0 0.0
      %3360 = vmatpush1.msra.mxu0 0.0
      %3361 = vmatprep.subr.mxu0 0.0
      %3362 = vmatpush1.msra.mxu0 0.0
      %3363 = vmatprep.subr.mxu0 0.0
      %3364 = vmatpush1.msra.mxu0 0.0
      %3365 = vmatprep.subr.mxu0 0.0
      %3366 = vmatpush1.msra.mxu0 0.0
      %3367 = vmatprep.subr.mxu0 0.0
      %3368 = vmatpush1.msra.mxu0 0.0
      %3369 = vmatprep.subr.mxu0 0.0
      %3370 = vmatpush1.msra.mxu0 0.0
      %3371 = vmatprep.subr.mxu0 0.0
      %3372 = vmatpush1.msra.mxu0 0.0
      %3373 = vmatprep.mubr.f32.mxu0 0.0
      %3374 = vmatmul.mubr.f32.gmra.mrb[0].mxu0 %v3286
      %v3375 = vpop.f32.mrb[0].mxu0
      %v3376 = vadd.f32 %v2860, %v3375
      %v3377 = vpop.f32.mrb[0].mxu0
      %3378 = vmatprep.mubr.f32.mxu0 0.0
      %3379 = vmatmul.mubr.f32.gmra.mrb[0].mxu0 %v3289
      %v3380 = vpop.f32.mrb[0].mxu0
      %v3381 = vadd.f32 %v2865, %v3380
      %v3382 = vpop.f32.mrb[0].mxu0
      %3383 = vmatprep.mubr.f32.mxu0 0.0
      %3384 = vmatmul.mubr.f32.gmra.mrb[0].mxu0 %v3292
      %v3385 = vpop.f32.mrb[0].mxu0
      %v3386 = vadd.f32 %v2870, %v3385
      %v3387 = vpop.f32.mrb[0].mxu0
      %3388 = vmatprep.mubr.f32.mxu0 0.0
      %3389 = vmatmul.mubr.f32.gmra.mrb[0].mxu0 %v3295
      %v3390 = vpop.f32.mrb[0].mxu0
      %v3391 = vadd.f32 %v2875, %v3390
      %v3392 = vpop.f32.mrb[0].mxu0
      %3393 = vmatprep.mubr.f32.mxu0 0.0
      %3394 = vmatmul.mubr.f32.gmra.mrb[0].mxu0 %v3298
      %v3395 = vpop.f32.mrb[0].mxu0
      %v3396 = vadd.f32 %v2880, %v3395
      %v3397 = vpop.f32.mrb[0].mxu0
      %3398 = vmatprep.mubr.f32.mxu0 0.0
      %3399 = vmatmul.mubr.f32.gmra.mrb[0].mxu0 %v3301
      %v3400 = vpop.f32.mrb[0].mxu0
      %v3401 = vadd.f32 %v2885, %v3400
      %v3402 = vpop.f32.mrb[0].mxu0
      %3403 = vmatprep.mubr.f32.mxu0 0.0
      %3404 = vmatmul.mubr.f32.gmra.mrb[0].mxu0 %v3304
      %v3405 = vpop.f32.mrb[0].mxu0
      %v3406 = vadd.f32 %v2890, %v3405
      %v3407 = vpop.f32.mrb[0].mxu0
      %3408 = vmatprep.mubr.f32.mxu0 0.0
      %3409 = vmatmul.mubr.f32.gmra.mrb[0].mxu0 %v3307
      %v3410 = vpop.f32.mrb[0].mxu0
      %v3411 = vadd.f32 %v2895, %v3410
      %v3412 = vpop.f32.mrb[0].mxu0
      %3413 = vdwg.mxu0
      %v3415 = vsel %vm1210, %v1539, 0
      %v3418 = vsel %vm1210, %v1540, 0
      %v3421 = vsel %vm1210, %v1541, 0
      %v3424 = vsel %vm1210, %v1542, 0
      %v3427 = vsel %vm1210, %v1543, 0
      %v3430 = vsel %vm1210, %v1544, 0
      %v3433 = vsel %vm1210, %v1545, 0
      %v3436 = vsel %vm1210, %v1546, 0
      %3438 = vmatprep.subr.mxu0 0.0
      %3439 = vmatpush1.msra.mxu0 %v1672
      %3440 = vmatprep.subr.mxu0 0.0
      %3441 = vmatpush1.msra.mxu0 %v1677
      %3442 = vmatprep.subr.mxu0 0.0
      %3443 = vmatpush1.msra.mxu0 0.0
      %3444 = vmatprep.subr.mxu0 0.0
      %3445 = vmatpush1.msra.mxu0 0.0
      %3446 = vmatprep.subr.mxu0 0.0
      %3447 = vmatpush1.msra.mxu0 0.0
      %3448 = vmatprep.subr.mxu0 0.0
      %3449 = vmatpush1.msra.mxu0 0.0
      %3450 = vmatprep.subr.mxu0 0.0
      %3451 = vmatpush1.msra.mxu0 0.0
      %3452 = vmatprep.subr.mxu0 0.0
      %3453 = vmatpush1.msra.mxu0 0.0
      %3454 = vmatprep.subr.mxu0 0.0
      %3455 = vmatpush1.msra.mxu0 0.0
      %3456 = vmatprep.subr.mxu0 0.0
      %3457 = vmatpush1.msra.mxu0 0.0
      %3458 = vmatprep.subr.mxu0 0.0
      %3459 = vmatpush1.msra.mxu0 0.0
      %3460 = vmatprep.subr.mxu0 0.0
      %3461 = vmatpush1.msra.mxu0 0.0
      %3462 = vmatprep.subr.mxu0 0.0
      %3463 = vmatpush1.msra.mxu0 0.0
      %3464 = vmatprep.subr.mxu0 0.0
      %3465 = vmatpush1.msra.mxu0 0.0
      %3466 = vmatprep.subr.mxu0 0.0
      %3467 = vmatpush1.msra.mxu0 0.0
      %3468 = vmatprep.subr.mxu0 0.0
      %3469 = vmatpush1.msra.mxu0 0.0
      %3470 = vmatprep.subr.mxu0 0.0
      %3471 = vmatpush1.msra.mxu0 0.0
      %3472 = vmatprep.subr.mxu0 0.0
      %3473 = vmatpush1.msra.mxu0 0.0
      %3474 = vmatprep.subr.mxu0 0.0
      %3475 = vmatpush1.msra.mxu0 0.0
      %3476 = vmatprep.subr.mxu0 0.0
      %3477 = vmatpush1.msra.mxu0 0.0
      %3478 = vmatprep.subr.mxu0 0.0
      %3479 = vmatpush1.msra.mxu0 0.0
      %3480 = vmatprep.subr.mxu0 0.0
      %3481 = vmatpush1.msra.mxu0 0.0
      %3482 = vmatprep.subr.mxu0 0.0
      %3483 = vmatpush1.msra.mxu0 0.0
      %3484 = vmatprep.subr.mxu0 0.0
      %3485 = vmatpush1.msra.mxu0 0.0
      %3486 = vmatprep.subr.mxu0 0.0
      %3487 = vmatpush1.msra.mxu0 0.0
      %3488 = vmatprep.subr.mxu0 0.0
      %3489 = vmatpush1.msra.mxu0 0.0
      %3490 = vmatprep.subr.mxu0 0.0
      %3491 = vmatpush1.msra.mxu0 0.0
      %3492 = vmatprep.subr.mxu0 0.0
      %3493 = vmatpush1.msra.mxu0 0.0
      %3494 = vmatprep.subr.mxu0 0.0
      %3495 = vmatpush1.msra.mxu0 0.0
      %3496 = vmatprep.subr.mxu0 0.0
      %3497 = vmatpush1.msra.mxu0 0.0
      %3498 = vmatprep.subr.mxu0 0.0
      %3499 = vmatpush1.msra.mxu0 0.0
      %3500 = vmatprep.subr.mxu0 0.0
      %3501 = vmatpush1.msra.mxu0 0.0
      %3502 = vmatprep.mubr.f32.mxu0 0.0
      %3503 = vmatmul.mubr.f32.gmra.mrb[0].mxu0 %v3415
      %v3504 = vpop.f32.mrb[0].mxu0
      %v3505 = vadd.f32 %v2989, %v3504
      %v3506 = vpop.f32.mrb[0].mxu0
      %3507 = vmatprep.mubr.f32.mxu0 0.0
      %3508 = vmatmul.mubr.f32.gmra.mrb[0].mxu0 %v3418
      %v3509 = vpop.f32.mrb[0].mxu0
      %v3510 = vadd.f32 %v2994, %v3509
      %v3511 = vpop.f32.mrb[0].mxu0
      %3512 = vmatprep.mubr.f32.mxu0 0.0
      %3513 = vmatmul.mubr.f32.gmra.mrb[0].mxu0 %v3421
      %v3514 = vpop.f32.mrb[0].mxu0
      %v3515 = vadd.f32 %v2999, %v3514
      %v3516 = vpop.f32.mrb[0].mxu0
      %3517 = vmatprep.mubr.f32.mxu0 0.0
      %3518 = vmatmul.mubr.f32.gmra.mrb[0].mxu0 %v3424
      %v3519 = vpop.f32.mrb[0].mxu0
      %v3520 = vadd.f32 %v3004, %v3519
      %v3521 = vpop.f32.mrb[0].mxu0
      %3522 = vmatprep.mubr.f32.mxu0 0.0
      %3523 = vmatmul.mubr.f32.gmra.mrb[0].mxu0 %v3427
      %v3524 = vpop.f32.mrb[0].mxu0
      %v3525 = vadd.f32 %v3009, %v3524
      %v3526 = vpop.f32.mrb[0].mxu0
      %3527 = vmatprep.mubr.f32.mxu0 0.0
      %3528 = vmatmul.mubr.f32.gmra.mrb[0].mxu0 %v3430
      %v3529 = vpop.f32.mrb[0].mxu0
      %v3530 = vadd.f32 %v3014, %v3529
      %v3531 = vpop.f32.mrb[0].mxu0
      %3532 = vmatprep.mubr.f32.mxu0 0.0
      %3533 = vmatmul.mubr.f32.gmra.mrb[0].mxu0 %v3433
      %v3534 = vpop.f32.mrb[0].mxu0
      %v3535 = vadd.f32 %v3019, %v3534
      %v3536 = vpop.f32.mrb[0].mxu0
      %3537 = vmatprep.mubr.f32.mxu0 0.0
      %3538 = vmatmul.mubr.f32.gmra.mrb[0].mxu0 %v3436
      %v3539 = vpop.f32.mrb[0].mxu0
      %v3540 = vadd.f32 %v3024, %v3539
      %v3541 = vpop.f32.mrb[0].mxu0
      %3542 = vdwg.mxu0
      %v3544 = vsel %vm1210, %v1547, 0
      %v3547 = vsel %vm1210, %v1548, 0
      %v3550 = vsel %vm1210, %v1549, 0
      %v3553 = vsel %vm1210, %v1550, 0
      %v3556 = vsel %vm1210, %v1551, 0
      %v3559 = vsel %vm1210, %v1552, 0
      %v3562 = vsel %vm1210, %v1553, 0
      %v3565 = vsel %vm1210, %v1554, 0
      %3567 = vmatprep.subr.mxu0 0.0
      %3568 = vmatpush1.msra.mxu0 %v1682
      %3569 = vmatprep.subr.mxu0 0.0
      %3570 = vmatpush1.msra.mxu0 %v1687
      %3571 = vmatprep.subr.mxu0 0.0
      %3572 = vmatpush1.msra.mxu0 0.0
      %3573 = vmatprep.subr.mxu0 0.0
      %3574 = vmatpush1.msra.mxu0 0.0
      %3575 = vmatprep.subr.mxu0 0.0
      %3576 = vmatpush1.msra.mxu0 0.0
      %3577 = vmatprep.subr.mxu0 0.0
      %3578 = vmatpush1.msra.mxu0 0.0
      %3579 = vmatprep.subr.mxu0 0.0
      %3580 = vmatpush1.msra.mxu0 0.0
      %3581 = vmatprep.subr.mxu0 0.0
      %3582 = vmatpush1.msra.mxu0 0.0
      %3583 = vmatprep.subr.mxu0 0.0
      %3584 = vmatpush1.msra.mxu0 0.0
      %3585 = vmatprep.subr.mxu0 0.0
      %3586 = vmatpush1.msra.mxu0 0.0
      %3587 = vmatprep.subr.mxu0 0.0
      %3588 = vmatpush1.msra.mxu0 0.0
      %3589 = vmatprep.subr.mxu0 0.0
      %3590 = vmatpush1.msra.mxu0 0.0
      %3591 = vmatprep.subr.mxu0 0.0
      %3592 = vmatpush1.msra.mxu0 0.0
      %3593 = vmatprep.subr.mxu0 0.0
      %3594 = vmatpush1.msra.mxu0 0.0
      %3595 = vmatprep.subr.mxu0 0.0
      %3596 = vmatpush1.msra.mxu0 0.0
      %3597 = vmatprep.subr.mxu0 0.0
      %3598 = vmatpush1.msra.mxu0 0.0
      %3599 = vmatprep.subr.mxu0 0.0
      %3600 = vmatpush1.msra.mxu0 0.0
      %3601 = vmatprep.subr.mxu0 0.0
      %3602 = vmatpush1.msra.mxu0 0.0
      %3603 = vmatprep.subr.mxu0 0.0
      %3604 = vmatpush1.msra.mxu0 0.0
      %3605 = vmatprep.subr.mxu0 0.0
      %3606 = vmatpush1.msra.mxu0 0.0
      %3607 = vmatprep.subr.mxu0 0.0
      %3608 = vmatpush1.msra.mxu0 0.0
      %3609 = vmatprep.subr.mxu0 0.0
      %3610 = vmatpush1.msra.mxu0 0.0
      %3611 = vmatprep.subr.mxu0 0.0
      %3612 = vmatpush1.msra.mxu0 0.0
      %3613 = vmatprep.subr.mxu0 0.0
      %3614 = vmatpush1.msra.mxu0 0.0
      %3615 = vmatprep.subr.mxu0 0.0
      %3616 = vmatpush1.msra.mxu0 0.0
      %3617 = vmatprep.subr.mxu0 0.0
      %3618 = vmatpush1.msra.mxu0 0.0
      %3619 = vmatprep.subr.mxu0 0.0
      %3620 = vmatpush1.msra.mxu0 0.0
      %3621 = vmatprep.subr.mxu0 0.0
      %3622 = vmatpush1.msra.mxu0 0.0
      %3623 = vmatprep.subr.mxu0 0.0
      %3624 = vmatpush1.msra.mxu0 0.0
      %3625 = vmatprep.subr.mxu0 0.0
      %3626 = vmatpush1.msra.mxu0 0.0
      %3627 = vmatprep.subr.mxu0 0.0
      %3628 = vmatpush1.msra.mxu0 0.0
      %3629 = vmatprep.subr.mxu0 0.0
      %3630 = vmatpush1.msra.mxu0 0.0
      %3631 = vmatprep.mubr.f32.mxu0 0.0
      %3632 = vmatmul.mubr.f32.gmra.mrb[0].mxu0 %v3544
      %v3633 = vpop.f32.mrb[0].mxu0
      %v3634 = vadd.f32 %v3118, %v3633
      %v3635 = vpop.f32.mrb[0].mxu0
      %3636 = vmatprep.mubr.f32.mxu0 0.0
      %3637 = vmatmul.mubr.f32.gmra.mrb[0].mxu0 %v3547
      %v3638 = vpop.f32.mrb[0].mxu0
      %v3639 = vadd.f32 %v3123, %v3638
      %v3640 = vpop.f32.mrb[0].mxu0
      %3641 = vmatprep.mubr.f32.mxu0 0.0
      %3642 = vmatmul.mubr.f32.gmra.mrb[0].mxu0 %v3550
      %v3643 = vpop.f32.mrb[0].mxu0
      %v3644 = vadd.f32 %v3128, %v3643
      %v3645 = vpop.f32.mrb[0].mxu0
      %3646 = vmatprep.mubr.f32.mxu0 0.0
      %3647 = vmatmul.mubr.f32.gmra.mrb[0].mxu0 %v3553
      %v3648 = vpop.f32.mrb[0].mxu0
      %v3649 = vadd.f32 %v3133, %v3648
      %v3650 = vpop.f32.mrb[0].mxu0
      %3651 = vmatprep.mubr.f32.mxu0 0.0
      %3652 = vmatmul.mubr.f32.gmra.mrb[0].mxu0 %v3556
      %v3653 = vpop.f32.mrb[0].mxu0
      %v3654 = vadd.f32 %v3138, %v3653
      %v3655 = vpop.f32.mrb[0].mxu0
      %3656 = vmatprep.mubr.f32.mxu0 0.0
      %3657 = vmatmul.mubr.f32.gmra.mrb[0].mxu0 %v3559
      %v3658 = vpop.f32.mrb[0].mxu0
      %v3659 = vadd.f32 %v3143, %v3658
      %v3660 = vpop.f32.mrb[0].mxu0
      %3661 = vmatprep.mubr.f32.mxu0 0.0
      %3662 = vmatmul.mubr.f32.gmra.mrb[0].mxu0 %v3562
      %v3663 = vpop.f32.mrb[0].mxu0
      %v3664 = vadd.f32 %v3148, %v3663
      %v3665 = vpop.f32.mrb[0].mxu0
      %3666 = vmatprep.mubr.f32.mxu0 0.0
      %3667 = vmatmul.mubr.f32.gmra.mrb[0].mxu0 %v3565
      %v3668 = vpop.f32.mrb[0].mxu0
      %v3669 = vadd.f32 %v3153, %v3668
      %v3670 = vpop.f32.mrb[0].mxu0
      %3671 = vdwg.mxu0
      %v3673 = vsel %vm1210, %v1555, 0
      %v3676 = vsel %vm1210, %v1556, 0
      %v3679 = vsel %vm1210, %v1557, 0
      %v3682 = vsel %vm1210, %v1558, 0
      %v3685 = vsel %vm1210, %v1559, 0
      %v3688 = vsel %vm1210, %v1560, 0
      %v3691 = vsel %vm1210, %v1561, 0
      %v3694 = vsel %vm1210, %v1562, 0
      %3696 = vmatprep.subr.mxu0 0.0
      %3697 = vmatpush1.msra.mxu0 %v1692
      %3698 = vmatprep.subr.mxu0 0.0
      %3699 = vmatpush1.msra.mxu0 %v1697
      %3700 = vmatprep.subr.mxu0 0.0
      %3701 = vmatpush1.msra.mxu0 0.0
      %3702 = vmatprep.subr.mxu0 0.0
      %3703 = vmatpush1.msra.mxu0 0.0
      %3704 = vmatprep.subr.mxu0 0.0
      %3705 = vmatpush1.msra.mxu0 0.0
      %3706 = vmatprep.subr.mxu0 0.0
      %3707 = vmatpush1.msra.mxu0 0.0
      %3708 = vmatprep.subr.mxu0 0.0
      %3709 = vmatpush1.msra.mxu0 0.0
      %3710 = vmatprep.subr.mxu0 0.0
      %3711 = vmatpush1.msra.mxu0 0.0
      %3712 = vmatprep.subr.mxu0 0.0
      %3713 = vmatpush1.msra.mxu0 0.0
      %3714 = vmatprep.subr.mxu0 0.0
      %3715 = vmatpush1.msra.mxu0 0.0
      %3716 = vmatprep.subr.mxu0 0.0
      %3717 = vmatpush1.msra.mxu0 0.0
      %3718 = vmatprep.subr.mxu0 0.0
      %3719 = vmatpush1.msra.mxu0 0.0
      %3720 = vmatprep.subr.mxu0 0.0
      %3721 = vmatpush1.msra.mxu0 0.0
      %3722 = vmatprep.subr.mxu0 0.0
      %3723 = vmatpush1.msra.mxu0 0.0
      %3724 = vmatprep.subr.mxu0 0.0
      %3725 = vmatpush1.msra.mxu0 0.0
      %3726 = vmatprep.subr.mxu0 0.0
      %3727 = vmatpush1.msra.mxu0 0.0
      %3728 = vmatprep.subr.mxu0 0.0
      %3729 = vmatpush1.msra.mxu0 0.0
      %3730 = vmatprep.subr.mxu0 0.0
      %3731 = vmatpush1.msra.mxu0 0.0
      %3732 = vmatprep.subr.mxu0 0.0
      %3733 = vmatpush1.msra.mxu0 0.0
      %3734 = vmatprep.subr.mxu0 0.0
      %3735 = vmatpush1.msra.mxu0 0.0
      %3736 = vmatprep.subr.mxu0 0.0
      %3737 = vmatpush1.msra.mxu0 0.0
      %3738 = vmatprep.subr.mxu0 0.0
      %3739 = vmatpush1.msra.mxu0 0.0
      %3740 = vmatprep.subr.mxu0 0.0
      %3741 = vmatpush1.msra.mxu0 0.0
      %3742 = vmatprep.subr.mxu0 0.0
      %3743 = vmatpush1.msra.mxu0 0.0
      %3744 = vmatprep.subr.mxu0 0.0
      %3745 = vmatpush1.msra.mxu0 0.0
      %3746 = vmatprep.subr.mxu0 0.0
      %3747 = vmatpush1.msra.mxu0 0.0
      %3748 = vmatprep.subr.mxu0 0.0
      %3749 = vmatpush1.msra.mxu0 0.0
      %3750 = vmatprep.subr.mxu0 0.0
      %3751 = vmatpush1.msra.mxu0 0.0
      %3752 = vmatprep.subr.mxu0 0.0
      %3753 = vmatpush1.msra.mxu0 0.0
      %3754 = vmatprep.subr.mxu0 0.0
      %3755 = vmatpush1.msra.mxu0 0.0
      %3756 = vmatprep.subr.mxu0 0.0
      %3757 = vmatpush1.msra.mxu0 0.0
      %3758 = vmatprep.subr.mxu0 0.0
      %3759 = vmatpush1.msra.mxu0 0.0
      %3760 = vmatprep.mubr.f32.mxu0 0.0
      %3761 = vmatmul.mubr.f32.gmra.mrb[0].mxu0 %v3673
      %v3762 = vpop.f32.mrb[0].mxu0
      %v3763 = vadd.f32 %v3247, %v3762
      %v3764 = vpop.f32.mrb[0].mxu0
      %3765 = vmatprep.mubr.f32.mxu0 0.0
      %3766 = vmatmul.mubr.f32.gmra.mrb[0].mxu0 %v3676
      %v3767 = vpop.f32.mrb[0].mxu0
      %v3768 = vadd.f32 %v3252, %v3767
      %v3769 = vpop.f32.mrb[0].mxu0
      %3770 = vmatprep.mubr.f32.mxu0 0.0
      %3771 = vmatmul.mubr.f32.gmra.mrb[0].mxu0 %v3679
      %v3772 = vpop.f32.mrb[0].mxu0
      %v3773 = vadd.f32 %v3257, %v3772
      %v3774 = vpop.f32.mrb[0].mxu0
      %3775 = vmatprep.mubr.f32.mxu0 0.0
      %3776 = vmatmul.mubr.f32.gmra.mrb[0].mxu0 %v3682
      %v3777 = vpop.f32.mrb[0].mxu0
      %v3778 = vadd.f32 %v3262, %v3777
      %v3779 = vpop.f32.mrb[0].mxu0
      %3780 = vmatprep.mubr.f32.mxu0 0.0
      %3781 = vmatmul.mubr.f32.gmra.mrb[0].mxu0 %v3685
      %v3782 = vpop.f32.mrb[0].mxu0
      %v3783 = vadd.f32 %v3267, %v3782
      %v3784 = vpop.f32.mrb[0].mxu0
      %3785 = vmatprep.mubr.f32.mxu0 0.0
      %3786 = vmatmul.mubr.f32.gmra.mrb[0].mxu0 %v3688
      %v3787 = vpop.f32.mrb[0].mxu0
      %v3788 = vadd.f32 %v3272, %v3787
      %v3789 = vpop.f32.mrb[0].mxu0
      %3790 = vmatprep.mubr.f32.mxu0 0.0
      %3791 = vmatmul.mubr.f32.gmra.mrb[0].mxu0 %v3691
      %v3792 = vpop.f32.mrb[0].mxu0
      %v3793 = vadd.f32 %v3277, %v3792
      %v3794 = vpop.f32.mrb[0].mxu0
      %3795 = vmatprep.mubr.f32.mxu0 0.0
      %3796 = vmatmul.mubr.f32.gmra.mrb[0].mxu0 %v3694
      %v3797 = vpop.f32.mrb[0].mxu0
      %v3798 = vadd.f32 %v3282, %v3797
      %v3799 = vpop.f32.mrb[0].mxu0
      %3800 = vdwg.mxu0
      %3801 = vrot.lane.b32.xlu0 %v467, 112
      %v3802 = vpop.permute.xlu0 %3801
      %3803 = vrot.lane.b32.xlu0 %v472, 112
      %v3804 = vpop.permute.xlu0 %3803
      %3805 = vrot.lane.b32.xlu0 %v477, 112
      %v3806 = vpop.permute.xlu0 %3805
      %3807 = vrot.lane.b32.xlu0 %v482, 112
      %v3808 = vpop.permute.xlu0 %3807
      %3809 = vrot.lane.b32.xlu0 %v487, 112
      %v3810 = vpop.permute.xlu0 %3809
      %3811 = vrot.lane.b32.xlu0 %v492, 112
      %v3812 = vpop.permute.xlu0 %3811
      %3813 = vrot.lane.b32.xlu0 %v497, 112
      %v3814 = vpop.permute.xlu0 %3813
      %3815 = vrot.lane.b32.xlu0 %v502, 112
      %v3816 = vpop.permute.xlu0 %3815
      %3817 = vrot.lane.b32.xlu0 %v487, 96
      %v3818 = vpop.permute.xlu0 %3817
      %3819 = vrot.lane.b32.xlu0 %v492, 96
      %v3820 = vpop.permute.xlu0 %3819
      %v3821 = vsel %vm667, %v3802, 0
      %v3823 = vsel %vm667, %v3804, 0
      %v3825 = vsel %vm667, %v3806, 0
      %v3827 = vsel %vm667, %v3808, 0
      %v3829 = vsel %vm667, %v3810, 0
      %v3831 = vsel %vm667, %v3812, 0
      %v3833 = vsel %vm667, %v3814, 0
      %v3835 = vsel %vm667, %v3816, 0
      %v3837 = vsel %vm667, %v3818, 0
      %v3839 = vsel %vm667, %v3820, 0
      %3841 = vmatprep.subr.mxu0 0.0
      %3842 = vmatpush1.xpose.msra.mxu0 %v3837
      %3843 = vmatprep.subr.mxu0 0.0
      %3844 = vmatpush1.xpose.msra.mxu0 %v3839
      %3845 = vmatprep.subr.mxu0 0.0
      %3846 = vmatpush1.xpose.msra.mxu0 0.0
      %3847 = vmatprep.subr.mxu0 0.0
      %3848 = vmatpush1.xpose.msra.mxu0 0.0
      %3849 = vmatprep.subr.mxu0 0.0
      %3850 = vmatpush1.xpose.msra.mxu0 0.0
      %3851 = vmatprep.subr.mxu0 0.0
      %3852 = vmatpush1.xpose.msra.mxu0 0.0
      %3853 = vmatprep.subr.mxu0 0.0
      %3854 = vmatpush1.xpose.msra.mxu0 0.0
      %3855 = vmatprep.subr.mxu0 0.0
      %3856 = vmatpush1.xpose.msra.mxu0 0.0
      %3857 = vmatprep.subr.mxu0 0.0
      %3858 = vmatpush1.xpose.msra.mxu0 0.0
      %3859 = vmatprep.subr.mxu0 0.0
      %3860 = vmatpush1.xpose.msra.mxu0 0.0
      %3861 = vmatprep.subr.mxu0 0.0
      %3862 = vmatpush1.xpose.msra.mxu0 0.0
      %3863 = vmatprep.subr.mxu0 0.0
      %3864 = vmatpush1.xpose.msra.mxu0 0.0
      %3865 = vmatprep.subr.mxu0 0.0
      %3866 = vmatpush1.xpose.msra.mxu0 0.0
      %3867 = vmatprep.subr.mxu0 0.0
      %3868 = vmatpush1.xpose.msra.mxu0 0.0
      %3869 = vmatprep.subr.mxu0 0.0
      %3870 = vmatpush1.xpose.msra.mxu0 0.0
      %3871 = vmatprep.subr.mxu0 0.0
      %3872 = vmatpush1.xpose.msra.mxu0 0.0
      %3873 = vmatprep.subr.mxu0 0.0
      %3874 = vmatpush1.xpose.msra.mxu0 0.0
      %3875 = vmatprep.subr.mxu0 0.0
      %3876 = vmatpush1.xpose.msra.mxu0 0.0
      %3877 = vmatprep.subr.mxu0 0.0
      %3878 = vmatpush1.xpose.msra.mxu0 0.0
      %3879 = vmatprep.subr.mxu0 0.0
      %3880 = vmatpush1.xpose.msra.mxu0 0.0
      %3881 = vmatprep.subr.mxu0 0.0
      %3882 = vmatpush1.xpose.msra.mxu0 0.0
      %3883 = vmatprep.subr.mxu0 0.0
      %3884 = vmatpush1.xpose.msra.mxu0 0.0
      %3885 = vmatprep.subr.mxu0 0.0
      %3886 = vmatpush1.xpose.msra.mxu0 0.0
      %3887 = vmatprep.subr.mxu0 0.0
      %3888 = vmatpush1.xpose.msra.mxu0 0.0
      %3889 = vmatprep.subr.mxu0 0.0
      %3890 = vmatpush1.xpose.msra.mxu0 0.0
      %3891 = vmatprep.subr.mxu0 0.0
      %3892 = vmatpush1.xpose.msra.mxu0 0.0
      %3893 = vmatprep.subr.mxu0 0.0
      %3894 = vmatpush1.xpose.msra.mxu0 0.0
      %3895 = vmatprep.subr.mxu0 0.0
      %3896 = vmatpush1.xpose.msra.mxu0 0.0
      %3897 = vmatprep.subr.mxu0 0.0
      %3898 = vmatpush1.xpose.msra.mxu0 0.0
      %3899 = vmatprep.subr.mxu0 0.0
      %3900 = vmatpush1.xpose.msra.mxu0 0.0
      %3901 = vmatprep.subr.mxu0 0.0
      %3902 = vmatpush1.xpose.msra.mxu0 0.0
      %3903 = vmatprep.subr.mxu0 0.0
      %3904 = vmatpush1.xpose.msra.mxu0 0.0
      %3905 = vmatprep.mubr.f32.mxu0 0.0
      %3906 = vmatmul.mubr.f32.gmra.mrb[0].mxu0 %v3821
      %v3907 = vpop.f32.mrb[0].mxu0
      %v3908 = vadd.f32 %v641, %v3907
      %v3909 = vpop.f32.mrb[0].mxu0
      %3910 = vmatprep.mubr.f32.mxu0 0.0
      %3911 = vmatmul.mubr.f32.gmra.mrb[0].mxu0 %v3823
      %v3912 = vpop.f32.mrb[0].mxu0
      %v3913 = vadd.f32 %v642, %v3912
      %v3914 = vpop.f32.mrb[0].mxu0
      %3915 = vmatprep.mubr.f32.mxu0 0.0
      %3916 = vmatmul.mubr.f32.gmra.mrb[0].mxu0 %v3825
      %v3917 = vpop.f32.mrb[0].mxu0
      %v3918 = vadd.f32 %v643, %v3917
      %v3919 = vpop.f32.mrb[0].mxu0
      %3920 = vmatprep.mubr.f32.mxu0 0.0
      %3921 = vmatmul.mubr.f32.gmra.mrb[0].mxu0 %v3827
      %v3922 = vpop.f32.mrb[0].mxu0
      %v3923 = vadd.f32 %v644, %v3922
      %v3924 = vpop.f32.mrb[0].mxu0
      %3925 = vmatprep.mubr.f32.mxu0 0.0
      %3926 = vmatmul.mubr.f32.gmra.mrb[0].mxu0 %v3829
      %v3927 = vpop.f32.mrb[0].mxu0
      %v3928 = vadd.f32 %v645, %v3927
      %v3929 = vpop.f32.mrb[0].mxu0
      %3930 = vmatprep.mubr.f32.mxu0 0.0
      %3931 = vmatmul.mubr.f32.gmra.mrb[0].mxu0 %v3831
      %v3932 = vpop.f32.mrb[0].mxu0
      %v3933 = vadd.f32 %v646, %v3932
      %v3934 = vpop.f32.mrb[0].mxu0
      %3935 = vmatprep.mubr.f32.mxu0 0.0
      %3936 = vmatmul.mubr.f32.gmra.mrb[0].mxu0 %v3833
      %v3937 = vpop.f32.mrb[0].mxu0
      %v3938 = vadd.f32 %v647, %v3937
      %v3939 = vpop.f32.mrb[0].mxu0
      %3940 = vmatprep.mubr.f32.mxu0 0.0
      %3941 = vmatmul.mubr.f32.gmra.mrb[0].mxu0 %v3835
      %v3942 = vpop.f32.mrb[0].mxu0
      %v3943 = vadd.f32 %v648, %v3942
      %v3944 = vpop.f32.mrb[0].mxu0
      %3945 = vdwg.mxu0
      %3946 = vrot.lane.b32.xlu0 %v507, 112
      %v3947 = vpop.permute.xlu0 %3946
      %3948 = vrot.lane.b32.xlu0 %v512, 112
      %v3949 = vpop.permute.xlu0 %3948
      %3950 = vrot.lane.b32.xlu0 %v517, 112
      %v3951 = vpop.permute.xlu0 %3950
      %3952 = vrot.lane.b32.xlu0 %v522, 112
      %v3953 = vpop.permute.xlu0 %3952
      %3954 = vrot.lane.b32.xlu0 %v527, 112
      %v3955 = vpop.permute.xlu0 %3954
      %3956 = vrot.lane.b32.xlu0 %v532, 112
      %v3957 = vpop.permute.xlu0 %3956
      %3958 = vrot.lane.b32.xlu0 %v537, 112
      %v3959 = vpop.permute.xlu0 %3958
      %3960 = vrot.lane.b32.xlu0 %v542, 112
      %v3961 = vpop.permute.xlu0 %3960
      %3962 = vrot.lane.b32.xlu0 %v527, 96
      %v3963 = vpop.permute.xlu0 %3962
      %3964 = vrot.lane.b32.xlu0 %v532, 96
      %v3965 = vpop.permute.xlu0 %3964
      %v3966 = vsel %vm667, %v3947, 0
      %v3968 = vsel %vm667, %v3949, 0
      %v3970 = vsel %vm667, %v3951, 0
      %v3972 = vsel %vm667, %v3953, 0
      %v3974 = vsel %vm667, %v3955, 0
      %v3976 = vsel %vm667, %v3957, 0
      %v3978 = vsel %vm667, %v3959, 0
      %v3980 = vsel %vm667, %v3961, 0
      %v3982 = vsel %vm667, %v3963, 0
      %v3984 = vsel %vm667, %v3965, 0
      %3986 = vmatprep.subr.mxu0 0.0
      %3987 = vmatpush1.xpose.msra.mxu0 %v3982
      %3988 = vmatprep.subr.mxu0 0.0
      %3989 = vmatpush1.xpose.msra.mxu0 %v3984
      %3990 = vmatprep.subr.mxu0 0.0
      %3991 = vmatpush1.xpose.msra.mxu0 0.0
      %3992 = vmatprep.subr.mxu0 0.0
      %3993 = vmatpush1.xpose.msra.mxu0 0.0
      %3994 = vmatprep.subr.mxu0 0.0
      %3995 = vmatpush1.xpose.msra.mxu0 0.0
      %3996 = vmatprep.subr.mxu0 0.0
      %3997 = vmatpush1.xpose.msra.mxu0 0.0
      %3998 = vmatprep.subr.mxu0 0.0
      %3999 = vmatpush1.xpose.msra.mxu0 0.0
      %4000 = vmatprep.subr.mxu0 0.0
      %4001 = vmatpush1.xpose.msra.mxu0 0.0
      %4002 = vmatprep.subr.mxu0 0.0
      %4003 = vmatpush1.xpose.msra.mxu0 0.0
      %4004 = vmatprep.subr.mxu0 0.0
      %4005 = vmatpush1.xpose.msra.mxu0 0.0
      %4006 = vmatprep.subr.mxu0 0.0
      %4007 = vmatpush1.xpose.msra.mxu0 0.0
      %4008 = vmatprep.subr.mxu0 0.0
      %4009 = vmatpush1.xpose.msra.mxu0 0.0
      %4010 = vmatprep.subr.mxu0 0.0
      %4011 = vmatpush1.xpose.msra.mxu0 0.0
      %4012 = vmatprep.subr.mxu0 0.0
      %4013 = vmatpush1.xpose.msra.mxu0 0.0
      %4014 = vmatprep.subr.mxu0 0.0
      %4015 = vmatpush1.xpose.msra.mxu0 0.0
      %4016 = vmatprep.subr.mxu0 0.0
      %4017 = vmatpush1.xpose.msra.mxu0 0.0
      %4018 = vmatprep.subr.mxu0 0.0
      %4019 = vmatpush1.xpose.msra.mxu0 0.0
      %4020 = vmatprep.subr.mxu0 0.0
      %4021 = vmatpush1.xpose.msra.mxu0 0.0
      %4022 = vmatprep.subr.mxu0 0.0
      %4023 = vmatpush1.xpose.msra.mxu0 0.0
      %4024 = vmatprep.subr.mxu0 0.0
      %4025 = vmatpush1.xpose.msra.mxu0 0.0
      %4026 = vmatprep.subr.mxu0 0.0
      %4027 = vmatpush1.xpose.msra.mxu0 0.0
      %4028 = vmatprep.subr.mxu0 0.0
      %4029 = vmatpush1.xpose.msra.mxu0 0.0
      %4030 = vmatprep.subr.mxu0 0.0
      %4031 = vmatpush1.xpose.msra.mxu0 0.0
      %4032 = vmatprep.subr.mxu0 0.0
      %4033 = vmatpush1.xpose.msra.mxu0 0.0
      %4034 = vmatprep.subr.mxu0 0.0
      %4035 = vmatpush1.xpose.msra.mxu0 0.0
      %4036 = vmatprep.subr.mxu0 0.0
      %4037 = vmatpush1.xpose.msra.mxu0 0.0
      %4038 = vmatprep.subr.mxu0 0.0
      %4039 = vmatpush1.xpose.msra.mxu0 0.0
      %4040 = vmatprep.subr.mxu0 0.0
      %4041 = vmatpush1.xpose.msra.mxu0 0.0
      %4042 = vmatprep.subr.mxu0 0.0
      %4043 = vmatpush1.xpose.msra.mxu0 0.0
      %4044 = vmatprep.subr.mxu0 0.0
      %4045 = vmatpush1.xpose.msra.mxu0 0.0
      %4046 = vmatprep.subr.mxu0 0.0
      %4047 = vmatpush1.xpose.msra.mxu0 0.0
      %4048 = vmatprep.subr.mxu0 0.0
      %4049 = vmatpush1.xpose.msra.mxu0 0.0
      %4050 = vmatprep.mubr.f32.mxu0 0.0
      %4051 = vmatmul.mubr.f32.gmra.mrb[0].mxu0 %v3966
      %v4052 = vpop.f32.mrb[0].mxu0
      %v4053 = vadd.f32 %v641, %v4052
      %v4054 = vpop.f32.mrb[0].mxu0
      %4055 = vmatprep.mubr.f32.mxu0 0.0
      %4056 = vmatmul.mubr.f32.gmra.mrb[0].mxu0 %v3968
      %v4057 = vpop.f32.mrb[0].mxu0
      %v4058 = vadd.f32 %v642, %v4057
      %v4059 = vpop.f32.mrb[0].mxu0
      %4060 = vmatprep.mubr.f32.mxu0 0.0
      %4061 = vmatmul.mubr.f32.gmra.mrb[0].mxu0 %v3970
      %v4062 = vpop.f32.mrb[0].mxu0
      %v4063 = vadd.f32 %v643, %v4062
      %v4064 = vpop.f32.mrb[0].mxu0
      %4065 = vmatprep.mubr.f32.mxu0 0.0
      %4066 = vmatmul.mubr.f32.gmra.mrb[0].mxu0 %v3972
      %v4067 = vpop.f32.mrb[0].mxu0
      %v4068 = vadd.f32 %v644, %v4067
      %v4069 = vpop.f32.mrb[0].mxu0
      %4070 = vmatprep.mubr.f32.mxu0 0.0
      %4071 = vmatmul.mubr.f32.gmra.mrb[0].mxu0 %v3974
      %v4072 = vpop.f32.mrb[0].mxu0
      %v4073 = vadd.f32 %v645, %v4072
      %v4074 = vpop.f32.mrb[0].mxu0
      %4075 = vmatprep.mubr.f32.mxu0 0.0
      %4076 = vmatmul.mubr.f32.gmra.mrb[0].mxu0 %v3976
      %v4077 = vpop.f32.mrb[0].mxu0
      %v4078 = vadd.f32 %v646, %v4077
      %v4079 = vpop.f32.mrb[0].mxu0
      %4080 = vmatprep.mubr.f32.mxu0 0.0
      %4081 = vmatmul.mubr.f32.gmra.mrb[0].mxu0 %v3978
      %v4082 = vpop.f32.mrb[0].mxu0
      %v4083 = vadd.f32 %v647, %v4082
      %v4084 = vpop.f32.mrb[0].mxu0
      %4085 = vmatprep.mubr.f32.mxu0 0.0
      %4086 = vmatmul.mubr.f32.gmra.mrb[0].mxu0 %v3980
      %v4087 = vpop.f32.mrb[0].mxu0
      %v4088 = vadd.f32 %v648, %v4087
      %v4089 = vpop.f32.mrb[0].mxu0
      %4090 = vdwg.mxu0
      %4091 = vrot.lane.b32.xlu0 %v547, 112
      %v4092 = vpop.permute.xlu0 %4091
      %4093 = vrot.lane.b32.xlu0 %v552, 112
      %v4094 = vpop.permute.xlu0 %4093
      %4095 = vrot.lane.b32.xlu0 %v557, 112
      %v4096 = vpop.permute.xlu0 %4095
      %4097 = vrot.lane.b32.xlu0 %v562, 112
      %v4098 = vpop.permute.xlu0 %4097
      %4099 = vrot.lane.b32.xlu0 %v567, 112
      %v4100 = vpop.permute.xlu0 %4099
      %4101 = vrot.lane.b32.xlu0 %v572, 112
      %v4102 = vpop.permute.xlu0 %4101
      %4103 = vrot.lane.b32.xlu0 %v577, 112
      %v4104 = vpop.permute.xlu0 %4103
      %4105 = vrot.lane.b32.xlu0 %v582, 112
      %v4106 = vpop.permute.xlu0 %4105
      %4107 = vrot.lane.b32.xlu0 %v567, 96
      %v4108 = vpop.permute.xlu0 %4107
      %4109 = vrot.lane.b32.xlu0 %v572, 96
      %v4110 = vpop.permute.xlu0 %4109
      %v4111 = vsel %vm667, %v4092, 0
      %v4113 = vsel %vm667, %v4094, 0
      %v4115 = vsel %vm667, %v4096, 0
      %v4117 = vsel %vm667, %v4098, 0
      %v4119 = vsel %vm667, %v4100, 0
      %v4121 = vsel %vm667, %v4102, 0
      %v4123 = vsel %vm667, %v4104, 0
      %v4125 = vsel %vm667, %v4106, 0
      %v4127 = vsel %vm667, %v4108, 0
      %v4129 = vsel %vm667, %v4110, 0
      %4131 = vmatprep.subr.mxu0 0.0
      %4132 = vmatpush1.xpose.msra.mxu0 %v4127
      %4133 = vmatprep.subr.mxu0 0.0
      %4134 = vmatpush1.xpose.msra.mxu0 %v4129
      %4135 = vmatprep.subr.mxu0 0.0
      %4136 = vmatpush1.xpose.msra.mxu0 0.0
      %4137 = vmatprep.subr.mxu0 0.0
      %4138 = vmatpush1.xpose.msra.mxu0 0.0
      %4139 = vmatprep.subr.mxu0 0.0
      %4140 = vmatpush1.xpose.msra.mxu0 0.0
      %4141 = vmatprep.subr.mxu0 0.0
      %4142 = vmatpush1.xpose.msra.mxu0 0.0
      %4143 = vmatprep.subr.mxu0 0.0
      %4144 = vmatpush1.xpose.msra.mxu0 0.0
      %4145 = vmatprep.subr.mxu0 0.0
      %4146 = vmatpush1.xpose.msra.mxu0 0.0
      %4147 = vmatprep.subr.mxu0 0.0
      %4148 = vmatpush1.xpose.msra.mxu0 0.0
      %4149 = vmatprep.subr.mxu0 0.0
      %4150 = vmatpush1.xpose.msra.mxu0 0.0
      %4151 = vmatprep.subr.mxu0 0.0
      %4152 = vmatpush1.xpose.msra.mxu0 0.0
      %4153 = vmatprep.subr.mxu0 0.0
      %4154 = vmatpush1.xpose.msra.mxu0 0.0
      %4155 = vmatprep.subr.mxu0 0.0
      %4156 = vmatpush1.xpose.msra.mxu0 0.0
      %4157 = vmatprep.subr.mxu0 0.0
      %4158 = vmatpush1.xpose.msra.mxu0 0.0
      %4159 = vmatprep.subr.mxu0 0.0
      %4160 = vmatpush1.xpose.msra.mxu0 0.0
      %4161 = vmatprep.subr.mxu0 0.0
      %4162 = vmatpush1.xpose.msra.mxu0 0.0
      %4163 = vmatprep.subr.mxu0 0.0
      %4164 = vmatpush1.xpose.msra.mxu0 0.0
      %4165 = vmatprep.subr.mxu0 0.0
      %4166 = vmatpush1.xpose.msra.mxu0 0.0
      %4167 = vmatprep.subr.mxu0 0.0
      %4168 = vmatpush1.xpose.msra.mxu0 0.0
      %4169 = vmatprep.subr.mxu0 0.0
      %4170 = vmatpush1.xpose.msra.mxu0 0.0
      %4171 = vmatprep.subr.mxu0 0.0
      %4172 = vmatpush1.xpose.msra.mxu0 0.0
      %4173 = vmatprep.subr.mxu0 0.0
      %4174 = vmatpush1.xpose.msra.mxu0 0.0
      %4175 = vmatprep.subr.mxu0 0.0
      %4176 = vmatpush1.xpose.msra.mxu0 0.0
      %4177 = vmatprep.subr.mxu0 0.0
      %4178 = vmatpush1.xpose.msra.mxu0 0.0
      %4179 = vmatprep.subr.mxu0 0.0
      %4180 = vmatpush1.xpose.msra.mxu0 0.0
      %4181 = vmatprep.subr.mxu0 0.0
      %4182 = vmatpush1.xpose.msra.mxu0 0.0
      %4183 = vmatprep.subr.mxu0 0.0
      %4184 = vmatpush1.xpose.msra.mxu0 0.0
      %4185 = vmatprep.subr.mxu0 0.0
      %4186 = vmatpush1.xpose.msra.mxu0 0.0
      %4187 = vmatprep.subr.mxu0 0.0
      %4188 = vmatpush1.xpose.msra.mxu0 0.0
      %4189 = vmatprep.subr.mxu0 0.0
      %4190 = vmatpush1.xpose.msra.mxu0 0.0
      %4191 = vmatprep.subr.mxu0 0.0
      %4192 = vmatpush1.xpose.msra.mxu0 0.0
      %4193 = vmatprep.subr.mxu0 0.0
      %4194 = vmatpush1.xpose.msra.mxu0 0.0
      %4195 = vmatprep.mubr.f32.mxu0 0.0
      %4196 = vmatmul.mubr.f32.gmra.mrb[0].mxu0 %v4111
      %v4197 = vpop.f32.mrb[0].mxu0
      %v4198 = vadd.f32 %v641, %v4197
      %v4199 = vpop.f32.mrb[0].mxu0
      %4200 = vmatprep.mubr.f32.mxu0 0.0
      %4201 = vmatmul.mubr.f32.gmra.mrb[0].mxu0 %v4113
      %v4202 = vpop.f32.mrb[0].mxu0
      %v4203 = vadd.f32 %v642, %v4202
      %v4204 = vpop.f32.mrb[0].mxu0
      %4205 = vmatprep.mubr.f32.mxu0 0.0
      %4206 = vmatmul.mubr.f32.gmra.mrb[0].mxu0 %v4115
      %v4207 = vpop.f32.mrb[0].mxu0
      %v4208 = vadd.f32 %v643, %v4207
      %v4209 = vpop.f32.mrb[0].mxu0
      %4210 = vmatprep.mubr.f32.mxu0 0.0
      %4211 = vmatmul.mubr.f32.gmra.mrb[0].mxu0 %v4117
      %v4212 = vpop.f32.mrb[0].mxu0
      %v4213 = vadd.f32 %v644, %v4212
      %v4214 = vpop.f32.mrb[0].mxu0
      %4215 = vmatprep.mubr.f32.mxu0 0.0
      %4216 = vmatmul.mubr.f32.gmra.mrb[0].mxu0 %v4119
      %v4217 = vpop.f32.mrb[0].mxu0
      %v4218 = vadd.f32 %v645, %v4217
      %v4219 = vpop.f32.mrb[0].mxu0
      %4220 = vmatprep.mubr.f32.mxu0 0.0
      %4221 = vmatmul.mubr.f32.gmra.mrb[0].mxu0 %v4121
      %v4222 = vpop.f32.mrb[0].mxu0
      %v4223 = vadd.f32 %v646, %v4222
      %v4224 = vpop.f32.mrb[0].mxu0
      %4225 = vmatprep.mubr.f32.mxu0 0.0
      %4226 = vmatmul.mubr.f32.gmra.mrb[0].mxu0 %v4123
      %v4227 = vpop.f32.mrb[0].mxu0
      %v4228 = vadd.f32 %v647, %v4227
      %v4229 = vpop.f32.mrb[0].mxu0
      %4230 = vmatprep.mubr.f32.mxu0 0.0
      %4231 = vmatmul.mubr.f32.gmra.mrb[0].mxu0 %v4125
      %v4232 = vpop.f32.mrb[0].mxu0
      %v4233 = vadd.f32 %v648, %v4232
      %v4234 = vpop.f32.mrb[0].mxu0
      %4235 = vdwg.mxu0
      %4236 = vrot.lane.b32.xlu0 %v587, 112
      %v4237 = vpop.permute.xlu0 %4236
      %4238 = vrot.lane.b32.xlu0 %v592, 112
      %v4239 = vpop.permute.xlu0 %4238
      %4240 = vrot.lane.b32.xlu0 %v597, 112
      %v4241 = vpop.permute.xlu0 %4240
      %4242 = vrot.lane.b32.xlu0 %v602, 112
      %v4243 = vpop.permute.xlu0 %4242
      %4244 = vrot.lane.b32.xlu0 %v607, 112
      %v4245 = vpop.permute.xlu0 %4244
      %4246 = vrot.lane.b32.xlu0 %v612, 112
      %v4247 = vpop.permute.xlu0 %4246
      %4248 = vrot.lane.b32.xlu0 %v617, 112
      %v4249 = vpop.permute.xlu0 %4248
      %4250 = vrot.lane.b32.xlu0 %v622, 112
      %v4251 = vpop.permute.xlu0 %4250
      %4252 = vrot.lane.b32.xlu0 %v607, 96
      %v4253 = vpop.permute.xlu0 %4252
      %4254 = vrot.lane.b32.xlu0 %v612, 96
      %v4255 = vpop.permute.xlu0 %4254
      %v4256 = vsel %vm667, %v4237, 0
      %v4258 = vsel %vm667, %v4239, 0
      %v4260 = vsel %vm667, %v4241, 0
      %v4262 = vsel %vm667, %v4243, 0
      %v4264 = vsel %vm667, %v4245, 0
      %v4266 = vsel %vm667, %v4247, 0
      %v4268 = vsel %vm667, %v4249, 0
      %v4270 = vsel %vm667, %v4251, 0
      %v4272 = vsel %vm667, %v4253, 0
      %v4274 = vsel %vm667, %v4255, 0
      %4276 = vmatprep.subr.mxu0 0.0
      %4277 = vmatpush1.xpose.msra.mxu0 %v4272
      %4278 = vmatprep.subr.mxu0 0.0
      %4279 = vmatpush1.xpose.msra.mxu0 %v4274
      %4280 = vmatprep.subr.mxu0 0.0
      %4281 = vmatpush1.xpose.msra.mxu0 0.0
      %4282 = vmatprep.subr.mxu0 0.0
      %4283 = vmatpush1.xpose.msra.mxu0 0.0
      %4284 = vmatprep.subr.mxu0 0.0
      %4285 = vmatpush1.xpose.msra.mxu0 0.0
      %4286 = vmatprep.subr.mxu0 0.0
      %4287 = vmatpush1.xpose.msra.mxu0 0.0
      %4288 = vmatprep.subr.mxu0 0.0
      %4289 = vmatpush1.xpose.msra.mxu0 0.0
      %4290 = vmatprep.subr.mxu0 0.0
      %4291 = vmatpush1.xpose.msra.mxu0 0.0
      %4292 = vmatprep.subr.mxu0 0.0
      %4293 = vmatpush1.xpose.msra.mxu0 0.0
      %4294 = vmatprep.subr.mxu0 0.0
      %4295 = vmatpush1.xpose.msra.mxu0 0.0
      %4296 = vmatprep.subr.mxu0 0.0
      %4297 = vmatpush1.xpose.msra.mxu0 0.0
      %4298 = vmatprep.subr.mxu0 0.0
      %4299 = vmatpush1.xpose.msra.mxu0 0.0
      %4300 = vmatprep.subr.mxu0 0.0
      %4301 = vmatpush1.xpose.msra.mxu0 0.0
      %4302 = vmatprep.subr.mxu0 0.0
      %4303 = vmatpush1.xpose.msra.mxu0 0.0
      %4304 = vmatprep.subr.mxu0 0.0
      %4305 = vmatpush1.xpose.msra.mxu0 0.0
      %4306 = vmatprep.subr.mxu0 0.0
      %4307 = vmatpush1.xpose.msra.mxu0 0.0
      %4308 = vmatprep.subr.mxu0 0.0
      %4309 = vmatpush1.xpose.msra.mxu0 0.0
      %4310 = vmatprep.subr.mxu0 0.0
      %4311 = vmatpush1.xpose.msra.mxu0 0.0
      %4312 = vmatprep.subr.mxu0 0.0
      %4313 = vmatpush1.xpose.msra.mxu0 0.0
      %4314 = vmatprep.subr.mxu0 0.0
      %4315 = vmatpush1.xpose.msra.mxu0 0.0
      %4316 = vmatprep.subr.mxu0 0.0
      %4317 = vmatpush1.xpose.msra.mxu0 0.0
      %4318 = vmatprep.subr.mxu0 0.0
      %4319 = vmatpush1.xpose.msra.mxu0 0.0
      %4320 = vmatprep.subr.mxu0 0.0
      %4321 = vmatpush1.xpose.msra.mxu0 0.0
      %4322 = vmatprep.subr.mxu0 0.0
      %4323 = vmatpush1.xpose.msra.mxu0 0.0
      %4324 = vmatprep.subr.mxu0 0.0
      %4325 = vmatpush1.xpose.msra.mxu0 0.0
      %4326 = vmatprep.subr.mxu0 0.0
      %4327 = vmatpush1.xpose.msra.mxu0 0.0
      %4328 = vmatprep.subr.mxu0 0.0
      %4329 = vmatpush1.xpose.msra.mxu0 0.0
      %4330 = vmatprep.subr.mxu0 0.0
      %4331 = vmatpush1.xpose.msra.mxu0 0.0
      %4332 = vmatprep.subr.mxu0 0.0
      %4333 = vmatpush1.xpose.msra.mxu0 0.0
      %4334 = vmatprep.subr.mxu0 0.0
      %4335 = vmatpush1.xpose.msra.mxu0 0.0
      %4336 = vmatprep.subr.mxu0 0.0
      %4337 = vmatpush1.xpose.msra.mxu0 0.0
      %4338 = vmatprep.subr.mxu0 0.0
      %4339 = vmatpush1.xpose.msra.mxu0 0.0
      %4340 = vmatprep.mubr.f32.mxu0 0.0
      %4341 = vmatmul.mubr.f32.gmra.mrb[0].mxu0 %v4256
      %v4342 = vpop.f32.mrb[0].mxu0
      %v4343 = vadd.f32 %v641, %v4342
      %v4344 = vpop.f32.mrb[0].mxu0
      %4345 = vmatprep.mubr.f32.mxu0 0.0
      %4346 = vmatmul.mubr.f32.gmra.mrb[0].mxu0 %v4258
      %v4347 = vpop.f32.mrb[0].mxu0
      %v4348 = vadd.f32 %v642, %v4347
      %v4349 = vpop.f32.mrb[0].mxu0
      %4350 = vmatprep.mubr.f32.mxu0 0.0
      %4351 = vmatmul.mubr.f32.gmra.mrb[0].mxu0 %v4260
      %v4352 = vpop.f32.mrb[0].mxu0
      %v4353 = vadd.f32 %v643, %v4352
      %v4354 = vpop.f32.mrb[0].mxu0
      %4355 = vmatprep.mubr.f32.mxu0 0.0
      %4356 = vmatmul.mubr.f32.gmra.mrb[0].mxu0 %v4262
      %v4357 = vpop.f32.mrb[0].mxu0
      %v4358 = vadd.f32 %v644, %v4357
      %v4359 = vpop.f32.mrb[0].mxu0
      %4360 = vmatprep.mubr.f32.mxu0 0.0
      %4361 = vmatmul.mubr.f32.gmra.mrb[0].mxu0 %v4264
      %v4362 = vpop.f32.mrb[0].mxu0
      %v4363 = vadd.f32 %v645, %v4362
      %v4364 = vpop.f32.mrb[0].mxu0
      %4365 = vmatprep.mubr.f32.mxu0 0.0
      %4366 = vmatmul.mubr.f32.gmra.mrb[0].mxu0 %v4266
      %v4367 = vpop.f32.mrb[0].mxu0
      %v4368 = vadd.f32 %v646, %v4367
      %v4369 = vpop.f32.mrb[0].mxu0
      %4370 = vmatprep.mubr.f32.mxu0 0.0
      %4371 = vmatmul.mubr.f32.gmra.mrb[0].mxu0 %v4268
      %v4372 = vpop.f32.mrb[0].mxu0
      %v4373 = vadd.f32 %v647, %v4372
      %v4374 = vpop.f32.mrb[0].mxu0
      %4375 = vmatprep.mubr.f32.mxu0 0.0
      %4376 = vmatmul.mubr.f32.gmra.mrb[0].mxu0 %v4270
      %v4377 = vpop.f32.mrb[0].mxu0
      %v4378 = vadd.f32 %v648, %v4377
      %v4379 = vpop.f32.mrb[0].mxu0
      %4380 = vdwg.mxu0
      %v4381 = vsel %vm1210, %v3908, -inf
      %4382 = vmax.xlane.f32.xlu0 %v4381
      %v4383 = vpop.xlane.xlu0 %4382
      %v4384 = vsel %vm1210, %v3913, -inf
      %4385 = vmax.xlane.f32.xlu0 %v4384
      %v4386 = vpop.xlane.xlu0 %4385
      %v4387 = vsel %vm1210, %v3918, -inf
      %4388 = vmax.xlane.f32.xlu0 %v4387
      %v4389 = vpop.xlane.xlu0 %4388
      %v4390 = vsel %vm1210, %v3923, -inf
      %4391 = vmax.xlane.f32.xlu0 %v4390
      %v4392 = vpop.xlane.xlu0 %4391
      %v4393 = vsel %vm1210, %v3928, -inf
      %4394 = vmax.xlane.f32.xlu0 %v4393
      %v4395 = vpop.xlane.xlu0 %4394
      %v4396 = vsel %vm1210, %v3933, -inf
      %4397 = vmax.xlane.f32.xlu0 %v4396
      %v4398 = vpop.xlane.xlu0 %4397
      %v4399 = vsel %vm1210, %v3938, -inf
      %4400 = vmax.xlane.f32.xlu0 %v4399
      %v4401 = vpop.xlane.xlu0 %4400
      %v4402 = vsel %vm1210, %v3943, -inf
      %4403 = vmax.xlane.f32.xlu0 %v4402
      %v4404 = vpop.xlane.xlu0 %4403
      %v4405 = vsel %vm1210, %v4053, -inf
      %4406 = vmax.xlane.f32.xlu0 %v4405
      %v4407 = vpop.xlane.xlu0 %4406
      %v4408 = vsel %vm1210, %v4058, -inf
      %4409 = vmax.xlane.f32.xlu0 %v4408
      %v4410 = vpop.xlane.xlu0 %4409
      %v4411 = vsel %vm1210, %v4063, -inf
      %4412 = vmax.xlane.f32.xlu0 %v4411
      %v4413 = vpop.xlane.xlu0 %4412
      %v4414 = vsel %vm1210, %v4068, -inf
      %4415 = vmax.xlane.f32.xlu0 %v4414
      %v4416 = vpop.xlane.xlu0 %4415
      %v4417 = vsel %vm1210, %v4073, -inf
      %4418 = vmax.xlane.f32.xlu0 %v4417
      %v4419 = vpop.xlane.xlu0 %4418
      %v4420 = vsel %vm1210, %v4078, -inf
      %4421 = vmax.xlane.f32.xlu0 %v4420
      %v4422 = vpop.xlane.xlu0 %4421
      %v4423 = vsel %vm1210, %v4083, -inf
      %4424 = vmax.xlane.f32.xlu0 %v4423
      %v4425 = vpop.xlane.xlu0 %4424
      %v4426 = vsel %vm1210, %v4088, -inf
      %4427 = vmax.xlane.f32.xlu0 %v4426
      %v4428 = vpop.xlane.xlu0 %4427
      %v4429 = vsel %vm1210, %v4198, -inf
      %4430 = vmax.xlane.f32.xlu0 %v4429
      %v4431 = vpop.xlane.xlu0 %4430
      %v4432 = vsel %vm1210, %v4203, -inf
      %4433 = vmax.xlane.f32.xlu0 %v4432
      %v4434 = vpop.xlane.xlu0 %4433
      %v4435 = vsel %vm1210, %v4208, -inf
      %4436 = vmax.xlane.f32.xlu0 %v4435
      %v4437 = vpop.xlane.xlu0 %4436
      %v4438 = vsel %vm1210, %v4213, -inf
      %4439 = vmax.xlane.f32.xlu0 %v4438
      %v4440 = vpop.xlane.xlu0 %4439
      %v4441 = vsel %vm1210, %v4218, -inf
      %4442 = vmax.xlane.f32.xlu0 %v4441
      %v4443 = vpop.xlane.xlu0 %4442
      %v4444 = vsel %vm1210, %v4223, -inf
      %4445 = vmax.xlane.f32.xlu0 %v4444
      %v4446 = vpop.xlane.xlu0 %4445
      %v4447 = vsel %vm1210, %v4228, -inf
      %4448 = vmax.xlane.f32.xlu0 %v4447
      %v4449 = vpop.xlane.xlu0 %4448
      %v4450 = vsel %vm1210, %v4233, -inf
      %4451 = vmax.xlane.f32.xlu0 %v4450
      %v4452 = vpop.xlane.xlu0 %4451
      %v4453 = vsel %vm1210, %v4343, -inf
      %4454 = vmax.xlane.f32.xlu0 %v4453
      %v4455 = vpop.xlane.xlu0 %4454
      %v4456 = vsel %vm1210, %v4348, -inf
      %4457 = vmax.xlane.f32.xlu0 %v4456
      %v4458 = vpop.xlane.xlu0 %4457
      %v4459 = vsel %vm1210, %v4353, -inf
      %4460 = vmax.xlane.f32.xlu0 %v4459
      %v4461 = vpop.xlane.xlu0 %4460
      %v4462 = vsel %vm1210, %v4358, -inf
      %4463 = vmax.xlane.f32.xlu0 %v4462
      %v4464 = vpop.xlane.xlu0 %4463
      %v4465 = vsel %vm1210, %v4363, -inf
      %4466 = vmax.xlane.f32.xlu0 %v4465
      %v4467 = vpop.xlane.xlu0 %4466
      %v4468 = vsel %vm1210, %v4368, -inf
      %4469 = vmax.xlane.f32.xlu0 %v4468
      %v4470 = vpop.xlane.xlu0 %4469
      %v4471 = vsel %vm1210, %v4373, -inf
      %4472 = vmax.xlane.f32.xlu0 %v4471
      %v4473 = vpop.xlane.xlu0 %4472
      %v4474 = vsel %vm1210, %v4378, -inf
      %4475 = vmax.xlane.f32.xlu0 %v4474
      %v4476 = vpop.xlane.xlu0 %4475
      %v4477 = vsub.f32 %v3908, %v4383
      %v4478 = vsub.f32 %v3913, %v4386
      %v4479 = vsub.f32 %v3918, %v4389
      %v4480 = vsub.f32 %v3923, %v4392
      %v4481 = vsub.f32 %v3928, %v4395
      %v4482 = vsub.f32 %v3933, %v4398
      %v4483 = vsub.f32 %v3938, %v4401
      %v4484 = vsub.f32 %v3943, %v4404
      %v4485 = vsub.f32 %v4053, %v4407
      %v4486 = vsub.f32 %v4058, %v4410
      %v4487 = vsub.f32 %v4063, %v4413
      %v4488 = vsub.f32 %v4068, %v4416
      %v4489 = vsub.f32 %v4073, %v4419
      %v4490 = vsub.f32 %v4078, %v4422
      %v4491 = vsub.f32 %v4083, %v4425
      %v4492 = vsub.f32 %v4088, %v4428
      %v4493 = vsub.f32 %v4198, %v4431
      %v4494 = vsub.f32 %v4203, %v4434
      %v4495 = vsub.f32 %v4208, %v4437
      %v4496 = vsub.f32 %v4213, %v4440
      %v4497 = vsub.f32 %v4218, %v4443
      %v4498 = vsub.f32 %v4223, %v4446
      %v4499 = vsub.f32 %v4228, %v4449
      %v4500 = vsub.f32 %v4233, %v4452
      %v4501 = vsub.f32 %v4343, %v4455
      %v4502 = vsub.f32 %v4348, %v4458
      %v4503 = vsub.f32 %v4353, %v4461
      %v4504 = vsub.f32 %v4358, %v4464
      %v4505 = vsub.f32 %v4363, %v4467
      %v4506 = vsub.f32 %v4368, %v4470
      %v4507 = vsub.f32 %v4373, %v4473
      %v4508 = vsub.f32 %v4378, %v4476
      %v4509 = vmul.f32 %v4477, 1.442695
      %v4510 = vpow.pop %v4509
      %v4511 = vmul.f32 %v4478, 1.442695
      %v4512 = vpow.pop %v4511
      %v4513 = vmul.f32 %v4479, 1.442695
      %v4514 = vpow.pop %v4513
      %v4515 = vmul.f32 %v4480, 1.442695
      %v4516 = vpow.pop %v4515
      %v4517 = vmul.f32 %v4481, 1.442695
      %v4518 = vpow.pop %v4517
      %v4519 = vmul.f32 %v4482, 1.442695
      %v4520 = vpow.pop %v4519
      %v4521 = vmul.f32 %v4483, 1.442695
      %v4522 = vpow.pop %v4521
      %v4523 = vmul.f32 %v4484, 1.442695
      %v4524 = vpow.pop %v4523
      %v4525 = vmul.f32 %v4485, 1.442695
      %v4526 = vpow.pop %v4525
      %v4527 = vmul.f32 %v4486, 1.442695
      %v4528 = vpow.pop %v4527
      %v4529 = vmul.f32 %v4487, 1.442695
      %v4530 = vpow.pop %v4529
      %v4531 = vmul.f32 %v4488, 1.442695
      %v4532 = vpow.pop %v4531
      %v4533 = vmul.f32 %v4489, 1.442695
      %v4534 = vpow.pop %v4533
      %v4535 = vmul.f32 %v4490, 1.442695
      %v4536 = vpow.pop %v4535
      %v4537 = vmul.f32 %v4491, 1.442695
      %v4538 = vpow.pop %v4537
      %v4539 = vmul.f32 %v4492, 1.442695
      %v4540 = vpow.pop %v4539
      %v4541 = vmul.f32 %v4493, 1.442695
      %v4542 = vpow.pop %v4541
      %v4543 = vmul.f32 %v4494, 1.442695
      %v4544 = vpow.pop %v4543
      %v4545 = vmul.f32 %v4495, 1.442695
      %v4546 = vpow.pop %v4545
      %v4547 = vmul.f32 %v4496, 1.442695
      %v4548 = vpow.pop %v4547
      %v4549 = vmul.f32 %v4497, 1.442695
      %v4550 = vpow.pop %v4549
      %v4551 = vmul.f32 %v4498, 1.442695
      %v4552 = vpow.pop %v4551
      %v4553 = vmul.f32 %v4499, 1.442695
      %v4554 = vpow.pop %v4553
      %v4555 = vmul.f32 %v4500, 1.442695
      %v4556 = vpow.pop %v4555
      %v4557 = vmul.f32 %v4501, 1.442695
      %v4558 = vpow.pop %v4557
      %v4559 = vmul.f32 %v4502, 1.442695
      %v4560 = vpow.pop %v4559
      %v4561 = vmul.f32 %v4503, 1.442695
      %v4562 = vpow.pop %v4561
      %v4563 = vmul.f32 %v4504, 1.442695
      %v4564 = vpow.pop %v4563
      %v4565 = vmul.f32 %v4505, 1.442695
      %v4566 = vpow.pop %v4565
      %v4567 = vmul.f32 %v4506, 1.442695
      %v4568 = vpow.pop %v4567
      %v4569 = vmul.f32 %v4507, 1.442695
      %v4570 = vpow.pop %v4569
      %v4571 = vmul.f32 %v4508, 1.442695
      %v4572 = vpow.pop %v4571
      %v4573 = vsel %vm1210, %v4510, 0.0
      %4574 = vadd.xlane.f32.xlu0 %v4573
      %v4575 = vpop.xlane.xlu0 %4574
      %v4576 = vsel %vm1210, %v4512, 0.0
      %4577 = vadd.xlane.f32.xlu0 %v4576
      %v4578 = vpop.xlane.xlu0 %4577
      %v4579 = vsel %vm1210, %v4514, 0.0
      %4580 = vadd.xlane.f32.xlu0 %v4579
      %v4581 = vpop.xlane.xlu0 %4580
      %v4582 = vsel %vm1210, %v4516, 0.0
      %4583 = vadd.xlane.f32.xlu0 %v4582
      %v4584 = vpop.xlane.xlu0 %4583
      %v4585 = vsel %vm1210, %v4518, 0.0
      %4586 = vadd.xlane.f32.xlu0 %v4585
      %v4587 = vpop.xlane.xlu0 %4586
      %v4588 = vsel %vm1210, %v4520, 0.0
      %4589 = vadd.xlane.f32.xlu0 %v4588
      %v4590 = vpop.xlane.xlu0 %4589
      %v4591 = vsel %vm1210, %v4522, 0.0
      %4592 = vadd.xlane.f32.xlu0 %v4591
      %v4593 = vpop.xlane.xlu0 %4592
      %v4594 = vsel %vm1210, %v4524, 0.0
      %4595 = vadd.xlane.f32.xlu0 %v4594
      %v4596 = vpop.xlane.xlu0 %4595
      %v4597 = vsel %vm1210, %v4526, 0.0
      %4598 = vadd.xlane.f32.xlu0 %v4597
      %v4599 = vpop.xlane.xlu0 %4598
      %v4600 = vsel %vm1210, %v4528, 0.0
      %4601 = vadd.xlane.f32.xlu0 %v4600
      %v4602 = vpop.xlane.xlu0 %4601
      %v4603 = vsel %vm1210, %v4530, 0.0
      %4604 = vadd.xlane.f32.xlu0 %v4603
      %v4605 = vpop.xlane.xlu0 %4604
      %v4606 = vsel %vm1210, %v4532, 0.0
      %4607 = vadd.xlane.f32.xlu0 %v4606
      %v4608 = vpop.xlane.xlu0 %4607
      %v4609 = vsel %vm1210, %v4534, 0.0
      %4610 = vadd.xlane.f32.xlu0 %v4609
      %v4611 = vpop.xlane.xlu0 %4610
      %v4612 = vsel %vm1210, %v4536, 0.0
      %4613 = vadd.xlane.f32.xlu0 %v4612
      %v4614 = vpop.xlane.xlu0 %4613
      %v4615 = vsel %vm1210, %v4538, 0.0
      %4616 = vadd.xlane.f32.xlu0 %v4615
      %v4617 = vpop.xlane.xlu0 %4616
      %v4618 = vsel %vm1210, %v4540, 0.0
      %4619 = vadd.xlane.f32.xlu0 %v4618
      %v4620 = vpop.xlane.xlu0 %4619
      %v4621 = vsel %vm1210, %v4542, 0.0
      %4622 = vadd.xlane.f32.xlu0 %v4621
      %v4623 = vpop.xlane.xlu0 %4622
      %v4624 = vsel %vm1210, %v4544, 0.0
      %4625 = vadd.xlane.f32.xlu0 %v4624
      %v4626 = vpop.xlane.xlu0 %4625
      %v4627 = vsel %vm1210, %v4546, 0.0
      %4628 = vadd.xlane.f32.xlu0 %v4627
      %v4629 = vpop.xlane.xlu0 %4628
      %v4630 = vsel %vm1210, %v4548, 0.0
      %4631 = vadd.xlane.f32.xlu0 %v4630
      %v4632 = vpop.xlane.xlu0 %4631
      %v4633 = vsel %vm1210, %v4550, 0.0
      %4634 = vadd.xlane.f32.xlu0 %v4633
      %v4635 = vpop.xlane.xlu0 %4634
      %v4636 = vsel %vm1210, %v4552, 0.0
      %4637 = vadd.xlane.f32.xlu0 %v4636
      %v4638 = vpop.xlane.xlu0 %4637
      %v4639 = vsel %vm1210, %v4554, 0.0
      %4640 = vadd.xlane.f32.xlu0 %v4639
      %v4641 = vpop.xlane.xlu0 %4640
      %v4642 = vsel %vm1210, %v4556, 0.0
      %4643 = vadd.xlane.f32.xlu0 %v4642
      %v4644 = vpop.xlane.xlu0 %4643
      %v4645 = vsel %vm1210, %v4558, 0.0
      %4646 = vadd.xlane.f32.xlu0 %v4645
      %v4647 = vpop.xlane.xlu0 %4646
      %v4648 = vsel %vm1210, %v4560, 0.0
      %4649 = vadd.xlane.f32.xlu0 %v4648
      %v4650 = vpop.xlane.xlu0 %4649
      %v4651 = vsel %vm1210, %v4562, 0.0
      %4652 = vadd.xlane.f32.xlu0 %v4651
      %v4653 = vpop.xlane.xlu0 %4652
      %v4654 = vsel %vm1210, %v4564, 0.0
      %4655 = vadd.xlane.f32.xlu0 %v4654
      %v4656 = vpop.xlane.xlu0 %4655
      %v4657 = vsel %vm1210, %v4566, 0.0
      %4658 = vadd.xlane.f32.xlu0 %v4657
      %v4659 = vpop.xlane.xlu0 %4658
      %v4660 = vsel %vm1210, %v4568, 0.0
      %4661 = vadd.xlane.f32.xlu0 %v4660
      %v4662 = vpop.xlane.xlu0 %4661
      %v4663 = vsel %vm1210, %v4570, 0.0
      %4664 = vadd.xlane.f32.xlu0 %v4663
      %v4665 = vpop.xlane.xlu0 %4664
      %v4666 = vsel %vm1210, %v4572, 0.0
      %4667 = vadd.xlane.f32.xlu0 %v4666
      %v4668 = vpop.xlane.xlu0 %4667
      %v4669 = vrcp.pop %v4575
      %v4670 = vrcp.pop %v4578
      %v4671 = vrcp.pop %v4581
      %v4672 = vrcp.pop %v4584
      %v4673 = vrcp.pop %v4587
      %v4674 = vrcp.pop %v4590
      %v4675 = vrcp.pop %v4593
      %v4676 = vrcp.pop %v4596
      %v4677 = vrcp.pop %v4599
      %v4678 = vrcp.pop %v4602
      %v4679 = vrcp.pop %v4605
      %v4680 = vrcp.pop %v4608
      %v4681 = vrcp.pop %v4611
      %v4682 = vrcp.pop %v4614
      %v4683 = vrcp.pop %v4617
      %v4684 = vrcp.pop %v4620
      %v4685 = vrcp.pop %v4623
      %v4686 = vrcp.pop %v4626
      %v4687 = vrcp.pop %v4629
      %v4688 = vrcp.pop %v4632
      %v4689 = vrcp.pop %v4635
      %v4690 = vrcp.pop %v4638
      %v4691 = vrcp.pop %v4641
      %v4692 = vrcp.pop %v4644
      %v4693 = vrcp.pop %v4647
      %v4694 = vrcp.pop %v4650
      %v4695 = vrcp.pop %v4653
      %v4696 = vrcp.pop %v4656
      %v4697 = vrcp.pop %v4659
      %v4698 = vrcp.pop %v4662
      %v4699 = vrcp.pop %v4665
      %v4700 = vrcp.pop %v4668
      %v4701 = vmul.f32 %v4510, %v4669
      %v4702 = vmul.f32 %v4512, %v4670
      %v4703 = vmul.f32 %v4514, %v4671
      %v4704 = vmul.f32 %v4516, %v4672
      %v4705 = vmul.f32 %v4518, %v4673
      %v4706 = vmul.f32 %v4520, %v4674
      %v4707 = vmul.f32 %v4522, %v4675
      %v4708 = vmul.f32 %v4524, %v4676
      %v4709 = vmul.f32 %v4526, %v4677
      %v4710 = vmul.f32 %v4528, %v4678
      %v4711 = vmul.f32 %v4530, %v4679
      %v4712 = vmul.f32 %v4532, %v4680
      %v4713 = vmul.f32 %v4534, %v4681
      %v4714 = vmul.f32 %v4536, %v4682
      %v4715 = vmul.f32 %v4538, %v4683
      %v4716 = vmul.f32 %v4540, %v4684
      %v4717 = vmul.f32 %v4542, %v4685
      %v4718 = vmul.f32 %v4544, %v4686
      %v4719 = vmul.f32 %v4546, %v4687
      %v4720 = vmul.f32 %v4548, %v4688
      %v4721 = vmul.f32 %v4550, %v4689
      %v4722 = vmul.f32 %v4552, %v4690
      %v4723 = vmul.f32 %v4554, %v4691
      %v4724 = vmul.f32 %v4556, %v4692
      %v4725 = vmul.f32 %v4558, %v4693
      %v4726 = vmul.f32 %v4560, %v4694
      %v4727 = vmul.f32 %v4562, %v4695
      %v4728 = vmul.f32 %v4564, %v4696
      %v4729 = vmul.f32 %v4566, %v4697
      %v4730 = vmul.f32 %v4568, %v4698
      %v4731 = vmul.f32 %v4570, %v4699
      %v4732 = vmul.f32 %v4572, %v4700
      %4733 = vrot.lane.b32.xlu0 %v487, 88
      %v4734 = vpop.permute.xlu0 %4733
      %4735 = vrot.lane.b32.xlu0 %v492, 88
      %v4736 = vpop.permute.xlu0 %4735
      %4737 = vrot.lane.b32.xlu0 %v527, 88
      %v4738 = vpop.permute.xlu0 %4737
      %4739 = vrot.lane.b32.xlu0 %v532, 88
      %v4740 = vpop.permute.xlu0 %4739
      %4741 = vrot.lane.b32.xlu0 %v567, 88
      %v4742 = vpop.permute.xlu0 %4741
      %4743 = vrot.lane.b32.xlu0 %v572, 88
      %v4744 = vpop.permute.xlu0 %4743
      %4745 = vrot.lane.b32.xlu0 %v607, 88
      %v4746 = vpop.permute.xlu0 %4745
      %4747 = vrot.lane.b32.xlu0 %v612, 88
      %v4748 = vpop.permute.xlu0 %4747
      %v4749 = vsel %vm667, %v4734, 0
      %v4751 = vsel %vm667, %v4736, 0
      %v4753 = vsel %vm667, %v4738, 0
      %v4755 = vsel %vm667, %v4740, 0
      %v4757 = vsel %vm667, %v4742, 0
      %v4759 = vsel %vm667, %v4744, 0
      %v4761 = vsel %vm667, %v4746, 0
      %v4763 = vsel %vm667, %v4748, 0
      %4765 = vmatprep.subr.mxu0 0.0
      %4766 = vmatpush1.msra.mxu0 %v659
      %4767 = vmatprep.subr.mxu0 0.0
      %4768 = vmatpush1.msra.mxu0 0.0
      %4769 = vmatprep.subr.mxu0 0.0
      %4770 = vmatpush1.msra.mxu0 0.0
      %4771 = vmatprep.subr.mxu0 0.0
      %4772 = vmatpush1.msra.mxu0 0.0
      %4773 = vmatprep.subr.mxu0 0.0
      %4774 = vmatpush1.msra.mxu0 0.0
      %4775 = vmatprep.subr.mxu0 0.0
      %4776 = vmatpush1.msra.mxu0 0.0
      %4777 = vmatprep.subr.mxu0 0.0
      %4778 = vmatpush1.msra.mxu0 0.0
      %4779 = vmatprep.subr.mxu0 0.0
      %4780 = vmatpush1.msra.mxu0 0.0
      %4781 = vmatprep.subr.mxu0 0.0
      %4782 = vmatpush1.msra.mxu0 0.0
      %4783 = vmatprep.subr.mxu0 0.0
      %4784 = vmatpush1.msra.mxu0 0.0
      %4785 = vmatprep.subr.mxu0 0.0
      %4786 = vmatpush1.msra.mxu0 0.0
      %4787 = vmatprep.subr.mxu0 0.0
      %4788 = vmatpush1.msra.mxu0 0.0
      %4789 = vmatprep.subr.mxu0 0.0
      %4790 = vmatpush1.msra.mxu0 0.0
      %4791 = vmatprep.subr.mxu0 0.0
      %4792 = vmatpush1.msra.mxu0 0.0
      %4793 = vmatprep.subr.mxu0 0.0
      %4794 = vmatpush1.msra.mxu0 0.0
      %4795 = vmatprep.subr.mxu0 0.0
      %4796 = vmatpush1.msra.mxu0 0.0
      %4797 = vmatprep.subr.mxu0 0.0
      %4798 = vmatpush1.msra.mxu0 0.0
      %4799 = vmatprep.subr.mxu0 0.0
      %4800 = vmatpush1.msra.mxu0 0.0
      %4801 = vmatprep.subr.mxu0 0.0
      %4802 = vmatpush1.msra.mxu0 0.0
      %4803 = vmatprep.subr.mxu0 0.0
      %4804 = vmatpush1.msra.mxu0 0.0
      %4805 = vmatprep.subr.mxu0 0.0
      %4806 = vmatpush1.msra.mxu0 0.0
      %4807 = vmatprep.subr.mxu0 0.0
      %4808 = vmatpush1.msra.mxu0 0.0
      %4809 = vmatprep.subr.mxu0 0.0
      %4810 = vmatpush1.msra.mxu0 0.0
      %4811 = vmatprep.subr.mxu0 0.0
      %4812 = vmatpush1.msra.mxu0 0.0
      %4813 = vmatprep.subr.mxu0 0.0
      %4814 = vmatpush1.msra.mxu0 0.0
      %4815 = vmatprep.subr.mxu0 0.0
      %4816 = vmatpush1.msra.mxu0 0.0
      %4817 = vmatprep.subr.mxu0 0.0
      %4818 = vmatpush1.msra.mxu0 0.0
      %4819 = vmatprep.subr.mxu0 0.0
      %4820 = vmatpush1.msra.mxu0 0.0
      %4821 = vmatprep.subr.mxu0 0.0
      %4822 = vmatpush1.msra.mxu0 0.0
      %4823 = vmatprep.subr.mxu0 0.0
      %4824 = vmatpush1.msra.mxu0 0.0
      %4825 = vmatprep.subr.mxu0 0.0
      %4826 = vmatpush1.msra.mxu0 0.0
      %4827 = vmatprep.subr.mxu0 0.0
      %4828 = vmatpush1.msra.mxu0 0.0
      %4829 = vmatprep.mubr.f32.mxu0 0.0
      %4830 = vmatmul.mubr.f32.gmra.mrb[0].mxu0 %v4749
      %v4831 = vpop.f32.mrb[0].mxu0
      %v4832 = vadd.f32 0.0, %v4831
      %v4833 = vpop.f32.mrb[0].mxu0
      %4834 = vmatprep.mubr.f32.mxu0 0.0
      %4835 = vmatmul.mubr.f32.gmra.mrb[0].mxu0 %v4751
      %v4836 = vpop.f32.mrb[0].mxu0
      %v4837 = vadd.f32 0.0, %v4836
      %v4838 = vpop.f32.mrb[0].mxu0
      %4839 = vmatprep.mubr.f32.mxu0 0.0
      %4840 = vmatmul.mubr.f32.gmra.mrb[0].mxu0 %v4753
      %v4841 = vpop.f32.mrb[0].mxu0
      %v4842 = vadd.f32 0.0, %v4841
      %v4843 = vpop.f32.mrb[0].mxu0
      %4844 = vmatprep.mubr.f32.mxu0 0.0
      %4845 = vmatmul.mubr.f32.gmra.mrb[0].mxu0 %v4755
      %v4846 = vpop.f32.mrb[0].mxu0
      %v4847 = vadd.f32 0.0, %v4846
      %v4848 = vpop.f32.mrb[0].mxu0
      %4849 = vmatprep.mubr.f32.mxu0 0.0
      %4850 = vmatmul.mubr.f32.gmra.mrb[0].mxu0 %v4757
      %v4851 = vpop.f32.mrb[0].mxu0
      %v4852 = vadd.f32 0.0, %v4851
      %v4853 = vpop.f32.mrb[0].mxu0
      %4854 = vmatprep.mubr.f32.mxu0 0.0
      %4855 = vmatmul.mubr.f32.gmra.mrb[0].mxu0 %v4759
      %v4856 = vpop.f32.mrb[0].mxu0
      %v4857 = vadd.f32 0.0, %v4856
      %v4858 = vpop.f32.mrb[0].mxu0
      %4859 = vmatprep.mubr.f32.mxu0 0.0
      %4860 = vmatmul.mubr.f32.gmra.mrb[0].mxu0 %v4761
      %v4861 = vpop.f32.mrb[0].mxu0
      %v4862 = vadd.f32 0.0, %v4861
      %v4863 = vpop.f32.mrb[0].mxu0
      %4864 = vmatprep.mubr.f32.mxu0 0.0
      %4865 = vmatmul.mubr.f32.gmra.mrb[0].mxu0 %v4763
      %v4866 = vpop.f32.mrb[0].mxu0
      %v4867 = vadd.f32 0.0, %v4866
      %v4868 = vpop.f32.mrb[0].mxu0
      %4869 = vdwg.mxu0
      %v4871 = vsel %vm1210, %v4701, 0
      %v4874 = vsel %vm1210, %v4702, 0
      %v4877 = vsel %vm1210, %v4703, 0
      %v4880 = vsel %vm1210, %v4704, 0
      %v4883 = vsel %vm1210, %v4705, 0
      %v4886 = vsel %vm1210, %v4706, 0
      %v4889 = vsel %vm1210, %v4707, 0
      %v4892 = vsel %vm1210, %v4708, 0
      %4894 = vmatprep.subr.mxu0 0.0
      %4895 = vmatpush1.msra.mxu0 %v4832
      %4896 = vmatprep.subr.mxu0 0.0
      %4897 = vmatpush1.msra.mxu0 %v4837
      %4898 = vmatprep.subr.mxu0 0.0
      %4899 = vmatpush1.msra.mxu0 0.0
      %4900 = vmatprep.subr.mxu0 0.0
      %4901 = vmatpush1.msra.mxu0 0.0
      %4902 = vmatprep.subr.mxu0 0.0
      %4903 = vmatpush1.msra.mxu0 0.0
      %4904 = vmatprep.subr.mxu0 0.0
      %4905 = vmatpush1.msra.mxu0 0.0
      %4906 = vmatprep.subr.mxu0 0.0
      %4907 = vmatpush1.msra.mxu0 0.0
      %4908 = vmatprep.subr.mxu0 0.0
      %4909 = vmatpush1.msra.mxu0 0.0
      %4910 = vmatprep.subr.mxu0 0.0
      %4911 = vmatpush1.msra.mxu0 0.0
      %4912 = vmatprep.subr.mxu0 0.0
      %4913 = vmatpush1.msra.mxu0 0.0
      %4914 = vmatprep.subr.mxu0 0.0
      %4915 = vmatpush1.msra.mxu0 0.0
      %4916 = vmatprep.subr.mxu0 0.0
      %4917 = vmatpush1.msra.mxu0 0.0
      %4918 = vmatprep.subr.mxu0 0.0
      %4919 = vmatpush1.msra.mxu0 0.0
      %4920 = vmatprep.subr.mxu0 0.0
      %4921 = vmatpush1.msra.mxu0 0.0
      %4922 = vmatprep.subr.mxu0 0.0
      %4923 = vmatpush1.msra.mxu0 0.0
      %4924 = vmatprep.subr.mxu0 0.0
      %4925 = vmatpush1.msra.mxu0 0.0
      %4926 = vmatprep.subr.mxu0 0.0
      %4927 = vmatpush1.msra.mxu0 0.0
      %4928 = vmatprep.subr.mxu0 0.0
      %4929 = vmatpush1.msra.mxu0 0.0
      %4930 = vmatprep.subr.mxu0 0.0
      %4931 = vmatpush1.msra.mxu0 0.0
      %4932 = vmatprep.subr.mxu0 0.0
      %4933 = vmatpush1.msra.mxu0 0.0
      %4934 = vmatprep.subr.mxu0 0.0
      %4935 = vmatpush1.msra.mxu0 0.0
      %4936 = vmatprep.subr.mxu0 0.0
      %4937 = vmatpush1.msra.mxu0 0.0
      %4938 = vmatprep.subr.mxu0 0.0
      %4939 = vmatpush1.msra.mxu0 0.0
      %4940 = vmatprep.subr.mxu0 0.0
      %4941 = vmatpush1.msra.mxu0 0.0
      %4942 = vmatprep.subr.mxu0 0.0
      %4943 = vmatpush1.msra.mxu0 0.0
      %4944 = vmatprep.subr.mxu0 0.0
      %4945 = vmatpush1.msra.mxu0 0.0
      %4946 = vmatprep.subr.mxu0 0.0
      %4947 = vmatpush1.msra.mxu0 0.0
      %4948 = vmatprep.subr.mxu0 0.0
      %4949 = vmatpush1.msra.mxu0 0.0
      %4950 = vmatprep.subr.mxu0 0.0
      %4951 = vmatpush1.msra.mxu0 0.0
      %4952 = vmatprep.subr.mxu0 0.0
      %4953 = vmatpush1.msra.mxu0 0.0
      %4954 = vmatprep.subr.mxu0 0.0
      %4955 = vmatpush1.msra.mxu0 0.0
      %4956 = vmatprep.subr.mxu0 0.0
      %4957 = vmatpush1.msra.mxu0 0.0
      %4958 = vmatprep.mubr.f32.mxu0 0.0
      %4959 = vmatmul.mubr.f32.gmra.mrb[0].mxu0 %v4871
      %v4960 = vpop.f32.mrb[0].mxu0
      %v4961 = vadd.f32 0.0, %v4960
      %v4962 = vpop.f32.mrb[0].mxu0
      %4963 = vmatprep.mubr.f32.mxu0 0.0
      %4964 = vmatmul.mubr.f32.gmra.mrb[0].mxu0 %v4874
      %v4965 = vpop.f32.mrb[0].mxu0
      %v4966 = vadd.f32 0.0, %v4965
      %v4967 = vpop.f32.mrb[0].mxu0
      %4968 = vmatprep.mubr.f32.mxu0 0.0
      %4969 = vmatmul.mubr.f32.gmra.mrb[0].mxu0 %v4877
      %v4970 = vpop.f32.mrb[0].mxu0
      %v4971 = vadd.f32 0.0, %v4970
      %v4972 = vpop.f32.mrb[0].mxu0
      %4973 = vmatprep.mubr.f32.mxu0 0.0
      %4974 = vmatmul.mubr.f32.gmra.mrb[0].mxu0 %v4880
      %v4975 = vpop.f32.mrb[0].mxu0
      %v4976 = vadd.f32 0.0, %v4975
      %v4977 = vpop.f32.mrb[0].mxu0
      %4978 = vmatprep.mubr.f32.mxu0 0.0
      %4979 = vmatmul.mubr.f32.gmra.mrb[0].mxu0 %v4883
      %v4980 = vpop.f32.mrb[0].mxu0
      %v4981 = vadd.f32 0.0, %v4980
      %v4982 = vpop.f32.mrb[0].mxu0
      %4983 = vmatprep.mubr.f32.mxu0 0.0
      %4984 = vmatmul.mubr.f32.gmra.mrb[0].mxu0 %v4886
      %v4985 = vpop.f32.mrb[0].mxu0
      %v4986 = vadd.f32 0.0, %v4985
      %v4987 = vpop.f32.mrb[0].mxu0
      %4988 = vmatprep.mubr.f32.mxu0 0.0
      %4989 = vmatmul.mubr.f32.gmra.mrb[0].mxu0 %v4889
      %v4990 = vpop.f32.mrb[0].mxu0
      %v4991 = vadd.f32 0.0, %v4990
      %v4992 = vpop.f32.mrb[0].mxu0
      %4993 = vmatprep.mubr.f32.mxu0 0.0
      %4994 = vmatmul.mubr.f32.gmra.mrb[0].mxu0 %v4892
      %v4995 = vpop.f32.mrb[0].mxu0
      %v4996 = vadd.f32 0.0, %v4995
      %v4997 = vpop.f32.mrb[0].mxu0
      %4998 = vdwg.mxu0
      %v5000 = vsel %vm1210, %v4709, 0
      %v5003 = vsel %vm1210, %v4710, 0
      %v5006 = vsel %vm1210, %v4711, 0
      %v5009 = vsel %vm1210, %v4712, 0
      %v5012 = vsel %vm1210, %v4713, 0
      %v5015 = vsel %vm1210, %v4714, 0
      %v5018 = vsel %vm1210, %v4715, 0
      %v5021 = vsel %vm1210, %v4716, 0
      %5023 = vmatprep.subr.mxu0 0.0
      %5024 = vmatpush1.msra.mxu0 %v4842
      %5025 = vmatprep.subr.mxu0 0.0
      %5026 = vmatpush1.msra.mxu0 %v4847
      %5027 = vmatprep.subr.mxu0 0.0
      %5028 = vmatpush1.msra.mxu0 0.0
      %5029 = vmatprep.subr.mxu0 0.0
      %5030 = vmatpush1.msra.mxu0 0.0
      %5031 = vmatprep.subr.mxu0 0.0
      %5032 = vmatpush1.msra.mxu0 0.0
      %5033 = vmatprep.subr.mxu0 0.0
      %5034 = vmatpush1.msra.mxu0 0.0
      %5035 = vmatprep.subr.mxu0 0.0
      %5036 = vmatpush1.msra.mxu0 0.0
      %5037 = vmatprep.subr.mxu0 0.0
      %5038 = vmatpush1.msra.mxu0 0.0
      %5039 = vmatprep.subr.mxu0 0.0
      %5040 = vmatpush1.msra.mxu0 0.0
      %5041 = vmatprep.subr.mxu0 0.0
      %5042 = vmatpush1.msra.mxu0 0.0
      %5043 = vmatprep.subr.mxu0 0.0
      %5044 = vmatpush1.msra.mxu0 0.0
      %5045 = vmatprep.subr.mxu0 0.0
      %5046 = vmatpush1.msra.mxu0 0.0
      %5047 = vmatprep.subr.mxu0 0.0
      %5048 = vmatpush1.msra.mxu0 0.0
      %5049 = vmatprep.subr.mxu0 0.0
      %5050 = vmatpush1.msra.mxu0 0.0
      %5051 = vmatprep.subr.mxu0 0.0
      %5052 = vmatpush1.msra.mxu0 0.0
      %5053 = vmatprep.subr.mxu0 0.0
      %5054 = vmatpush1.msra.mxu0 0.0
      %5055 = vmatprep.subr.mxu0 0.0
      %5056 = vmatpush1.msra.mxu0 0.0
      %5057 = vmatprep.subr.mxu0 0.0
      %5058 = vmatpush1.msra.mxu0 0.0
      %5059 = vmatprep.subr.mxu0 0.0
      %5060 = vmatpush1.msra.mxu0 0.0
      %5061 = vmatprep.subr.mxu0 0.0
      %5062 = vmatpush1.msra.mxu0 0.0
      %5063 = vmatprep.subr.mxu0 0.0
      %5064 = vmatpush1.msra.mxu0 0.0
      %5065 = vmatprep.subr.mxu0 0.0
      %5066 = vmatpush1.msra.mxu0 0.0
      %5067 = vmatprep.subr.mxu0 0.0
      %5068 = vmatpush1.msra.mxu0 0.0
      %5069 = vmatprep.subr.mxu0 0.0
      %5070 = vmatpush1.msra.mxu0 0.0
      %5071 = vmatprep.subr.mxu0 0.0
      %5072 = vmatpush1.msra.mxu0 0.0
      %5073 = vmatprep.subr.mxu0 0.0
      %5074 = vmatpush1.msra.mxu0 0.0
      %5075 = vmatprep.subr.mxu0 0.0
      %5076 = vmatpush1.msra.mxu0 0.0
      %5077 = vmatprep.subr.mxu0 0.0
      %5078 = vmatpush1.msra.mxu0 0.0
      %5079 = vmatprep.subr.mxu0 0.0
      %5080 = vmatpush1.msra.mxu0 0.0
      %5081 = vmatprep.subr.mxu0 0.0
      %5082 = vmatpush1.msra.mxu0 0.0
      %5083 = vmatprep.subr.mxu0 0.0
      %5084 = vmatpush1.msra.mxu0 0.0
      %5085 = vmatprep.subr.mxu0 0.0
      %5086 = vmatpush1.msra.mxu0 0.0
      %5087 = vmatprep.mubr.f32.mxu0 0.0
      %5088 = vmatmul.mubr.f32.gmra.mrb[0].mxu0 %v5000
      %v5089 = vpop.f32.mrb[0].mxu0
      %v5090 = vadd.f32 0.0, %v5089
      %v5091 = vpop.f32.mrb[0].mxu0
      %5092 = vmatprep.mubr.f32.mxu0 0.0
      %5093 = vmatmul.mubr.f32.gmra.mrb[0].mxu0 %v5003
      %v5094 = vpop.f32.mrb[0].mxu0
      %v5095 = vadd.f32 0.0, %v5094
      %v5096 = vpop.f32.mrb[0].mxu0
      %5097 = vmatprep.mubr.f32.mxu0 0.0
      %5098 = vmatmul.mubr.f32.gmra.mrb[0].mxu0 %v5006
      %v5099 = vpop.f32.mrb[0].mxu0
      %v5100 = vadd.f32 0.0, %v5099
      %v5101 = vpop.f32.mrb[0].mxu0
      %5102 = vmatprep.mubr.f32.mxu0 0.0
      %5103 = vmatmul.mubr.f32.gmra.mrb[0].mxu0 %v5009
      %v5104 = vpop.f32.mrb[0].mxu0
      %v5105 = vadd.f32 0.0, %v5104
      %v5106 = vpop.f32.mrb[0].mxu0
      %5107 = vmatprep.mubr.f32.mxu0 0.0
      %5108 = vmatmul.mubr.f32.gmra.mrb[0].mxu0 %v5012
      %v5109 = vpop.f32.mrb[0].mxu0
      %v5110 = vadd.f32 0.0, %v5109
      %v5111 = vpop.f32.mrb[0].mxu0
      %5112 = vmatprep.mubr.f32.mxu0 0.0
      %5113 = vmatmul.mubr.f32.gmra.mrb[0].mxu0 %v5015
      %v5114 = vpop.f32.mrb[0].mxu0
      %v5115 = vadd.f32 0.0, %v5114
      %v5116 = vpop.f32.mrb[0].mxu0
      %5117 = vmatprep.mubr.f32.mxu0 0.0
      %5118 = vmatmul.mubr.f32.gmra.mrb[0].mxu0 %v5018
      %v5119 = vpop.f32.mrb[0].mxu0
      %v5120 = vadd.f32 0.0, %v5119
      %v5121 = vpop.f32.mrb[0].mxu0
      %5122 = vmatprep.mubr.f32.mxu0 0.0
      %5123 = vmatmul.mubr.f32.gmra.mrb[0].mxu0 %v5021
      %v5124 = vpop.f32.mrb[0].mxu0
      %v5125 = vadd.f32 0.0, %v5124
      %v5126 = vpop.f32.mrb[0].mxu0
      %5127 = vdwg.mxu0
      %v5129 = vsel %vm1210, %v4717, 0
      %v5132 = vsel %vm1210, %v4718, 0
      %v5135 = vsel %vm1210, %v4719, 0
      %v5138 = vsel %vm1210, %v4720, 0
      %v5141 = vsel %vm1210, %v4721, 0
      %v5144 = vsel %vm1210, %v4722, 0
      %v5147 = vsel %vm1210, %v4723, 0
      %v5150 = vsel %vm1210, %v4724, 0
      %5152 = vmatprep.subr.mxu0 0.0
      %5153 = vmatpush1.msra.mxu0 %v4852
      %5154 = vmatprep.subr.mxu0 0.0
      %5155 = vmatpush1.msra.mxu0 %v4857
      %5156 = vmatprep.subr.mxu0 0.0
      %5157 = vmatpush1.msra.mxu0 0.0
      %5158 = vmatprep.subr.mxu0 0.0
      %5159 = vmatpush1.msra.mxu0 0.0
      %5160 = vmatprep.subr.mxu0 0.0
      %5161 = vmatpush1.msra.mxu0 0.0
      %5162 = vmatprep.subr.mxu0 0.0
      %5163 = vmatpush1.msra.mxu0 0.0
      %5164 = vmatprep.subr.mxu0 0.0
      %5165 = vmatpush1.msra.mxu0 0.0
      %5166 = vmatprep.subr.mxu0 0.0
      %5167 = vmatpush1.msra.mxu0 0.0
      %5168 = vmatprep.subr.mxu0 0.0
      %5169 = vmatpush1.msra.mxu0 0.0
      %5170 = vmatprep.subr.mxu0 0.0
      %5171 = vmatpush1.msra.mxu0 0.0
      %5172 = vmatprep.subr.mxu0 0.0
      %5173 = vmatpush1.msra.mxu0 0.0
      %5174 = vmatprep.subr.mxu0 0.0
      %5175 = vmatpush1.msra.mxu0 0.0
      %5176 = vmatprep.subr.mxu0 0.0
      %5177 = vmatpush1.msra.mxu0 0.0
      %5178 = vmatprep.subr.mxu0 0.0
      %5179 = vmatpush1.msra.mxu0 0.0
      %5180 = vmatprep.subr.mxu0 0.0
      %5181 = vmatpush1.msra.mxu0 0.0
      %5182 = vmatprep.subr.mxu0 0.0
      %5183 = vmatpush1.msra.mxu0 0.0
      %5184 = vmatprep.subr.mxu0 0.0
      %5185 = vmatpush1.msra.mxu0 0.0
      %5186 = vmatprep.subr.mxu0 0.0
      %5187 = vmatpush1.msra.mxu0 0.0
      %5188 = vmatprep.subr.mxu0 0.0
      %5189 = vmatpush1.msra.mxu0 0.0
      %5190 = vmatprep.subr.mxu0 0.0
      %5191 = vmatpush1.msra.mxu0 0.0
      %5192 = vmatprep.subr.mxu0 0.0
      %5193 = vmatpush1.msra.mxu0 0.0
      %5194 = vmatprep.subr.mxu0 0.0
      %5195 = vmatpush1.msra.mxu0 0.0
      %5196 = vmatprep.subr.mxu0 0.0
      %5197 = vmatpush1.msra.mxu0 0.0
      %5198 = vmatprep.subr.mxu0 0.0
      %5199 = vmatpush1.msra.mxu0 0.0
      %5200 = vmatprep.subr.mxu0 0.0
      %5201 = vmatpush1.msra.mxu0 0.0
      %5202 = vmatprep.subr.mxu0 0.0
      %5203 = vmatpush1.msra.mxu0 0.0
      %5204 = vmatprep.subr.mxu0 0.0
      %5205 = vmatpush1.msra.mxu0 0.0
      %5206 = vmatprep.subr.mxu0 0.0
      %5207 = vmatpush1.msra.mxu0 0.0
      %5208 = vmatprep.subr.mxu0 0.0
      %5209 = vmatpush1.msra.mxu0 0.0
      %5210 = vmatprep.subr.mxu0 0.0
      %5211 = vmatpush1.msra.mxu0 0.0
      %5212 = vmatprep.subr.mxu0 0.0
      %5213 = vmatpush1.msra.mxu0 0.0
      %5214 = vmatprep.subr.mxu0 0.0
      %5215 = vmatpush1.msra.mxu0 0.0
      %5216 = vmatprep.mubr.f32.mxu0 0.0
      %5217 = vmatmul.mubr.f32.gmra.mrb[0].mxu0 %v5129
      %v5218 = vpop.f32.mrb[0].mxu0
      %v5219 = vadd.f32 0.0, %v5218
      %v5220 = vpop.f32.mrb[0].mxu0
      %5221 = vmatprep.mubr.f32.mxu0 0.0
      %5222 = vmatmul.mubr.f32.gmra.mrb[0].mxu0 %v5132
      %v5223 = vpop.f32.mrb[0].mxu0
      %v5224 = vadd.f32 0.0, %v5223
      %v5225 = vpop.f32.mrb[0].mxu0
      %5226 = vmatprep.mubr.f32.mxu0 0.0
      %5227 = vmatmul.mubr.f32.gmra.mrb[0].mxu0 %v5135
      %v5228 = vpop.f32.mrb[0].mxu0
      %v5229 = vadd.f32 0.0, %v5228
      %v5230 = vpop.f32.mrb[0].mxu0
      %5231 = vmatprep.mubr.f32.mxu0 0.0
      %5232 = vmatmul.mubr.f32.gmra.mrb[0].mxu0 %v5138
      %v5233 = vpop.f32.mrb[0].mxu0
      %v5234 = vadd.f32 0.0, %v5233
      %v5235 = vpop.f32.mrb[0].mxu0
      %5236 = vmatprep.mubr.f32.mxu0 0.0
      %5237 = vmatmul.mubr.f32.gmra.mrb[0].mxu0 %v5141
      %v5238 = vpop.f32.mrb[0].mxu0
      %v5239 = vadd.f32 0.0, %v5238
      %v5240 = vpop.f32.mrb[0].mxu0
      %5241 = vmatprep.mubr.f32.mxu0 0.0
      %5242 = vmatmul.mubr.f32.gmra.mrb[0].mxu0 %v5144
      %v5243 = vpop.f32.mrb[0].mxu0
      %v5244 = vadd.f32 0.0, %v5243
      %v5245 = vpop.f32.mrb[0].mxu0
      %5246 = vmatprep.mubr.f32.mxu0 0.0
      %5247 = vmatmul.mubr.f32.gmra.mrb[0].mxu0 %v5147
      %v5248 = vpop.f32.mrb[0].mxu0
      %v5249 = vadd.f32 0.0, %v5248
      %v5250 = vpop.f32.mrb[0].mxu0
      %5251 = vmatprep.mubr.f32.mxu0 0.0
      %5252 = vmatmul.mubr.f32.gmra.mrb[0].mxu0 %v5150
      %v5253 = vpop.f32.mrb[0].mxu0
      %v5254 = vadd.f32 0.0, %v5253
      %v5255 = vpop.f32.mrb[0].mxu0
      %5256 = vdwg.mxu0
      %v5258 = vsel %vm1210, %v4725, 0
      %v5261 = vsel %vm1210, %v4726, 0
      %v5264 = vsel %vm1210, %v4727, 0
      %v5267 = vsel %vm1210, %v4728, 0
      %v5270 = vsel %vm1210, %v4729, 0
      %v5273 = vsel %vm1210, %v4730, 0
      %v5276 = vsel %vm1210, %v4731, 0
      %v5279 = vsel %vm1210, %v4732, 0
      %5281 = vmatprep.subr.mxu0 0.0
      %5282 = vmatpush1.msra.mxu0 %v4862
      %5283 = vmatprep.subr.mxu0 0.0
      %5284 = vmatpush1.msra.mxu0 %v4867
      %5285 = vmatprep.subr.mxu0 0.0
      %5286 = vmatpush1.msra.mxu0 0.0
      %5287 = vmatprep.subr.mxu0 0.0
      %5288 = vmatpush1.msra.mxu0 0.0
      %5289 = vmatprep.subr.mxu0 0.0
      %5290 = vmatpush1.msra.mxu0 0.0
      %5291 = vmatprep.subr.mxu0 0.0
      %5292 = vmatpush1.msra.mxu0 0.0
      %5293 = vmatprep.subr.mxu0 0.0
      %5294 = vmatpush1.msra.mxu0 0.0
      %5295 = vmatprep.subr.mxu0 0.0
      %5296 = vmatpush1.msra.mxu0 0.0
      %5297 = vmatprep.subr.mxu0 0.0
      %5298 = vmatpush1.msra.mxu0 0.0
      %5299 = vmatprep.subr.mxu0 0.0
      %5300 = vmatpush1.msra.mxu0 0.0
      %5301 = vmatprep.subr.mxu0 0.0
      %5302 = vmatpush1.msra.mxu0 0.0
      %5303 = vmatprep.subr.mxu0 0.0
      %5304 = vmatpush1.msra.mxu0 0.0
      %5305 = vmatprep.subr.mxu0 0.0
      %5306 = vmatpush1.msra.mxu0 0.0
      %5307 = vmatprep.subr.mxu0 0.0
      %5308 = vmatpush1.msra.mxu0 0.0
      %5309 = vmatprep.subr.mxu0 0.0
      %5310 = vmatpush1.msra.mxu0 0.0
      %5311 = vmatprep.subr.mxu0 0.0
      %5312 = vmatpush1.msra.mxu0 0.0
      %5313 = vmatprep.subr.mxu0 0.0
      %5314 = vmatpush1.msra.mxu0 0.0
      %5315 = vmatprep.subr.mxu0 0.0
      %5316 = vmatpush1.msra.mxu0 0.0
      %5317 = vmatprep.subr.mxu0 0.0
      %5318 = vmatpush1.msra.mxu0 0.0
      %5319 = vmatprep.subr.mxu0 0.0
      %5320 = vmatpush1.msra.mxu0 0.0
      %5321 = vmatprep.subr.mxu0 0.0
      %5322 = vmatpush1.msra.mxu0 0.0
      %5323 = vmatprep.subr.mxu0 0.0
      %5324 = vmatpush1.msra.mxu0 0.0
      %5325 = vmatprep.subr.mxu0 0.0
      %5326 = vmatpush1.msra.mxu0 0.0
      %5327 = vmatprep.subr.mxu0 0.0
      %5328 = vmatpush1.msra.mxu0 0.0
      %5329 = vmatprep.subr.mxu0 0.0
      %5330 = vmatpush1.msra.mxu0 0.0
      %5331 = vmatprep.subr.mxu0 0.0
      %5332 = vmatpush1.msra.mxu0 0.0
      %5333 = vmatprep.subr.mxu0 0.0
      %5334 = vmatpush1.msra.mxu0 0.0
      %5335 = vmatprep.subr.mxu0 0.0
      %5336 = vmatpush1.msra.mxu0 0.0
      %5337 = vmatprep.subr.mxu0 0.0
      %5338 = vmatpush1.msra.mxu0 0.0
      %5339 = vmatprep.subr.mxu0 0.0
      %5340 = vmatpush1.msra.mxu0 0.0
      %5341 = vmatprep.subr.mxu0 0.0
      %5342 = vmatpush1.msra.mxu0 0.0
      %5343 = vmatprep.subr.mxu0 0.0
      %5344 = vmatpush1.msra.mxu0 0.0
      %5345 = vmatprep.mubr.f32.mxu0 0.0
      %5346 = vmatmul.mubr.f32.gmra.mrb[0].mxu0 %v5258
      %v5347 = vpop.f32.mrb[0].mxu0
      %v5348 = vadd.f32 0.0, %v5347
      %v5349 = vpop.f32.mrb[0].mxu0
      %5350 = vmatprep.mubr.f32.mxu0 0.0
      %5351 = vmatmul.mubr.f32.gmra.mrb[0].mxu0 %v5261
      %v5352 = vpop.f32.mrb[0].mxu0
      %v5353 = vadd.f32 0.0, %v5352
      %v5354 = vpop.f32.mrb[0].mxu0
      %5355 = vmatprep.mubr.f32.mxu0 0.0
      %5356 = vmatmul.mubr.f32.gmra.mrb[0].mxu0 %v5264
      %v5357 = vpop.f32.mrb[0].mxu0
      %v5358 = vadd.f32 0.0, %v5357
      %v5359 = vpop.f32.mrb[0].mxu0
      %5360 = vmatprep.mubr.f32.mxu0 0.0
      %5361 = vmatmul.mubr.f32.gmra.mrb[0].mxu0 %v5267
      %v5362 = vpop.f32.mrb[0].mxu0
      %v5363 = vadd.f32 0.0, %v5362
      %v5364 = vpop.f32.mrb[0].mxu0
      %5365 = vmatprep.mubr.f32.mxu0 0.0
      %5366 = vmatmul.mubr.f32.gmra.mrb[0].mxu0 %v5270
      %v5367 = vpop.f32.mrb[0].mxu0
      %v5368 = vadd.f32 0.0, %v5367
      %v5369 = vpop.f32.mrb[0].mxu0
      %5370 = vmatprep.mubr.f32.mxu0 0.0
      %5371 = vmatmul.mubr.f32.gmra.mrb[0].mxu0 %v5273
      %v5372 = vpop.f32.mrb[0].mxu0
      %v5373 = vadd.f32 0.0, %v5372
      %v5374 = vpop.f32.mrb[0].mxu0
      %5375 = vmatprep.mubr.f32.mxu0 0.0
      %5376 = vmatmul.mubr.f32.gmra.mrb[0].mxu0 %v5276
      %v5377 = vpop.f32.mrb[0].mxu0
      %v5378 = vadd.f32 0.0, %v5377
      %v5379 = vpop.f32.mrb[0].mxu0
      %5380 = vmatprep.mubr.f32.mxu0 0.0
      %5381 = vmatmul.mubr.f32.gmra.mrb[0].mxu0 %v5279
      %v5382 = vpop.f32.mrb[0].mxu0
      %v5383 = vadd.f32 0.0, %v5382
      %v5384 = vpop.f32.mrb[0].mxu0
      %5385 = vdwg.mxu0
      %v5386 = vadd.f32 %v3376, %v4961
      %v5387 = vadd.f32 %v3381, %v4966
      %v5388 = vadd.f32 %v3386, %v4971
      %v5389 = vadd.f32 %v3391, %v4976
      %v5390 = vadd.f32 %v3396, %v4981
      %v5391 = vadd.f32 %v3401, %v4986
      %v5392 = vadd.f32 %v3406, %v4991
      %v5393 = vadd.f32 %v3411, %v4996
      %v5394 = vadd.f32 %v3505, %v5090
      %v5395 = vadd.f32 %v3510, %v5095
      %v5396 = vadd.f32 %v3515, %v5100
      %v5397 = vadd.f32 %v3520, %v5105
      %v5398 = vadd.f32 %v3525, %v5110
      %v5399 = vadd.f32 %v3530, %v5115
      %v5400 = vadd.f32 %v3535, %v5120
      %v5401 = vadd.f32 %v3540, %v5125
      %v5402 = vadd.f32 %v3634, %v5219
      %v5403 = vadd.f32 %v3639, %v5224
      %v5404 = vadd.f32 %v3644, %v5229
      %v5405 = vadd.f32 %v3649, %v5234
      %v5406 = vadd.f32 %v3654, %v5239
      %v5407 = vadd.f32 %v3659, %v5244
      %v5408 = vadd.f32 %v3664, %v5249
      %v5409 = vadd.f32 %v3669, %v5254
      %v5410 = vadd.f32 %v3763, %v5348
      %v5411 = vadd.f32 %v3768, %v5353
      %v5412 = vadd.f32 %v3773, %v5358
      %v5413 = vadd.f32 %v3778, %v5363
      %v5414 = vadd.f32 %v3783, %v5368
      %v5415 = vadd.f32 %v3788, %v5373
      %v5416 = vadd.f32 %v3793, %v5378
      %v5417 = vadd.f32 %v3798, %v5383
      %5418 = vrot.lane.b32.xlu0 %v467, 104
      %v5419 = vpop.permute.xlu0 %5418
      %5420 = vrot.lane.b32.xlu0 %v472, 104
      %v5421 = vpop.permute.xlu0 %5420
      %5422 = vrot.lane.b32.xlu0 %v477, 104
      %v5423 = vpop.permute.xlu0 %5422
      %5424 = vrot.lane.b32.xlu0 %v482, 104
      %v5425 = vpop.permute.xlu0 %5424
      %5426 = vrot.lane.b32.xlu0 %v487, 104
      %v5427 = vpop.permute.xlu0 %5426
      %5428 = vrot.lane.b32.xlu0 %v492, 104
      %v5429 = vpop.permute.xlu0 %5428
      %5430 = vrot.lane.b32.xlu0 %v497, 104
      %v5431 = vpop.permute.xlu0 %5430
      %5432 = vrot.lane.b32.xlu0 %v502, 104
      %v5433 = vpop.permute.xlu0 %5432
      %5434 = vrot.lane.b32.xlu0 %v497, 96
      %v5435 = vpop.permute.xlu0 %5434
      %5436 = vrot.lane.b32.xlu0 %v502, 96
      %v5437 = vpop.permute.xlu0 %5436
      %v5438 = vsel %vm667, %v5419, 0
      %v5440 = vsel %vm667, %v5421, 0
      %v5442 = vsel %vm667, %v5423, 0
      %v5444 = vsel %vm667, %v5425, 0
      %v5446 = vsel %vm667, %v5427, 0
      %v5448 = vsel %vm667, %v5429, 0
      %v5450 = vsel %vm667, %v5431, 0
      %v5452 = vsel %vm667, %v5433, 0
      %v5454 = vsel %vm667, %v5435, 0
      %v5456 = vsel %vm667, %v5437, 0
      %5458 = vmatprep.subr.mxu0 0.0
      %5459 = vmatpush1.xpose.msra.mxu0 %v5454
      %5460 = vmatprep.subr.mxu0 0.0
      %5461 = vmatpush1.xpose.msra.mxu0 %v5456
      %5462 = vmatprep.subr.mxu0 0.0
      %5463 = vmatpush1.xpose.msra.mxu0 0.0
      %5464 = vmatprep.subr.mxu0 0.0
      %5465 = vmatpush1.xpose.msra.mxu0 0.0
      %5466 = vmatprep.subr.mxu0 0.0
      %5467 = vmatpush1.xpose.msra.mxu0 0.0
      %5468 = vmatprep.subr.mxu0 0.0
      %5469 = vmatpush1.xpose.msra.mxu0 0.0
      %5470 = vmatprep.subr.mxu0 0.0
      %5471 = vmatpush1.xpose.msra.mxu0 0.0
      %5472 = vmatprep.subr.mxu0 0.0
      %5473 = vmatpush1.xpose.msra.mxu0 0.0
      %5474 = vmatprep.subr.mxu0 0.0
      %5475 = vmatpush1.xpose.msra.mxu0 0.0
      %5476 = vmatprep.subr.mxu0 0.0
      %5477 = vmatpush1.xpose.msra.mxu0 0.0
      %5478 = vmatprep.subr.mxu0 0.0
      %5479 = vmatpush1.xpose.msra.mxu0 0.0
      %5480 = vmatprep.subr.mxu0 0.0
      %5481 = vmatpush1.xpose.msra.mxu0 0.0
      %5482 = vmatprep.subr.mxu0 0.0
      %5483 = vmatpush1.xpose.msra.mxu0 0.0
      %5484 = vmatprep.subr.mxu0 0.0
      %5485 = vmatpush1.xpose.msra.mxu0 0.0
      %5486 = vmatprep.subr.mxu0 0.0
      %5487 = vmatpush1.xpose.msra.mxu0 0.0
      %5488 = vmatprep.subr.mxu0 0.0
      %5489 = vmatpush1.xpose.msra.mxu0 0.0
      %5490 = vmatprep.subr.mxu0 0.0
      %5491 = vmatpush1.xpose.msra.mxu0 0.0
      %5492 = vmatprep.subr.mxu0 0.0
      %5493 = vmatpush1.xpose.msra.mxu0 0.0
      %5494 = vmatprep.subr.mxu0 0.0
      %5495 = vmatpush1.xpose.msra.mxu0 0.0
      %5496 = vmatprep.subr.mxu0 0.0
      %5497 = vmatpush1.xpose.msra.mxu0 0.0
      %5498 = vmatprep.subr.mxu0 0.0
      %5499 = vmatpush1.xpose.msra.mxu0 0.0
      %5500 = vmatprep.subr.mxu0 0.0
      %5501 = vmatpush1.xpose.msra.mxu0 0.0
      %5502 = vmatprep.subr.mxu0 0.0
      %5503 = vmatpush1.xpose.msra.mxu0 0.0
      %5504 = vmatprep.subr.mxu0 0.0
      %5505 = vmatpush1.xpose.msra.mxu0 0.0
      %5506 = vmatprep.subr.mxu0 0.0
      %5507 = vmatpush1.xpose.msra.mxu0 0.0
      %5508 = vmatprep.subr.mxu0 0.0
      %5509 = vmatpush1.xpose.msra.mxu0 0.0
      %5510 = vmatprep.subr.mxu0 0.0
      %5511 = vmatpush1.xpose.msra.mxu0 0.0
      %5512 = vmatprep.subr.mxu0 0.0
      %5513 = vmatpush1.xpose.msra.mxu0 0.0
      %5514 = vmatprep.subr.mxu0 0.0
      %5515 = vmatpush1.xpose.msra.mxu0 0.0
      %5516 = vmatprep.subr.mxu0 0.0
      %5517 = vmatpush1.xpose.msra.mxu0 0.0
      %5518 = vmatprep.subr.mxu0 0.0
      %5519 = vmatpush1.xpose.msra.mxu0 0.0
      %5520 = vmatprep.subr.mxu0 0.0
      %5521 = vmatpush1.xpose.msra.mxu0 0.0
      %5522 = vmatprep.mubr.f32.mxu0 0.0
      %5523 = vmatmul.mubr.f32.gmra.mrb[0].mxu0 %v5438
      %v5524 = vpop.f32.mrb[0].mxu0
      %v5525 = vadd.f32 %v649, %v5524
      %v5526 = vpop.f32.mrb[0].mxu0
      %5527 = vmatprep.mubr.f32.mxu0 0.0
      %5528 = vmatmul.mubr.f32.gmra.mrb[0].mxu0 %v5440
      %v5529 = vpop.f32.mrb[0].mxu0
      %v5530 = vadd.f32 %v650, %v5529
      %v5531 = vpop.f32.mrb[0].mxu0
      %5532 = vmatprep.mubr.f32.mxu0 0.0
      %5533 = vmatmul.mubr.f32.gmra.mrb[0].mxu0 %v5442
      %v5534 = vpop.f32.mrb[0].mxu0
      %v5535 = vadd.f32 %v651, %v5534
      %v5536 = vpop.f32.mrb[0].mxu0
      %5537 = vmatprep.mubr.f32.mxu0 0.0
      %5538 = vmatmul.mubr.f32.gmra.mrb[0].mxu0 %v5444
      %v5539 = vpop.f32.mrb[0].mxu0
      %v5540 = vadd.f32 %v652, %v5539
      %v5541 = vpop.f32.mrb[0].mxu0
      %5542 = vmatprep.mubr.f32.mxu0 0.0
      %5543 = vmatmul.mubr.f32.gmra.mrb[0].mxu0 %v5446
      %v5544 = vpop.f32.mrb[0].mxu0
      %v5545 = vadd.f32 %v653, %v5544
      %v5546 = vpop.f32.mrb[0].mxu0
      %5547 = vmatprep.mubr.f32.mxu0 0.0
      %5548 = vmatmul.mubr.f32.gmra.mrb[0].mxu0 %v5448
      %v5549 = vpop.f32.mrb[0].mxu0
      %v5550 = vadd.f32 %v654, %v5549
      %v5551 = vpop.f32.mrb[0].mxu0
      %5552 = vmatprep.mubr.f32.mxu0 0.0
      %5553 = vmatmul.mubr.f32.gmra.mrb[0].mxu0 %v5450
      %v5554 = vpop.f32.mrb[0].mxu0
      %v5555 = vadd.f32 %v655, %v5554
      %v5556 = vpop.f32.mrb[0].mxu0
      %5557 = vmatprep.mubr.f32.mxu0 0.0
      %5558 = vmatmul.mubr.f32.gmra.mrb[0].mxu0 %v5452
      %v5559 = vpop.f32.mrb[0].mxu0
      %v5560 = vadd.f32 %v656, %v5559
      %v5561 = vpop.f32.mrb[0].mxu0
      %5562 = vdwg.mxu0
      %5563 = vrot.lane.b32.xlu0 %v507, 104
      %v5564 = vpop.permute.xlu0 %5563
      %5565 = vrot.lane.b32.xlu0 %v512, 104
      %v5566 = vpop.permute.xlu0 %5565
      %5567 = vrot.lane.b32.xlu0 %v517, 104
      %v5568 = vpop.permute.xlu0 %5567
      %5569 = vrot.lane.b32.xlu0 %v522, 104
      %v5570 = vpop.permute.xlu0 %5569
      %5571 = vrot.lane.b32.xlu0 %v527, 104
      %v5572 = vpop.permute.xlu0 %5571
      %5573 = vrot.lane.b32.xlu0 %v532, 104
      %v5574 = vpop.permute.xlu0 %5573
      %5575 = vrot.lane.b32.xlu0 %v537, 104
      %v5576 = vpop.permute.xlu0 %5575
      %5577 = vrot.lane.b32.xlu0 %v542, 104
      %v5578 = vpop.permute.xlu0 %5577
      %5579 = vrot.lane.b32.xlu0 %v537, 96
      %v5580 = vpop.permute.xlu0 %5579
      %5581 = vrot.lane.b32.xlu0 %v542, 96
      %v5582 = vpop.permute.xlu0 %5581
      %v5583 = vsel %vm667, %v5564, 0
      %v5585 = vsel %vm667, %v5566, 0
      %v5587 = vsel %vm667, %v5568, 0
      %v5589 = vsel %vm667, %v5570, 0
      %v5591 = vsel %vm667, %v5572, 0
      %v5593 = vsel %vm667, %v5574, 0
      %v5595 = vsel %vm667, %v5576, 0
      %v5597 = vsel %vm667, %v5578, 0
      %v5599 = vsel %vm667, %v5580, 0
      %v5601 = vsel %vm667, %v5582, 0
      %5603 = vmatprep.subr.mxu0 0.0
      %5604 = vmatpush1.xpose.msra.mxu0 %v5599
      %5605 = vmatprep.subr.mxu0 0.0
      %5606 = vmatpush1.xpose.msra.mxu0 %v5601
      %5607 = vmatprep.subr.mxu0 0.0
      %5608 = vmatpush1.xpose.msra.mxu0 0.0
      %5609 = vmatprep.subr.mxu0 0.0
      %5610 = vmatpush1.xpose.msra.mxu0 0.0
      %5611 = vmatprep.subr.mxu0 0.0
      %5612 = vmatpush1.xpose.msra.mxu0 0.0
      %5613 = vmatprep.subr.mxu0 0.0
      %5614 = vmatpush1.xpose.msra.mxu0 0.0
      %5615 = vmatprep.subr.mxu0 0.0
      %5616 = vmatpush1.xpose.msra.mxu0 0.0
      %5617 = vmatprep.subr.mxu0 0.0
      %5618 = vmatpush1.xpose.msra.mxu0 0.0
      %5619 = vmatprep.subr.mxu0 0.0
      %5620 = vmatpush1.xpose.msra.mxu0 0.0
      %5621 = vmatprep.subr.mxu0 0.0
      %5622 = vmatpush1.xpose.msra.mxu0 0.0
      %5623 = vmatprep.subr.mxu0 0.0
      %5624 = vmatpush1.xpose.msra.mxu0 0.0
      %5625 = vmatprep.subr.mxu0 0.0
      %5626 = vmatpush1.xpose.msra.mxu0 0.0
      %5627 = vmatprep.subr.mxu0 0.0
      %5628 = vmatpush1.xpose.msra.mxu0 0.0
      %5629 = vmatprep.subr.mxu0 0.0
      %5630 = vmatpush1.xpose.msra.mxu0 0.0
      %5631 = vmatprep.subr.mxu0 0.0
      %5632 = vmatpush1.xpose.msra.mxu0 0.0
      %5633 = vmatprep.subr.mxu0 0.0
      %5634 = vmatpush1.xpose.msra.mxu0 0.0
      %5635 = vmatprep.subr.mxu0 0.0
      %5636 = vmatpush1.xpose.msra.mxu0 0.0
      %5637 = vmatprep.subr.mxu0 0.0
      %5638 = vmatpush1.xpose.msra.mxu0 0.0
      %5639 = vmatprep.subr.mxu0 0.0
      %5640 = vmatpush1.xpose.msra.mxu0 0.0
      %5641 = vmatprep.subr.mxu0 0.0
      %5642 = vmatpush1.xpose.msra.mxu0 0.0
      %5643 = vmatprep.subr.mxu0 0.0
      %5644 = vmatpush1.xpose.msra.mxu0 0.0
      %5645 = vmatprep.subr.mxu0 0.0
      %5646 = vmatpush1.xpose.msra.mxu0 0.0
      %5647 = vmatprep.subr.mxu0 0.0
      %5648 = vmatpush1.xpose.msra.mxu0 0.0
      %5649 = vmatprep.subr.mxu0 0.0
      %5650 = vmatpush1.xpose.msra.mxu0 0.0
      %5651 = vmatprep.subr.mxu0 0.0
      %5652 = vmatpush1.xpose.msra.mxu0 0.0
      %5653 = vmatprep.subr.mxu0 0.0
      %5654 = vmatpush1.xpose.msra.mxu0 0.0
      %5655 = vmatprep.subr.mxu0 0.0
      %5656 = vmatpush1.xpose.msra.mxu0 0.0
      %5657 = vmatprep.subr.mxu0 0.0
      %5658 = vmatpush1.xpose.msra.mxu0 0.0
      %5659 = vmatprep.subr.mxu0 0.0
      %5660 = vmatpush1.xpose.msra.mxu0 0.0
      %5661 = vmatprep.subr.mxu0 0.0
      %5662 = vmatpush1.xpose.msra.mxu0 0.0
      %5663 = vmatprep.subr.mxu0 0.0
      %5664 = vmatpush1.xpose.msra.mxu0 0.0
      %5665 = vmatprep.subr.mxu0 0.0
      %5666 = vmatpush1.xpose.msra.mxu0 0.0
      %5667 = vmatprep.mubr.f32.mxu0 0.0
      %5668 = vmatmul.mubr.f32.gmra.mrb[0].mxu0 %v5583
      %v5669 = vpop.f32.mrb[0].mxu0
      %v5670 = vadd.f32 %v649, %v5669
      %v5671 = vpop.f32.mrb[0].mxu0
      %5672 = vmatprep.mubr.f32.mxu0 0.0
      %5673 = vmatmul.mubr.f32.gmra.mrb[0].mxu0 %v5585
      %v5674 = vpop.f32.mrb[0].mxu0
      %v5675 = vadd.f32 %v650, %v5674
      %v5676 = vpop.f32.mrb[0].mxu0
      %5677 = vmatprep.mubr.f32.mxu0 0.0
      %5678 = vmatmul.mubr.f32.gmra.mrb[0].mxu0 %v5587
      %v5679 = vpop.f32.mrb[0].mxu0
      %v5680 = vadd.f32 %v651, %v5679
      %v5681 = vpop.f32.mrb[0].mxu0
      %5682 = vmatprep.mubr.f32.mxu0 0.0
      %5683 = vmatmul.mubr.f32.gmra.mrb[0].mxu0 %v5589
      %v5684 = vpop.f32.mrb[0].mxu0
      %v5685 = vadd.f32 %v652, %v5684
      %v5686 = vpop.f32.mrb[0].mxu0
      %5687 = vmatprep.mubr.f32.mxu0 0.0
      %5688 = vmatmul.mubr.f32.gmra.mrb[0].mxu0 %v5591
      %v5689 = vpop.f32.mrb[0].mxu0
      %v5690 = vadd.f32 %v653, %v5689
      %v5691 = vpop.f32.mrb[0].mxu0
      %5692 = vmatprep.mubr.f32.mxu0 0.0
      %5693 = vmatmul.mubr.f32.gmra.mrb[0].mxu0 %v5593
      %v5694 = vpop.f32.mrb[0].mxu0
      %v5695 = vadd.f32 %v654, %v5694
      %v5696 = vpop.f32.mrb[0].mxu0
      %5697 = vmatprep.mubr.f32.mxu0 0.0
      %5698 = vmatmul.mubr.f32.gmra.mrb[0].mxu0 %v5595
      %v5699 = vpop.f32.mrb[0].mxu0
      %v5700 = vadd.f32 %v655, %v5699
      %v5701 = vpop.f32.mrb[0].mxu0
      %5702 = vmatprep.mubr.f32.mxu0 0.0
      %5703 = vmatmul.mubr.f32.gmra.mrb[0].mxu0 %v5597
      %v5704 = vpop.f32.mrb[0].mxu0
      %v5705 = vadd.f32 %v656, %v5704
      %v5706 = vpop.f32.mrb[0].mxu0
      %5707 = vdwg.mxu0
      %5708 = vrot.lane.b32.xlu0 %v547, 104
      %v5709 = vpop.permute.xlu0 %5708
      %5710 = vrot.lane.b32.xlu0 %v552, 104
      %v5711 = vpop.permute.xlu0 %5710
      %5712 = vrot.lane.b32.xlu0 %v557, 104
      %v5713 = vpop.permute.xlu0 %5712
      %5714 = vrot.lane.b32.xlu0 %v562, 104
      %v5715 = vpop.permute.xlu0 %5714
      %5716 = vrot.lane.b32.xlu0 %v567, 104
      %v5717 = vpop.permute.xlu0 %5716
      %5718 = vrot.lane.b32.xlu0 %v572, 104
      %v5719 = vpop.permute.xlu0 %5718
      %5720 = vrot.lane.b32.xlu0 %v577, 104
      %v5721 = vpop.permute.xlu0 %5720
      %5722 = vrot.lane.b32.xlu0 %v582, 104
      %v5723 = vpop.permute.xlu0 %5722
      %5724 = vrot.lane.b32.xlu0 %v577, 96
      %v5725 = vpop.permute.xlu0 %5724
      %5726 = vrot.lane.b32.xlu0 %v582, 96
      %v5727 = vpop.permute.xlu0 %5726
      %v5728 = vsel %vm667, %v5709, 0
      %v5730 = vsel %vm667, %v5711, 0
      %v5732 = vsel %vm667, %v5713, 0
      %v5734 = vsel %vm667, %v5715, 0
      %v5736 = vsel %vm667, %v5717, 0
      %v5738 = vsel %vm667, %v5719, 0
      %v5740 = vsel %vm667, %v5721, 0
      %v5742 = vsel %vm667, %v5723, 0
      %v5744 = vsel %vm667, %v5725, 0
      %v5746 = vsel %vm667, %v5727, 0
      %5748 = vmatprep.subr.mxu0 0.0
      %5749 = vmatpush1.xpose.msra.mxu0 %v5744
      %5750 = vmatprep.subr.mxu0 0.0
      %5751 = vmatpush1.xpose.msra.mxu0 %v5746
      %5752 = vmatprep.subr.mxu0 0.0
      %5753 = vmatpush1.xpose.msra.mxu0 0.0
      %5754 = vmatprep.subr.mxu0 0.0
      %5755 = vmatpush1.xpose.msra.mxu0 0.0
      %5756 = vmatprep.subr.mxu0 0.0
      %5757 = vmatpush1.xpose.msra.mxu0 0.0
      %5758 = vmatprep.subr.mxu0 0.0
      %5759 = vmatpush1.xpose.msra.mxu0 0.0
      %5760 = vmatprep.subr.mxu0 0.0
      %5761 = vmatpush1.xpose.msra.mxu0 0.0
      %5762 = vmatprep.subr.mxu0 0.0
      %5763 = vmatpush1.xpose.msra.mxu0 0.0
      %5764 = vmatprep.subr.mxu0 0.0
      %5765 = vmatpush1.xpose.msra.mxu0 0.0
      %5766 = vmatprep.subr.mxu0 0.0
      %5767 = vmatpush1.xpose.msra.mxu0 0.0
      %5768 = vmatprep.subr.mxu0 0.0
      %5769 = vmatpush1.xpose.msra.mxu0 0.0
      %5770 = vmatprep.subr.mxu0 0.0
      %5771 = vmatpush1.xpose.msra.mxu0 0.0
      %5772 = vmatprep.subr.mxu0 0.0
      %5773 = vmatpush1.xpose.msra.mxu0 0.0
      %5774 = vmatprep.subr.mxu0 0.0
      %5775 = vmatpush1.xpose.msra.mxu0 0.0
      %5776 = vmatprep.subr.mxu0 0.0
      %5777 = vmatpush1.xpose.msra.mxu0 0.0
      %5778 = vmatprep.subr.mxu0 0.0
      %5779 = vmatpush1.xpose.msra.mxu0 0.0
      %5780 = vmatprep.subr.mxu0 0.0
      %5781 = vmatpush1.xpose.msra.mxu0 0.0
      %5782 = vmatprep.subr.mxu0 0.0
      %5783 = vmatpush1.xpose.msra.mxu0 0.0
      %5784 = vmatprep.subr.mxu0 0.0
      %5785 = vmatpush1.xpose.msra.mxu0 0.0
      %5786 = vmatprep.subr.mxu0 0.0
      %5787 = vmatpush1.xpose.msra.mxu0 0.0
      %5788 = vmatprep.subr.mxu0 0.0
      %5789 = vmatpush1.xpose.msra.mxu0 0.0
      %5790 = vmatprep.subr.mxu0 0.0
      %5791 = vmatpush1.xpose.msra.mxu0 0.0
      %5792 = vmatprep.subr.mxu0 0.0
      %5793 = vmatpush1.xpose.msra.mxu0 0.0
      %5794 = vmatprep.subr.mxu0 0.0
      %5795 = vmatpush1.xpose.msra.mxu0 0.0
      %5796 = vmatprep.subr.mxu0 0.0
      %5797 = vmatpush1.xpose.msra.mxu0 0.0
      %5798 = vmatprep.subr.mxu0 0.0
      %5799 = vmatpush1.xpose.msra.mxu0 0.0
      %5800 = vmatprep.subr.mxu0 0.0
      %5801 = vmatpush1.xpose.msra.mxu0 0.0
      %5802 = vmatprep.subr.mxu0 0.0
      %5803 = vmatpush1.xpose.msra.mxu0 0.0
      %5804 = vmatprep.subr.mxu0 0.0
      %5805 = vmatpush1.xpose.msra.mxu0 0.0
      %5806 = vmatprep.subr.mxu0 0.0
      %5807 = vmatpush1.xpose.msra.mxu0 0.0
      %5808 = vmatprep.subr.mxu0 0.0
      %5809 = vmatpush1.xpose.msra.mxu0 0.0
      %5810 = vmatprep.subr.mxu0 0.0
      %5811 = vmatpush1.xpose.msra.mxu0 0.0
      %5812 = vmatprep.mubr.f32.mxu0 0.0
      %5813 = vmatmul.mubr.f32.gmra.mrb[0].mxu0 %v5728
      %v5814 = vpop.f32.mrb[0].mxu0
      %v5815 = vadd.f32 %v649, %v5814
      %v5816 = vpop.f32.mrb[0].mxu0
      %5817 = vmatprep.mubr.f32.mxu0 0.0
      %5818 = vmatmul.mubr.f32.gmra.mrb[0].mxu0 %v5730
      %v5819 = vpop.f32.mrb[0].mxu0
      %v5820 = vadd.f32 %v650, %v5819
      %v5821 = vpop.f32.mrb[0].mxu0
      %5822 = vmatprep.mubr.f32.mxu0 0.0
      %5823 = vmatmul.mubr.f32.gmra.mrb[0].mxu0 %v5732
      %v5824 = vpop.f32.mrb[0].mxu0
      %v5825 = vadd.f32 %v651, %v5824
      %v5826 = vpop.f32.mrb[0].mxu0
      %5827 = vmatprep.mubr.f32.mxu0 0.0
      %5828 = vmatmul.mubr.f32.gmra.mrb[0].mxu0 %v5734
      %v5829 = vpop.f32.mrb[0].mxu0
      %v5830 = vadd.f32 %v652, %v5829
      %v5831 = vpop.f32.mrb[0].mxu0
      %5832 = vmatprep.mubr.f32.mxu0 0.0
      %5833 = vmatmul.mubr.f32.gmra.mrb[0].mxu0 %v5736
      %v5834 = vpop.f32.mrb[0].mxu0
      %v5835 = vadd.f32 %v653, %v5834
      %v5836 = vpop.f32.mrb[0].mxu0
      %5837 = vmatprep.mubr.f32.mxu0 0.0
      %5838 = vmatmul.mubr.f32.gmra.mrb[0].mxu0 %v5738
      %v5839 = vpop.f32.mrb[0].mxu0
      %v5840 = vadd.f32 %v654, %v5839
      %v5841 = vpop.f32.mrb[0].mxu0
      %5842 = vmatprep.mubr.f32.mxu0 0.0
      %5843 = vmatmul.mubr.f32.gmra.mrb[0].mxu0 %v5740
      %v5844 = vpop.f32.mrb[0].mxu0
      %v5845 = vadd.f32 %v655, %v5844
      %v5846 = vpop.f32.mrb[0].mxu0
      %5847 = vmatprep.mubr.f32.mxu0 0.0
      %5848 = vmatmul.mubr.f32.gmra.mrb[0].mxu0 %v5742
      %v5849 = vpop.f32.mrb[0].mxu0
      %v5850 = vadd.f32 %v656, %v5849
      %v5851 = vpop.f32.mrb[0].mxu0
      %5852 = vdwg.mxu0
      %5853 = vrot.lane.b32.xlu0 %v587, 104
      %v5854 = vpop.permute.xlu0 %5853
      %5855 = vrot.lane.b32.xlu0 %v592, 104
      %v5856 = vpop.permute.xlu0 %5855
      %5857 = vrot.lane.b32.xlu0 %v597, 104
      %v5858 = vpop.permute.xlu0 %5857
      %5859 = vrot.lane.b32.xlu0 %v602, 104
      %v5860 = vpop.permute.xlu0 %5859
      %5861 = vrot.lane.b32.xlu0 %v607, 104
      %v5862 = vpop.permute.xlu0 %5861
      %5863 = vrot.lane.b32.xlu0 %v612, 104
      %v5864 = vpop.permute.xlu0 %5863
      %5865 = vrot.lane.b32.xlu0 %v617, 104
      %v5866 = vpop.permute.xlu0 %5865
      %5867 = vrot.lane.b32.xlu0 %v622, 104
      %v5868 = vpop.permute.xlu0 %5867
      %5869 = vrot.lane.b32.xlu0 %v617, 96
      %v5870 = vpop.permute.xlu0 %5869
      %5871 = vrot.lane.b32.xlu0 %v622, 96
      %v5872 = vpop.permute.xlu0 %5871
      %v5873 = vsel %vm667, %v5854, 0
      %v5875 = vsel %vm667, %v5856, 0
      %v5877 = vsel %vm667, %v5858, 0
      %v5879 = vsel %vm667, %v5860, 0
      %v5881 = vsel %vm667, %v5862, 0
      %v5883 = vsel %vm667, %v5864, 0
      %v5885 = vsel %vm667, %v5866, 0
      %v5887 = vsel %vm667, %v5868, 0
      %v5889 = vsel %vm667, %v5870, 0
      %v5891 = vsel %vm667, %v5872, 0
      %5893 = vmatprep.subr.mxu0 0.0
      %5894 = vmatpush1.xpose.msra.mxu0 %v5889
      %5895 = vmatprep.subr.mxu0 0.0
      %5896 = vmatpush1.xpose.msra.mxu0 %v5891
      %5897 = vmatprep.subr.mxu0 0.0
      %5898 = vmatpush1.xpose.msra.mxu0 0.0
      %5899 = vmatprep.subr.mxu0 0.0
      %5900 = vmatpush1.xpose.msra.mxu0 0.0
      %5901 = vmatprep.subr.mxu0 0.0
      %5902 = vmatpush1.xpose.msra.mxu0 0.0
      %5903 = vmatprep.subr.mxu0 0.0
      %5904 = vmatpush1.xpose.msra.mxu0 0.0
      %5905 = vmatprep.subr.mxu0 0.0
      %5906 = vmatpush1.xpose.msra.mxu0 0.0
      %5907 = vmatprep.subr.mxu0 0.0
      %5908 = vmatpush1.xpose.msra.mxu0 0.0
      %5909 = vmatprep.subr.mxu0 0.0
      %5910 = vmatpush1.xpose.msra.mxu0 0.0
      %5911 = vmatprep.subr.mxu0 0.0
      %5912 = vmatpush1.xpose.msra.mxu0 0.0
      %5913 = vmatprep.subr.mxu0 0.0
      %5914 = vmatpush1.xpose.msra.mxu0 0.0
      %5915 = vmatprep.subr.mxu0 0.0
      %5916 = vmatpush1.xpose.msra.mxu0 0.0
      %5917 = vmatprep.subr.mxu0 0.0
      %5918 = vmatpush1.xpose.msra.mxu0 0.0
      %5919 = vmatprep.subr.mxu0 0.0
      %5920 = vmatpush1.xpose.msra.mxu0 0.0
      %5921 = vmatprep.subr.mxu0 0.0
      %5922 = vmatpush1.xpose.msra.mxu0 0.0
      %5923 = vmatprep.subr.mxu0 0.0
      %5924 = vmatpush1.xpose.msra.mxu0 0.0
      %5925 = vmatprep.subr.mxu0 0.0
      %5926 = vmatpush1.xpose.msra.mxu0 0.0
      %5927 = vmatprep.subr.mxu0 0.0
      %5928 = vmatpush1.xpose.msra.mxu0 0.0
      %5929 = vmatprep.subr.mxu0 0.0
      %5930 = vmatpush1.xpose.msra.mxu0 0.0
      %5931 = vmatprep.subr.mxu0 0.0
      %5932 = vmatpush1.xpose.msra.mxu0 0.0
      %5933 = vmatprep.subr.mxu0 0.0
      %5934 = vmatpush1.xpose.msra.mxu0 0.0
      %5935 = vmatprep.subr.mxu0 0.0
      %5936 = vmatpush1.xpose.msra.mxu0 0.0
      %5937 = vmatprep.subr.mxu0 0.0
      %5938 = vmatpush1.xpose.msra.mxu0 0.0
      %5939 = vmatprep.subr.mxu0 0.0
      %5940 = vmatpush1.xpose.msra.mxu0 0.0
      %5941 = vmatprep.subr.mxu0 0.0
      %5942 = vmatpush1.xpose.msra.mxu0 0.0
      %5943 = vmatprep.subr.mxu0 0.0
      %5944 = vmatpush1.xpose.msra.mxu0 0.0
      %5945 = vmatprep.subr.mxu0 0.0
      %5946 = vmatpush1.xpose.msra.mxu0 0.0
      %5947 = vmatprep.subr.mxu0 0.0
      %5948 = vmatpush1.xpose.msra.mxu0 0.0
      %5949 = vmatprep.subr.mxu0 0.0
      %5950 = vmatpush1.xpose.msra.mxu0 0.0
      %5951 = vmatprep.subr.mxu0 0.0
      %5952 = vmatpush1.xpose.msra.mxu0 0.0
      %5953 = vmatprep.subr.mxu0 0.0
      %5954 = vmatpush1.xpose.msra.mxu0 0.0
      %5955 = vmatprep.subr.mxu0 0.0
      %5956 = vmatpush1.xpose.msra.mxu0 0.0
      %5957 = vmatprep.mubr.f32.mxu0 0.0
      %5958 = vmatmul.mubr.f32.gmra.mrb[0].mxu0 %v5873
      %v5959 = vpop.f32.mrb[0].mxu0
      %v5960 = vadd.f32 %v649, %v5959
      %v5961 = vpop.f32.mrb[0].mxu0
      %5962 = vmatprep.mubr.f32.mxu0 0.0
      %5963 = vmatmul.mubr.f32.gmra.mrb[0].mxu0 %v5875
      %v5964 = vpop.f32.mrb[0].mxu0
      %v5965 = vadd.f32 %v650, %v5964
      %v5966 = vpop.f32.mrb[0].mxu0
      %5967 = vmatprep.mubr.f32.mxu0 0.0
      %5968 = vmatmul.mubr.f32.gmra.mrb[0].mxu0 %v5877
      %v5969 = vpop.f32.mrb[0].mxu0
      %v5970 = vadd.f32 %v651, %v5969
      %v5971 = vpop.f32.mrb[0].mxu0
      %5972 = vmatprep.mubr.f32.mxu0 0.0
      %5973 = vmatmul.mubr.f32.gmra.mrb[0].mxu0 %v5879
      %v5974 = vpop.f32.mrb[0].mxu0
      %v5975 = vadd.f32 %v652, %v5974
      %v5976 = vpop.f32.mrb[0].mxu0
      %5977 = vmatprep.mubr.f32.mxu0 0.0
      %5978 = vmatmul.mubr.f32.gmra.mrb[0].mxu0 %v5881
      %v5979 = vpop.f32.mrb[0].mxu0
      %v5980 = vadd.f32 %v653, %v5979
      %v5981 = vpop.f32.mrb[0].mxu0
      %5982 = vmatprep.mubr.f32.mxu0 0.0
      %5983 = vmatmul.mubr.f32.gmra.mrb[0].mxu0 %v5883
      %v5984 = vpop.f32.mrb[0].mxu0
      %v5985 = vadd.f32 %v654, %v5984
      %v5986 = vpop.f32.mrb[0].mxu0
      %5987 = vmatprep.mubr.f32.mxu0 0.0
      %5988 = vmatmul.mubr.f32.gmra.mrb[0].mxu0 %v5885
      %v5989 = vpop.f32.mrb[0].mxu0
      %v5990 = vadd.f32 %v655, %v5989
      %v5991 = vpop.f32.mrb[0].mxu0
      %5992 = vmatprep.mubr.f32.mxu0 0.0
      %5993 = vmatmul.mubr.f32.gmra.mrb[0].mxu0 %v5887
      %v5994 = vpop.f32.mrb[0].mxu0
      %v5995 = vadd.f32 %v656, %v5994
      %v5996 = vpop.f32.mrb[0].mxu0
      %5997 = vdwg.mxu0
      %v5998 = vsel %vm1210, %v5525, -inf
      %5999 = vmax.xlane.f32.xlu0 %v5998
      %v6000 = vpop.xlane.xlu0 %5999
      %v6001 = vsel %vm1210, %v5530, -inf
      %6002 = vmax.xlane.f32.xlu0 %v6001
      %v6003 = vpop.xlane.xlu0 %6002
      %v6004 = vsel %vm1210, %v5535, -inf
      %6005 = vmax.xlane.f32.xlu0 %v6004
      %v6006 = vpop.xlane.xlu0 %6005
      %v6007 = vsel %vm1210, %v5540, -inf
      %6008 = vmax.xlane.f32.xlu0 %v6007
      %v6009 = vpop.xlane.xlu0 %6008
      %v6010 = vsel %vm1210, %v5545, -inf
      %6011 = vmax.xlane.f32.xlu0 %v6010
      %v6012 = vpop.xlane.xlu0 %6011
      %v6013 = vsel %vm1210, %v5550, -inf
      %6014 = vmax.xlane.f32.xlu0 %v6013
      %v6015 = vpop.xlane.xlu0 %6014
      %v6016 = vsel %vm1210, %v5555, -inf
      %6017 = vmax.xlane.f32.xlu0 %v6016
      %v6018 = vpop.xlane.xlu0 %6017
      %v6019 = vsel %vm1210, %v5560, -inf
      %6020 = vmax.xlane.f32.xlu0 %v6019
      %v6021 = vpop.xlane.xlu0 %6020
      %v6022 = vsel %vm1210, %v5670, -inf
      %6023 = vmax.xlane.f32.xlu0 %v6022
      %v6024 = vpop.xlane.xlu0 %6023
      %v6025 = vsel %vm1210, %v5675, -inf
      %6026 = vmax.xlane.f32.xlu0 %v6025
      %v6027 = vpop.xlane.xlu0 %6026
      %v6028 = vsel %vm1210, %v5680, -inf
      %6029 = vmax.xlane.f32.xlu0 %v6028
      %v6030 = vpop.xlane.xlu0 %6029
      %v6031 = vsel %vm1210, %v5685, -inf
      %6032 = vmax.xlane.f32.xlu0 %v6031
      %v6033 = vpop.xlane.xlu0 %6032
      %v6034 = vsel %vm1210, %v5690, -inf
      %6035 = vmax.xlane.f32.xlu0 %v6034
      %v6036 = vpop.xlane.xlu0 %6035
      %v6037 = vsel %vm1210, %v5695, -inf
      %6038 = vmax.xlane.f32.xlu0 %v6037
      %v6039 = vpop.xlane.xlu0 %6038
      %v6040 = vsel %vm1210, %v5700, -inf
      %6041 = vmax.xlane.f32.xlu0 %v6040
      %v6042 = vpop.xlane.xlu0 %6041
      %v6043 = vsel %vm1210, %v5705, -inf
      %6044 = vmax.xlane.f32.xlu0 %v6043
      %v6045 = vpop.xlane.xlu0 %6044
      %v6046 = vsel %vm1210, %v5815, -inf
      %6047 = vmax.xlane.f32.xlu0 %v6046
      %v6048 = vpop.xlane.xlu0 %6047
      %v6049 = vsel %vm1210, %v5820, -inf
      %6050 = vmax.xlane.f32.xlu0 %v6049
      %v6051 = vpop.xlane.xlu0 %6050
      %v6052 = vsel %vm1210, %v5825, -inf
      %6053 = vmax.xlane.f32.xlu0 %v6052
      %v6054 = vpop.xlane.xlu0 %6053
      %v6055 = vsel %vm1210, %v5830, -inf
      %6056 = vmax.xlane.f32.xlu0 %v6055
      %v6057 = vpop.xlane.xlu0 %6056
      %v6058 = vsel %vm1210, %v5835, -inf
      %6059 = vmax.xlane.f32.xlu0 %v6058
      %v6060 = vpop.xlane.xlu0 %6059
      %v6061 = vsel %vm1210, %v5840, -inf
      %6062 = vmax.xlane.f32.xlu0 %v6061
      %v6063 = vpop.xlane.xlu0 %6062
      %v6064 = vsel %vm1210, %v5845, -inf
      %6065 = vmax.xlane.f32.xlu0 %v6064
      %v6066 = vpop.xlane.xlu0 %6065
      %v6067 = vsel %vm1210, %v5850, -inf
      %6068 = vmax.xlane.f32.xlu0 %v6067
      %v6069 = vpop.xlane.xlu0 %6068
      %v6070 = vsel %vm1210, %v5960, -inf
      %6071 = vmax.xlane.f32.xlu0 %v6070
      %v6072 = vpop.xlane.xlu0 %6071
      %v6073 = vsel %vm1210, %v5965, -inf
      %6074 = vmax.xlane.f32.xlu0 %v6073
      %v6075 = vpop.xlane.xlu0 %6074
      %v6076 = vsel %vm1210, %v5970, -inf
      %6077 = vmax.xlane.f32.xlu0 %v6076
      %v6078 = vpop.xlane.xlu0 %6077
      %v6079 = vsel %vm1210, %v5975, -inf
      %6080 = vmax.xlane.f32.xlu0 %v6079
      %v6081 = vpop.xlane.xlu0 %6080
      %v6082 = vsel %vm1210, %v5980, -inf
      %6083 = vmax.xlane.f32.xlu0 %v6082
      %v6084 = vpop.xlane.xlu0 %6083
      %v6085 = vsel %vm1210, %v5985, -inf
      %6086 = vmax.xlane.f32.xlu0 %v6085
      %v6087 = vpop.xlane.xlu0 %6086
      %v6088 = vsel %vm1210, %v5990, -inf
      %6089 = vmax.xlane.f32.xlu0 %v6088
      %v6090 = vpop.xlane.xlu0 %6089
      %v6091 = vsel %vm1210, %v5995, -inf
      %6092 = vmax.xlane.f32.xlu0 %v6091
      %v6093 = vpop.xlane.xlu0 %6092
      %v6094 = vsub.f32 %v5525, %v6000
      %v6095 = vsub.f32 %v5530, %v6003
      %v6096 = vsub.f32 %v5535, %v6006
      %v6097 = vsub.f32 %v5540, %v6009
      %v6098 = vsub.f32 %v5545, %v6012
      %v6099 = vsub.f32 %v5550, %v6015
      %v6100 = vsub.f32 %v5555, %v6018
      %v6101 = vsub.f32 %v5560, %v6021
      %v6102 = vsub.f32 %v5670, %v6024
      %v6103 = vsub.f32 %v5675, %v6027
      %v6104 = vsub.f32 %v5680, %v6030
      %v6105 = vsub.f32 %v5685, %v6033
      %v6106 = vsub.f32 %v5690, %v6036
      %v6107 = vsub.f32 %v5695, %v6039
      %v6108 = vsub.f32 %v5700, %v6042
      %v6109 = vsub.f32 %v5705, %v6045
      %v6110 = vsub.f32 %v5815, %v6048
      %v6111 = vsub.f32 %v5820, %v6051
      %v6112 = vsub.f32 %v5825, %v6054
      %v6113 = vsub.f32 %v5830, %v6057
      %v6114 = vsub.f32 %v5835, %v6060
      %v6115 = vsub.f32 %v5840, %v6063
      %v6116 = vsub.f32 %v5845, %v6066
      %v6117 = vsub.f32 %v5850, %v6069
      %v6118 = vsub.f32 %v5960, %v6072
      %v6119 = vsub.f32 %v5965, %v6075
      %v6120 = vsub.f32 %v5970, %v6078
      %v6121 = vsub.f32 %v5975, %v6081
      %v6122 = vsub.f32 %v5980, %v6084
      %v6123 = vsub.f32 %v5985, %v6087
      %v6124 = vsub.f32 %v5990, %v6090
      %v6125 = vsub.f32 %v5995, %v6093
      %v6126 = vmul.f32 %v6094, 1.442695
      %v6127 = vpow.pop %v6126
      %v6128 = vmul.f32 %v6095, 1.442695
      %v6129 = vpow.pop %v6128
      %v6130 = vmul.f32 %v6096, 1.442695
      %v6131 = vpow.pop %v6130
      %v6132 = vmul.f32 %v6097, 1.442695
      %v6133 = vpow.pop %v6132
      %v6134 = vmul.f32 %v6098, 1.442695
      %v6135 = vpow.pop %v6134
      %v6136 = vmul.f32 %v6099, 1.442695
      %v6137 = vpow.pop %v6136
      %v6138 = vmul.f32 %v6100, 1.442695
      %v6139 = vpow.pop %v6138
      %v6140 = vmul.f32 %v6101, 1.442695
      %v6141 = vpow.pop %v6140
      %v6142 = vmul.f32 %v6102, 1.442695
      %v6143 = vpow.pop %v6142
      %v6144 = vmul.f32 %v6103, 1.442695
      %v6145 = vpow.pop %v6144
      %v6146 = vmul.f32 %v6104, 1.442695
      %v6147 = vpow.pop %v6146
      %v6148 = vmul.f32 %v6105, 1.442695
      %v6149 = vpow.pop %v6148
      %v6150 = vmul.f32 %v6106, 1.442695
      %v6151 = vpow.pop %v6150
      %v6152 = vmul.f32 %v6107, 1.442695
      %v6153 = vpow.pop %v6152
      %v6154 = vmul.f32 %v6108, 1.442695
      %v6155 = vpow.pop %v6154
      %v6156 = vmul.f32 %v6109, 1.442695
      %v6157 = vpow.pop %v6156
      %v6158 = vmul.f32 %v6110, 1.442695
      %v6159 = vpow.pop %v6158
      %v6160 = vmul.f32 %v6111, 1.442695
      %v6161 = vpow.pop %v6160
      %v6162 = vmul.f32 %v6112, 1.442695
      %v6163 = vpow.pop %v6162
      %v6164 = vmul.f32 %v6113, 1.442695
      %v6165 = vpow.pop %v6164
      %v6166 = vmul.f32 %v6114, 1.442695
      %v6167 = vpow.pop %v6166
      %v6168 = vmul.f32 %v6115, 1.442695
      %v6169 = vpow.pop %v6168
      %v6170 = vmul.f32 %v6116, 1.442695
      %v6171 = vpow.pop %v6170
      %v6172 = vmul.f32 %v6117, 1.442695
      %v6173 = vpow.pop %v6172
      %v6174 = vmul.f32 %v6118, 1.442695
      %v6175 = vpow.pop %v6174
      %v6176 = vmul.f32 %v6119, 1.442695
      %v6177 = vpow.pop %v6176
      %v6178 = vmul.f32 %v6120, 1.442695
      %v6179 = vpow.pop %v6178
      %v6180 = vmul.f32 %v6121, 1.442695
      %v6181 = vpow.pop %v6180
      %v6182 = vmul.f32 %v6122, 1.442695
      %v6183 = vpow.pop %v6182
      %v6184 = vmul.f32 %v6123, 1.442695
      %v6185 = vpow.pop %v6184
      %v6186 = vmul.f32 %v6124, 1.442695
      %v6187 = vpow.pop %v6186
      %v6188 = vmul.f32 %v6125, 1.442695
      %v6189 = vpow.pop %v6188
      %v6190 = vsel %vm1210, %v6127, 0.0
      %6191 = vadd.xlane.f32.xlu0 %v6190
      %v6192 = vpop.xlane.xlu0 %6191
      %v6193 = vsel %vm1210, %v6129, 0.0
      %6194 = vadd.xlane.f32.xlu0 %v6193
      %v6195 = vpop.xlane.xlu0 %6194
      %v6196 = vsel %vm1210, %v6131, 0.0
      %6197 = vadd.xlane.f32.xlu0 %v6196
      %v6198 = vpop.xlane.xlu0 %6197
      %v6199 = vsel %vm1210, %v6133, 0.0
      %6200 = vadd.xlane.f32.xlu0 %v6199
      %v6201 = vpop.xlane.xlu0 %6200
      %v6202 = vsel %vm1210, %v6135, 0.0
      %6203 = vadd.xlane.f32.xlu0 %v6202
      %v6204 = vpop.xlane.xlu0 %6203
      %v6205 = vsel %vm1210, %v6137, 0.0
      %6206 = vadd.xlane.f32.xlu0 %v6205
      %v6207 = vpop.xlane.xlu0 %6206
      %v6208 = vsel %vm1210, %v6139, 0.0
      %6209 = vadd.xlane.f32.xlu0 %v6208
      %v6210 = vpop.xlane.xlu0 %6209
      %v6211 = vsel %vm1210, %v6141, 0.0
      %6212 = vadd.xlane.f32.xlu0 %v6211
      %v6213 = vpop.xlane.xlu0 %6212
      %v6214 = vsel %vm1210, %v6143, 0.0
      %6215 = vadd.xlane.f32.xlu0 %v6214
      %v6216 = vpop.xlane.xlu0 %6215
      %v6217 = vsel %vm1210, %v6145, 0.0
      %6218 = vadd.xlane.f32.xlu0 %v6217
      %v6219 = vpop.xlane.xlu0 %6218
      %v6220 = vsel %vm1210, %v6147, 0.0
      %6221 = vadd.xlane.f32.xlu0 %v6220
      %v6222 = vpop.xlane.xlu0 %6221
      %v6223 = vsel %vm1210, %v6149, 0.0
      %6224 = vadd.xlane.f32.xlu0 %v6223
      %v6225 = vpop.xlane.xlu0 %6224
      %v6226 = vsel %vm1210, %v6151, 0.0
      %6227 = vadd.xlane.f32.xlu0 %v6226
      %v6228 = vpop.xlane.xlu0 %6227
      %v6229 = vsel %vm1210, %v6153, 0.0
      %6230 = vadd.xlane.f32.xlu0 %v6229
      %v6231 = vpop.xlane.xlu0 %6230
      %v6232 = vsel %vm1210, %v6155, 0.0
      %6233 = vadd.xlane.f32.xlu0 %v6232
      %v6234 = vpop.xlane.xlu0 %6233
      %v6235 = vsel %vm1210, %v6157, 0.0
      %6236 = vadd.xlane.f32.xlu0 %v6235
      %v6237 = vpop.xlane.xlu0 %6236
      %v6238 = vsel %vm1210, %v6159, 0.0
      %6239 = vadd.xlane.f32.xlu0 %v6238
      %v6240 = vpop.xlane.xlu0 %6239
      %v6241 = vsel %vm1210, %v6161, 0.0
      %6242 = vadd.xlane.f32.xlu0 %v6241
      %v6243 = vpop.xlane.xlu0 %6242
      %v6244 = vsel %vm1210, %v6163, 0.0
      %6245 = vadd.xlane.f32.xlu0 %v6244
      %v6246 = vpop.xlane.xlu0 %6245
      %v6247 = vsel %vm1210, %v6165, 0.0
      %6248 = vadd.xlane.f32.xlu0 %v6247
      %v6249 = vpop.xlane.xlu0 %6248
      %v6250 = vsel %vm1210, %v6167, 0.0
      %6251 = vadd.xlane.f32.xlu0 %v6250
      %v6252 = vpop.xlane.xlu0 %6251
      %v6253 = vsel %vm1210, %v6169, 0.0
      %6254 = vadd.xlane.f32.xlu0 %v6253
      %v6255 = vpop.xlane.xlu0 %6254
      %v6256 = vsel %vm1210, %v6171, 0.0
      %6257 = vadd.xlane.f32.xlu0 %v6256
      %v6258 = vpop.xlane.xlu0 %6257
      %v6259 = vsel %vm1210, %v6173, 0.0
      %6260 = vadd.xlane.f32.xlu0 %v6259
      %v6261 = vpop.xlane.xlu0 %6260
      %v6262 = vsel %vm1210, %v6175, 0.0
      %6263 = vadd.xlane.f32.xlu0 %v6262
      %v6264 = vpop.xlane.xlu0 %6263
      %v6265 = vsel %vm1210, %v6177, 0.0
      %6266 = vadd.xlane.f32.xlu0 %v6265
      %v6267 = vpop.xlane.xlu0 %6266
      %v6268 = vsel %vm1210, %v6179, 0.0
      %6269 = vadd.xlane.f32.xlu0 %v6268
      %v6270 = vpop.xlane.xlu0 %6269
      %v6271 = vsel %vm1210, %v6181, 0.0
      %6272 = vadd.xlane.f32.xlu0 %v6271
      %v6273 = vpop.xlane.xlu0 %6272
      %v6274 = vsel %vm1210, %v6183, 0.0
      %6275 = vadd.xlane.f32.xlu0 %v6274
      %v6276 = vpop.xlane.xlu0 %6275
      %v6277 = vsel %vm1210, %v6185, 0.0
      %6278 = vadd.xlane.f32.xlu0 %v6277
      %v6279 = vpop.xlane.xlu0 %6278
      %v6280 = vsel %vm1210, %v6187, 0.0
      %6281 = vadd.xlane.f32.xlu0 %v6280
      %v6282 = vpop.xlane.xlu0 %6281
      %v6283 = vsel %vm1210, %v6189, 0.0
      %6284 = vadd.xlane.f32.xlu0 %v6283
      %v6285 = vpop.xlane.xlu0 %6284
      %v6286 = vrcp.pop %v6192
      %v6287 = vrcp.pop %v6195
      %v6288 = vrcp.pop %v6198
      %v6289 = vrcp.pop %v6201
      %v6290 = vrcp.pop %v6204
      %v6291 = vrcp.pop %v6207
      %v6292 = vrcp.pop %v6210
      %v6293 = vrcp.pop %v6213
      %v6294 = vrcp.pop %v6216
      %v6295 = vrcp.pop %v6219
      %v6296 = vrcp.pop %v6222
      %v6297 = vrcp.pop %v6225
      %v6298 = vrcp.pop %v6228
      %v6299 = vrcp.pop %v6231
      %v6300 = vrcp.pop %v6234
      %v6301 = vrcp.pop %v6237
      %v6302 = vrcp.pop %v6240
      %v6303 = vrcp.pop %v6243
      %v6304 = vrcp.pop %v6246
      %v6305 = vrcp.pop %v6249
      %v6306 = vrcp.pop %v6252
      %v6307 = vrcp.pop %v6255
      %v6308 = vrcp.pop %v6258
      %v6309 = vrcp.pop %v6261
      %v6310 = vrcp.pop %v6264
      %v6311 = vrcp.pop %v6267
      %v6312 = vrcp.pop %v6270
      %v6313 = vrcp.pop %v6273
      %v6314 = vrcp.pop %v6276
      %v6315 = vrcp.pop %v6279
      %v6316 = vrcp.pop %v6282
      %v6317 = vrcp.pop %v6285
      %v6318 = vmul.f32 %v6127, %v6286
      %v6319 = vmul.f32 %v6129, %v6287
      %v6320 = vmul.f32 %v6131, %v6288
      %v6321 = vmul.f32 %v6133, %v6289
      %v6322 = vmul.f32 %v6135, %v6290
      %v6323 = vmul.f32 %v6137, %v6291
      %v6324 = vmul.f32 %v6139, %v6292
      %v6325 = vmul.f32 %v6141, %v6293
      %v6326 = vmul.f32 %v6143, %v6294
      %v6327 = vmul.f32 %v6145, %v6295
      %v6328 = vmul.f32 %v6147, %v6296
      %v6329 = vmul.f32 %v6149, %v6297
      %v6330 = vmul.f32 %v6151, %v6298
      %v6331 = vmul.f32 %v6153, %v6299
      %v6332 = vmul.f32 %v6155, %v6300
      %v6333 = vmul.f32 %v6157, %v6301
      %v6334 = vmul.f32 %v6159, %v6302
      %v6335 = vmul.f32 %v6161, %v6303
      %v6336 = vmul.f32 %v6163, %v6304
      %v6337 = vmul.f32 %v6165, %v6305
      %v6338 = vmul.f32 %v6167, %v6306
      %v6339 = vmul.f32 %v6169, %v6307
      %v6340 = vmul.f32 %v6171, %v6308
      %v6341 = vmul.f32 %v6173, %v6309
      %v6342 = vmul.f32 %v6175, %v6310
      %v6343 = vmul.f32 %v6177, %v6311
      %v6344 = vmul.f32 %v6179, %v6312
      %v6345 = vmul.f32 %v6181, %v6313
      %v6346 = vmul.f32 %v6183, %v6314
      %v6347 = vmul.f32 %v6185, %v6315
      %v6348 = vmul.f32 %v6187, %v6316
      %v6349 = vmul.f32 %v6189, %v6317
      %6350 = vrot.lane.b32.xlu0 %v497, 88
      %v6351 = vpop.permute.xlu0 %6350
      %6352 = vrot.lane.b32.xlu0 %v502, 88
      %v6353 = vpop.permute.xlu0 %6352
      %6354 = vrot.lane.b32.xlu0 %v537, 88
      %v6355 = vpop.permute.xlu0 %6354
      %6356 = vrot.lane.b32.xlu0 %v542, 88
      %v6357 = vpop.permute.xlu0 %6356
      %6358 = vrot.lane.b32.xlu0 %v577, 88
      %v6359 = vpop.permute.xlu0 %6358
      %6360 = vrot.lane.b32.xlu0 %v582, 88
      %v6361 = vpop.permute.xlu0 %6360
      %6362 = vrot.lane.b32.xlu0 %v617, 88
      %v6363 = vpop.permute.xlu0 %6362
      %6364 = vrot.lane.b32.xlu0 %v622, 88
      %v6365 = vpop.permute.xlu0 %6364
      %v6366 = vsel %vm667, %v6351, 0
      %v6368 = vsel %vm667, %v6353, 0
      %v6370 = vsel %vm667, %v6355, 0
      %v6372 = vsel %vm667, %v6357, 0
      %v6374 = vsel %vm667, %v6359, 0
      %v6376 = vsel %vm667, %v6361, 0
      %v6378 = vsel %vm667, %v6363, 0
      %v6380 = vsel %vm667, %v6365, 0
      %6382 = vmatprep.subr.mxu0 0.0
      %6383 = vmatpush1.msra.mxu0 %v660
      %6384 = vmatprep.subr.mxu0 0.0
      %6385 = vmatpush1.msra.mxu0 0.0
      %6386 = vmatprep.subr.mxu0 0.0
      %6387 = vmatpush1.msra.mxu0 0.0
      %6388 = vmatprep.subr.mxu0 0.0
      %6389 = vmatpush1.msra.mxu0 0.0
      %6390 = vmatprep.subr.mxu0 0.0
      %6391 = vmatpush1.msra.mxu0 0.0
      %6392 = vmatprep.subr.mxu0 0.0
      %6393 = vmatpush1.msra.mxu0 0.0
      %6394 = vmatprep.subr.mxu0 0.0
      %6395 = vmatpush1.msra.mxu0 0.0
      %6396 = vmatprep.subr.mxu0 0.0
      %6397 = vmatpush1.msra.mxu0 0.0
      %6398 = vmatprep.subr.mxu0 0.0
      %6399 = vmatpush1.msra.mxu0 0.0
      %6400 = vmatprep.subr.mxu0 0.0
      %6401 = vmatpush1.msra.mxu0 0.0
      %6402 = vmatprep.subr.mxu0 0.0
      %6403 = vmatpush1.msra.mxu0 0.0
      %6404 = vmatprep.subr.mxu0 0.0
      %6405 = vmatpush1.msra.mxu0 0.0
      %6406 = vmatprep.subr.mxu0 0.0
      %6407 = vmatpush1.msra.mxu0 0.0
      %6408 = vmatprep.subr.mxu0 0.0
      %6409 = vmatpush1.msra.mxu0 0.0
      %6410 = vmatprep.subr.mxu0 0.0
      %6411 = vmatpush1.msra.mxu0 0.0
      %6412 = vmatprep.subr.mxu0 0.0
      %6413 = vmatpush1.msra.mxu0 0.0
      %6414 = vmatprep.subr.mxu0 0.0
      %6415 = vmatpush1.msra.mxu0 0.0
      %6416 = vmatprep.subr.mxu0 0.0
      %6417 = vmatpush1.msra.mxu0 0.0
      %6418 = vmatprep.subr.mxu0 0.0
      %6419 = vmatpush1.msra.mxu0 0.0
      %6420 = vmatprep.subr.mxu0 0.0
      %6421 = vmatpush1.msra.mxu0 0.0
      %6422 = vmatprep.subr.mxu0 0.0
      %6423 = vmatpush1.msra.mxu0 0.0
      %6424 = vmatprep.subr.mxu0 0.0
      %6425 = vmatpush1.msra.mxu0 0.0
      %6426 = vmatprep.subr.mxu0 0.0
      %6427 = vmatpush1.msra.mxu0 0.0
      %6428 = vmatprep.subr.mxu0 0.0
      %6429 = vmatpush1.msra.mxu0 0.0
      %6430 = vmatprep.subr.mxu0 0.0
      %6431 = vmatpush1.msra.mxu0 0.0
      %6432 = vmatprep.subr.mxu0 0.0
      %6433 = vmatpush1.msra.mxu0 0.0
      %6434 = vmatprep.subr.mxu0 0.0
      %6435 = vmatpush1.msra.mxu0 0.0
      %6436 = vmatprep.subr.mxu0 0.0
      %6437 = vmatpush1.msra.mxu0 0.0
      %6438 = vmatprep.subr.mxu0 0.0
      %6439 = vmatpush1.msra.mxu0 0.0
      %6440 = vmatprep.subr.mxu0 0.0
      %6441 = vmatpush1.msra.mxu0 0.0
      %6442 = vmatprep.subr.mxu0 0.0
      %6443 = vmatpush1.msra.mxu0 0.0
      %6444 = vmatprep.subr.mxu0 0.0
      %6445 = vmatpush1.msra.mxu0 0.0
      %6446 = vmatprep.mubr.f32.mxu0 0.0
      %6447 = vmatmul.mubr.f32.gmra.mrb[0].mxu0 %v6366
      %v6448 = vpop.f32.mrb[0].mxu0
      %v6449 = vadd.f32 0.0, %v6448
      %v6450 = vpop.f32.mrb[0].mxu0
      %6451 = vmatprep.mubr.f32.mxu0 0.0
      %6452 = vmatmul.mubr.f32.gmra.mrb[0].mxu0 %v6368
      %v6453 = vpop.f32.mrb[0].mxu0
      %v6454 = vadd.f32 0.0, %v6453
      %v6455 = vpop.f32.mrb[0].mxu0
      %6456 = vmatprep.mubr.f32.mxu0 0.0
      %6457 = vmatmul.mubr.f32.gmra.mrb[0].mxu0 %v6370
      %v6458 = vpop.f32.mrb[0].mxu0
      %v6459 = vadd.f32 0.0, %v6458
      %v6460 = vpop.f32.mrb[0].mxu0
      %6461 = vmatprep.mubr.f32.mxu0 0.0
      %6462 = vmatmul.mubr.f32.gmra.mrb[0].mxu0 %v6372
      %v6463 = vpop.f32.mrb[0].mxu0
      %v6464 = vadd.f32 0.0, %v6463
      %v6465 = vpop.f32.mrb[0].mxu0
      %6466 = vmatprep.mubr.f32.mxu0 0.0
      %6467 = vmatmul.mubr.f32.gmra.mrb[0].mxu0 %v6374
      %v6468 = vpop.f32.mrb[0].mxu0
      %v6469 = vadd.f32 0.0, %v6468
      %v6470 = vpop.f32.mrb[0].mxu0
      %6471 = vmatprep.mubr.f32.mxu0 0.0
      %6472 = vmatmul.mubr.f32.gmra.mrb[0].mxu0 %v6376
      %v6473 = vpop.f32.mrb[0].mxu0
      %v6474 = vadd.f32 0.0, %v6473
      %v6475 = vpop.f32.mrb[0].mxu0
      %6476 = vmatprep.mubr.f32.mxu0 0.0
      %6477 = vmatmul.mubr.f32.gmra.mrb[0].mxu0 %v6378
      %v6478 = vpop.f32.mrb[0].mxu0
      %v6479 = vadd.f32 0.0, %v6478
      %v6480 = vpop.f32.mrb[0].mxu0
      %6481 = vmatprep.mubr.f32.mxu0 0.0
      %6482 = vmatmul.mubr.f32.gmra.mrb[0].mxu0 %v6380
      %v6483 = vpop.f32.mrb[0].mxu0
      %v6484 = vadd.f32 0.0, %v6483
      %v6485 = vpop.f32.mrb[0].mxu0
      %6486 = vdwg.mxu0
      %v6488 = vsel %vm1210, %v6318, 0
      %v6491 = vsel %vm1210, %v6319, 0
      %v6494 = vsel %vm1210, %v6320, 0
      %v6497 = vsel %vm1210, %v6321, 0
      %v6500 = vsel %vm1210, %v6322, 0
      %v6503 = vsel %vm1210, %v6323, 0
      %v6506 = vsel %vm1210, %v6324, 0
      %v6509 = vsel %vm1210, %v6325, 0
      %6511 = vmatprep.subr.mxu0 0.0
      %6512 = vmatpush1.msra.mxu0 %v6449
      %6513 = vmatprep.subr.mxu0 0.0
      %6514 = vmatpush1.msra.mxu0 %v6454
      %6515 = vmatprep.subr.mxu0 0.0
      %6516 = vmatpush1.msra.mxu0 0.0
      %6517 = vmatprep.subr.mxu0 0.0
      %6518 = vmatpush1.msra.mxu0 0.0
      %6519 = vmatprep.subr.mxu0 0.0
      %6520 = vmatpush1.msra.mxu0 0.0
      %6521 = vmatprep.subr.mxu0 0.0
      %6522 = vmatpush1.msra.mxu0 0.0
      %6523 = vmatprep.subr.mxu0 0.0
      %6524 = vmatpush1.msra.mxu0 0.0
      %6525 = vmatprep.subr.mxu0 0.0
      %6526 = vmatpush1.msra.mxu0 0.0
      %6527 = vmatprep.subr.mxu0 0.0
      %6528 = vmatpush1.msra.mxu0 0.0
      %6529 = vmatprep.subr.mxu0 0.0
      %6530 = vmatpush1.msra.mxu0 0.0
      %6531 = vmatprep.subr.mxu0 0.0
      %6532 = vmatpush1.msra.mxu0 0.0
      %6533 = vmatprep.subr.mxu0 0.0
      %6534 = vmatpush1.msra.mxu0 0.0
      %6535 = vmatprep.subr.mxu0 0.0
      %6536 = vmatpush1.msra.mxu0 0.0
      %6537 = vmatprep.subr.mxu0 0.0
      %6538 = vmatpush1.msra.mxu0 0.0
      %6539 = vmatprep.subr.mxu0 0.0
      %6540 = vmatpush1.msra.mxu0 0.0
      %6541 = vmatprep.subr.mxu0 0.0
      %6542 = vmatpush1.msra.mxu0 0.0
      %6543 = vmatprep.subr.mxu0 0.0
      %6544 = vmatpush1.msra.mxu0 0.0
      %6545 = vmatprep.subr.mxu0 0.0
      %6546 = vmatpush1.msra.mxu0 0.0
      %6547 = vmatprep.subr.mxu0 0.0
      %6548 = vmatpush1.msra.mxu0 0.0
      %6549 = vmatprep.subr.mxu0 0.0
      %6550 = vmatpush1.msra.mxu0 0.0
      %6551 = vmatprep.subr.mxu0 0.0
      %6552 = vmatpush1.msra.mxu0 0.0
      %6553 = vmatprep.subr.mxu0 0.0
      %6554 = vmatpush1.msra.mxu0 0.0
      %6555 = vmatprep.subr.mxu0 0.0
      %6556 = vmatpush1.msra.mxu0 0.0
      %6557 = vmatprep.subr.mxu0 0.0
      %6558 = vmatpush1.msra.mxu0 0.0
      %6559 = vmatprep.subr.mxu0 0.0
      %6560 = vmatpush1.msra.mxu0 0.0
      %6561 = vmatprep.subr.mxu0 0.0
      %6562 = vmatpush1.msra.mxu0 0.0
      %6563 = vmatprep.subr.mxu0 0.0
      %6564 = vmatpush1.msra.mxu0 0.0
      %6565 = vmatprep.subr.mxu0 0.0
      %6566 = vmatpush1.msra.mxu0 0.0
      %6567 = vmatprep.subr.mxu0 0.0
      %6568 = vmatpush1.msra.mxu0 0.0
      %6569 = vmatprep.subr.mxu0 0.0
      %6570 = vmatpush1.msra.mxu0 0.0
      %6571 = vmatprep.subr.mxu0 0.0
      %6572 = vmatpush1.msra.mxu0 0.0
      %6573 = vmatprep.subr.mxu0 0.0
      %6574 = vmatpush1.msra.mxu0 0.0
      %6575 = vmatprep.mubr.f32.mxu0 0.0
      %6576 = vmatmul.mubr.f32.gmra.mrb[0].mxu0 %v6488
      %v6577 = vpop.f32.mrb[0].mxu0
      %v6578 = vadd.f32 0.0, %v6577
      %v6579 = vpop.f32.mrb[0].mxu0
      %6580 = vmatprep.mubr.f32.mxu0 0.0
      %6581 = vmatmul.mubr.f32.gmra.mrb[0].mxu0 %v6491
      %v6582 = vpop.f32.mrb[0].mxu0
      %v6583 = vadd.f32 0.0, %v6582
      %v6584 = vpop.f32.mrb[0].mxu0
      %6585 = vmatprep.mubr.f32.mxu0 0.0
      %6586 = vmatmul.mubr.f32.gmra.mrb[0].mxu0 %v6494
      %v6587 = vpop.f32.mrb[0].mxu0
      %v6588 = vadd.f32 0.0, %v6587
      %v6589 = vpop.f32.mrb[0].mxu0
      %6590 = vmatprep.mubr.f32.mxu0 0.0
      %6591 = vmatmul.mubr.f32.gmra.mrb[0].mxu0 %v6497
      %v6592 = vpop.f32.mrb[0].mxu0
      %v6593 = vadd.f32 0.0, %v6592
      %v6594 = vpop.f32.mrb[0].mxu0
      %6595 = vmatprep.mubr.f32.mxu0 0.0
      %6596 = vmatmul.mubr.f32.gmra.mrb[0].mxu0 %v6500
      %v6597 = vpop.f32.mrb[0].mxu0
      %v6598 = vadd.f32 0.0, %v6597
      %v6599 = vpop.f32.mrb[0].mxu0
      %6600 = vmatprep.mubr.f32.mxu0 0.0
      %6601 = vmatmul.mubr.f32.gmra.mrb[0].mxu0 %v6503
      %v6602 = vpop.f32.mrb[0].mxu0
      %v6603 = vadd.f32 0.0, %v6602
      %v6604 = vpop.f32.mrb[0].mxu0
      %6605 = vmatprep.mubr.f32.mxu0 0.0
      %6606 = vmatmul.mubr.f32.gmra.mrb[0].mxu0 %v6506
      %v6607 = vpop.f32.mrb[0].mxu0
      %v6608 = vadd.f32 0.0, %v6607
      %v6609 = vpop.f32.mrb[0].mxu0
      %6610 = vmatprep.mubr.f32.mxu0 0.0
      %6611 = vmatmul.mubr.f32.gmra.mrb[0].mxu0 %v6509
      %v6612 = vpop.f32.mrb[0].mxu0
      %v6613 = vadd.f32 0.0, %v6612
      %v6614 = vpop.f32.mrb[0].mxu0
      %6615 = vdwg.mxu0
      %v6617 = vsel %vm1210, %v6326, 0
      %v6620 = vsel %vm1210, %v6327, 0
      %v6623 = vsel %vm1210, %v6328, 0
      %v6626 = vsel %vm1210, %v6329, 0
      %v6629 = vsel %vm1210, %v6330, 0
      %v6632 = vsel %vm1210, %v6331, 0
      %v6635 = vsel %vm1210, %v6332, 0
      %v6638 = vsel %vm1210, %v6333, 0
      %6640 = vmatprep.subr.mxu0 0.0
      %6641 = vmatpush1.msra.mxu0 %v6459
      %6642 = vmatprep.subr.mxu0 0.0
      %6643 = vmatpush1.msra.mxu0 %v6464
      %6644 = vmatprep.subr.mxu0 0.0
      %6645 = vmatpush1.msra.mxu0 0.0
      %6646 = vmatprep.subr.mxu0 0.0
      %6647 = vmatpush1.msra.mxu0 0.0
      %6648 = vmatprep.subr.mxu0 0.0
      %6649 = vmatpush1.msra.mxu0 0.0
      %6650 = vmatprep.subr.mxu0 0.0
      %6651 = vmatpush1.msra.mxu0 0.0
      %6652 = vmatprep.subr.mxu0 0.0
      %6653 = vmatpush1.msra.mxu0 0.0
      %6654 = vmatprep.subr.mxu0 0.0
      %6655 = vmatpush1.msra.mxu0 0.0
      %6656 = vmatprep.subr.mxu0 0.0
      %6657 = vmatpush1.msra.mxu0 0.0
      %6658 = vmatprep.subr.mxu0 0.0
      %6659 = vmatpush1.msra.mxu0 0.0
      %6660 = vmatprep.subr.mxu0 0.0
      %6661 = vmatpush1.msra.mxu0 0.0
      %6662 = vmatprep.subr.mxu0 0.0
      %6663 = vmatpush1.msra.mxu0 0.0
      %6664 = vmatprep.subr.mxu0 0.0
      %6665 = vmatpush1.msra.mxu0 0.0
      %6666 = vmatprep.subr.mxu0 0.0
      %6667 = vmatpush1.msra.mxu0 0.0
      %6668 = vmatprep.subr.mxu0 0.0
      %6669 = vmatpush1.msra.mxu0 0.0
      %6670 = vmatprep.subr.mxu0 0.0
      %6671 = vmatpush1.msra.mxu0 0.0
      %6672 = vmatprep.subr.mxu0 0.0
      %6673 = vmatpush1.msra.mxu0 0.0
      %6674 = vmatprep.subr.mxu0 0.0
      %6675 = vmatpush1.msra.mxu0 0.0
      %6676 = vmatprep.subr.mxu0 0.0
      %6677 = vmatpush1.msra.mxu0 0.0
      %6678 = vmatprep.subr.mxu0 0.0
      %6679 = vmatpush1.msra.mxu0 0.0
      %6680 = vmatprep.subr.mxu0 0.0
      %6681 = vmatpush1.msra.mxu0 0.0
      %6682 = vmatprep.subr.mxu0 0.0
      %6683 = vmatpush1.msra.mxu0 0.0
      %6684 = vmatprep.subr.mxu0 0.0
      %6685 = vmatpush1.msra.mxu0 0.0
      %6686 = vmatprep.subr.mxu0 0.0
      %6687 = vmatpush1.msra.mxu0 0.0
      %6688 = vmatprep.subr.mxu0 0.0
      %6689 = vmatpush1.msra.mxu0 0.0
      %6690 = vmatprep.subr.mxu0 0.0
      %6691 = vmatpush1.msra.mxu0 0.0
      %6692 = vmatprep.subr.mxu0 0.0
      %6693 = vmatpush1.msra.mxu0 0.0
      %6694 = vmatprep.subr.mxu0 0.0
      %6695 = vmatpush1.msra.mxu0 0.0
      %6696 = vmatprep.subr.mxu0 0.0
      %6697 = vmatpush1.msra.mxu0 0.0
      %6698 = vmatprep.subr.mxu0 0.0
      %6699 = vmatpush1.msra.mxu0 0.0
      %6700 = vmatprep.subr.mxu0 0.0
      %6701 = vmatpush1.msra.mxu0 0.0
      %6702 = vmatprep.subr.mxu0 0.0
      %6703 = vmatpush1.msra.mxu0 0.0
      %6704 = vmatprep.mubr.f32.mxu0 0.0
      %6705 = vmatmul.mubr.f32.gmra.mrb[0].mxu0 %v6617
      %v6706 = vpop.f32.mrb[0].mxu0
      %v6707 = vadd.f32 0.0, %v6706
      %v6708 = vpop.f32.mrb[0].mxu0
      %6709 = vmatprep.mubr.f32.mxu0 0.0
      %6710 = vmatmul.mubr.f32.gmra.mrb[0].mxu0 %v6620
      %v6711 = vpop.f32.mrb[0].mxu0
      %v6712 = vadd.f32 0.0, %v6711
      %v6713 = vpop.f32.mrb[0].mxu0
      %6714 = vmatprep.mubr.f32.mxu0 0.0
      %6715 = vmatmul.mubr.f32.gmra.mrb[0].mxu0 %v6623
      %v6716 = vpop.f32.mrb[0].mxu0
      %v6717 = vadd.f32 0.0, %v6716
      %v6718 = vpop.f32.mrb[0].mxu0
      %6719 = vmatprep.mubr.f32.mxu0 0.0
      %6720 = vmatmul.mubr.f32.gmra.mrb[0].mxu0 %v6626
      %v6721 = vpop.f32.mrb[0].mxu0
      %v6722 = vadd.f32 0.0, %v6721
      %v6723 = vpop.f32.mrb[0].mxu0
      %6724 = vmatprep.mubr.f32.mxu0 0.0
      %6725 = vmatmul.mubr.f32.gmra.mrb[0].mxu0 %v6629
      %v6726 = vpop.f32.mrb[0].mxu0
      %v6727 = vadd.f32 0.0, %v6726
      %v6728 = vpop.f32.mrb[0].mxu0
      %6729 = vmatprep.mubr.f32.mxu0 0.0
      %6730 = vmatmul.mubr.f32.gmra.mrb[0].mxu0 %v6632
      %v6731 = vpop.f32.mrb[0].mxu0
      %v6732 = vadd.f32 0.0, %v6731
      %v6733 = vpop.f32.mrb[0].mxu0
      %6734 = vmatprep.mubr.f32.mxu0 0.0
      %6735 = vmatmul.mubr.f32.gmra.mrb[0].mxu0 %v6635
      %v6736 = vpop.f32.mrb[0].mxu0
      %v6737 = vadd.f32 0.0, %v6736
      %v6738 = vpop.f32.mrb[0].mxu0
      %6739 = vmatprep.mubr.f32.mxu0 0.0
      %6740 = vmatmul.mubr.f32.gmra.mrb[0].mxu0 %v6638
      %v6741 = vpop.f32.mrb[0].mxu0
      %v6742 = vadd.f32 0.0, %v6741
      %v6743 = vpop.f32.mrb[0].mxu0
      %6744 = vdwg.mxu0
      %v6746 = vsel %vm1210, %v6334, 0
      %v6749 = vsel %vm1210, %v6335, 0
      %v6752 = vsel %vm1210, %v6336, 0
      %v6755 = vsel %vm1210, %v6337, 0
      %v6758 = vsel %vm1210, %v6338, 0
      %v6761 = vsel %vm1210, %v6339, 0
      %v6764 = vsel %vm1210, %v6340, 0
      %v6767 = vsel %vm1210, %v6341, 0
      %6769 = vmatprep.subr.mxu0 0.0
      %6770 = vmatpush1.msra.mxu0 %v6469
      %6771 = vmatprep.subr.mxu0 0.0
      %6772 = vmatpush1.msra.mxu0 %v6474
      %6773 = vmatprep.subr.mxu0 0.0
      %6774 = vmatpush1.msra.mxu0 0.0
      %6775 = vmatprep.subr.mxu0 0.0
      %6776 = vmatpush1.msra.mxu0 0.0
      %6777 = vmatprep.subr.mxu0 0.0
      %6778 = vmatpush1.msra.mxu0 0.0
      %6779 = vmatprep.subr.mxu0 0.0
      %6780 = vmatpush1.msra.mxu0 0.0
      %6781 = vmatprep.subr.mxu0 0.0
      %6782 = vmatpush1.msra.mxu0 0.0
      %6783 = vmatprep.subr.mxu0 0.0
      %6784 = vmatpush1.msra.mxu0 0.0
      %6785 = vmatprep.subr.mxu0 0.0
      %6786 = vmatpush1.msra.mxu0 0.0
      %6787 = vmatprep.subr.mxu0 0.0
      %6788 = vmatpush1.msra.mxu0 0.0
      %6789 = vmatprep.subr.mxu0 0.0
      %6790 = vmatpush1.msra.mxu0 0.0
      %6791 = vmatprep.subr.mxu0 0.0
      %6792 = vmatpush1.msra.mxu0 0.0
      %6793 = vmatprep.subr.mxu0 0.0
      %6794 = vmatpush1.msra.mxu0 0.0
      %6795 = vmatprep.subr.mxu0 0.0
      %6796 = vmatpush1.msra.mxu0 0.0
      %6797 = vmatprep.subr.mxu0 0.0
      %6798 = vmatpush1.msra.mxu0 0.0
      %6799 = vmatprep.subr.mxu0 0.0
      %6800 = vmatpush1.msra.mxu0 0.0
      %6801 = vmatprep.subr.mxu0 0.0
      %6802 = vmatpush1.msra.mxu0 0.0
      %6803 = vmatprep.subr.mxu0 0.0
      %6804 = vmatpush1.msra.mxu0 0.0
      %6805 = vmatprep.subr.mxu0 0.0
      %6806 = vmatpush1.msra.mxu0 0.0
      %6807 = vmatprep.subr.mxu0 0.0
      %6808 = vmatpush1.msra.mxu0 0.0
      %6809 = vmatprep.subr.mxu0 0.0
      %6810 = vmatpush1.msra.mxu0 0.0
      %6811 = vmatprep.subr.mxu0 0.0
      %6812 = vmatpush1.msra.mxu0 0.0
      %6813 = vmatprep.subr.mxu0 0.0
      %6814 = vmatpush1.msra.mxu0 0.0
      %6815 = vmatprep.subr.mxu0 0.0
      %6816 = vmatpush1.msra.mxu0 0.0
      %6817 = vmatprep.subr.mxu0 0.0
      %6818 = vmatpush1.msra.mxu0 0.0
      %6819 = vmatprep.subr.mxu0 0.0
      %6820 = vmatpush1.msra.mxu0 0.0
      %6821 = vmatprep.subr.mxu0 0.0
      %6822 = vmatpush1.msra.mxu0 0.0
      %6823 = vmatprep.subr.mxu0 0.0
      %6824 = vmatpush1.msra.mxu0 0.0
      %6825 = vmatprep.subr.mxu0 0.0
      %6826 = vmatpush1.msra.mxu0 0.0
      %6827 = vmatprep.subr.mxu0 0.0
      %6828 = vmatpush1.msra.mxu0 0.0
      %6829 = vmatprep.subr.mxu0 0.0
      %6830 = vmatpush1.msra.mxu0 0.0
      %6831 = vmatprep.subr.mxu0 0.0
      %6832 = vmatpush1.msra.mxu0 0.0
      %6833 = vmatprep.mubr.f32.mxu0 0.0
      %6834 = vmatmul.mubr.f32.gmra.mrb[0].mxu0 %v6746
      %v6835 = vpop.f32.mrb[0].mxu0
      %v6836 = vadd.f32 0.0, %v6835
      %v6837 = vpop.f32.mrb[0].mxu0
      %6838 = vmatprep.mubr.f32.mxu0 0.0
      %6839 = vmatmul.mubr.f32.gmra.mrb[0].mxu0 %v6749
      %v6840 = vpop.f32.mrb[0].mxu0
      %v6841 = vadd.f32 0.0, %v6840
      %v6842 = vpop.f32.mrb[0].mxu0
      %6843 = vmatprep.mubr.f32.mxu0 0.0
      %6844 = vmatmul.mubr.f32.gmra.mrb[0].mxu0 %v6752
      %v6845 = vpop.f32.mrb[0].mxu0
      %v6846 = vadd.f32 0.0, %v6845
      %v6847 = vpop.f32.mrb[0].mxu0
      %6848 = vmatprep.mubr.f32.mxu0 0.0
      %6849 = vmatmul.mubr.f32.gmra.mrb[0].mxu0 %v6755
      %v6850 = vpop.f32.mrb[0].mxu0
      %v6851 = vadd.f32 0.0, %v6850
      %v6852 = vpop.f32.mrb[0].mxu0
      %6853 = vmatprep.mubr.f32.mxu0 0.0
      %6854 = vmatmul.mubr.f32.gmra.mrb[0].mxu0 %v6758
      %v6855 = vpop.f32.mrb[0].mxu0
      %v6856 = vadd.f32 0.0, %v6855
      %v6857 = vpop.f32.mrb[0].mxu0
      %6858 = vmatprep.mubr.f32.mxu0 0.0
      %6859 = vmatmul.mubr.f32.gmra.mrb[0].mxu0 %v6761
      %v6860 = vpop.f32.mrb[0].mxu0
      %v6861 = vadd.f32 0.0, %v6860
      %v6862 = vpop.f32.mrb[0].mxu0
      %6863 = vmatprep.mubr.f32.mxu0 0.0
      %6864 = vmatmul.mubr.f32.gmra.mrb[0].mxu0 %v6764
      %v6865 = vpop.f32.mrb[0].mxu0
      %v6866 = vadd.f32 0.0, %v6865
      %v6867 = vpop.f32.mrb[0].mxu0
      %6868 = vmatprep.mubr.f32.mxu0 0.0
      %6869 = vmatmul.mubr.f32.gmra.mrb[0].mxu0 %v6767
      %v6870 = vpop.f32.mrb[0].mxu0
      %v6871 = vadd.f32 0.0, %v6870
      %v6872 = vpop.f32.mrb[0].mxu0
      %6873 = vdwg.mxu0
      %v6875 = vsel %vm1210, %v6342, 0
      %v6878 = vsel %vm1210, %v6343, 0
      %v6881 = vsel %vm1210, %v6344, 0
      %v6884 = vsel %vm1210, %v6345, 0
      %v6887 = vsel %vm1210, %v6346, 0
      %v6890 = vsel %vm1210, %v6347, 0
      %v6893 = vsel %vm1210, %v6348, 0
      %v6896 = vsel %vm1210, %v6349, 0
      %6898 = vmatprep.subr.mxu0 0.0
      %6899 = vmatpush1.msra.mxu0 %v6479
      %6900 = vmatprep.subr.mxu0 0.0
      %6901 = vmatpush1.msra.mxu0 %v6484
      %6902 = vmatprep.subr.mxu0 0.0
      %6903 = vmatpush1.msra.mxu0 0.0
      %6904 = vmatprep.subr.mxu0 0.0
      %6905 = vmatpush1.msra.mxu0 0.0
      %6906 = vmatprep.subr.mxu0 0.0
      %6907 = vmatpush1.msra.mxu0 0.0
      %6908 = vmatprep.subr.mxu0 0.0
      %6909 = vmatpush1.msra.mxu0 0.0
      %6910 = vmatprep.subr.mxu0 0.0
      %6911 = vmatpush1.msra.mxu0 0.0
      %6912 = vmatprep.subr.mxu0 0.0
      %6913 = vmatpush1.msra.mxu0 0.0
      %6914 = vmatprep.subr.mxu0 0.0
      %6915 = vmatpush1.msra.mxu0 0.0
      %6916 = vmatprep.subr.mxu0 0.0
      %6917 = vmatpush1.msra.mxu0 0.0
      %6918 = vmatprep.subr.mxu0 0.0
      %6919 = vmatpush1.msra.mxu0 0.0
      %6920 = vmatprep.subr.mxu0 0.0
      %6921 = vmatpush1.msra.mxu0 0.0
      %6922 = vmatprep.subr.mxu0 0.0
      %6923 = vmatpush1.msra.mxu0 0.0
      %6924 = vmatprep.subr.mxu0 0.0
      %6925 = vmatpush1.msra.mxu0 0.0
      %6926 = vmatprep.subr.mxu0 0.0
      %6927 = vmatpush1.msra.mxu0 0.0
      %6928 = vmatprep.subr.mxu0 0.0
      %6929 = vmatpush1.msra.mxu0 0.0
      %6930 = vmatprep.subr.mxu0 0.0
      %6931 = vmatpush1.msra.mxu0 0.0
      %6932 = vmatprep.subr.mxu0 0.0
      %6933 = vmatpush1.msra.mxu0 0.0
      %6934 = vmatprep.subr.mxu0 0.0
      %6935 = vmatpush1.msra.mxu0 0.0
      %6936 = vmatprep.subr.mxu0 0.0
      %6937 = vmatpush1.msra.mxu0 0.0
      %6938 = vmatprep.subr.mxu0 0.0
      %6939 = vmatpush1.msra.mxu0 0.0
      %6940 = vmatprep.subr.mxu0 0.0
      %6941 = vmatpush1.msra.mxu0 0.0
      %6942 = vmatprep.subr.mxu0 0.0
      %6943 = vmatpush1.msra.mxu0 0.0
      %6944 = vmatprep.subr.mxu0 0.0
      %6945 = vmatpush1.msra.mxu0 0.0
      %6946 = vmatprep.subr.mxu0 0.0
      %6947 = vmatpush1.msra.mxu0 0.0
      %6948 = vmatprep.subr.mxu0 0.0
      %6949 = vmatpush1.msra.mxu0 0.0
      %6950 = vmatprep.subr.mxu0 0.0
      %6951 = vmatpush1.msra.mxu0 0.0
      %6952 = vmatprep.subr.mxu0 0.0
      %6953 = vmatpush1.msra.mxu0 0.0
      %6954 = vmatprep.subr.mxu0 0.0
      %6955 = vmatpush1.msra.mxu0 0.0
      %6956 = vmatprep.subr.mxu0 0.0
      %6957 = vmatpush1.msra.mxu0 0.0
      %6958 = vmatprep.subr.mxu0 0.0
      %6959 = vmatpush1.msra.mxu0 0.0
      %6960 = vmatprep.subr.mxu0 0.0
      %6961 = vmatpush1.msra.mxu0 0.0
      %6962 = vmatprep.mubr.f32.mxu0 0.0
      %6963 = vmatmul.mubr.f32.gmra.mrb[0].mxu0 %v6875
      %v6964 = vpop.f32.mrb[0].mxu0
      %v6965 = vadd.f32 0.0, %v6964
      %v6966 = vpop.f32.mrb[0].mxu0
      %6967 = vmatprep.mubr.f32.mxu0 0.0
      %6968 = vmatmul.mubr.f32.gmra.mrb[0].mxu0 %v6878
      %v6969 = vpop.f32.mrb[0].mxu0
      %v6970 = vadd.f32 0.0, %v6969
      %v6971 = vpop.f32.mrb[0].mxu0
      %6972 = vmatprep.mubr.f32.mxu0 0.0
      %6973 = vmatmul.mubr.f32.gmra.mrb[0].mxu0 %v6881
      %v6974 = vpop.f32.mrb[0].mxu0
      %v6975 = vadd.f32 0.0, %v6974
      %v6976 = vpop.f32.mrb[0].mxu0
      %6977 = vmatprep.mubr.f32.mxu0 0.0
      %6978 = vmatmul.mubr.f32.gmra.mrb[0].mxu0 %v6884
      %v6979 = vpop.f32.mrb[0].mxu0
      %v6980 = vadd.f32 0.0, %v6979
      %v6981 = vpop.f32.mrb[0].mxu0
      %6982 = vmatprep.mubr.f32.mxu0 0.0
      %6983 = vmatmul.mubr.f32.gmra.mrb[0].mxu0 %v6887
      %v6984 = vpop.f32.mrb[0].mxu0
      %v6985 = vadd.f32 0.0, %v6984
      %v6986 = vpop.f32.mrb[0].mxu0
      %6987 = vmatprep.mubr.f32.mxu0 0.0
      %6988 = vmatmul.mubr.f32.gmra.mrb[0].mxu0 %v6890
      %v6989 = vpop.f32.mrb[0].mxu0
      %v6990 = vadd.f32 0.0, %v6989
      %v6991 = vpop.f32.mrb[0].mxu0
      %6992 = vmatprep.mubr.f32.mxu0 0.0
      %6993 = vmatmul.mubr.f32.gmra.mrb[0].mxu0 %v6893
      %v6994 = vpop.f32.mrb[0].mxu0
      %v6995 = vadd.f32 0.0, %v6994
      %v6996 = vpop.f32.mrb[0].mxu0
      %6997 = vmatprep.mubr.f32.mxu0 0.0
      %6998 = vmatmul.mubr.f32.gmra.mrb[0].mxu0 %v6896
      %v6999 = vpop.f32.mrb[0].mxu0
      %v7000 = vadd.f32 0.0, %v6999
      %v7001 = vpop.f32.mrb[0].mxu0
      %7002 = vdwg.mxu0
      %v7003 = vadd.f32 %v5386, %v6578
      %v7004 = vadd.f32 %v5387, %v6583
      %v7005 = vadd.f32 %v5388, %v6588
      %v7006 = vadd.f32 %v5389, %v6593
      %v7007 = vadd.f32 %v5390, %v6598
      %v7008 = vadd.f32 %v5391, %v6603
      %v7009 = vadd.f32 %v5392, %v6608
      %v7010 = vadd.f32 %v5393, %v6613
      %v7011 = vadd.f32 %v5394, %v6707
      %v7012 = vadd.f32 %v5395, %v6712
      %v7013 = vadd.f32 %v5396, %v6717
      %v7014 = vadd.f32 %v5397, %v6722
      %v7015 = vadd.f32 %v5398, %v6727
      %v7016 = vadd.f32 %v5399, %v6732
      %v7017 = vadd.f32 %v5400, %v6737
      %v7018 = vadd.f32 %v5401, %v6742
      %v7019 = vadd.f32 %v5402, %v6836
      %v7020 = vadd.f32 %v5403, %v6841
      %v7021 = vadd.f32 %v5404, %v6846
      %v7022 = vadd.f32 %v5405, %v6851
      %v7023 = vadd.f32 %v5406, %v6856
      %v7024 = vadd.f32 %v5407, %v6861
      %v7025 = vadd.f32 %v5408, %v6866
      %v7026 = vadd.f32 %v5409, %v6871
      %v7027 = vadd.f32 %v5410, %v6965
      %v7028 = vadd.f32 %v5411, %v6970
      %v7029 = vadd.f32 %v5412, %v6975
      %v7030 = vadd.f32 %v5413, %v6980
      %v7031 = vadd.f32 %v5414, %v6985
      %v7032 = vadd.f32 %v5415, %v6990
      %v7033 = vadd.f32 %v5416, %v6995
      %v7034 = vadd.f32 %v5417, %v7000
      %v7035 = vld [vmem:[%s4] sm:$0x1]
      %v7037 = vlaneseq
      %v7038 = vshrl.u32 %v7037, 7
      %v7039 = vsub.s32 0, %v7038
      %v7040 = vrot.slane %v7035, %v7039
      %v7042 = vadd.f32 %v7003, %v7040
      %v7043 = vadd.f32 %v7004, %v7040
      %v7044 = vadd.f32 %v7005, %v7040
      %v7045 = vadd.f32 %v7006, %v7040
      %v7046 = vadd.f32 %v7007, %v7040
      %v7047 = vadd.f32 %v7008, %v7040
      %v7048 = vadd.f32 %v7009, %v7040
      %v7049 = vadd.f32 %v7010, %v7040
      %v7050 = vadd.f32 %v7011, %v7040
      %v7051 = vadd.f32 %v7012, %v7040
      %v7052 = vadd.f32 %v7013, %v7040
      %v7053 = vadd.f32 %v7014, %v7040
      %v7054 = vadd.f32 %v7015, %v7040
      %v7055 = vadd.f32 %v7016, %v7040
      %v7056 = vadd.f32 %v7017, %v7040
      %v7057 = vadd.f32 %v7018, %v7040
      %v7058 = vadd.f32 %v7019, %v7040
      %v7059 = vadd.f32 %v7020, %v7040
      %v7060 = vadd.f32 %v7021, %v7040
      %v7061 = vadd.f32 %v7022, %v7040
      %v7062 = vadd.f32 %v7023, %v7040
      %v7063 = vadd.f32 %v7024, %v7040
      %v7064 = vadd.f32 %v7025, %v7040
      %v7065 = vadd.f32 %v7026, %v7040
      %v7066 = vadd.f32 %v7027, %v7040
      %v7067 = vadd.f32 %v7028, %v7040
      %v7068 = vadd.f32 %v7029, %v7040
      %v7069 = vadd.f32 %v7030, %v7040
      %v7070 = vadd.f32 %v7031, %v7040
      %v7071 = vadd.f32 %v7032, %v7040
      %v7072 = vadd.f32 %v7033, %v7040
      %v7073 = vadd.f32 %v7034, %v7040
      %7074 = vst.msk [vmem:[%s258] sm:$0xff] %vm303, %v7042
      %7075 = vst.msk [vmem:[%s258 + $0x8] sm:$0xff] %vm303, %v7043
      %7076 = vst.msk [vmem:[%s258 + $0x10] sm:$0xff] %vm303, %v7044
      %7077 = vst.msk [vmem:[%s258 + $0x18] sm:$0xff] %vm303, %v7045
      %7078 = vst.msk [vmem:[%s258 + $0x20] sm:$0xff] %vm303, %v7046
      %7079 = vst.msk [vmem:[%s258 + $0x28] sm:$0xff] %vm303, %v7047
      %7080 = vst.msk [vmem:[%s258 + $0x30] sm:$0xff] %vm303, %v7048
      %7081 = vst.msk [vmem:[%s258 + $0x38] sm:$0xff] %vm303, %v7049
      %7082 = vst.msk [vmem:[%s258 + $0x40] sm:$0xff] %vm303, %v7050
      %7083 = vst.msk [vmem:[%s258 + $0x48] sm:$0xff] %vm303, %v7051
      %7084 = vst.msk [vmem:[%s258 + $0x50] sm:$0xff] %vm303, %v7052
      %7085 = vst.msk [vmem:[%s258 + $0x58] sm:$0xff] %vm303, %v7053
      %7086 = vst.msk [vmem:[%s258 + $0x60] sm:$0xff] %vm303, %v7054
      %7087 = vst.msk [vmem:[%s258 + $0x68] sm:$0xff] %vm303, %v7055
      %7088 = vst.msk [vmem:[%s258 + $0x70] sm:$0xff] %vm303, %v7056
      %7089 = vst.msk [vmem:[%s258 + $0x78] sm:$0xff] %vm303, %v7057
      %7090 = vst.msk [vmem:[%s258 + $0x80] sm:$0xff] %vm303, %v7058
      %7091 = vst.msk [vmem:[%s258 + $0x88] sm:$0xff] %vm303, %v7059
      %7092 = vst.msk [vmem:[%s258 + $0x90] sm:$0xff] %vm303, %v7060
      %7093 = vst.msk [vmem:[%s258 + $0x98] sm:$0xff] %vm303, %v7061
      %7094 = vst.msk [vmem:[%s258 + $0xa0] sm:$0xff] %vm303, %v7062
      %7095 = vst.msk [vmem:[%s258 + $0xa8] sm:$0xff] %vm303, %v7063
      %7096 = vst.msk [vmem:[%s258 + $0xb0] sm:$0xff] %vm303, %v7064
      %7097 = vst.msk [vmem:[%s258 + $0xb8] sm:$0xff] %vm303, %v7065
      %7098 = vst.msk [vmem:[%s258 + $0xc0] sm:$0xff] %vm303, %v7066
      %7099 = vst.msk [vmem:[%s258 + $0xc8] sm:$0xff] %vm303, %v7067
      %7100 = vst.msk [vmem:[%s258 + $0xd0] sm:$0xff] %vm303, %v7068
      %7101 = vst.msk [vmem:[%s258 + $0xd8] sm:$0xff] %vm303, %v7069
      %7102 = vst.msk [vmem:[%s258 + $0xe0] sm:$0xff] %vm303, %v7070
      %7103 = vst.msk [vmem:[%s258 + $0xe8] sm:$0xff] %vm303, %v7071
      %7104 = vst.msk [vmem:[%s258 + $0xf0] sm:$0xff] %vm303, %v7072
      %7105 = vst.msk [vmem:[%s258 + $0xf8] sm:$0xff] %vm303, %v7073
      %s7106 = smul.u32 4, %s17
      %p7107 = scmp.lt.s32.totalorder %s7106, 7
      %s7108 = scalar_select %p7107, %s7106, 7
      %s7109 = smul.addr %s7108, 8
      %s7110 = smul.addr %s7109, 8
      %s7111 = scalar_lea.vmem %s6, %s7110
      // Predicated region
      $region45: #{tpu_custom_call.1} parent=43 // pred_check
        %p7112 = pneg %p166
      $region46: #{tpu_custom_call.1} parent=43 // pred_check_branch
        %7114 = sbr.rel (%p7112) target = $region48
      $region47: #{tpu_custom_call.1} parent=43 // pred_region
        %s7115 = smul.u32 4, %s17
      $region48: #{tpu_custom_call.1} parent=43 // pred_fallthru
        _
    $region44: #{tpu_custom_call.1} parent=5 // pred_fallthru
      _
    %p7116 = scmp.le.s32.totalorder 2, %s12
    // Predicated region
    $region49: #{tpu_custom_call.1} parent=5 // pred_check
      %p7117 = pneg %p7116
    $region50: #{tpu_custom_call.1} parent=5 // pred_check_branch
      %7119 = sbr.rel (%p7117) target = $region52
    $region51: #{tpu_custom_call.1} parent=5 // pred_region
      %s7120 = ssub.s32 %s12, 2
      // Predicated region
      $region53: #{tpu_custom_call.1} parent=51 // pred_check
        %p7121 = pneg %p172
      $region54: #{tpu_custom_call.1} parent=51 // pred_check_branch
        %7123 = sbr.rel (%p7121) target = $region56
      $region55: #{tpu_custom_call.1} parent=51 // pred_region
        %s7124 = smul.u32 4, %s18
        %p7125 = scmp.lt.s32.totalorder %s7124, 7
        %s7126 = scalar_select %p7125, %s7124, 7
        %s7127 = smul.addr %s7126, 8
        %s7128 = smul.addr %s7127, 8
        %s7129 = scalar_lea.vmem %s6, %s7128
      $region56: #{tpu_custom_call.1} parent=51 // pred_fallthru
        _
    $region52: #{tpu_custom_call.1} parent=5 // pred_fallthru
      _
  $region6: #{tpu_custom_call.1} parent=0 // loop_footer
    %s16 = sadd.s32 1, %s12
  $region7: #{tpu_custom_call.1} parent=0 // loop_footer_branch
    %11 = sbr.rel target = $region3
  $region8: #{tpu_custom_call.1} parent=0 // loop_exit
    _

</llo_original>
